<compile_context>
chip_gen: v6e
topology: v6e:2x2x1
jax: 0.10.0
libtpu: 0.0.40
codegen_flags: <defaults>
</compile_context>

<pallas_src>
import jax
import jax.numpy as jnp
from jax.experimental import pallas as pl
from jax.experimental.pallas import tpu as pltpu


def _round_up(x, m):
    return ((x + m - 1) // m) * m


def _const_spec(shape):
    """BlockSpec for a weight/shift that is identical for every grid point."""
    ndim = len(shape)
    return pl.BlockSpec(shape, lambda i, t, _n=ndim: (0,) * _n)


# ---------------------------------------------------------------------------
# Kernel 1: T-Net — fused point MLP + max-pool + FC head (finalize)
# ---------------------------------------------------------------------------
def _stn_kernel(x_ref, w1, sh1, w2, sh2, w3, sh3,
                fw1, fsh1, fw2, fsh2, fw3, fsh3,
                o_ref, acc_ref):
    t = pl.program_id(1)

    @pl.when(t == 0)
    def _init():
        acc_ref[...] = jnp.full(acc_ref.shape, -jnp.inf, dtype=acc_ref.dtype)

    x = x_ref[0]                                                 # (tn, 8) bf16
    h = jnp.dot(x, w1[...], preferred_element_type=jnp.float32)
    h = jnp.maximum(h + sh1[...], 0.0).astype(jnp.bfloat16)
    h = jnp.dot(h, w2[...], preferred_element_type=jnp.float32)
    h = jnp.maximum(h + sh2[...], 0.0).astype(jnp.bfloat16)
    h = jnp.dot(h, w3[...], preferred_element_type=jnp.float32)  # (tn, 1024)
    # shift3 + ReLU deferred past the max-pool (exact, per-column constant).
    acc_ref[...] = jnp.maximum(acc_ref[...],
                               jnp.max(h, axis=0, keepdims=True))

    @pl.when(t == pl.num_programs(1) - 1)
    def _finalize():
        g = jnp.maximum(acc_ref[...] + sh3[...], 0.0)            # (1, 1024)
        g = g.astype(jnp.bfloat16)
        h1 = jnp.dot(g, fw1[...], preferred_element_type=jnp.float32)
        h1 = jnp.maximum(h1 + fsh1[...], 0.0).astype(jnp.bfloat16)
        h2 = jnp.dot(h1, fw2[...], preferred_element_type=jnp.float32)
        h2 = jnp.maximum(h2 + fsh2[...], 0.0).astype(jnp.bfloat16)
        t9 = jnp.dot(h2, fw3[...], preferred_element_type=jnp.float32)
        t9 = t9 + fsh3[...]                                      # identity folded
        o_ref[0] = t9.astype(o_ref.dtype)


def stn_forward(x_pad, params, tn):
    """x_pad: (B, N_pad, 8) bf16 -> (B, 9) flattened 3x3 transform."""
    b, n_pad, c_pad = x_pad.shape
    names = ["stn_conv1", "stn_conv2", "stn_conv3",
             "stn_fc1", "stn_fc2", "stn_fc3"]
    args = [x_pad]
    in_specs = [pl.BlockSpec((1, tn, c_pad), lambda i, t: (i, t, 0))]
    for nm in names:
        w, sh = params[nm]
        args += [w, sh]
        in_specs += [_const_spec(w.shape), _const_spec(sh.shape)]

    out = pl.pallas_call(
        _stn_kernel,
        out_shape=jax.ShapeDtypeStruct((b, 1, 9), jnp.float32),
        grid=(b, n_pad // tn),
        in_specs=in_specs,
        out_specs=pl.BlockSpec((1, 1, 9), lambda i, t: (i, 0, 0)),
        scratch_shapes=[pltpu.VMEM((1, 1024), jnp.float32)],
        compiler_params=pltpu.CompilerParams(
            dimension_semantics=("parallel", "arbitrary")),
    )(*args)
    return out.reshape(b, 9)


# ---------------------------------------------------------------------------
# Kernel 2: encoder (trans folded into conv1) + max-pool + cls head (finalize)
# ---------------------------------------------------------------------------
def _enc_cls_kernel(x_ref, w1e_ref, sh1, w2, sh2, w3, sh3,
                    cw1, csh1, cw2, csh2, cw3, csh3, cw4, csh4,
                    o_ref, acc_ref):
    t = pl.program_id(1)

    @pl.when(t == 0)
    def _init():
        acc_ref[...] = jnp.full(acc_ref.shape, -jnp.inf, dtype=acc_ref.dtype)

    x = x_ref[0]                                                 # (tn, 8) bf16
    h = jnp.dot(x, w1e_ref[0], preferred_element_type=jnp.float32)
    h = jnp.maximum(h + sh1[...], 0.0).astype(jnp.bfloat16)
    h = jnp.dot(h, w2[...], preferred_element_type=jnp.float32)
    h = jnp.maximum(h + sh2[...], 0.0).astype(jnp.bfloat16)
    h = jnp.dot(h, w3[...], preferred_element_type=jnp.float32)  # (tn, 1024)
    # bn3 has no ReLU; its shift is deferred past the max-pool.
    acc_ref[...] = jnp.maximum(acc_ref[...],
                               jnp.max(h, axis=0, keepdims=True))

    @pl.when(t == pl.num_programs(1) - 1)
    def _finalize():
        g = (acc_ref[...] + sh3[...]).astype(jnp.bfloat16)       # (1, 1024)
        h1 = jnp.dot(g, cw1[...], preferred_element_type=jnp.float32)
        h1 = jnp.maximum(h1 + csh1[...], 0.0).astype(jnp.bfloat16)
        h2 = jnp.dot(h1, cw2[...], preferred_element_type=jnp.float32)
        h2 = jnp.maximum(h2 + csh2[...], 0.0).astype(jnp.bfloat16)
        h3 = jnp.dot(h2, cw3[...], preferred_element_type=jnp.float32)
        h3 = jnp.maximum(h3 + csh3[...], 0.0).astype(jnp.bfloat16)
        logits = jnp.dot(h3, cw4[...], preferred_element_type=jnp.float32)
        logits = logits + csh4[...]                              # (1, k)
        m = jnp.max(logits, axis=-1, keepdims=True)
        s = logits - m
        lse = jnp.log(jnp.sum(jnp.exp(s), axis=-1, keepdims=True))
        o_ref[0] = (s - lse).astype(o_ref.dtype)


def encoder_cls_forward(x_pad, w1_eff, params, tn):
    """x_pad: (B, N_pad, 8) bf16, w1_eff: (B, 8, 64) bf16 -> (B, k) log-probs."""
    b, n_pad, c_pad = x_pad.shape
    k = params["cls_conv4"][0].shape[1]

    names = ["enc_conv2", "enc_conv3",
             "cls_conv1", "cls_conv2", "cls_conv3", "cls_conv4"]
    args = [x_pad, w1_eff, params["enc_conv1"][1]]
    in_specs = [
        pl.BlockSpec((1, tn, c_pad), lambda i, t: (i, t, 0)),
        pl.BlockSpec((1,) + w1_eff.shape[1:], lambda i, t: (i, 0, 0)),
        _const_spec(params["enc_conv1"][1].shape),
    ]
    for nm in names:
        w, sh = params[nm]
        args += [w, sh]
        in_specs += [_const_spec(w.shape), _const_spec(sh.shape)]

    out = pl.pallas_call(
        _enc_cls_kernel,
        out_shape=jax.ShapeDtypeStruct((b, 1, k), jnp.float32),
        grid=(b, n_pad // tn),
        in_specs=in_specs,
        out_specs=pl.BlockSpec((1, 1, k), lambda i, t: (i, 0, 0)),
        scratch_shapes=[pltpu.VMEM((1, 1024), jnp.float32)],
        compiler_params=pltpu.CompilerParams(
            dimension_semantics=("parallel", "arbitrary")),
    )(*args)
    return out.reshape(b, k)


# ---------------------------------------------------------------------------
# Deterministic parameter initialization (shapes from PointNetCls.__init__).
# Bias + BN (eval mode) folded: scale -> weights, shift kept separately.
# ---------------------------------------------------------------------------
_LAYER_DEFS = [
    # name, cin, cout(None -> k), has_bn, pad_cin_to
    ("stn_conv1", 3, 64, True, 8),
    ("stn_conv2", 64, 128, True, 0),
    ("stn_conv3", 128, 1024, True, 0),
    ("stn_fc1", 1024, 512, True, 0),
    ("stn_fc2", 512, 256, True, 0),
    ("stn_fc3", 256, 9, False, 0),
    ("enc_conv1", 3, 64, True, 0),     # kept (3, 64); trans folded per batch
    ("enc_conv2", 64, 128, True, 0),
    ("enc_conv3", 128, 1024, True, 0),
    ("cls_conv1", 1024, 512, True, 0),
    ("cls_conv2", 512, 256, True, 0),
    ("cls_conv3", 256, 128, True, 0),
    ("cls_conv4", 128, None, False, 0),
]


def init_params(key, k_classes=2):
    eps = 1e-5
    params = {}
    for name, cin, cout, has_bn, pad_cin in _LAYER_DEFS:
        if cout is None:
            cout = k_classes
        key, kw, kb, kg, kbt = jax.random.split(key, 5)
        bound = 1.0 / float(cin) ** 0.5
        w = jax.random.uniform(kw, (cin, cout), jnp.float32, -bound, bound)
        bias = jax.random.uniform(kb, (cout,), jnp.float32, -bound, bound)
        if has_bn:
            gamma = 1.0 + 0.1 * jax.random.normal(kg, (cout,), jnp.float32)
            beta = 0.1 * jax.random.normal(kbt, (cout,), jnp.float32)
            scale = gamma / jnp.sqrt(1.0 + eps)      # running_var = 1
            w = w * scale[None, :]                   # fold BN scale into W
            shift = bias * scale + beta              # running_mean = 0, bias folded
        else:
            shift = bias
        if name == "stn_fc3":
            # Fold the 3x3 identity addition of T_Net into the shift.
            shift = shift + jnp.eye(3, dtype=jnp.float32).reshape(9)
        if pad_cin and pad_cin > cin:
            w = jnp.pad(w, ((0, pad_cin - cin), (0, 0)))
        params[name] = (w.astype(jnp.bfloat16), shift.reshape(1, cout))
    return params


# ---------------------------------------------------------------------------
# Full PointNetCls forward
# ---------------------------------------------------------------------------
def pointnet_cls_forward(x, params, *, tn_max=1024):
    """x: (B, 3, N) float32 (PyTorch NCW) -> (B, k) log-probabilities."""
    b, c, n = x.shape
    assert c == 3

    # Point tile: multiple of 8, at most tn_max; pad N up to a tile multiple.
    tn = min(tn_max, _round_up(n, 8))
    n_pad = _round_up(n, tn)

    x_nlc = jnp.transpose(x, (0, 2, 1))                          # (B, N, 3)
    if n_pad != n:
        # Edge-pad (duplicate last point): duplicates never change the max.
        x_nlc = jnp.pad(x_nlc, ((0, 0), (0, n_pad - n), (0, 0)), mode="edge")
    # Pad channels 3 -> 8 and cast the streamed cloud to bf16 (MXU already
    # runs fp32 dots at bf16 precision by default; this halves the DMA).
    x_pad = jnp.pad(x_nlc, ((0, 0), (0, 0), (0, 5))).astype(jnp.bfloat16)

    # ---- Kernel 1: T-Net (point MLP + max-pool + fc head) -> (B, 9) ----
    t9 = stn_forward(x_pad, params, tn)
    trans = t9.reshape(b, 3, 3)

    # ---- Fold the 3x3 transform into enc_conv1 per batch (tiny einsum) ----
    # y = (x @ trans) @ W1  ==  x @ (trans @ W1); BN scale (already in W1)
    # acts on output channels, so the fold is exact.
    w1_enc = params["enc_conv1"][0].astype(jnp.float32)          # (3, 64)
    w1_eff = jnp.einsum("bij,jk->bik", trans, w1_enc)            # (B, 3, 64)
    w1_eff = jnp.pad(w1_eff, ((0, 0), (0, 5), (0, 0))).astype(jnp.bfloat16)

    # ---- Kernel 2: encoder + max-pool + cls head + log_softmax -> (B, k) ----
    return encoder_cls_forward(x_pad, w1_eff, params, tn)


if __name__ == "__main__":
    B, N, K = 2, 16, 2
    key = jax.random.PRNGKey(0)
    kx, kp = jax.random.split(key)
    x = jax.random.normal(kx, (B, 3, N), jnp.float32)
    params = init_params(kp, k_classes=K)

    fwd = jax.jit(pointnet_cls_forward)
    out = jax.block_until_ready(fwd(x, params))

    assert out.shape == (B, K), out.shape
    assert out.dtype == jnp.float32
    assert bool(jnp.all(jnp.isfinite(out)))
    # log_softmax rows must (approximately) exponentiate-sum to 1
    assert jnp.allclose(jnp.sum(jnp.exp(out), axis=-1), 1.0, atol=1e-3)
    print("KERNEL_OK")
</pallas_src>

<mosaic_0001>
module attributes {stable_mosaic.version = 11 : i64} {
  func.func @_enc_cls_kernel(%arg0: i32, %arg1: i32, %arg2: memref<1x16x8xbf16, #tpu.memory_space<vmem>>, %arg3: memref<1x8x64xbf16, #tpu.memory_space<vmem>>, %arg4: memref<1x64xf32, #tpu.memory_space<vmem>>, %arg5: memref<64x128xbf16, #tpu.memory_space<vmem>>, %arg6: memref<1x128xf32, #tpu.memory_space<vmem>>, %arg7: memref<128x1024xbf16, #tpu.memory_space<vmem>>, %arg8: memref<1x1024xf32, #tpu.memory_space<vmem>>, %arg9: memref<1024x512xbf16, #tpu.memory_space<vmem>>, %arg10: memref<1x512xf32, #tpu.memory_space<vmem>>, %arg11: memref<512x256xbf16, #tpu.memory_space<vmem>>, %arg12: memref<1x256xf32, #tpu.memory_space<vmem>>, %arg13: memref<256x128xbf16, #tpu.memory_space<vmem>>, %arg14: memref<1x128xf32, #tpu.memory_space<vmem>>, %arg15: memref<128x2xbf16, #tpu.memory_space<vmem>>, %arg16: memref<1x2xf32, #tpu.memory_space<vmem>>, %arg17: memref<1x1x2xf32, #tpu.memory_space<vmem>>, %arg18: memref<1x1024xf32, #tpu.memory_space<vmem>>) attributes {dimension_semantics = [#tpu.dimension_semantics<parallel>, #tpu.dimension_semantics<arbitrary>], iteration_bounds = array<i64: 2, 1>, scalar_prefetch = 0 : i64, scratch_operands = 1 : i64, tpu.core_type = #tpu.core_type<tc>, window_params = [{transform_indices = @transform_0, window_bounds = array<i64: 1, 16, 8>}, {transform_indices = @transform_1, window_bounds = array<i64: 1, 8, 64>}, {pipeline_mode = #tpu.pipeline_mode<synchronous>, transform_indices = @transform_2, window_bounds = array<i64: 1, 64>}, {pipeline_mode = #tpu.pipeline_mode<synchronous>, transform_indices = @transform_3, window_bounds = array<i64: 64, 128>}, {pipeline_mode = #tpu.pipeline_mode<synchronous>, transform_indices = @transform_4, window_bounds = array<i64: 1, 128>}, {pipeline_mode = #tpu.pipeline_mode<synchronous>, transform_indices = @transform_5, window_bounds = array<i64: 128, 1024>}, {pipeline_mode = #tpu.pipeline_mode<synchronous>, transform_indices = @transform_6, window_bounds = array<i64: 1, 1024>}, {pipeline_mode = #tpu.pipeline_mode<synchronous>, transform_indices = @transform_7, window_bounds = array<i64: 1024, 512>}, {pipeline_mode = #tpu.pipeline_mode<synchronous>, transform_indices = @transform_8, window_bounds = array<i64: 1, 512>}, {pipeline_mode = #tpu.pipeline_mode<synchronous>, transform_indices = @transform_9, window_bounds = array<i64: 512, 256>}, {pipeline_mode = #tpu.pipeline_mode<synchronous>, transform_indices = @transform_10, window_bounds = array<i64: 1, 256>}, {pipeline_mode = #tpu.pipeline_mode<synchronous>, transform_indices = @transform_11, window_bounds = array<i64: 256, 128>}, {pipeline_mode = #tpu.pipeline_mode<synchronous>, transform_indices = @transform_12, window_bounds = array<i64: 1, 128>}, {pipeline_mode = #tpu.pipeline_mode<synchronous>, transform_indices = @transform_13, window_bounds = array<i64: 128, 2>}, {pipeline_mode = #tpu.pipeline_mode<synchronous>, transform_indices = @transform_14, window_bounds = array<i64: 1, 2>}, {transform_indices = @transform_15, window_bounds = array<i64: 1, 1, 2>}]} {
    %c0_i32 = arith.constant 0 : i32
    %0 = arith.cmpi eq, %arg1, %c0_i32 : i32
    %1 = arith.extui %0 : i1 to i32
    %c0_i32_0 = arith.constant 0 : i32
    %2 = arith.cmpi ne, %1, %c0_i32_0 : i32
    scf.if %2 {
      %cst_25 = arith.constant 0xFF800000 : f32
      %32 = vector.broadcast %cst_25 : f32 to vector<1x1024xf32>
      %c0_26 = arith.constant 0 : index
      %c0_27 = arith.constant 0 : index
      %33 = vector.load %arg18[%c0_26, %c0_27] : memref<1x1024xf32, #tpu.memory_space<vmem>>, vector<1x1024xf32>
      tpu.vector_store %arg18[%c0_26, %c0_27], %32 {strides = array<i32>} : memref<1x1024xf32, #tpu.memory_space<vmem>>, vector<1x1024xf32>,
    } else {
    }
    %c0 = arith.constant 0 : index
    %c0_1 = arith.constant 0 : index
    %c0_2 = arith.constant 0 : index
    %3 = vector.load %arg2[%c0, %c0_1, %c0_2] : memref<1x16x8xbf16, #tpu.memory_space<vmem>>, vector<1x16x8xbf16>
    %4 = vector.shape_cast %3 : vector<1x16x8xbf16> to vector<16x8xbf16>
    %c0_3 = arith.constant 0 : index
    %c0_4 = arith.constant 0 : index
    %c0_5 = arith.constant 0 : index
    %5 = vector.load %arg3[%c0_3, %c0_4, %c0_5] : memref<1x8x64xbf16, #tpu.memory_space<vmem>>, vector<1x8x64xbf16>
    %6 = vector.shape_cast %5 : vector<1x8x64xbf16> to vector<8x64xbf16>
    %cst = arith.constant dense<0.000000e+00> : vector<16x64xf32>
    %7 = tpu.matmul %4, %6, %cst {dimension_numbers = #tpu.dot_dimension_numbers<[1], [0], [0], [1], [0, 0, 1, 1], [], []>} : vector<16x8xbf16>, vector<8x64xbf16>, vector<16x64xf32> -> vector<16x64xf32>
    %c0_6 = arith.constant 0 : index
    %c0_7 = arith.constant 0 : index
    %8 = vector.load %arg4[%c0_6, %c0_7] : memref<1x64xf32, #tpu.memory_space<vmem>>, vector<1x64xf32>
    %9 = vector.broadcast %8 : vector<1x64xf32> to vector<16x64xf32>
    %10 = arith.addf %7, %9 : vector<16x64xf32>
    %cst_8 = arith.constant 0.000000e+00 : f32
    %11 = vector.broadcast %cst_8 : f32 to vector<16x64xf32>
    %12 = arith.maximumf %10, %11 : vector<16x64xf32>
    %13 = arith.truncf %12 : vector<16x64xf32> to vector<16x64xbf16>
    %c0_9 = arith.constant 0 : index
    %c0_10 = arith.constant 0 : index
    %14 = vector.load %arg5[%c0_9, %c0_10] : memref<64x128xbf16, #tpu.memory_space<vmem>>, vector<64x128xbf16>
    %cst_11 = arith.constant dense<0.000000e+00> : vector<16x128xf32>
    %15 = tpu.matmul %13, %14, %cst_11 {dimension_numbers = #tpu.dot_dimension_numbers<[1], [0], [0], [1], [0, 0, 1, 1], [], []>} : vector<16x64xbf16>, vector<64x128xbf16>, vector<16x128xf32> -> vector<16x128xf32>
    %c0_12 = arith.constant 0 : index
    %c0_13 = arith.constant 0 : index
    %16 = vector.load %arg6[%c0_12, %c0_13] : memref<1x128xf32, #tpu.memory_space<vmem>>, vector<1x128xf32>
    %17 = vector.broadcast %16 : vector<1x128xf32> to vector<16x128xf32>
    %18 = arith.addf %15, %17 : vector<16x128xf32>
    %cst_14 = arith.constant 0.000000e+00 : f32
    %19 = vector.broadcast %cst_14 : f32 to vector<16x128xf32>
    %20 = arith.maximumf %18, %19 : vector<16x128xf32>
    %21 = arith.truncf %20 : vector<16x128xf32> to vector<16x128xbf16>
    %c0_15 = arith.constant 0 : index
    %c0_16 = arith.constant 0 : index
    %22 = vector.load %arg7[%c0_15, %c0_16] : memref<128x1024xbf16, #tpu.memory_space<vmem>>, vector<128x1024xbf16>
    %cst_17 = arith.constant dense<0.000000e+00> : vector<16x1024xf32>
    %23 = tpu.matmul %21, %22, %cst_17 {dimension_numbers = #tpu.dot_dimension_numbers<[1], [0], [0], [1], [0, 0, 1, 1], [], []>} : vector<16x128xbf16>, vector<128x1024xbf16>, vector<16x1024xf32> -> vector<16x1024xf32>
    %c0_18 = arith.constant 0 : index
    %c0_19 = arith.constant 0 : index
    %24 = vector.load %arg18[%c0_18, %c0_19] : memref<1x1024xf32, #tpu.memory_space<vmem>>, vector<1x1024xf32>
    %cst_20 = arith.constant dense<0xFF800000> : vector<1024xf32>
    %25 = vector.multi_reduction <maximumf>, %23, %cst_20 [0] : vector<16x1024xf32> to vector<1024xf32>
    %26 = vector.shape_cast %25 : vector<1024xf32> to vector<1x1024xf32>
    %27 = arith.maximumf %24, %26 : vector<1x1024xf32>
    %c0_21 = arith.constant 0 : index
    %c0_22 = arith.constant 0 : index
    %28 = vector.load %arg18[%c0_21, %c0_22] : memref<1x1024xf32, #tpu.memory_space<vmem>>, vector<1x1024xf32>
    tpu.vector_store %arg18[%c0_21, %c0_22], %27 {strides = array<i32>} : memref<1x1024xf32, #tpu.memory_space<vmem>>, vector<1x1024xf32>,
    %c0_i32_23 = arith.constant 0 : i32
    %29 = arith.cmpi eq, %arg1, %c0_i32_23 : i32
    %30 = arith.extui %29 : i1 to i32
    %c0_i32_24 = arith.constant 0 : i32
    %31 = arith.cmpi ne, %30, %c0_i32_24 : i32
    scf.if %31 {
      %c0_25 = arith.constant 0 : index
      %c0_26 = arith.constant 0 : index
      %32 = vector.load %arg18[%c0_25, %c0_26] : memref<1x1024xf32, #tpu.memory_space<vmem>>, vector<1x1024xf32>
      %c0_27 = arith.constant 0 : index
      %c0_28 = arith.constant 0 : index
      %33 = vector.load %arg8[%c0_27, %c0_28] : memref<1x1024xf32, #tpu.memory_space<vmem>>, vector<1x1024xf32>
      %34 = arith.addf %32, %33 : vector<1x1024xf32>
      %35 = arith.truncf %34 : vector<1x1024xf32> to vector<1x1024xbf16>
      %c0_29 = arith.constant 0 : index
      %c0_30 = arith.constant 0 : index
      %36 = vector.load %arg9[%c0_29, %c0_30] : memref<1024x512xbf16, #tpu.memory_space<vmem>>, vector<1024x512xbf16>
      %cst_31 = arith.constant dense<0.000000e+00> : vector<1x512xf32>
      %37 = tpu.matmul %35, %36, %cst_31 {dimension_numbers = #tpu.dot_dimension_numbers<[1], [0], [0], [1], [0, 0, 1, 1], [], []>} : vector<1x1024xbf16>, vector<1024x512xbf16>, vector<1x512xf32> -> vector<1x512xf32>
      %c0_32 = arith.constant 0 : index
      %c0_33 = arith.constant 0 : index
      %38 = vector.load %arg10[%c0_32, %c0_33] : memref<1x512xf32, #tpu.memory_space<vmem>>, vector<1x512xf32>
      %39 = arith.addf %37, %38 : vector<1x512xf32>
      %cst_34 = arith.constant 0.000000e+00 : f32
      %40 = vector.broadcast %cst_34 : f32 to vector<1x512xf32>
      %41 = arith.maximumf %39, %40 : vector<1x512xf32>
      %42 = arith.truncf %41 : vector<1x512xf32> to vector<1x512xbf16>
      %c0_35 = arith.constant 0 : index
      %c0_36 = arith.constant 0 : index
      %43 = vector.load %arg11[%c0_35, %c0_36] : memref<512x256xbf16, #tpu.memory_space<vmem>>, vector<512x256xbf16>
      %cst_37 = arith.constant dense<0.000000e+00> : vector<1x256xf32>
      %44 = tpu.matmul %42, %43, %cst_37 {dimension_numbers = #tpu.dot_dimension_numbers<[1], [0], [0], [1], [0, 0, 1, 1], [], []>} : vector<1x512xbf16>, vector<512x256xbf16>, vector<1x256xf32> -> vector<1x256xf32>
      %c0_38 = arith.constant 0 : index
      %c0_39 = arith.constant 0 : index
      %45 = vector.load %arg12[%c0_38, %c0_39] : memref<1x256xf32, #tpu.memory_space<vmem>>, vector<1x256xf32>
      %46 = arith.addf %44, %45 : vector<1x256xf32>
      %cst_40 = arith.constant 0.000000e+00 : f32
      %47 = vector.broadcast %cst_40 : f32 to vector<1x256xf32>
      %48 = arith.maximumf %46, %47 : vector<1x256xf32>
      %49 = arith.truncf %48 : vector<1x256xf32> to vector<1x256xbf16>
      %c0_41 = arith.constant 0 : index
      %c0_42 = arith.constant 0 : index
      %50 = vector.load %arg13[%c0_41, %c0_42] : memref<256x128xbf16, #tpu.memory_space<vmem>>, vector<256x128xbf16>
      %cst_43 = arith.constant dense<0.000000e+00> : vector<1x128xf32>
      %51 = tpu.matmul %49, %50, %cst_43 {dimension_numbers = #tpu.dot_dimension_numbers<[1], [0], [0], [1], [0, 0, 1, 1], [], []>} : vector<1x256xbf16>, vector<256x128xbf16>, vector<1x128xf32> -> vector<1x128xf32>
      %c0_44 = arith.constant 0 : index
      %c0_45 = arith.constant 0 : index
      %52 = vector.load %arg14[%c0_44, %c0_45] : memref<1x128xf32, #tpu.memory_space<vmem>>, vector<1x128xf32>
      %53 = arith.addf %51, %52 : vector<1x128xf32>
      %cst_46 = arith.constant 0.000000e+00 : f32
      %54 = vector.broadcast %cst_46 : f32 to vector<1x128xf32>
      %55 = arith.maximumf %53, %54 : vector<1x128xf32>
      %56 = arith.truncf %55 : vector<1x128xf32> to vector<1x128xbf16>
      %c0_47 = arith.constant 0 : index
      %c0_48 = arith.constant 0 : index
      %57 = vector.load %arg15[%c0_47, %c0_48] : memref<128x2xbf16, #tpu.memory_space<vmem>>, vector<128x2xbf16>
      %cst_49 = arith.constant dense<0.000000e+00> : vector<1x2xf32>
      %58 = tpu.matmul %56, %57, %cst_49 {dimension_numbers = #tpu.dot_dimension_numbers<[1], [0], [0], [1], [0, 0, 1, 1], [], []>} : vector<1x128xbf16>, vector<128x2xbf16>, vector<1x2xf32> -> vector<1x2xf32>
      %c0_50 = arith.constant 0 : index
      %c0_51 = arith.constant 0 : index
      %59 = vector.load %arg16[%c0_50, %c0_51] : memref<1x2xf32, #tpu.memory_space<vmem>>, vector<1x2xf32>
      %60 = arith.addf %58, %59 : vector<1x2xf32>
      %cst_52 = arith.constant dense<0xFF800000> : vector<1xf32>
      %61 = vector.multi_reduction <maximumf>, %60, %cst_52 [1] : vector<1x2xf32> to vector<1xf32>
      %62 = vector.shape_cast %61 : vector<1xf32> to vector<1x1xf32>
      %63 = vector.broadcast %62 : vector<1x1xf32> to vector<1x2xf32>
      %64 = arith.subf %60, %63 : vector<1x2xf32>
      %65 = math.exp %64 : vector<1x2xf32>
      %cst_53 = arith.constant dense<0.000000e+00> : vector<1xf32>
      %66 = vector.multi_reduction <add>, %65, %cst_53 [1] : vector<1x2xf32> to vector<1xf32>
      %67 = vector.shape_cast %66 : vector<1xf32> to vector<1x1xf32>
      %68 = math.log %67 : vector<1x1xf32>
      %69 = vector.broadcast %68 : vector<1x1xf32> to vector<1x2xf32>
      %70 = arith.subf %64, %69 : vector<1x2xf32>
      %c0_54 = arith.constant 0 : index
      %c0_55 = arith.constant 0 : index
      %c0_56 = arith.constant 0 : index
      %71 = vector.load %arg17[%c0_54, %c0_55, %c0_56] : memref<1x1x2xf32, #tpu.memory_space<vmem>>, vector<1x1x2xf32>
      %72 = vector.shape_cast %71 : vector<1x1x2xf32> to vector<1x2xf32>
      %73 = vector.shape_cast %70 : vector<1x2xf32> to vector<1x1x2xf32>
      tpu.vector_store %arg17[%c0_54, %c0_55, %c0_56], %73 {strides = array<i32>} : memref<1x1x2xf32, #tpu.memory_space<vmem>>, vector<1x1x2xf32>,
    } else {
    }
    return
  }
  func.func @transform_0(%arg0: i32, %arg1: i32) -> (i32, i32, i32) {
    %c0_i32 = arith.constant 0 : i32
    %c0_i32_0 = arith.constant 0 : i32
    return %arg0, %arg1, %c0_i32 : i32, i32, i32
  }
  func.func @transform_1(%arg0: i32, %arg1: i32) -> (i32, i32, i32) {
    %c0_i32 = arith.constant 0 : i32
    %c0_i32_0 = arith.constant 0 : i32
    %c0_i32_1 = arith.constant 0 : i32
    return %arg0, %c0_i32, %c0_i32_0 : i32, i32, i32
  }
  func.func @transform_2(%arg0: i32, %arg1: i32) -> (i32, i32) {
    %c0_i32 = arith.constant 0 : i32
    %c0_i32_0 = arith.constant 0 : i32
    %c0_i32_1 = arith.constant 0 : i32
    return %c0_i32, %c0_i32_0 : i32, i32
  }
  func.func @transform_3(%arg0: i32, %arg1: i32) -> (i32, i32) {
    %c0_i32 = arith.constant 0 : i32
    %c0_i32_0 = arith.constant 0 : i32
    %c0_i32_1 = arith.constant 0 : i32
    return %c0_i32, %c0_i32_0 : i32, i32
  }
  func.func @transform_4(%arg0: i32, %arg1: i32) -> (i32, i32) {
    %c0_i32 = arith.constant 0 : i32
    %c0_i32_0 = arith.constant 0 : i32
    %c0_i32_1 = arith.constant 0 : i32
    return %c0_i32, %c0_i32_0 : i32, i32
  }
  func.func @transform_5(%arg0: i32, %arg1: i32) -> (i32, i32) {
    %c0_i32 = arith.constant 0 : i32
    %c0_i32_0 = arith.constant 0 : i32
    %c0_i32_1 = arith.constant 0 : i32
    return %c0_i32, %c0_i32_0 : i32, i32
  }
  func.func @transform_6(%arg0: i32, %arg1: i32) -> (i32, i32) {
    %c0_i32 = arith.constant 0 : i32
    %c0_i32_0 = arith.constant 0 : i32
    %c0_i32_1 = arith.constant 0 : i32
    return %c0_i32, %c0_i32_0 : i32, i32
  }
  func.func @transform_7(%arg0: i32, %arg1: i32) -> (i32, i32) {
    %c0_i32 = arith.constant 0 : i32
    %c0_i32_0 = arith.constant 0 : i32
    %c0_i32_1 = arith.constant 0 : i32
    return %c0_i32, %c0_i32_0 : i32, i32
  }
  func.func @transform_8(%arg0: i32, %arg1: i32) -> (i32, i32) {
    %c0_i32 = arith.constant 0 : i32
    %c0_i32_0 = arith.constant 0 : i32
    %c0_i32_1 = arith.constant 0 : i32
    return %c0_i32, %c0_i32_0 : i32, i32
  }
  func.func @transform_9(%arg0: i32, %arg1: i32) -> (i32, i32) {
    %c0_i32 = arith.constant 0 : i32
    %c0_i32_0 = arith.constant 0 : i32
    %c0_i32_1 = arith.constant 0 : i32
    return %c0_i32, %c0_i32_0 : i32, i32
  }
  func.func @transform_10(%arg0: i32, %arg1: i32) -> (i32, i32) {
    %c0_i32 = arith.constant 0 : i32
    %c0_i32_0 = arith.constant 0 : i32
    %c0_i32_1 = arith.constant 0 : i32
    return %c0_i32, %c0_i32_0 : i32, i32
  }
  func.func @transform_11(%arg0: i32, %arg1: i32) -> (i32, i32) {
    %c0_i32 = arith.constant 0 : i32
    %c0_i32_0 = arith.constant 0 : i32
    %c0_i32_1 = arith.constant 0 : i32
    return %c0_i32, %c0_i32_0 : i32, i32
  }
  func.func @transform_12(%arg0: i32, %arg1: i32) -> (i32, i32) {
    %c0_i32 = arith.constant 0 : i32
    %c0_i32_0 = arith.constant 0 : i32
    %c0_i32_1 = arith.constant 0 : i32
    return %c0_i32, %c0_i32_0 : i32, i32
  }
  func.func @transform_13(%arg0: i32, %arg1: i32) -> (i32, i32) {
    %c0_i32 = arith.constant 0 : i32
    %c0_i32_0 = arith.constant 0 : i32
    %c0_i32_1 = arith.constant 0 : i32
    return %c0_i32, %c0_i32_0 : i32, i32
  }
  func.func @transform_14(%arg0: i32, %arg1: i32) -> (i32, i32) {
    %c0_i32 = arith.constant 0 : i32
    %c0_i32_0 = arith.constant 0 : i32
    %c0_i32_1 = arith.constant 0 : i32
    return %c0_i32, %c0_i32_0 : i32, i32
  }
  func.func @transform_15(%arg0: i32, %arg1: i32) -> (i32, i32, i32) {
    %c0_i32 = arith.constant 0 : i32
    %c0_i32_0 = arith.constant 0 : i32
    %c0_i32_1 = arith.constant 0 : i32
    return %arg0, %c0_i32, %c0_i32_0 : i32, i32, i32
  }
}

module attributes {stable_mosaic.version = 11 : i64} {
  func.func @_stn_kernel(%arg0: i32, %arg1: i32, %arg2: memref<1x16x8xbf16, #tpu.memory_space<vmem>>, %arg3: memref<8x64xbf16, #tpu.memory_space<vmem>>, %arg4: memref<1x64xf32, #tpu.memory_space<vmem>>, %arg5: memref<64x128xbf16, #tpu.memory_space<vmem>>, %arg6: memref<1x128xf32, #tpu.memory_space<vmem>>, %arg7: memref<128x1024xbf16, #tpu.memory_space<vmem>>, %arg8: memref<1x1024xf32, #tpu.memory_space<vmem>>, %arg9: memref<1024x512xbf16, #tpu.memory_space<vmem>>, %arg10: memref<1x512xf32, #tpu.memory_space<vmem>>, %arg11: memref<512x256xbf16, #tpu.memory_space<vmem>>, %arg12: memref<1x256xf32, #tpu.memory_space<vmem>>, %arg13: memref<256x9xbf16, #tpu.memory_space<vmem>>, %arg14: memref<1x9xf32, #tpu.memory_space<vmem>>, %arg15: memref<1x1x9xf32, #tpu.memory_space<vmem>>, %arg16: memref<1x1024xf32, #tpu.memory_space<vmem>>) attributes {dimension_semantics = [#tpu.dimension_semantics<parallel>, #tpu.dimension_semantics<arbitrary>], iteration_bounds = array<i64: 2, 1>, scalar_prefetch = 0 : i64, scratch_operands = 1 : i64, tpu.core_type = #tpu.core_type<tc>, window_params = [{transform_indices = @transform_0, window_bounds = array<i64: 1, 16, 8>}, {pipeline_mode = #tpu.pipeline_mode<synchronous>, transform_indices = @transform_1, window_bounds = array<i64: 8, 64>}, {pipeline_mode = #tpu.pipeline_mode<synchronous>, transform_indices = @transform_2, window_bounds = array<i64: 1, 64>}, {pipeline_mode = #tpu.pipeline_mode<synchronous>, transform_indices = @transform_3, window_bounds = array<i64: 64, 128>}, {pipeline_mode = #tpu.pipeline_mode<synchronous>, transform_indices = @transform_4, window_bounds = array<i64: 1, 128>}, {pipeline_mode = #tpu.pipeline_mode<synchronous>, transform_indices = @transform_5, window_bounds = array<i64: 128, 1024>}, {pipeline_mode = #tpu.pipeline_mode<synchronous>, transform_indices = @transform_6, window_bounds = array<i64: 1, 1024>}, {pipeline_mode = #tpu.pipeline_mode<synchronous>, transform_indices = @transform_7, window_bounds = array<i64: 1024, 512>}, {pipeline_mode = #tpu.pipeline_mode<synchronous>, transform_indices = @transform_8, window_bounds = array<i64: 1, 512>}, {pipeline_mode = #tpu.pipeline_mode<synchronous>, transform_indices = @transform_9, window_bounds = array<i64: 512, 256>}, {pipeline_mode = #tpu.pipeline_mode<synchronous>, transform_indices = @transform_10, window_bounds = array<i64: 1, 256>}, {pipeline_mode = #tpu.pipeline_mode<synchronous>, transform_indices = @transform_11, window_bounds = array<i64: 256, 9>}, {pipeline_mode = #tpu.pipeline_mode<synchronous>, transform_indices = @transform_12, window_bounds = array<i64: 1, 9>}, {transform_indices = @transform_13, window_bounds = array<i64: 1, 1, 9>}]} {
    %c0_i32 = arith.constant 0 : i32
    %0 = arith.cmpi eq, %arg1, %c0_i32 : i32
    %1 = arith.extui %0 : i1 to i32
    %c0_i32_0 = arith.constant 0 : i32
    %2 = arith.cmpi ne, %1, %c0_i32_0 : i32
    scf.if %2 {
      %cst_24 = arith.constant 0xFF800000 : f32
      %31 = vector.broadcast %cst_24 : f32 to vector<1x1024xf32>
      %c0_25 = arith.constant 0 : index
      %c0_26 = arith.constant 0 : index
      %32 = vector.load %arg16[%c0_25, %c0_26] : memref<1x1024xf32, #tpu.memory_space<vmem>>, vector<1x1024xf32>
      tpu.vector_store %arg16[%c0_25, %c0_26], %31 {strides = array<i32>} : memref<1x1024xf32, #tpu.memory_space<vmem>>, vector<1x1024xf32>,
    } else {
    }
    %c0 = arith.constant 0 : index
    %c0_1 = arith.constant 0 : index
    %c0_2 = arith.constant 0 : index
    %3 = vector.load %arg2[%c0, %c0_1, %c0_2] : memref<1x16x8xbf16, #tpu.memory_space<vmem>>, vector<1x16x8xbf16>
    %4 = vector.shape_cast %3 : vector<1x16x8xbf16> to vector<16x8xbf16>
    %c0_3 = arith.constant 0 : index
    %c0_4 = arith.constant 0 : index
    %5 = vector.load %arg3[%c0_3, %c0_4] : memref<8x64xbf16, #tpu.memory_space<vmem>>, vector<8x64xbf16>
    %cst = arith.constant dense<0.000000e+00> : vector<16x64xf32>
    %6 = tpu.matmul %4, %5, %cst {dimension_numbers = #tpu.dot_dimension_numbers<[1], [0], [0], [1], [0, 0, 1, 1], [], []>} : vector<16x8xbf16>, vector<8x64xbf16>, vector<16x64xf32> -> vector<16x64xf32>
    %c0_5 = arith.constant 0 : index
    %c0_6 = arith.constant 0 : index
    %7 = vector.load %arg4[%c0_5, %c0_6] : memref<1x64xf32, #tpu.memory_space<vmem>>, vector<1x64xf32>
    %8 = vector.broadcast %7 : vector<1x64xf32> to vector<16x64xf32>
    %9 = arith.addf %6, %8 : vector<16x64xf32>
    %cst_7 = arith.constant 0.000000e+00 : f32
    %10 = vector.broadcast %cst_7 : f32 to vector<16x64xf32>
    %11 = arith.maximumf %9, %10 : vector<16x64xf32>
    %12 = arith.truncf %11 : vector<16x64xf32> to vector<16x64xbf16>
    %c0_8 = arith.constant 0 : index
    %c0_9 = arith.constant 0 : index
    %13 = vector.load %arg5[%c0_8, %c0_9] : memref<64x128xbf16, #tpu.memory_space<vmem>>, vector<64x128xbf16>
    %cst_10 = arith.constant dense<0.000000e+00> : vector<16x128xf32>
    %14 = tpu.matmul %12, %13, %cst_10 {dimension_numbers = #tpu.dot_dimension_numbers<[1], [0], [0], [1], [0, 0, 1, 1], [], []>} : vector<16x64xbf16>, vector<64x128xbf16>, vector<16x128xf32> -> vector<16x128xf32>
    %c0_11 = arith.constant 0 : index
    %c0_12 = arith.constant 0 : index
    %15 = vector.load %arg6[%c0_11, %c0_12] : memref<1x128xf32, #tpu.memory_space<vmem>>, vector<1x128xf32>
    %16 = vector.broadcast %15 : vector<1x128xf32> to vector<16x128xf32>
    %17 = arith.addf %14, %16 : vector<16x128xf32>
    %cst_13 = arith.constant 0.000000e+00 : f32
    %18 = vector.broadcast %cst_13 : f32 to vector<16x128xf32>
    %19 = arith.maximumf %17, %18 : vector<16x128xf32>
    %20 = arith.truncf %19 : vector<16x128xf32> to vector<16x128xbf16>
    %c0_14 = arith.constant 0 : index
    %c0_15 = arith.constant 0 : index
    %21 = vector.load %arg7[%c0_14, %c0_15] : memref<128x1024xbf16, #tpu.memory_space<vmem>>, vector<128x1024xbf16>
    %cst_16 = arith.constant dense<0.000000e+00> : vector<16x1024xf32>
    %22 = tpu.matmul %20, %21, %cst_16 {dimension_numbers = #tpu.dot_dimension_numbers<[1], [0], [0], [1], [0, 0, 1, 1], [], []>} : vector<16x128xbf16>, vector<128x1024xbf16>, vector<16x1024xf32> -> vector<16x1024xf32>
    %c0_17 = arith.constant 0 : index
    %c0_18 = arith.constant 0 : index
    %23 = vector.load %arg16[%c0_17, %c0_18] : memref<1x1024xf32, #tpu.memory_space<vmem>>, vector<1x1024xf32>
    %cst_19 = arith.constant dense<0xFF800000> : vector<1024xf32>
    %24 = vector.multi_reduction <maximumf>, %22, %cst_19 [0] : vector<16x1024xf32> to vector<1024xf32>
    %25 = vector.shape_cast %24 : vector<1024xf32> to vector<1x1024xf32>
    %26 = arith.maximumf %23, %25 : vector<1x1024xf32>
    %c0_20 = arith.constant 0 : index
    %c0_21 = arith.constant 0 : index
    %27 = vector.load %arg16[%c0_20, %c0_21] : memref<1x1024xf32, #tpu.memory_space<vmem>>, vector<1x1024xf32>
    tpu.vector_store %arg16[%c0_20, %c0_21], %26 {strides = array<i32>} : memref<1x1024xf32, #tpu.memory_space<vmem>>, vector<1x1024xf32>,
    %c0_i32_22 = arith.constant 0 : i32
    %28 = arith.cmpi eq, %arg1, %c0_i32_22 : i32
    %29 = arith.extui %28 : i1 to i32
    %c0_i32_23 = arith.constant 0 : i32
    %30 = arith.cmpi ne, %29, %c0_i32_23 : i32
    scf.if %30 {
      %c0_24 = arith.constant 0 : index
      %c0_25 = arith.constant 0 : index
      %31 = vector.load %arg16[%c0_24, %c0_25] : memref<1x1024xf32, #tpu.memory_space<vmem>>, vector<1x1024xf32>
      %c0_26 = arith.constant 0 : index
      %c0_27 = arith.constant 0 : index
      %32 = vector.load %arg8[%c0_26, %c0_27] : memref<1x1024xf32, #tpu.memory_space<vmem>>, vector<1x1024xf32>
      %33 = arith.addf %31, %32 : vector<1x1024xf32>
      %cst_28 = arith.constant 0.000000e+00 : f32
      %34 = vector.broadcast %cst_28 : f32 to vector<1x1024xf32>
      %35 = arith.maximumf %33, %34 : vector<1x1024xf32>
      %36 = arith.truncf %35 : vector<1x1024xf32> to vector<1x1024xbf16>
      %c0_29 = arith.constant 0 : index
      %c0_30 = arith.constant 0 : index
      %37 = vector.load %arg9[%c0_29, %c0_30] : memref<1024x512xbf16, #tpu.memory_space<vmem>>, vector<1024x512xbf16>
      %cst_31 = arith.constant dense<0.000000e+00> : vector<1x512xf32>
      %38 = tpu.matmul %36, %37, %cst_31 {dimension_numbers = #tpu.dot_dimension_numbers<[1], [0], [0], [1], [0, 0, 1, 1], [], []>} : vector<1x1024xbf16>, vector<1024x512xbf16>, vector<1x512xf32> -> vector<1x512xf32>
      %c0_32 = arith.constant 0 : index
      %c0_33 = arith.constant 0 : index
      %39 = vector.load %arg10[%c0_32, %c0_33] : memref<1x512xf32, #tpu.memory_space<vmem>>, vector<1x512xf32>
      %40 = arith.addf %38, %39 : vector<1x512xf32>
      %cst_34 = arith.constant 0.000000e+00 : f32
      %41 = vector.broadcast %cst_34 : f32 to vector<1x512xf32>
      %42 = arith.maximumf %40, %41 : vector<1x512xf32>
      %43 = arith.truncf %42 : vector<1x512xf32> to vector<1x512xbf16>
      %c0_35 = arith.constant 0 : index
      %c0_36 = arith.constant 0 : index
      %44 = vector.load %arg11[%c0_35, %c0_36] : memref<512x256xbf16, #tpu.memory_space<vmem>>, vector<512x256xbf16>
      %cst_37 = arith.constant dense<0.000000e+00> : vector<1x256xf32>
      %45 = tpu.matmul %43, %44, %cst_37 {dimension_numbers = #tpu.dot_dimension_numbers<[1], [0], [0], [1], [0, 0, 1, 1], [], []>} : vector<1x512xbf16>, vector<512x256xbf16>, vector<1x256xf32> -> vector<1x256xf32>
      %c0_38 = arith.constant 0 : index
      %c0_39 = arith.constant 0 : index
      %46 = vector.load %arg12[%c0_38, %c0_39] : memref<1x256xf32, #tpu.memory_space<vmem>>, vector<1x256xf32>
      %47 = arith.addf %45, %46 : vector<1x256xf32>
      %cst_40 = arith.constant 0.000000e+00 : f32
      %48 = vector.broadcast %cst_40 : f32 to vector<1x256xf32>
      %49 = arith.maximumf %47, %48 : vector<1x256xf32>
      %50 = arith.truncf %49 : vector<1x256xf32> to vector<1x256xbf16>
      %c0_41 = arith.constant 0 : index
      %c0_42 = arith.constant 0 : index
      %51 = vector.load %arg13[%c0_41, %c0_42] : memref<256x9xbf16, #tpu.memory_space<vmem>>, vector<256x9xbf16>
      %cst_43 = arith.constant dense<0.000000e+00> : vector<1x9xf32>
      %52 = tpu.matmul %50, %51, %cst_43 {dimension_numbers = #tpu.dot_dimension_numbers<[1], [0], [0], [1], [0, 0, 1, 1], [], []>} : vector<1x256xbf16>, vector<256x9xbf16>, vector<1x9xf32> -> vector<1x9xf32>
      %c0_44 = arith.constant 0 : index
      %c0_45 = arith.constant 0 : index
      %53 = vector.load %arg14[%c0_44, %c0_45] : memref<1x9xf32, #tpu.memory_space<vmem>>, vector<1x9xf32>
      %54 = arith.addf %52, %53 : vector<1x9xf32>
      %c0_46 = arith.constant 0 : index
      %c0_47 = arith.constant 0 : index
      %c0_48 = arith.constant 0 : index
      %55 = vector.load %arg15[%c0_46, %c0_47, %c0_48] : memref<1x1x9xf32, #tpu.memory_space<vmem>>, vector<1x1x9xf32>
      %56 = vector.shape_cast %55 : vector<1x1x9xf32> to vector<1x9xf32>
      %57 = vector.shape_cast %54 : vector<1x9xf32> to vector<1x1x9xf32>
      tpu.vector_store %arg15[%c0_46, %c0_47, %c0_48], %57 {strides = array<i32>} : memref<1x1x9xf32, #tpu.memory_space<vmem>>, vector<1x1x9xf32>,
    } else {
    }
    return
  }
  func.func @transform_0(%arg0: i32, %arg1: i32) -> (i32, i32, i32) {
    %c0_i32 = arith.constant 0 : i32
    %c0_i32_0 = arith.constant 0 : i32
    return %arg0, %arg1, %c0_i32 : i32, i32, i32
  }
  func.func @transform_1(%arg0: i32, %arg1: i32) -> (i32, i32) {
    %c0_i32 = arith.constant 0 : i32
    %c0_i32_0 = arith.constant 0 : i32
    %c0_i32_1 = arith.constant 0 : i32
    return %c0_i32, %c0_i32_0 : i32, i32
  }
  func.func @transform_2(%arg0: i32, %arg1: i32) -> (i32, i32) {
    %c0_i32 = arith.constant 0 : i32
    %c0_i32_0 = arith.constant 0 : i32
    %c0_i32_1 = arith.constant 0 : i32
    return %c0_i32, %c0_i32_0 : i32, i32
  }
  func.func @transform_3(%arg0: i32, %arg1: i32) -> (i32, i32) {
    %c0_i32 = arith.constant 0 : i32
    %c0_i32_0 = arith.constant 0 : i32
    %c0_i32_1 = arith.constant 0 : i32
    return %c0_i32, %c0_i32_0 : i32, i32
  }
  func.func @transform_4(%arg0: i32, %arg1: i32) -> (i32, i32) {
    %c0_i32 = arith.constant 0 : i32
    %c0_i32_0 = arith.constant 0 : i32
    %c0_i32_1 = arith.constant 0 : i32
    return %c0_i32, %c0_i32_0 : i32, i32
  }
  func.func @transform_5(%arg0: i32, %arg1: i32) -> (i32, i32) {
    %c0_i32 = arith.constant 0 : i32
    %c0_i32_0 = arith.constant 0 : i32
    %c0_i32_1 = arith.constant 0 : i32
    return %c0_i32, %c0_i32_0 : i32, i32
  }
  func.func @transform_6(%arg0: i32, %arg1: i32) -> (i32, i32) {
    %c0_i32 = arith.constant 0 : i32
    %c0_i32_0 = arith.constant 0 : i32
    %c0_i32_1 = arith.constant 0 : i32
    return %c0_i32, %c0_i32_0 : i32, i32
  }
  func.func @transform_7(%arg0: i32, %arg1: i32) -> (i32, i32) {
    %c0_i32 = arith.constant 0 : i32
    %c0_i32_0 = arith.constant 0 : i32
    %c0_i32_1 = arith.constant 0 : i32
    return %c0_i32, %c0_i32_0 : i32, i32
  }
  func.func @transform_8(%arg0: i32, %arg1: i32) -> (i32, i32) {
    %c0_i32 = arith.constant 0 : i32
    %c0_i32_0 = arith.constant 0 : i32
    %c0_i32_1 = arith.constant 0 : i32
    return %c0_i32, %c0_i32_0 : i32, i32
  }
  func.func @transform_9(%arg0: i32, %arg1: i32) -> (i32, i32) {
    %c0_i32 = arith.constant 0 : i32
    %c0_i32_0 = arith.constant 0 : i32
    %c0_i32_1 = arith.constant 0 : i32
    return %c0_i32, %c0_i32_0 : i32, i32
  }
  func.func @transform_10(%arg0: i32, %arg1: i32) -> (i32, i32) {
    %c0_i32 = arith.constant 0 : i32
    %c0_i32_0 = arith.constant 0 : i32
    %c0_i32_1 = arith.constant 0 : i32
    return %c0_i32, %c0_i32_0 : i32, i32
  }
  func.func @transform_11(%arg0: i32, %arg1: i32) -> (i32, i32) {
    %c0_i32 = arith.constant 0 : i32
    %c0_i32_0 = arith.constant 0 : i32
    %c0_i32_1 = arith.constant 0 : i32
    return %c0_i32, %c0_i32_0 : i32, i32
  }
  func.func @transform_12(%arg0: i32, %arg1: i32) -> (i32, i32) {
    %c0_i32 = arith.constant 0 : i32
    %c0_i32_0 = arith.constant 0 : i32
    %c0_i32_1 = arith.constant 0 : i32
    return %c0_i32, %c0_i32_0 : i32, i32
  }
  func.func @transform_13(%arg0: i32, %arg1: i32) -> (i32, i32, i32) {
    %c0_i32 = arith.constant 0 : i32
    %c0_i32_0 = arith.constant 0 : i32
    %c0_i32_1 = arith.constant 0 : i32
    return %arg0, %c0_i32, %c0_i32_0 : i32, i32, i32
  }
}

</mosaic_0001>

<llo_original>
// kernel: pointnet_cls_forward.3
$region0: #{pointnet_cls_forward.3}
  #allocation0 [shape = 'u32[]', space=smem, size = 0x4, offset = 0x4, fixed_abs, tag = 'smem constant byte address 0x4 - core index']
  #allocation1 [shape = 'u32[144,128]{1,0:T(1,128)}', space=vmem, size = 0x12000, scoped, tag = 'internal scratch']
  #allocation2 [shape = 'f32[1,1024]{1,0:T(1,128)}', space=vmem, size = 0x1000, scoped, tag = 'scratch operand']
  %s0 = inlined_call_operand.vmem [shape: bf16[2,16,8], index: 0, kind: input, shape index: {}]
  %s1 = inlined_call_operand.vmem [shape: bf16[2,8,64], index: 1, kind: input, shape index: {}]
  %s2 = inlined_call_operand.vmem [shape: f32[1,64], index: 2, kind: input, shape index: {}]
  %s3 = inlined_call_operand.vmem [shape: bf16[64,128], index: 3, kind: input, shape index: {}]
  %s4 = inlined_call_operand.vmem [shape: f32[1,128], index: 4, kind: input, shape index: {}]
  %s5 = inlined_call_operand.vmem [shape: bf16[128,1024], index: 5, kind: input, shape index: {}]
  %s6 = inlined_call_operand.vmem [shape: f32[1,1024], index: 6, kind: input, shape index: {}]
  %s7 = inlined_call_operand.vmem [shape: bf16[1024,512], index: 7, kind: input, shape index: {}]
  %s8 = inlined_call_operand.vmem [shape: f32[1,512], index: 8, kind: input, shape index: {}]
  %s9 = inlined_call_operand.vmem [shape: bf16[512,256], index: 9, kind: input, shape index: {}]
  %s10 = inlined_call_operand.vmem [shape: f32[1,256], index: 10, kind: input, shape index: {}]
  %s11 = inlined_call_operand.vmem [shape: bf16[256,128], index: 11, kind: input, shape index: {}]
  %s12 = inlined_call_operand.vmem [shape: f32[1,128], index: 12, kind: input, shape index: {}]
  %s13 = inlined_call_operand.vmem [shape: bf16[128,2], index: 13, kind: input, shape index: {}]
  %s14 = inlined_call_operand.vmem [shape: f32[1,2], index: 14, kind: input, shape index: {}]
  %s15 = inlined_call_operand.hbm [shape: f32[2,1,2], index: 15, kind: output, shape index: {}]
  %s16 = sld [smem:[#allocation0]]
  $region101: #{pointnet_cls_forward.3} parent=0
    _
  %s18 = ssub.s32 1, %s16
  %s19 = scalar_select 0, %s18, %s16
  $region1: #{pointnet_cls_forward.3} parent=0
    #allocation3 [shape = 'u8[1024]{0}', space=vmem, size = 0x400, scoped, tag = 'output window, operand 0']
    #allocation4 [shape = 's32[2]{0}', space=sflag, size = 0x8, scoped, tag = 'scoped memory for pointnet_cls_forward.3']
    %20 = vsyncpa [#allocation4], 0
    %s21 = scalar_lea.sflag [#allocation4], 1
    %22 = vsyncpa %s21, 0
    loop: start=0, step=1, limit=4
    $region2: #{pointnet_cls_forward.3} parent=1 // loop_pre_header
      _
    $region3: #{pointnet_cls_forward.3} parent=1 // loop_header
      %s24 = sphi 0, %s28
      %p25 = scmp.ge.s32.totalorder %s24, 4
      %s31 = sphi 0, %s43
      %s32 = sphi 0, %s39
      %s33 = sphi 0, %s31
      %s34 = sphi 0, %s32
      %s35 = sphi 0, %s33
      %s36 = sphi 0, %s34
      %s48 = sphi 0, %s50
      %s51 = sphi 0, %s48
      %s52 = sphi 0, %s51
      %s68 = sphi 0, %s52
      %s74 = sphi 0, %s76
      %s77 = sphi 0, %s74
      %s78 = sphi 0, %s77
      %s94 = sphi 0, %s78
      %s98 = sphi 0, %s98
      %s100 = sphi 0, %s98
      %s101 = sphi 0, %s100
      %s115 = sphi 0, %s101
      %s119 = sphi 0, %s119
      %s121 = sphi 0, %s119
      %s122 = sphi 0, %s121
      %s136 = sphi 0, %s122
      %s140 = sphi 0, %s140
      %s142 = sphi 0, %s140
      %s143 = sphi 0, %s142
      %s157 = sphi 0, %s143
      %s161 = sphi 0, %s161
      %s163 = sphi 0, %s161
      %s164 = sphi 0, %s163
      %s178 = sphi 0, %s164
      %s182 = sphi 0, %s182
      %s184 = sphi 0, %s182
      %s185 = sphi 0, %s184
      %s199 = sphi 0, %s185
      %s203 = sphi 0, %s203
      %s205 = sphi 0, %s203
      %s206 = sphi 0, %s205
      %s220 = sphi 0, %s206
      %s224 = sphi 0, %s224
      %s226 = sphi 0, %s224
      %s227 = sphi 0, %s226
      %s241 = sphi 0, %s227
      %s245 = sphi 0, %s245
      %s247 = sphi 0, %s245
      %s248 = sphi 0, %s247
      %s262 = sphi 0, %s248
      %s266 = sphi 0, %s266
      %s268 = sphi 0, %s266
      %s269 = sphi 0, %s268
      %s283 = sphi 0, %s269
      %s287 = sphi 0, %s287
      %s289 = sphi 0, %s287
      %s290 = sphi 0, %s289
      %s304 = sphi 0, %s290
      %s308 = sphi 0, %s308
      %s310 = sphi 0, %s308
      %s311 = sphi 0, %s310
      %s325 = sphi 0, %s311
      %s329 = sphi 0, %s329
      %s331 = sphi 0, %s329
      %s332 = sphi 0, %s331
      %s346 = sphi 0, %s332
      %s350 = sphi 0, %s350
      %s352 = sphi 0, %s350
      %s353 = sphi 0, %s352
      %s367 = sphi 0, %s353
      %s373 = sphi 0, %s375
      %s376 = sphi 0, %s373
      %s377 = sphi 0, %s376
      %s393 = sphi 0, %s377
    $region4: #{pointnet_cls_forward.3} parent=1 // loop_header_branch
      %27 = sbr.rel (%p25) target = $region8
    $region5: #{pointnet_cls_forward.3} parent=1 // loop_body
      %s29 = ssub.s32 %s24, 1
      %s30 = ssub.s32 %s24, 2
      %s37 = sadd.s32 1, %s32
      %p38 = scmp.ge.s32.totalorder %s37, 1
      %s39 = scalar_select %p38, 0, %s37
      %s40 = sadd.s32 1, %s31
      %s41 = scalar_select %p38, %s40, %s31
      %p42 = scmp.ge.s32.totalorder %s41, 2
      %s43 = scalar_select %p42, 0, %s41
      %s44 = ssub.s32 %s31, %s43
      %s45 = ssub.s32 %s32, %s39
      %s46 = sor.u32 %s44, %s45
      %p47 = scmp.eq.s32.totalorder %s46, 0
      %s49 = sadd.s32 %s48, 1
      %s50 = scalar_select %p47, %s48, %s49
      %p53 = pneg %p47
      %p54 = scmp.eq.s32.totalorder %s24, 1
      %p55 = por %p53, %p54
      %p56 = scmp.ne.s32.totalorder %s48, %s51
      %p57 = scmp.eq.s32.totalorder %s24, 0
      %p58 = por %p56, %p57
      %p59 = scmp.ne.s32.totalorder %s48, %s51
      %p60 = scmp.eq.s32.totalorder %s29, 1
      %p61 = por %p59, %p60
      %p62 = scmp.ne.s32.totalorder %s51, %s52
      %p63 = scmp.eq.s32.totalorder %s29, 0
      %p64 = por %p62, %p63
      %p65 = scmp.ne.s32.totalorder %s51, %s52
      %p66 = scmp.eq.s32.totalorder %s30, 1
      %p67 = por %p65, %p66
      %p69 = scmp.ne.s32.totalorder %s52, %s68
      %p70 = scmp.eq.s32.totalorder %s30, 0
      %p71 = por %p69, %p70
      %s72 = ssub.s32 %s31, %s43
      %p73 = scmp.eq.s32.totalorder %s72, 0
      %s75 = sadd.s32 %s74, 1
      %s76 = scalar_select %p73, %s74, %s75
      %p79 = pneg %p73
      %p80 = scmp.eq.s32.totalorder %s24, 1
      %p81 = por %p79, %p80
      %p82 = scmp.ne.s32.totalorder %s74, %s77
      %p83 = scmp.eq.s32.totalorder %s24, 0
      %p84 = por %p82, %p83
      %p85 = scmp.ne.s32.totalorder %s74, %s77
      %p86 = scmp.eq.s32.totalorder %s29, 1
      %p87 = por %p85, %p86
      %p88 = scmp.ne.s32.totalorder %s77, %s78
      %p89 = scmp.eq.s32.totalorder %s29, 0
      %p90 = por %p88, %p89
      %p91 = scmp.ne.s32.totalorder %s77, %s78
      %p92 = scmp.eq.s32.totalorder %s30, 1
      %p93 = por %p91, %p92
      %p95 = scmp.ne.s32.totalorder %s78, %s94
      %p96 = scmp.eq.s32.totalorder %s30, 0
      %p97 = por %p95, %p96
      %s99 = sadd.s32 %s98, 1
      %p102 = scmp.eq.s32.totalorder %s24, 1
      %p103 = scmp.ne.s32.totalorder %s98, %s100
      %p104 = scmp.eq.s32.totalorder %s24, 0
      %p105 = por %p103, %p104
      %p106 = scmp.ne.s32.totalorder %s98, %s100
      %p107 = scmp.eq.s32.totalorder %s29, 1
      %p108 = por %p106, %p107
      %p109 = scmp.ne.s32.totalorder %s100, %s101
      %p110 = scmp.eq.s32.totalorder %s29, 0
      %p111 = por %p109, %p110
      %p112 = scmp.ne.s32.totalorder %s100, %s101
      %p113 = scmp.eq.s32.totalorder %s30, 1
      %p114 = por %p112, %p113
      %p116 = scmp.ne.s32.totalorder %s101, %s115
      %p117 = scmp.eq.s32.totalorder %s30, 0
      %p118 = por %p116, %p117
      %s120 = sadd.s32 %s119, 1
      %p123 = scmp.eq.s32.totalorder %s24, 1
      %p124 = scmp.ne.s32.totalorder %s119, %s121
      %p125 = scmp.eq.s32.totalorder %s24, 0
      %p126 = por %p124, %p125
      %p127 = scmp.ne.s32.totalorder %s119, %s121
      %p128 = scmp.eq.s32.totalorder %s29, 1
      %p129 = por %p127, %p128
      %p130 = scmp.ne.s32.totalorder %s121, %s122
      %p131 = scmp.eq.s32.totalorder %s29, 0
      %p132 = por %p130, %p131
      %p133 = scmp.ne.s32.totalorder %s121, %s122
      %p134 = scmp.eq.s32.totalorder %s30, 1
      %p135 = por %p133, %p134
      %p137 = scmp.ne.s32.totalorder %s122, %s136
      %p138 = scmp.eq.s32.totalorder %s30, 0
      %p139 = por %p137, %p138
      %s141 = sadd.s32 %s140, 1
      %p144 = scmp.eq.s32.totalorder %s24, 1
      %p145 = scmp.ne.s32.totalorder %s140, %s142
      %p146 = scmp.eq.s32.totalorder %s24, 0
      %p147 = por %p145, %p146
      %p148 = scmp.ne.s32.totalorder %s140, %s142
      %p149 = scmp.eq.s32.totalorder %s29, 1
      %p150 = por %p148, %p149
      %p151 = scmp.ne.s32.totalorder %s142, %s143
      %p152 = scmp.eq.s32.totalorder %s29, 0
      %p153 = por %p151, %p152
      %p154 = scmp.ne.s32.totalorder %s142, %s143
      %p155 = scmp.eq.s32.totalorder %s30, 1
      %p156 = por %p154, %p155
      %p158 = scmp.ne.s32.totalorder %s143, %s157
      %p159 = scmp.eq.s32.totalorder %s30, 0
      %p160 = por %p158, %p159
      %s162 = sadd.s32 %s161, 1
      %p165 = scmp.eq.s32.totalorder %s24, 1
      %p166 = scmp.ne.s32.totalorder %s161, %s163
      %p167 = scmp.eq.s32.totalorder %s24, 0
      %p168 = por %p166, %p167
      %p169 = scmp.ne.s32.totalorder %s161, %s163
      %p170 = scmp.eq.s32.totalorder %s29, 1
      %p171 = por %p169, %p170
      %p172 = scmp.ne.s32.totalorder %s163, %s164
      %p173 = scmp.eq.s32.totalorder %s29, 0
      %p174 = por %p172, %p173
      %p175 = scmp.ne.s32.totalorder %s163, %s164
      %p176 = scmp.eq.s32.totalorder %s30, 1
      %p177 = por %p175, %p176
      %p179 = scmp.ne.s32.totalorder %s164, %s178
      %p180 = scmp.eq.s32.totalorder %s30, 0
      %p181 = por %p179, %p180
      %s183 = sadd.s32 %s182, 1
      %p186 = scmp.eq.s32.totalorder %s24, 1
      %p187 = scmp.ne.s32.totalorder %s182, %s184
      %p188 = scmp.eq.s32.totalorder %s24, 0
      %p189 = por %p187, %p188
      %p190 = scmp.ne.s32.totalorder %s182, %s184
      %p191 = scmp.eq.s32.totalorder %s29, 1
      %p192 = por %p190, %p191
      %p193 = scmp.ne.s32.totalorder %s184, %s185
      %p194 = scmp.eq.s32.totalorder %s29, 0
      %p195 = por %p193, %p194
      %p196 = scmp.ne.s32.totalorder %s184, %s185
      %p197 = scmp.eq.s32.totalorder %s30, 1
      %p198 = por %p196, %p197
      %p200 = scmp.ne.s32.totalorder %s185, %s199
      %p201 = scmp.eq.s32.totalorder %s30, 0
      %p202 = por %p200, %p201
      %s204 = sadd.s32 %s203, 1
      %p207 = scmp.eq.s32.totalorder %s24, 1
      %p208 = scmp.ne.s32.totalorder %s203, %s205
      %p209 = scmp.eq.s32.totalorder %s24, 0
      %p210 = por %p208, %p209
      %p211 = scmp.ne.s32.totalorder %s203, %s205
      %p212 = scmp.eq.s32.totalorder %s29, 1
      %p213 = por %p211, %p212
      %p214 = scmp.ne.s32.totalorder %s205, %s206
      %p215 = scmp.eq.s32.totalorder %s29, 0
      %p216 = por %p214, %p215
      %p217 = scmp.ne.s32.totalorder %s205, %s206
      %p218 = scmp.eq.s32.totalorder %s30, 1
      %p219 = por %p217, %p218
      %p221 = scmp.ne.s32.totalorder %s206, %s220
      %p222 = scmp.eq.s32.totalorder %s30, 0
      %p223 = por %p221, %p222
      %s225 = sadd.s32 %s224, 1
      %p228 = scmp.eq.s32.totalorder %s24, 1
      %p229 = scmp.ne.s32.totalorder %s224, %s226
      %p230 = scmp.eq.s32.totalorder %s24, 0
      %p231 = por %p229, %p230
      %p232 = scmp.ne.s32.totalorder %s224, %s226
      %p233 = scmp.eq.s32.totalorder %s29, 1
      %p234 = por %p232, %p233
      %p235 = scmp.ne.s32.totalorder %s226, %s227
      %p236 = scmp.eq.s32.totalorder %s29, 0
      %p237 = por %p235, %p236
      %p238 = scmp.ne.s32.totalorder %s226, %s227
      %p239 = scmp.eq.s32.totalorder %s30, 1
      %p240 = por %p238, %p239
      %p242 = scmp.ne.s32.totalorder %s227, %s241
      %p243 = scmp.eq.s32.totalorder %s30, 0
      %p244 = por %p242, %p243
      %s246 = sadd.s32 %s245, 1
      %p249 = scmp.eq.s32.totalorder %s24, 1
      %p250 = scmp.ne.s32.totalorder %s245, %s247
      %p251 = scmp.eq.s32.totalorder %s24, 0
      %p252 = por %p250, %p251
      %p253 = scmp.ne.s32.totalorder %s245, %s247
      %p254 = scmp.eq.s32.totalorder %s29, 1
      %p255 = por %p253, %p254
      %p256 = scmp.ne.s32.totalorder %s247, %s248
      %p257 = scmp.eq.s32.totalorder %s29, 0
      %p258 = por %p256, %p257
      %p259 = scmp.ne.s32.totalorder %s247, %s248
      %p260 = scmp.eq.s32.totalorder %s30, 1
      %p261 = por %p259, %p260
      %p263 = scmp.ne.s32.totalorder %s248, %s262
      %p264 = scmp.eq.s32.totalorder %s30, 0
      %p265 = por %p263, %p264
      %s267 = sadd.s32 %s266, 1
      %p270 = scmp.eq.s32.totalorder %s24, 1
      %p271 = scmp.ne.s32.totalorder %s266, %s268
      %p272 = scmp.eq.s32.totalorder %s24, 0
      %p273 = por %p271, %p272
      %p274 = scmp.ne.s32.totalorder %s266, %s268
      %p275 = scmp.eq.s32.totalorder %s29, 1
      %p276 = por %p274, %p275
      %p277 = scmp.ne.s32.totalorder %s268, %s269
      %p278 = scmp.eq.s32.totalorder %s29, 0
      %p279 = por %p277, %p278
      %p280 = scmp.ne.s32.totalorder %s268, %s269
      %p281 = scmp.eq.s32.totalorder %s30, 1
      %p282 = por %p280, %p281
      %p284 = scmp.ne.s32.totalorder %s269, %s283
      %p285 = scmp.eq.s32.totalorder %s30, 0
      %p286 = por %p284, %p285
      %s288 = sadd.s32 %s287, 1
      %p291 = scmp.eq.s32.totalorder %s24, 1
      %p292 = scmp.ne.s32.totalorder %s287, %s289
      %p293 = scmp.eq.s32.totalorder %s24, 0
      %p294 = por %p292, %p293
      %p295 = scmp.ne.s32.totalorder %s287, %s289
      %p296 = scmp.eq.s32.totalorder %s29, 1
      %p297 = por %p295, %p296
      %p298 = scmp.ne.s32.totalorder %s289, %s290
      %p299 = scmp.eq.s32.totalorder %s29, 0
      %p300 = por %p298, %p299
      %p301 = scmp.ne.s32.totalorder %s289, %s290
      %p302 = scmp.eq.s32.totalorder %s30, 1
      %p303 = por %p301, %p302
      %p305 = scmp.ne.s32.totalorder %s290, %s304
      %p306 = scmp.eq.s32.totalorder %s30, 0
      %p307 = por %p305, %p306
      %s309 = sadd.s32 %s308, 1
      %p312 = scmp.eq.s32.totalorder %s24, 1
      %p313 = scmp.ne.s32.totalorder %s308, %s310
      %p314 = scmp.eq.s32.totalorder %s24, 0
      %p315 = por %p313, %p314
      %p316 = scmp.ne.s32.totalorder %s308, %s310
      %p317 = scmp.eq.s32.totalorder %s29, 1
      %p318 = por %p316, %p317
      %p319 = scmp.ne.s32.totalorder %s310, %s311
      %p320 = scmp.eq.s32.totalorder %s29, 0
      %p321 = por %p319, %p320
      %p322 = scmp.ne.s32.totalorder %s310, %s311
      %p323 = scmp.eq.s32.totalorder %s30, 1
      %p324 = por %p322, %p323
      %p326 = scmp.ne.s32.totalorder %s311, %s325
      %p327 = scmp.eq.s32.totalorder %s30, 0
      %p328 = por %p326, %p327
      %s330 = sadd.s32 %s329, 1
      %p333 = scmp.eq.s32.totalorder %s24, 1
      %p334 = scmp.ne.s32.totalorder %s329, %s331
      %p335 = scmp.eq.s32.totalorder %s24, 0
      %p336 = por %p334, %p335
      %p337 = scmp.ne.s32.totalorder %s329, %s331
      %p338 = scmp.eq.s32.totalorder %s29, 1
      %p339 = por %p337, %p338
      %p340 = scmp.ne.s32.totalorder %s331, %s332
      %p341 = scmp.eq.s32.totalorder %s29, 0
      %p342 = por %p340, %p341
      %p343 = scmp.ne.s32.totalorder %s331, %s332
      %p344 = scmp.eq.s32.totalorder %s30, 1
      %p345 = por %p343, %p344
      %p347 = scmp.ne.s32.totalorder %s332, %s346
      %p348 = scmp.eq.s32.totalorder %s30, 0
      %p349 = por %p347, %p348
      %s351 = sadd.s32 %s350, 1
      %p354 = scmp.eq.s32.totalorder %s24, 1
      %p355 = scmp.ne.s32.totalorder %s350, %s352
      %p356 = scmp.eq.s32.totalorder %s24, 0
      %p357 = por %p355, %p356
      %p358 = scmp.ne.s32.totalorder %s350, %s352
      %p359 = scmp.eq.s32.totalorder %s29, 1
      %p360 = por %p358, %p359
      %p361 = scmp.ne.s32.totalorder %s352, %s353
      %p362 = scmp.eq.s32.totalorder %s29, 0
      %p363 = por %p361, %p362
      %p364 = scmp.ne.s32.totalorder %s352, %s353
      %p365 = scmp.eq.s32.totalorder %s30, 1
      %p366 = por %p364, %p365
      %p368 = scmp.ne.s32.totalorder %s353, %s367
      %p369 = scmp.eq.s32.totalorder %s30, 0
      %p370 = por %p368, %p369
      %s371 = ssub.s32 %s31, %s43
      %p372 = scmp.eq.s32.totalorder %s371, 0
      %s374 = sadd.s32 %s373, 1
      %s375 = scalar_select %p372, %s373, %s374
      %p378 = pneg %p372
      %p379 = scmp.eq.s32.totalorder %s24, 1
      %p380 = por %p378, %p379
      %p381 = scmp.ne.s32.totalorder %s373, %s376
      %p382 = scmp.eq.s32.totalorder %s24, 0
      %p383 = por %p381, %p382
      %p384 = scmp.ne.s32.totalorder %s373, %s376
      %p385 = scmp.eq.s32.totalorder %s29, 1
      %p386 = por %p384, %p385
      %p387 = scmp.ne.s32.totalorder %s376, %s377
      %p388 = scmp.eq.s32.totalorder %s29, 0
      %p389 = por %p387, %p388
      %p390 = scmp.ne.s32.totalorder %s376, %s377
      %p391 = scmp.eq.s32.totalorder %s30, 1
      %p392 = por %p390, %p391
      %p394 = scmp.ne.s32.totalorder %s377, %s393
      %p395 = scmp.eq.s32.totalorder %s30, 0
      %p396 = por %p394, %p395
      %p397 = scmp.le.s32.totalorder 1, %s24
      %p398 = scmp.lt.s32.totalorder %s24, 3
      %p399 = pnand %p397, %p398
      %p400 = pneg %p399
      // Predicated region
      $region9: #{pointnet_cls_forward.3} parent=5 // pred_check
        _
      $region10: #{pointnet_cls_forward.3} parent=5 // pred_check_branch
        %402 = sbr.rel (%p399) target = $region12
      $region11: #{pointnet_cls_forward.3} parent=5 // pred_region
        %s403 = ssub.s32 %s24, 1
        // Predicated region
        $region13: #{pointnet_cls_forward.3} parent=11 // pred_check
          %p404 = pneg %p111
        $region14: #{pointnet_cls_forward.3} parent=11 // pred_check_branch
          %406 = sbr.rel (%p404) target = $region16
        $region15: #{pointnet_cls_forward.3} parent=11 // pred_region
          _
        $region16: #{pointnet_cls_forward.3} parent=11 // pred_fallthru
          _
        // Predicated region
        $region17: #{pointnet_cls_forward.3} parent=11 // pred_check
          %p407 = pneg %p132
        $region18: #{pointnet_cls_forward.3} parent=11 // pred_check_branch
          %409 = sbr.rel (%p407) target = $region20
        $region19: #{pointnet_cls_forward.3} parent=11 // pred_region
          _
        $region20: #{pointnet_cls_forward.3} parent=11 // pred_fallthru
          _
        // Predicated region
        $region21: #{pointnet_cls_forward.3} parent=11 // pred_check
          %p410 = pneg %p153
        $region22: #{pointnet_cls_forward.3} parent=11 // pred_check_branch
          %412 = sbr.rel (%p410) target = $region24
        $region23: #{pointnet_cls_forward.3} parent=11 // pred_region
          _
        $region24: #{pointnet_cls_forward.3} parent=11 // pred_fallthru
          _
        // Predicated region
        $region25: #{pointnet_cls_forward.3} parent=11 // pred_check
          %p413 = pneg %p174
        $region26: #{pointnet_cls_forward.3} parent=11 // pred_check_branch
          %415 = sbr.rel (%p413) target = $region28
        $region27: #{pointnet_cls_forward.3} parent=11 // pred_region
          _
        $region28: #{pointnet_cls_forward.3} parent=11 // pred_fallthru
          _
        // Predicated region
        $region29: #{pointnet_cls_forward.3} parent=11 // pred_check
          %p416 = pneg %p195
        $region30: #{pointnet_cls_forward.3} parent=11 // pred_check_branch
          %418 = sbr.rel (%p416) target = $region32
        $region31: #{pointnet_cls_forward.3} parent=11 // pred_region
          _
        $region32: #{pointnet_cls_forward.3} parent=11 // pred_fallthru
          _
        // Predicated region
        $region33: #{pointnet_cls_forward.3} parent=11 // pred_check
          %p419 = pneg %p216
        $region34: #{pointnet_cls_forward.3} parent=11 // pred_check_branch
          %421 = sbr.rel (%p419) target = $region36
        $region35: #{pointnet_cls_forward.3} parent=11 // pred_region
          _
        $region36: #{pointnet_cls_forward.3} parent=11 // pred_fallthru
          _
        // Predicated region
        $region37: #{pointnet_cls_forward.3} parent=11 // pred_check
          %p422 = pneg %p237
        $region38: #{pointnet_cls_forward.3} parent=11 // pred_check_branch
          %424 = sbr.rel (%p422) target = $region40
        $region39: #{pointnet_cls_forward.3} parent=11 // pred_region
          _
        $region40: #{pointnet_cls_forward.3} parent=11 // pred_fallthru
          _
        // Predicated region
        $region41: #{pointnet_cls_forward.3} parent=11 // pred_check
          %p425 = pneg %p258
        $region42: #{pointnet_cls_forward.3} parent=11 // pred_check_branch
          %427 = sbr.rel (%p425) target = $region44
        $region43: #{pointnet_cls_forward.3} parent=11 // pred_region
          _
        $region44: #{pointnet_cls_forward.3} parent=11 // pred_fallthru
          _
        // Predicated region
        $region45: #{pointnet_cls_forward.3} parent=11 // pred_check
          %p428 = pneg %p279
        $region46: #{pointnet_cls_forward.3} parent=11 // pred_check_branch
          %430 = sbr.rel (%p428) target = $region48
        $region47: #{pointnet_cls_forward.3} parent=11 // pred_region
          _
        $region48: #{pointnet_cls_forward.3} parent=11 // pred_fallthru
          _
        // Predicated region
        $region49: #{pointnet_cls_forward.3} parent=11 // pred_check
          %p431 = pneg %p300
        $region50: #{pointnet_cls_forward.3} parent=11 // pred_check_branch
          %433 = sbr.rel (%p431) target = $region52
        $region51: #{pointnet_cls_forward.3} parent=11 // pred_region
          _
        $region52: #{pointnet_cls_forward.3} parent=11 // pred_fallthru
          _
        // Predicated region
        $region53: #{pointnet_cls_forward.3} parent=11 // pred_check
          %p434 = pneg %p321
        $region54: #{pointnet_cls_forward.3} parent=11 // pred_check_branch
          %436 = sbr.rel (%p434) target = $region56
        $region55: #{pointnet_cls_forward.3} parent=11 // pred_region
          _
        $region56: #{pointnet_cls_forward.3} parent=11 // pred_fallthru
          _
        // Predicated region
        $region57: #{pointnet_cls_forward.3} parent=11 // pred_check
          %p437 = pneg %p342
        $region58: #{pointnet_cls_forward.3} parent=11 // pred_check_branch
          %439 = sbr.rel (%p437) target = $region60
        $region59: #{pointnet_cls_forward.3} parent=11 // pred_region
          _
        $region60: #{pointnet_cls_forward.3} parent=11 // pred_fallthru
          _
        // Predicated region
        $region61: #{pointnet_cls_forward.3} parent=11 // pred_check
          %p440 = pneg %p363
        $region62: #{pointnet_cls_forward.3} parent=11 // pred_check_branch
          %442 = sbr.rel (%p440) target = $region64
        $region63: #{pointnet_cls_forward.3} parent=11 // pred_region
          _
        $region64: #{pointnet_cls_forward.3} parent=11 // pred_fallthru
          _
      $region12: #{pointnet_cls_forward.3} parent=5 // pred_fallthru
        _
      %p443 = scmp.lt.s32.totalorder %s24, 2
      // Predicated region
      $region65: #{pointnet_cls_forward.3} parent=5 // pred_check
        %p444 = pneg %p443
      $region66: #{pointnet_cls_forward.3} parent=5 // pred_check_branch
        %446 = sbr.rel (%p444) target = $region68
      $region67: #{pointnet_cls_forward.3} parent=5 // pred_region
        // Predicated region
        $region69: #{pointnet_cls_forward.3} parent=67 // pred_check
          %p447 = pneg %p58
        $region70: #{pointnet_cls_forward.3} parent=67 // pred_check_branch
          %449 = sbr.rel (%p447) target = $region72
        $region71: #{pointnet_cls_forward.3} parent=67 // pred_region
          %s450 = smul.u32 2, %s32
          %p451 = scmp.lt.s32.totalorder %s31, 1
          %s452 = scalar_select %p451, %s31, 1
          %p453 = scmp.lt.s32.totalorder %s450, 1
          %s454 = scalar_select %p453, %s450, 1
          %s455 = smul.addr %s452, 2
          %s456 = sadd.s32 %s454, %s455
          %s457 = smul.addr %s456, 4
          %s458 = scalar_lea.vmem %s0, %s457
          %s459 = smul.u32 2, %s32
        $region72: #{pointnet_cls_forward.3} parent=67 // pred_fallthru
          _
        // Predicated region
        $region73: #{pointnet_cls_forward.3} parent=67 // pred_check
          %p460 = pneg %p84
        $region74: #{pointnet_cls_forward.3} parent=67 // pred_check_branch
          %462 = sbr.rel (%p460) target = $region76
        $region75: #{pointnet_cls_forward.3} parent=67 // pred_region
          %p463 = scmp.lt.s32.totalorder %s31, 1
          %s464 = scalar_select %p463, %s31, 1
          %s465 = smul.addr %s464, 4
          %s466 = scalar_lea.vmem %s1, %s465
        $region76: #{pointnet_cls_forward.3} parent=67 // pred_fallthru
          _
      $region68: #{pointnet_cls_forward.3} parent=5 // pred_fallthru
        _
      %p467 = scmp.le.s32.totalorder 1, %s24
      %p468 = scmp.lt.s32.totalorder %s24, 3
      %p469 = pnand %p467, %p468
      %p470 = pneg %p469
      // Predicated region
      $region77: #{pointnet_cls_forward.3} parent=5 // pred_check
        _
      $region78: #{pointnet_cls_forward.3} parent=5 // pred_check_branch
        %472 = sbr.rel (%p469) target = $region80
      $region79: #{pointnet_cls_forward.3} parent=5 // pred_region
        %s473 = ssub.s32 %s24, 1
        %s474 = smul.u32 2, %s34
        %p475 = scmp.lt.s32.totalorder %s33, 1
        %s476 = scalar_select %p475, %s33, 1
        %p477 = scmp.lt.s32.totalorder %s474, 1
        %s478 = scalar_select %p477, %s474, 1
        %s479 = smul.addr %s476, 2
        %s480 = sadd.s32 %s478, %s479
        %s481 = smul.addr %s480, 4
        %s482 = scalar_lea.vmem %s0, %s481
        %p483 = pneg %p64
        %p484 = pneg %p61
        %p485 = scmp.lt.s32.totalorder %s33, 1
        %s486 = scalar_select %p485, %s33, 1
        %s487 = smul.addr %s486, 4
        %s488 = scalar_lea.vmem %s1, %s487
        %p489 = pneg %p90
        %p490 = pneg %p87
        %p491 = pneg %p111
        %p492 = pneg %p108
        %p493 = pneg %p132
        %p494 = pneg %p129
        %p495 = pneg %p153
        %p496 = pneg %p150
        %p497 = pneg %p174
        %p498 = pneg %p171
        %p499 = pneg %p195
        %p500 = pneg %p192
        %p501 = pneg %p216
        %p502 = pneg %p213
        %p503 = pneg %p237
        %p504 = pneg %p234
        %p505 = pneg %p258
        %p506 = pneg %p255
        %p507 = pneg %p279
        %p508 = pneg %p276
        %p509 = pneg %p300
        %p510 = pneg %p297
        %p511 = pneg %p321
        %p512 = pneg %p318
        %p513 = pneg %p342
        %p514 = pneg %p339
        %p515 = pneg %p363
        %p516 = pneg %p360
        %p517 = pneg %p389
        %p518 = pneg %p386
        %s519 = sand.u32 %s376, 1
        %s520 = scalar_lea.sflag [#allocation4], %s519
        %s521 = sand.u32 %s376, 1
        %s522 = scalar_lea.vmem [#allocation3], %s521
        %s523 = smul.u32 2, %s34
        %p524 = scmp.lt.s32.totalorder %s33, 1
        %s525 = scalar_select %p524, %s33, 1
        %p526 = scmp.lt.s32.totalorder %s523, 1
        %s527 = scalar_select %p526, %s523, 1
        %s528 = smul.addr %s525, 2
        %s529 = sadd.s32 %s527, %s528
        %s530 = smul.addr %s529, 4
        %s531 = scalar_lea.vmem %s0, %s530
        %s532 = smul.u32 2, %s34
        %p533 = scmp.lt.s32.totalorder %s33, 1
        %s534 = scalar_select %p533, %s33, 1
        %s535 = smul.addr %s534, 4
        %s536 = scalar_lea.vmem %s1, %s535
        %p538 = scmp.eq.s32.totalorder %s34, 0
        // Predicated region
        $region81: #{pointnet_cls_forward.3} parent=79 // pred_check
          %p539 = pneg %p538
        $region82: #{pointnet_cls_forward.3} parent=79 // pred_check_branch
          %541 = sbr.rel (%p539) target = $region84
        $region83: #{pointnet_cls_forward.3} parent=79 // pred_region
          %542 = vst [vmem:[#allocation2] sm:$0xff] -inf
        $region84: #{pointnet_cls_forward.3} parent=79 // pred_fallthru
          _
        %v543 = vld [vmem:[%s531] sm:$0xf]
        %v544 = vld [vmem:[%s531 + $0x4] sm:$0xf]
        %v545 = vld [vmem:[%s536] sm:$0xf]
        %v546 = vld [vmem:[%s2] sm:$0x1]
        %v548 = vlaneseq
        %v549 = vshrl.u32 %v548, 7
        %v550 = vsub.s32 0, %v549
        %v551 = vrot.slane %v546, %v550
        %v555 = vunpack.c.l.b16 %v543
        %v556 = vunpack.c.l.b16 %v544
        %v557 = vpack.c.b16 %v556, %v555
        %vm558 = vcmask 64512
        %v560 = vsel %vm558, %v557, 0
        %vm562 = vcmask 1043456
        %v564 = vsel %vm562, %v545, 0
        %566 = vmatprep.subr.bf16.mxu0 0
        %567 = vmatpush1.bf16.msra.mxu0 0
        %568 = vmatprep.subr.bf16.mxu0 0
        %569 = vmatpush1.bf16.msra.mxu0 0
        %570 = vmatprep.subr.bf16.mxu0 0
        %571 = vmatpush1.bf16.msra.mxu0 0
        %572 = vmatprep.subr.bf16.mxu0 0
        %573 = vmatpush1.bf16.msra.mxu0 0
        %574 = vmatprep.subr.bf16.mxu0 0
        %575 = vmatpush1.bf16.msra.mxu0 0
        %576 = vmatprep.subr.bf16.mxu0 0
        %577 = vmatpush1.bf16.msra.mxu0 0
        %578 = vmatprep.subr.bf16.mxu0 0
        %579 = vmatpush1.bf16.msra.mxu0 0
        %580 = vmatprep.subr.bf16.mxu0 0
        %581 = vmatpush1.bf16.msra.mxu0 %v564
        %582 = vmatprep.subr.bf16.mxu0 0
        %583 = vmatpush2.bf16.msra.mxu0 0
        %584 = vmatprep.subr.bf16.mxu0 0
        %585 = vmatpush2.bf16.msra.mxu0 0
        %586 = vmatprep.subr.bf16.mxu0 0
        %587 = vmatpush2.bf16.msra.mxu0 0
        %588 = vmatprep.subr.bf16.mxu0 0
        %589 = vmatpush2.bf16.msra.mxu0 0
        %590 = vmatprep.subr.bf16.mxu0 0
        %591 = vmatpush2.bf16.msra.mxu0 0
        %592 = vmatprep.subr.bf16.mxu0 0
        %593 = vmatpush2.bf16.msra.mxu0 0
        %594 = vmatprep.subr.bf16.mxu0 0
        %595 = vmatpush2.bf16.msra.mxu0 0
        %596 = vmatprep.subr.bf16.mxu0 0
        %597 = vmatpush2.bf16.msra.mxu0 0
        %598 = vmatprep.mubr.bf16.mxu0 0
        %599 = vmatmul.mubr.bf16.gmra.mxu0 %v560
        %v600 = vpop.f32.mrf.mxu0
        %v601 = vadd.f32 %v551, %v600
        %v602 = vpop.f32.mrf.mxu0
        %v603 = vpop.f32.mrf.mxu0
        %v604 = vadd.f32 %v551, %v603
        %v605 = vpop.f32.mrf.mxu0
        %606 = vdwg.mxu0
        %v607 = vmax.f32 %v601, 0.0
        %v608 = vmax.f32 %v604, 0.0
        %v609 = vpack.c.bf16 %v608, %v607
        %v610 = vld [vmem:[%s3] sm:$0xf]
        %v611 = vld [vmem:[%s3 + $0x4] sm:$0xf]
        %v612 = vld [vmem:[%s3 + $0x8] sm:$0xf]
        %v613 = vld [vmem:[%s3 + $0xc] sm:$0xf]
        %v614 = vld [vmem:[%s3 + $0x10] sm:$0xf]
        %v615 = vld [vmem:[%s3 + $0x14] sm:$0xf]
        %v616 = vld [vmem:[%s3 + $0x18] sm:$0xf]
        %v617 = vld [vmem:[%s3 + $0x1c] sm:$0xf]
        %v618 = vld [vmem:[%s4] sm:$0x1]
        %v620 = vlaneseq
        %v621 = vshrl.u32 %v620, 7
        %v622 = vsub.s32 0, %v621
        %v623 = vrot.slane %v618, %v622
        %v633 = vunpack.c.l.b16 %v610
        %v634 = vunpack.c.l.b16 %v611
        %v635 = vunpack.c.l.b16 %v612
        %v636 = vunpack.c.l.b16 %v613
        %v637 = vunpack.c.l.b16 %v614
        %v638 = vunpack.c.l.b16 %v615
        %v639 = vunpack.c.l.b16 %v616
        %v640 = vunpack.c.l.b16 %v617
        %v641 = vpack.c.b16 %v634, %v633
        %v642 = vpack.c.b16 %v636, %v635
        %v643 = vpack.c.b16 %v638, %v637
        %v644 = vpack.c.b16 %v640, %v639
        %vm649 = vcmask 523264
        %v651 = vsel %vm649, %v609, 0
        %653 = vmatprep.subr.bf16.mxu0 0
        %654 = vmatpush1.bf16.msra.mxu0 0
        %655 = vmatprep.subr.bf16.mxu0 0
        %656 = vmatpush1.bf16.msra.mxu0 0
        %657 = vmatprep.subr.bf16.mxu0 0
        %658 = vmatpush1.bf16.msra.mxu0 0
        %659 = vmatprep.subr.bf16.mxu0 0
        %660 = vmatpush1.bf16.msra.mxu0 0
        %661 = vmatprep.subr.bf16.mxu0 0
        %662 = vmatpush1.bf16.msra.mxu0 %v644
        %663 = vmatprep.subr.bf16.mxu0 0
        %664 = vmatpush1.bf16.msra.mxu0 %v643
        %665 = vmatprep.subr.bf16.mxu0 0
        %666 = vmatpush1.bf16.msra.mxu0 %v642
        %667 = vmatprep.subr.bf16.mxu0 0
        %668 = vmatpush1.bf16.msra.mxu0 %v641
        %669 = vmatprep.subr.bf16.mxu0 0
        %670 = vmatpush2.bf16.msra.mxu0 0
        %671 = vmatprep.subr.bf16.mxu0 0
        %672 = vmatpush2.bf16.msra.mxu0 0
        %673 = vmatprep.subr.bf16.mxu0 0
        %674 = vmatpush2.bf16.msra.mxu0 0
        %675 = vmatprep.subr.bf16.mxu0 0
        %676 = vmatpush2.bf16.msra.mxu0 0
        %677 = vmatprep.subr.bf16.mxu0 0
        %678 = vmatpush2.bf16.msra.mxu0 0
        %679 = vmatprep.subr.bf16.mxu0 0
        %680 = vmatpush2.bf16.msra.mxu0 0
        %681 = vmatprep.subr.bf16.mxu0 0
        %682 = vmatpush2.bf16.msra.mxu0 0
        %683 = vmatprep.subr.bf16.mxu0 0
        %684 = vmatpush2.bf16.msra.mxu0 0
        %685 = vmatprep.mubr.bf16.mxu0 0
        %686 = vmatmul.mubr.bf16.gmra.mxu0 %v651
        %v687 = vpop.f32.mrf.mxu0
        %v688 = vadd.f32 %v623, %v687
        %v689 = vpop.f32.mrf.mxu0
        %v690 = vpop.f32.mrf.mxu0
        %v691 = vadd.f32 %v623, %v690
        %v692 = vpop.f32.mrf.mxu0
        %693 = vdwg.mxu0
        %v694 = vmax.f32 %v688, 0.0
        %v695 = vmax.f32 %v691, 0.0
        %v696 = vpack.c.bf16 %v695, %v694
        %v697 = vld [vmem:[%s5] sm:$0xff]
        %v698 = vld [vmem:[%s5 + $0x8] sm:$0xff]
        %v699 = vld [vmem:[%s5 + $0x10] sm:$0xff]
        %v700 = vld [vmem:[%s5 + $0x18] sm:$0xff]
        %v701 = vld [vmem:[%s5 + $0x20] sm:$0xff]
        %v702 = vld [vmem:[%s5 + $0x28] sm:$0xff]
        %v703 = vld [vmem:[%s5 + $0x30] sm:$0xff]
        %v704 = vld [vmem:[%s5 + $0x38] sm:$0xff]
        %v705 = vld [vmem:[%s5 + $0x40] sm:$0xff]
        %v706 = vld [vmem:[%s5 + $0x48] sm:$0xff]
        %v707 = vld [vmem:[%s5 + $0x50] sm:$0xff]
        %v708 = vld [vmem:[%s5 + $0x58] sm:$0xff]
        %v709 = vld [vmem:[%s5 + $0x60] sm:$0xff]
        %v710 = vld [vmem:[%s5 + $0x68] sm:$0xff]
        %v711 = vld [vmem:[%s5 + $0x70] sm:$0xff]
        %v712 = vld [vmem:[%s5 + $0x78] sm:$0xff]
        %v713 = vld [vmem:[%s5 + $0x80] sm:$0xff]
        %v714 = vld [vmem:[%s5 + $0x88] sm:$0xff]
        %v715 = vld [vmem:[%s5 + $0x90] sm:$0xff]
        %v716 = vld [vmem:[%s5 + $0x98] sm:$0xff]
        %v717 = vld [vmem:[%s5 + $0xa0] sm:$0xff]
        %v718 = vld [vmem:[%s5 + $0xa8] sm:$0xff]
        %v719 = vld [vmem:[%s5 + $0xb0] sm:$0xff]
        %v720 = vld [vmem:[%s5 + $0xb8] sm:$0xff]
        %v721 = vld [vmem:[%s5 + $0xc0] sm:$0xff]
        %v722 = vld [vmem:[%s5 + $0xc8] sm:$0xff]
        %v723 = vld [vmem:[%s5 + $0xd0] sm:$0xff]
        %v724 = vld [vmem:[%s5 + $0xd8] sm:$0xff]
        %v725 = vld [vmem:[%s5 + $0xe0] sm:$0xff]
        %v726 = vld [vmem:[%s5 + $0xe8] sm:$0xff]
        %v727 = vld [vmem:[%s5 + $0xf0] sm:$0xff]
        %v728 = vld [vmem:[%s5 + $0xf8] sm:$0xff]
        %v729 = vld [vmem:[%s5 + $0x100] sm:$0xff]
        %v730 = vld [vmem:[%s5 + $0x108] sm:$0xff]
        %v731 = vld [vmem:[%s5 + $0x110] sm:$0xff]
        %v732 = vld [vmem:[%s5 + $0x118] sm:$0xff]
        %v733 = vld [vmem:[%s5 + $0x120] sm:$0xff]
        %v734 = vld [vmem:[%s5 + $0x128] sm:$0xff]
        %v735 = vld [vmem:[%s5 + $0x130] sm:$0xff]
        %v736 = vld [vmem:[%s5 + $0x138] sm:$0xff]
        %v737 = vld [vmem:[%s5 + $0x140] sm:$0xff]
        %v738 = vld [vmem:[%s5 + $0x148] sm:$0xff]
        %v739 = vld [vmem:[%s5 + $0x150] sm:$0xff]
        %v740 = vld [vmem:[%s5 + $0x158] sm:$0xff]
        %v741 = vld [vmem:[%s5 + $0x160] sm:$0xff]
        %v742 = vld [vmem:[%s5 + $0x168] sm:$0xff]
        %v743 = vld [vmem:[%s5 + $0x170] sm:$0xff]
        %v744 = vld [vmem:[%s5 + $0x178] sm:$0xff]
        %v745 = vld [vmem:[%s5 + $0x180] sm:$0xff]
        %v746 = vld [vmem:[%s5 + $0x188] sm:$0xff]
        %v747 = vld [vmem:[%s5 + $0x190] sm:$0xff]
        %v748 = vld [vmem:[%s5 + $0x198] sm:$0xff]
        %v749 = vld [vmem:[%s5 + $0x1a0] sm:$0xff]
        %v750 = vld [vmem:[%s5 + $0x1a8] sm:$0xff]
        %v751 = vld [vmem:[%s5 + $0x1b0] sm:$0xff]
        %v752 = vld [vmem:[%s5 + $0x1b8] sm:$0xff]
        %v753 = vld [vmem:[%s5 + $0x1c0] sm:$0xff]
        %v754 = vld [vmem:[%s5 + $0x1c8] sm:$0xff]
        %v755 = vld [vmem:[%s5 + $0x1d0] sm:$0xff]
        %v756 = vld [vmem:[%s5 + $0x1d8] sm:$0xff]
        %v757 = vld [vmem:[%s5 + $0x1e0] sm:$0xff]
        %v758 = vld [vmem:[%s5 + $0x1e8] sm:$0xff]
        %v759 = vld [vmem:[%s5 + $0x1f0] sm:$0xff]
        %v760 = vld [vmem:[%s5 + $0x1f8] sm:$0xff]
        %v825 = vunpack.c.l.b16 %v697
        %v826 = vunpack.c.h.b16 %v697
        %v827 = vunpack.c.l.b16 %v698
        %v828 = vunpack.c.h.b16 %v698
        %v829 = vunpack.c.l.b16 %v699
        %v830 = vunpack.c.h.b16 %v699
        %v831 = vunpack.c.l.b16 %v700
        %v832 = vunpack.c.h.b16 %v700
        %v833 = vunpack.c.l.b16 %v701
        %v834 = vunpack.c.h.b16 %v701
        %v835 = vunpack.c.l.b16 %v702
        %v836 = vunpack.c.h.b16 %v702
        %v837 = vunpack.c.l.b16 %v703
        %v838 = vunpack.c.h.b16 %v703
        %v839 = vunpack.c.l.b16 %v704
        %v840 = vunpack.c.h.b16 %v704
        %v841 = vunpack.c.l.b16 %v705
        %v842 = vunpack.c.h.b16 %v705
        %v843 = vunpack.c.l.b16 %v706
        %v844 = vunpack.c.h.b16 %v706
        %v845 = vunpack.c.l.b16 %v707
        %v846 = vunpack.c.h.b16 %v707
        %v847 = vunpack.c.l.b16 %v708
        %v848 = vunpack.c.h.b16 %v708
        %v849 = vunpack.c.l.b16 %v709
        %v850 = vunpack.c.h.b16 %v709
        %v851 = vunpack.c.l.b16 %v710
        %v852 = vunpack.c.h.b16 %v710
        %v853 = vunpack.c.l.b16 %v711
        %v854 = vunpack.c.h.b16 %v711
        %v855 = vunpack.c.l.b16 %v712
        %v856 = vunpack.c.h.b16 %v712
        %v857 = vunpack.c.l.b16 %v713
        %v858 = vunpack.c.h.b16 %v713
        %v859 = vunpack.c.l.b16 %v714
        %v860 = vunpack.c.h.b16 %v714
        %v861 = vunpack.c.l.b16 %v715
        %v862 = vunpack.c.h.b16 %v715
        %v863 = vunpack.c.l.b16 %v716
        %v864 = vunpack.c.h.b16 %v716
        %v865 = vunpack.c.l.b16 %v717
        %v866 = vunpack.c.h.b16 %v717
        %v867 = vunpack.c.l.b16 %v718
        %v868 = vunpack.c.h.b16 %v718
        %v869 = vunpack.c.l.b16 %v719
        %v870 = vunpack.c.h.b16 %v719
        %v871 = vunpack.c.l.b16 %v720
        %v872 = vunpack.c.h.b16 %v720
        %v873 = vunpack.c.l.b16 %v721
        %v874 = vunpack.c.h.b16 %v721
        %v875 = vunpack.c.l.b16 %v722
        %v876 = vunpack.c.h.b16 %v722
        %v877 = vunpack.c.l.b16 %v723
        %v878 = vunpack.c.h.b16 %v723
        %v879 = vunpack.c.l.b16 %v724
        %v880 = vunpack.c.h.b16 %v724
        %v881 = vunpack.c.l.b16 %v725
        %v882 = vunpack.c.h.b16 %v725
        %v883 = vunpack.c.l.b16 %v726
        %v884 = vunpack.c.h.b16 %v726
        %v885 = vunpack.c.l.b16 %v727
        %v886 = vunpack.c.h.b16 %v727
        %v887 = vunpack.c.l.b16 %v728
        %v888 = vunpack.c.h.b16 %v728
        %v889 = vunpack.c.l.b16 %v729
        %v890 = vunpack.c.h.b16 %v729
        %v891 = vunpack.c.l.b16 %v730
        %v892 = vunpack.c.h.b16 %v730
        %v893 = vunpack.c.l.b16 %v731
        %v894 = vunpack.c.h.b16 %v731
        %v895 = vunpack.c.l.b16 %v732
        %v896 = vunpack.c.h.b16 %v732
        %v897 = vunpack.c.l.b16 %v733
        %v898 = vunpack.c.h.b16 %v733
        %v899 = vunpack.c.l.b16 %v734
        %v900 = vunpack.c.h.b16 %v734
        %v901 = vunpack.c.l.b16 %v735
        %v902 = vunpack.c.h.b16 %v735
        %v903 = vunpack.c.l.b16 %v736
        %v904 = vunpack.c.h.b16 %v736
        %v905 = vunpack.c.l.b16 %v737
        %v906 = vunpack.c.h.b16 %v737
        %v907 = vunpack.c.l.b16 %v738
        %v908 = vunpack.c.h.b16 %v738
        %v909 = vunpack.c.l.b16 %v739
        %v910 = vunpack.c.h.b16 %v739
        %v911 = vunpack.c.l.b16 %v740
        %v912 = vunpack.c.h.b16 %v740
        %v913 = vunpack.c.l.b16 %v741
        %v914 = vunpack.c.h.b16 %v741
        %v915 = vunpack.c.l.b16 %v742
        %v916 = vunpack.c.h.b16 %v742
        %v917 = vunpack.c.l.b16 %v743
        %v918 = vunpack.c.h.b16 %v743
        %v919 = vunpack.c.l.b16 %v744
        %v920 = vunpack.c.h.b16 %v744
        %v921 = vunpack.c.l.b16 %v745
        %v922 = vunpack.c.h.b16 %v745
        %v923 = vunpack.c.l.b16 %v746
        %v924 = vunpack.c.h.b16 %v746
        %v925 = vunpack.c.l.b16 %v747
        %v926 = vunpack.c.h.b16 %v747
        %v927 = vunpack.c.l.b16 %v748
        %v928 = vunpack.c.h.b16 %v748
        %v929 = vunpack.c.l.b16 %v749
        %v930 = vunpack.c.h.b16 %v749
        %v931 = vunpack.c.l.b16 %v750
        %v932 = vunpack.c.h.b16 %v750
        %v933 = vunpack.c.l.b16 %v751
        %v934 = vunpack.c.h.b16 %v751
        %v935 = vunpack.c.l.b16 %v752
        %v936 = vunpack.c.h.b16 %v752
        %v937 = vunpack.c.l.b16 %v753
        %v938 = vunpack.c.h.b16 %v753
        %v939 = vunpack.c.l.b16 %v754
        %v940 = vunpack.c.h.b16 %v754
        %v941 = vunpack.c.l.b16 %v755
        %v942 = vunpack.c.h.b16 %v755
        %v943 = vunpack.c.l.b16 %v756
        %v944 = vunpack.c.h.b16 %v756
        %v945 = vunpack.c.l.b16 %v757
        %v946 = vunpack.c.h.b16 %v757
        %v947 = vunpack.c.l.b16 %v758
        %v948 = vunpack.c.h.b16 %v758
        %v949 = vunpack.c.l.b16 %v759
        %v950 = vunpack.c.h.b16 %v759
        %v951 = vunpack.c.l.b16 %v760
        %v952 = vunpack.c.h.b16 %v760
        %v953 = vpack.c.b16 %v833, %v825
        %v954 = vpack.c.b16 %v834, %v826
        %v955 = vpack.c.b16 %v835, %v827
        %v956 = vpack.c.b16 %v836, %v828
        %v957 = vpack.c.b16 %v837, %v829
        %v958 = vpack.c.b16 %v838, %v830
        %v959 = vpack.c.b16 %v839, %v831
        %v960 = vpack.c.b16 %v840, %v832
        %v961 = vpack.c.b16 %v849, %v841
        %v962 = vpack.c.b16 %v850, %v842
        %v963 = vpack.c.b16 %v851, %v843
        %v964 = vpack.c.b16 %v852, %v844
        %v965 = vpack.c.b16 %v853, %v845
        %v966 = vpack.c.b16 %v854, %v846
        %v967 = vpack.c.b16 %v855, %v847
        %v968 = vpack.c.b16 %v856, %v848
        %v969 = vpack.c.b16 %v865, %v857
        %v970 = vpack.c.b16 %v866, %v858
        %v971 = vpack.c.b16 %v867, %v859
        %v972 = vpack.c.b16 %v868, %v860
        %v973 = vpack.c.b16 %v869, %v861
        %v974 = vpack.c.b16 %v870, %v862
        %v975 = vpack.c.b16 %v871, %v863
        %v976 = vpack.c.b16 %v872, %v864
        %v977 = vpack.c.b16 %v881, %v873
        %v978 = vpack.c.b16 %v882, %v874
        %v979 = vpack.c.b16 %v883, %v875
        %v980 = vpack.c.b16 %v884, %v876
        %v981 = vpack.c.b16 %v885, %v877
        %v982 = vpack.c.b16 %v886, %v878
        %v983 = vpack.c.b16 %v887, %v879
        %v984 = vpack.c.b16 %v888, %v880
        %v985 = vpack.c.b16 %v897, %v889
        %v986 = vpack.c.b16 %v898, %v890
        %v987 = vpack.c.b16 %v899, %v891
        %v988 = vpack.c.b16 %v900, %v892
        %v989 = vpack.c.b16 %v901, %v893
        %v990 = vpack.c.b16 %v902, %v894
        %v991 = vpack.c.b16 %v903, %v895
        %v992 = vpack.c.b16 %v904, %v896
        %v993 = vpack.c.b16 %v913, %v905
        %v994 = vpack.c.b16 %v914, %v906
        %v995 = vpack.c.b16 %v915, %v907
        %v996 = vpack.c.b16 %v916, %v908
        %v997 = vpack.c.b16 %v917, %v909
        %v998 = vpack.c.b16 %v918, %v910
        %v999 = vpack.c.b16 %v919, %v911
        %v1000 = vpack.c.b16 %v920, %v912
        %v1001 = vpack.c.b16 %v929, %v921
        %v1002 = vpack.c.b16 %v930, %v922
        %v1003 = vpack.c.b16 %v931, %v923
        %v1004 = vpack.c.b16 %v932, %v924
        %v1005 = vpack.c.b16 %v933, %v925
        %v1006 = vpack.c.b16 %v934, %v926
        %v1007 = vpack.c.b16 %v935, %v927
        %v1008 = vpack.c.b16 %v936, %v928
        %v1009 = vpack.c.b16 %v945, %v937
        %v1010 = vpack.c.b16 %v946, %v938
        %v1011 = vpack.c.b16 %v947, %v939
        %v1012 = vpack.c.b16 %v948, %v940
        %v1013 = vpack.c.b16 %v949, %v941
        %v1014 = vpack.c.b16 %v950, %v942
        %v1015 = vpack.c.b16 %v951, %v943
        %v1016 = vpack.c.b16 %v952, %v944
        %1081 = vmatprep.subr.bf16.mxu0 %v1010
        %1082 = vmatpush1.bf16.msra.mxu0 %v1009
        %1083 = vmatprep.subr.bf16.mxu0 %v1002
        %1084 = vmatpush1.bf16.msra.mxu0 %v1001
        %1085 = vmatprep.subr.bf16.mxu0 %v994
        %1086 = vmatpush1.bf16.msra.mxu0 %v993
        %1087 = vmatprep.subr.bf16.mxu0 %v986
        %1088 = vmatpush1.bf16.msra.mxu0 %v985
        %1089 = vmatprep.subr.bf16.mxu0 %v978
        %1090 = vmatpush1.bf16.msra.mxu0 %v977
        %1091 = vmatprep.subr.bf16.mxu0 %v970
        %1092 = vmatpush1.bf16.msra.mxu0 %v969
        %1093 = vmatprep.subr.bf16.mxu0 %v962
        %1094 = vmatpush1.bf16.msra.mxu0 %v961
        %1095 = vmatprep.subr.bf16.mxu0 %v954
        %1096 = vmatpush1.bf16.msra.mxu0 %v953
        %1097 = vmatprep.subr.bf16.mxu0 0
        %1098 = vmatpush2.bf16.msra.mxu0 0
        %1099 = vmatprep.subr.bf16.mxu0 0
        %1100 = vmatpush2.bf16.msra.mxu0 0
        %1101 = vmatprep.subr.bf16.mxu0 0
        %1102 = vmatpush2.bf16.msra.mxu0 0
        %1103 = vmatprep.subr.bf16.mxu0 0
        %1104 = vmatpush2.bf16.msra.mxu0 0
        %1105 = vmatprep.subr.bf16.mxu0 0
        %1106 = vmatpush2.bf16.msra.mxu0 0
        %1107 = vmatprep.subr.bf16.mxu0 0
        %1108 = vmatpush2.bf16.msra.mxu0 0
        %1109 = vmatprep.subr.bf16.mxu0 0
        %1110 = vmatpush2.bf16.msra.mxu0 0
        %1111 = vmatprep.subr.bf16.mxu0 0
        %1112 = vmatpush2.bf16.msra.mxu0 0
        %1113 = vmatprep.mubr.bf16.mxu0 0
        %1114 = vmatmul.mubr.bf16.gmra.mxu0 %v696
        %v1115 = vpop.f32.mrf.mxu0
        %v1116 = vadd.f32 0.0, %v1115
        %v1117 = vpop.f32.mrf.mxu0
        %v1118 = vadd.f32 0.0, %v1117
        %v1119 = vpop.f32.mrf.mxu0
        %v1120 = vadd.f32 0.0, %v1119
        %v1121 = vpop.f32.mrf.mxu0
        %v1122 = vadd.f32 0.0, %v1121
        %1123 = vdwg.mxu0
        %1124 = vmatprep.subr.bf16.mxu0 %v1012
        %1125 = vmatpush1.bf16.msra.mxu0 %v1011
        %1126 = vmatprep.subr.bf16.mxu0 %v1004
        %1127 = vmatpush1.bf16.msra.mxu0 %v1003
        %1128 = vmatprep.subr.bf16.mxu0 %v996
        %1129 = vmatpush1.bf16.msra.mxu0 %v995
        %1130 = vmatprep.subr.bf16.mxu0 %v988
        %1131 = vmatpush1.bf16.msra.mxu0 %v987
        %1132 = vmatprep.subr.bf16.mxu0 %v980
        %1133 = vmatpush1.bf16.msra.mxu0 %v979
        %1134 = vmatprep.subr.bf16.mxu0 %v972
        %1135 = vmatpush1.bf16.msra.mxu0 %v971
        %1136 = vmatprep.subr.bf16.mxu0 %v964
        %1137 = vmatpush1.bf16.msra.mxu0 %v963
        %1138 = vmatprep.subr.bf16.mxu0 %v956
        %1139 = vmatpush1.bf16.msra.mxu0 %v955
        %1140 = vmatprep.subr.bf16.mxu0 0
        %1141 = vmatpush2.bf16.msra.mxu0 0
        %1142 = vmatprep.subr.bf16.mxu0 0
        %1143 = vmatpush2.bf16.msra.mxu0 0
        %1144 = vmatprep.subr.bf16.mxu0 0
        %1145 = vmatpush2.bf16.msra.mxu0 0
        %1146 = vmatprep.subr.bf16.mxu0 0
        %1147 = vmatpush2.bf16.msra.mxu0 0
        %1148 = vmatprep.subr.bf16.mxu0 0
        %1149 = vmatpush2.bf16.msra.mxu0 0
        %1150 = vmatprep.subr.bf16.mxu0 0
        %1151 = vmatpush2.bf16.msra.mxu0 0
        %1152 = vmatprep.subr.bf16.mxu0 0
        %1153 = vmatpush2.bf16.msra.mxu0 0
        %1154 = vmatprep.subr.bf16.mxu0 0
        %1155 = vmatpush2.bf16.msra.mxu0 0
        %1156 = vmatprep.mubr.bf16.mxu0 0
        %1157 = vmatmul.mubr.bf16.gmra.mxu0 %v696
        %v1158 = vpop.f32.mrf.mxu0
        %v1159 = vadd.f32 0.0, %v1158
        %v1160 = vpop.f32.mrf.mxu0
        %v1161 = vadd.f32 0.0, %v1160
        %v1162 = vpop.f32.mrf.mxu0
        %v1163 = vadd.f32 0.0, %v1162
        %v1164 = vpop.f32.mrf.mxu0
        %v1165 = vadd.f32 0.0, %v1164
        %1166 = vdwg.mxu0
        %1167 = vmatprep.subr.bf16.mxu0 %v1014
        %1168 = vmatpush1.bf16.msra.mxu0 %v1013
        %1169 = vmatprep.subr.bf16.mxu0 %v1006
        %1170 = vmatpush1.bf16.msra.mxu0 %v1005
        %1171 = vmatprep.subr.bf16.mxu0 %v998
        %1172 = vmatpush1.bf16.msra.mxu0 %v997
        %1173 = vmatprep.subr.bf16.mxu0 %v990
        %1174 = vmatpush1.bf16.msra.mxu0 %v989
        %1175 = vmatprep.subr.bf16.mxu0 %v982
        %1176 = vmatpush1.bf16.msra.mxu0 %v981
        %1177 = vmatprep.subr.bf16.mxu0 %v974
        %1178 = vmatpush1.bf16.msra.mxu0 %v973
        %1179 = vmatprep.subr.bf16.mxu0 %v966
        %1180 = vmatpush1.bf16.msra.mxu0 %v965
        %1181 = vmatprep.subr.bf16.mxu0 %v958
        %1182 = vmatpush1.bf16.msra.mxu0 %v957
        %1183 = vmatprep.subr.bf16.mxu0 0
        %1184 = vmatpush2.bf16.msra.mxu0 0
        %1185 = vmatprep.subr.bf16.mxu0 0
        %1186 = vmatpush2.bf16.msra.mxu0 0
        %1187 = vmatprep.subr.bf16.mxu0 0
        %1188 = vmatpush2.bf16.msra.mxu0 0
        %1189 = vmatprep.subr.bf16.mxu0 0
        %1190 = vmatpush2.bf16.msra.mxu0 0
        %1191 = vmatprep.subr.bf16.mxu0 0
        %1192 = vmatpush2.bf16.msra.mxu0 0
        %1193 = vmatprep.subr.bf16.mxu0 0
        %1194 = vmatpush2.bf16.msra.mxu0 0
        %1195 = vmatprep.subr.bf16.mxu0 0
        %1196 = vmatpush2.bf16.msra.mxu0 0
        %1197 = vmatprep.subr.bf16.mxu0 0
        %1198 = vmatpush2.bf16.msra.mxu0 0
        %1199 = vmatprep.mubr.bf16.mxu0 0
        %1200 = vmatmul.mubr.bf16.gmra.mxu0 %v696
        %v1201 = vpop.f32.mrf.mxu0
        %v1202 = vadd.f32 0.0, %v1201
        %v1203 = vpop.f32.mrf.mxu0
        %v1204 = vadd.f32 0.0, %v1203
        %v1205 = vpop.f32.mrf.mxu0
        %v1206 = vadd.f32 0.0, %v1205
        %v1207 = vpop.f32.mrf.mxu0
        %v1208 = vadd.f32 0.0, %v1207
        %1209 = vdwg.mxu0
        %1210 = vmatprep.subr.bf16.mxu0 %v1016
        %1211 = vmatpush1.bf16.msra.mxu0 %v1015
        %1212 = vmatprep.subr.bf16.mxu0 %v1008
        %1213 = vmatpush1.bf16.msra.mxu0 %v1007
        %1214 = vmatprep.subr.bf16.mxu0 %v1000
        %1215 = vmatpush1.bf16.msra.mxu0 %v999
        %1216 = vmatprep.subr.bf16.mxu0 %v992
        %1217 = vmatpush1.bf16.msra.mxu0 %v991
        %1218 = vmatprep.subr.bf16.mxu0 %v984
        %1219 = vmatpush1.bf16.msra.mxu0 %v983
        %1220 = vmatprep.subr.bf16.mxu0 %v976
        %1221 = vmatpush1.bf16.msra.mxu0 %v975
        %1222 = vmatprep.subr.bf16.mxu0 %v968
        %1223 = vmatpush1.bf16.msra.mxu0 %v967
        %1224 = vmatprep.subr.bf16.mxu0 %v960
        %1225 = vmatpush1.bf16.msra.mxu0 %v959
        %1226 = vmatprep.subr.bf16.mxu0 0
        %1227 = vmatpush2.bf16.msra.mxu0 0
        %1228 = vmatprep.subr.bf16.mxu0 0
        %1229 = vmatpush2.bf16.msra.mxu0 0
        %1230 = vmatprep.subr.bf16.mxu0 0
        %1231 = vmatpush2.bf16.msra.mxu0 0
        %1232 = vmatprep.subr.bf16.mxu0 0
        %1233 = vmatpush2.bf16.msra.mxu0 0
        %1234 = vmatprep.subr.bf16.mxu0 0
        %1235 = vmatpush2.bf16.msra.mxu0 0
        %1236 = vmatprep.subr.bf16.mxu0 0
        %1237 = vmatpush2.bf16.msra.mxu0 0
        %1238 = vmatprep.subr.bf16.mxu0 0
        %1239 = vmatpush2.bf16.msra.mxu0 0
        %1240 = vmatprep.subr.bf16.mxu0 0
        %1241 = vmatpush2.bf16.msra.mxu0 0
        %1242 = vmatprep.mubr.bf16.mxu0 0
        %1243 = vmatmul.mubr.bf16.gmra.mxu0 %v696
        %v1244 = vpop.f32.mrf.mxu0
        %v1245 = vadd.f32 0.0, %v1244
        %v1246 = vpop.f32.mrf.mxu0
        %v1247 = vadd.f32 0.0, %v1246
        %v1248 = vpop.f32.mrf.mxu0
        %v1249 = vadd.f32 0.0, %v1248
        %v1250 = vpop.f32.mrf.mxu0
        %v1251 = vadd.f32 0.0, %v1250
        %1252 = vdwg.mxu0
        %v1253 = vld [vmem:[#allocation2] sm:$0xff]
        %v1254 = vmax.f32 %v1116, %v1120
        %v1255 = vrot.slane %v1254, 4
        %v1256 = vmax.f32 %v1254, %v1255
        %v1257 = vrot.slane %v1256, 2
        %v1258 = vmax.f32 %v1256, %v1257
        %v1259 = vrot.slane %v1258, 1
        %v1260 = vmax.f32 %v1258, %v1259
        %v1261 = vmax.f32 %v1118, %v1122
        %v1262 = vrot.slane %v1261, 4
        %v1263 = vmax.f32 %v1261, %v1262
        %v1264 = vrot.slane %v1263, 2
        %v1265 = vmax.f32 %v1263, %v1264
        %v1266 = vrot.slane %v1265, 1
        %v1267 = vmax.f32 %v1265, %v1266
        %v1268 = vmax.f32 %v1159, %v1163
        %v1269 = vrot.slane %v1268, 4
        %v1270 = vmax.f32 %v1268, %v1269
        %v1271 = vrot.slane %v1270, 2
        %v1272 = vmax.f32 %v1270, %v1271
        %v1273 = vrot.slane %v1272, 1
        %v1274 = vmax.f32 %v1272, %v1273
        %v1275 = vmax.f32 %v1161, %v1165
        %v1276 = vrot.slane %v1275, 4
        %v1277 = vmax.f32 %v1275, %v1276
        %v1278 = vrot.slane %v1277, 2
        %v1279 = vmax.f32 %v1277, %v1278
        %v1280 = vrot.slane %v1279, 1
        %v1281 = vmax.f32 %v1279, %v1280
        %v1282 = vmax.f32 %v1202, %v1206
        %v1283 = vrot.slane %v1282, 4
        %v1284 = vmax.f32 %v1282, %v1283
        %v1285 = vrot.slane %v1284, 2
        %v1286 = vmax.f32 %v1284, %v1285
        %v1287 = vrot.slane %v1286, 1
        %v1288 = vmax.f32 %v1286, %v1287
        %v1289 = vmax.f32 %v1204, %v1208
        %v1290 = vrot.slane %v1289, 4
        %v1291 = vmax.f32 %v1289, %v1290
        %v1292 = vrot.slane %v1291, 2
        %v1293 = vmax.f32 %v1291, %v1292
        %v1294 = vrot.slane %v1293, 1
        %v1295 = vmax.f32 %v1293, %v1294
        %v1296 = vmax.f32 %v1245, %v1249
        %v1297 = vrot.slane %v1296, 4
        %v1298 = vmax.f32 %v1296, %v1297
        %v1299 = vrot.slane %v1298, 2
        %v1300 = vmax.f32 %v1298, %v1299
        %v1301 = vrot.slane %v1300, 1
        %v1302 = vmax.f32 %v1300, %v1301
        %v1303 = vmax.f32 %v1247, %v1251
        %v1304 = vrot.slane %v1303, 4
        %v1305 = vmax.f32 %v1303, %v1304
        %v1306 = vrot.slane %v1305, 2
        %v1307 = vmax.f32 %v1305, %v1306
        %v1308 = vrot.slane %v1307, 1
        %v1309 = vmax.f32 %v1307, %v1308
        %v1318 = vcombine.low %v1260, %v1267
        %v1319 = vcombine.low %v1274, %v1281
        %v1320 = vcombine.low %v1288, %v1295
        %v1321 = vcombine.low %v1302, %v1309
        %v1323 = vunpack.c.l.s4 1966171168
        %v1324 = vunpack.c.0.s8 %v1323
        %v1325 = vlaneseq
        %v1326 = vshrl.u32 %v1325, 7
        %v1327 = vsub.s32 %v1324, %v1326
        %v1328 = vrot.slane %v1318, %v1327
        %v1330 = vunpack.c.l.s4 1966171168
        %v1331 = vunpack.c.0.s8 %v1330
        %v1332 = vlaneseq
        %v1333 = vshrl.u32 %v1332, 7
        %v1334 = vsub.s32 %v1331, %v1333
        %v1335 = vrot.slane %v1319, %v1334
        %v1337 = vunpack.c.l.s4 1966171168
        %v1338 = vunpack.c.0.s8 %v1337
        %v1339 = vlaneseq
        %v1340 = vshrl.u32 %v1339, 7
        %v1341 = vsub.s32 %v1338, %v1340
        %v1342 = vrot.slane %v1320, %v1341
        %v1344 = vunpack.c.l.s4 1966171168
        %v1345 = vunpack.c.0.s8 %v1344
        %v1346 = vlaneseq
        %v1347 = vshrl.u32 %v1346, 7
        %v1348 = vsub.s32 %v1345, %v1347
        %v1349 = vrot.slane %v1321, %v1348
        %v1350 = vcombine.low %v1328, %v1335
        %v1351 = vcombine.low %v1342, %v1349
        %v1353 = vunpack.c.l.s4 1966171168
        %v1354 = vunpack.c.0.s8 %v1353
        %v1355 = vlaneseq
        %v1356 = vshrl.u32 %v1355, 7
        %v1357 = vsub.s32 %v1354, %v1356
        %v1358 = vrot.slane %v1350, %v1357
        %v1360 = vunpack.c.l.s4 1966171168
        %v1361 = vunpack.c.0.s8 %v1360
        %v1362 = vlaneseq
        %v1363 = vshrl.u32 %v1362, 7
        %v1364 = vsub.s32 %v1361, %v1363
        %v1365 = vrot.slane %v1351, %v1364
        %v1366 = vcombine.low %v1358, %v1365
        %v1368 = vmax.f32 %v1253, %v1366
        %1369 = vst [vmem:[#allocation2] sm:$0xff] %v1368
        // Predicated region
        $region85: #{pointnet_cls_forward.3} parent=79 // pred_check
          %p1370 = pneg %p538
        $region86: #{pointnet_cls_forward.3} parent=79 // pred_check_branch
          %1372 = sbr.rel (%p1370) target = $region88
        $region87: #{pointnet_cls_forward.3} parent=79 // pred_region
          %v1373 = vld [vmem:[#allocation2] sm:$0xff]
          %v1374 = vld [vmem:[%s6] sm:$0xff]
          %v1375 = vadd.f32 %v1373, %v1374
          %v1377 = vlaneseq
          %v1378 = vshrl.u32 %v1377, 7
          %v1379 = vsub.s32 0, %v1378
          %v1380 = vrot.slane %v1375, %v1379
          %v1381 = vlaneseq
          %v1382 = vshrl.u32 %v1381, 7
          %v1383 = vsub.s32 1, %v1382
          %v1384 = vrot.slane %v1375, %v1383
          %v1385 = vlaneseq
          %v1386 = vshrl.u32 %v1385, 7
          %v1387 = vsub.s32 2, %v1386
          %v1388 = vrot.slane %v1375, %v1387
          %v1389 = vlaneseq
          %v1390 = vshrl.u32 %v1389, 7
          %v1391 = vsub.s32 3, %v1390
          %v1392 = vrot.slane %v1375, %v1391
          %v1393 = vlaneseq
          %v1394 = vshrl.u32 %v1393, 7
          %v1395 = vsub.s32 4, %v1394
          %v1396 = vrot.slane %v1375, %v1395
          %v1397 = vlaneseq
          %v1398 = vshrl.u32 %v1397, 7
          %v1399 = vsub.s32 5, %v1398
          %v1400 = vrot.slane %v1375, %v1399
          %v1401 = vlaneseq
          %v1402 = vshrl.u32 %v1401, 7
          %v1403 = vsub.s32 6, %v1402
          %v1404 = vrot.slane %v1375, %v1403
          %v1405 = vlaneseq
          %v1406 = vshrl.u32 %v1405, 7
          %v1407 = vsub.s32 7, %v1406
          %v1408 = vrot.slane %v1375, %v1407
          %v1417 = vpack.c.bf16 %v1380, %v1380
          %v1418 = vpack.c.bf16 %v1384, %v1384
          %v1419 = vpack.c.bf16 %v1388, %v1388
          %v1420 = vpack.c.bf16 %v1392, %v1392
          %v1421 = vpack.c.bf16 %v1396, %v1396
          %v1422 = vpack.c.bf16 %v1400, %v1400
          %v1423 = vpack.c.bf16 %v1404, %v1404
          %v1424 = vpack.c.bf16 %v1408, %v1408
          %v1425 = vld [vmem:[%s7] sm:$0xff]
          %v1426 = vld [vmem:[%s7 + $0x8] sm:$0xff]
          %v1427 = vld [vmem:[%s7 + $0x10] sm:$0xff]
          %v1428 = vld [vmem:[%s7 + $0x18] sm:$0xff]
          %v1429 = vld [vmem:[%s7 + $0x20] sm:$0xff]
          %v1430 = vld [vmem:[%s7 + $0x28] sm:$0xff]
          %v1431 = vld [vmem:[%s7 + $0x30] sm:$0xff]
          %v1432 = vld [vmem:[%s7 + $0x38] sm:$0xff]
          %v1433 = vld [vmem:[%s7 + $0x40] sm:$0xff]
          %v1434 = vld [vmem:[%s7 + $0x48] sm:$0xff]
          %v1435 = vld [vmem:[%s7 + $0x50] sm:$0xff]
          %v1436 = vld [vmem:[%s7 + $0x58] sm:$0xff]
          %v1437 = vld [vmem:[%s7 + $0x60] sm:$0xff]
          %v1438 = vld [vmem:[%s7 + $0x68] sm:$0xff]
          %v1439 = vld [vmem:[%s7 + $0x70] sm:$0xff]
          %v1440 = vld [vmem:[%s7 + $0x78] sm:$0xff]
          %v1441 = vld [vmem:[%s7 + $0x80] sm:$0xff]
          %v1442 = vld [vmem:[%s7 + $0x88] sm:$0xff]
          %v1443 = vld [vmem:[%s7 + $0x90] sm:$0xff]
          %v1444 = vld [vmem:[%s7 + $0x98] sm:$0xff]
          %v1445 = vld [vmem:[%s7 + $0xa0] sm:$0xff]
          %v1446 = vld [vmem:[%s7 + $0xa8] sm:$0xff]
          %v1447 = vld [vmem:[%s7 + $0xb0] sm:$0xff]
          %v1448 = vld [vmem:[%s7 + $0xb8] sm:$0xff]
          %v1449 = vld [vmem:[%s7 + $0xc0] sm:$0xff]
          %v1450 = vld [vmem:[%s7 + $0xc8] sm:$0xff]
          %v1451 = vld [vmem:[%s7 + $0xd0] sm:$0xff]
          %v1452 = vld [vmem:[%s7 + $0xd8] sm:$0xff]
          %v1453 = vld [vmem:[%s7 + $0xe0] sm:$0xff]
          %v1454 = vld [vmem:[%s7 + $0xe8] sm:$0xff]
          %v1455 = vld [vmem:[%s7 + $0xf0] sm:$0xff]
          %v1456 = vld [vmem:[%s7 + $0xf8] sm:$0xff]
          %v1457 = vld [vmem:[%s7 + $0x100] sm:$0xff]
          %v1458 = vld [vmem:[%s7 + $0x108] sm:$0xff]
          %v1459 = vld [vmem:[%s7 + $0x110] sm:$0xff]
          %v1460 = vld [vmem:[%s7 + $0x118] sm:$0xff]
          %v1461 = vld [vmem:[%s7 + $0x120] sm:$0xff]
          %v1462 = vld [vmem:[%s7 + $0x128] sm:$0xff]
          %v1463 = vld [vmem:[%s7 + $0x130] sm:$0xff]
          %v1464 = vld [vmem:[%s7 + $0x138] sm:$0xff]
          %v1465 = vld [vmem:[%s7 + $0x140] sm:$0xff]
          %v1466 = vld [vmem:[%s7 + $0x148] sm:$0xff]
          %v1467 = vld [vmem:[%s7 + $0x150] sm:$0xff]
          %v1468 = vld [vmem:[%s7 + $0x158] sm:$0xff]
          %v1469 = vld [vmem:[%s7 + $0x160] sm:$0xff]
          %v1470 = vld [vmem:[%s7 + $0x168] sm:$0xff]
          %v1471 = vld [vmem:[%s7 + $0x170] sm:$0xff]
          %v1472 = vld [vmem:[%s7 + $0x178] sm:$0xff]
          %v1473 = vld [vmem:[%s7 + $0x180] sm:$0xff]
          %v1474 = vld [vmem:[%s7 + $0x188] sm:$0xff]
          %v1475 = vld [vmem:[%s7 + $0x190] sm:$0xff]
          %v1476 = vld [vmem:[%s7 + $0x198] sm:$0xff]
          %v1477 = vld [vmem:[%s7 + $0x1a0] sm:$0xff]
          %v1478 = vld [vmem:[%s7 + $0x1a8] sm:$0xff]
          %v1479 = vld [vmem:[%s7 + $0x1b0] sm:$0xff]
          %v1480 = vld [vmem:[%s7 + $0x1b8] sm:$0xff]
          %v1481 = vld [vmem:[%s7 + $0x1c0] sm:$0xff]
          %v1482 = vld [vmem:[%s7 + $0x1c8] sm:$0xff]
          %v1483 = vld [vmem:[%s7 + $0x1d0] sm:$0xff]
          %v1484 = vld [vmem:[%s7 + $0x1d8] sm:$0xff]
          %v1485 = vld [vmem:[%s7 + $0x1e0] sm:$0xff]
          %v1486 = vld [vmem:[%s7 + $0x1e8] sm:$0xff]
          %v1487 = vld [vmem:[%s7 + $0x1f0] sm:$0xff]
          %v1488 = vld [vmem:[%s7 + $0x1f8] sm:$0xff]
          %v1489 = vld [vmem:[%s7 + $0x200] sm:$0xff]
          %v1490 = vld [vmem:[%s7 + $0x208] sm:$0xff]
          %v1491 = vld [vmem:[%s7 + $0x210] sm:$0xff]
          %v1492 = vld [vmem:[%s7 + $0x218] sm:$0xff]
          %v1493 = vld [vmem:[%s7 + $0x220] sm:$0xff]
          %v1494 = vld [vmem:[%s7 + $0x228] sm:$0xff]
          %v1495 = vld [vmem:[%s7 + $0x230] sm:$0xff]
          %v1496 = vld [vmem:[%s7 + $0x238] sm:$0xff]
          %v1497 = vld [vmem:[%s7 + $0x240] sm:$0xff]
          %v1498 = vld [vmem:[%s7 + $0x248] sm:$0xff]
          %v1499 = vld [vmem:[%s7 + $0x250] sm:$0xff]
          %v1500 = vld [vmem:[%s7 + $0x258] sm:$0xff]
          %v1501 = vld [vmem:[%s7 + $0x260] sm:$0xff]
          %v1502 = vld [vmem:[%s7 + $0x268] sm:$0xff]
          %v1503 = vld [vmem:[%s7 + $0x270] sm:$0xff]
          %v1504 = vld [vmem:[%s7 + $0x278] sm:$0xff]
          %v1505 = vld [vmem:[%s7 + $0x280] sm:$0xff]
          %v1506 = vld [vmem:[%s7 + $0x288] sm:$0xff]
          %v1507 = vld [vmem:[%s7 + $0x290] sm:$0xff]
          %v1508 = vld [vmem:[%s7 + $0x298] sm:$0xff]
          %v1509 = vld [vmem:[%s7 + $0x2a0] sm:$0xff]
          %v1510 = vld [vmem:[%s7 + $0x2a8] sm:$0xff]
          %v1511 = vld [vmem:[%s7 + $0x2b0] sm:$0xff]
          %v1512 = vld [vmem:[%s7 + $0x2b8] sm:$0xff]
          %v1513 = vld [vmem:[%s7 + $0x2c0] sm:$0xff]
          %v1514 = vld [vmem:[%s7 + $0x2c8] sm:$0xff]
          %v1515 = vld [vmem:[%s7 + $0x2d0] sm:$0xff]
          %v1516 = vld [vmem:[%s7 + $0x2d8] sm:$0xff]
          %v1517 = vld [vmem:[%s7 + $0x2e0] sm:$0xff]
          %v1518 = vld [vmem:[%s7 + $0x2e8] sm:$0xff]
          %v1519 = vld [vmem:[%s7 + $0x2f0] sm:$0xff]
          %v1520 = vld [vmem:[%s7 + $0x2f8] sm:$0xff]
          %v1521 = vld [vmem:[%s7 + $0x300] sm:$0xff]
          %v1522 = vld [vmem:[%s7 + $0x308] sm:$0xff]
          %v1523 = vld [vmem:[%s7 + $0x310] sm:$0xff]
          %v1524 = vld [vmem:[%s7 + $0x318] sm:$0xff]
          %v1525 = vld [vmem:[%s7 + $0x320] sm:$0xff]
          %v1526 = vld [vmem:[%s7 + $0x328] sm:$0xff]
          %v1527 = vld [vmem:[%s7 + $0x330] sm:$0xff]
          %v1528 = vld [vmem:[%s7 + $0x338] sm:$0xff]
          %v1529 = vld [vmem:[%s7 + $0x340] sm:$0xff]
          %v1530 = vld [vmem:[%s7 + $0x348] sm:$0xff]
          %v1531 = vld [vmem:[%s7 + $0x350] sm:$0xff]
          %v1532 = vld [vmem:[%s7 + $0x358] sm:$0xff]
          %v1533 = vld [vmem:[%s7 + $0x360] sm:$0xff]
          %v1534 = vld [vmem:[%s7 + $0x368] sm:$0xff]
          %v1535 = vld [vmem:[%s7 + $0x370] sm:$0xff]
          %v1536 = vld [vmem:[%s7 + $0x378] sm:$0xff]
          %v1537 = vld [vmem:[%s7 + $0x380] sm:$0xff]
          %v1538 = vld [vmem:[%s7 + $0x388] sm:$0xff]
          %v1539 = vld [vmem:[%s7 + $0x390] sm:$0xff]
          %v1540 = vld [vmem:[%s7 + $0x398] sm:$0xff]
          %v1541 = vld [vmem:[%s7 + $0x3a0] sm:$0xff]
          %v1542 = vld [vmem:[%s7 + $0x3a8] sm:$0xff]
          %v1543 = vld [vmem:[%s7 + $0x3b0] sm:$0xff]
          %v1544 = vld [vmem:[%s7 + $0x3b8] sm:$0xff]
          %v1545 = vld [vmem:[%s7 + $0x3c0] sm:$0xff]
          %v1546 = vld [vmem:[%s7 + $0x3c8] sm:$0xff]
          %v1547 = vld [vmem:[%s7 + $0x3d0] sm:$0xff]
          %v1548 = vld [vmem:[%s7 + $0x3d8] sm:$0xff]
          %v1549 = vld [vmem:[%s7 + $0x3e0] sm:$0xff]
          %v1550 = vld [vmem:[%s7 + $0x3e8] sm:$0xff]
          %v1551 = vld [vmem:[%s7 + $0x3f0] sm:$0xff]
          %v1552 = vld [vmem:[%s7 + $0x3f8] sm:$0xff]
          %v1553 = vld [vmem:[%s7 + $0x400] sm:$0xff]
          %v1554 = vld [vmem:[%s7 + $0x408] sm:$0xff]
          %v1555 = vld [vmem:[%s7 + $0x410] sm:$0xff]
          %v1556 = vld [vmem:[%s7 + $0x418] sm:$0xff]
          %v1557 = vld [vmem:[%s7 + $0x420] sm:$0xff]
          %v1558 = vld [vmem:[%s7 + $0x428] sm:$0xff]
          %v1559 = vld [vmem:[%s7 + $0x430] sm:$0xff]
          %v1560 = vld [vmem:[%s7 + $0x438] sm:$0xff]
          %v1561 = vld [vmem:[%s7 + $0x440] sm:$0xff]
          %v1562 = vld [vmem:[%s7 + $0x448] sm:$0xff]
          %v1563 = vld [vmem:[%s7 + $0x450] sm:$0xff]
          %v1564 = vld [vmem:[%s7 + $0x458] sm:$0xff]
          %v1565 = vld [vmem:[%s7 + $0x460] sm:$0xff]
          %v1566 = vld [vmem:[%s7 + $0x468] sm:$0xff]
          %v1567 = vld [vmem:[%s7 + $0x470] sm:$0xff]
          %v1568 = vld [vmem:[%s7 + $0x478] sm:$0xff]
          %v1569 = vld [vmem:[%s7 + $0x480] sm:$0xff]
          %v1570 = vld [vmem:[%s7 + $0x488] sm:$0xff]
          %v1571 = vld [vmem:[%s7 + $0x490] sm:$0xff]
          %v1572 = vld [vmem:[%s7 + $0x498] sm:$0xff]
          %v1573 = vld [vmem:[%s7 + $0x4a0] sm:$0xff]
          %v1574 = vld [vmem:[%s7 + $0x4a8] sm:$0xff]
          %v1575 = vld [vmem:[%s7 + $0x4b0] sm:$0xff]
          %v1576 = vld [vmem:[%s7 + $0x4b8] sm:$0xff]
          %v1577 = vld [vmem:[%s7 + $0x4c0] sm:$0xff]
          %v1578 = vld [vmem:[%s7 + $0x4c8] sm:$0xff]
          %v1579 = vld [vmem:[%s7 + $0x4d0] sm:$0xff]
          %v1580 = vld [vmem:[%s7 + $0x4d8] sm:$0xff]
          %v1581 = vld [vmem:[%s7 + $0x4e0] sm:$0xff]
          %v1582 = vld [vmem:[%s7 + $0x4e8] sm:$0xff]
          %v1583 = vld [vmem:[%s7 + $0x4f0] sm:$0xff]
          %v1584 = vld [vmem:[%s7 + $0x4f8] sm:$0xff]
          %v1585 = vld [vmem:[%s7 + $0x500] sm:$0xff]
          %v1586 = vld [vmem:[%s7 + $0x508] sm:$0xff]
          %v1587 = vld [vmem:[%s7 + $0x510] sm:$0xff]
          %v1588 = vld [vmem:[%s7 + $0x518] sm:$0xff]
          %v1589 = vld [vmem:[%s7 + $0x520] sm:$0xff]
          %v1590 = vld [vmem:[%s7 + $0x528] sm:$0xff]
          %v1591 = vld [vmem:[%s7 + $0x530] sm:$0xff]
          %v1592 = vld [vmem:[%s7 + $0x538] sm:$0xff]
          %v1593 = vld [vmem:[%s7 + $0x540] sm:$0xff]
          %v1594 = vld [vmem:[%s7 + $0x548] sm:$0xff]
          %v1595 = vld [vmem:[%s7 + $0x550] sm:$0xff]
          %v1596 = vld [vmem:[%s7 + $0x558] sm:$0xff]
          %v1597 = vld [vmem:[%s7 + $0x560] sm:$0xff]
          %v1598 = vld [vmem:[%s7 + $0x568] sm:$0xff]
          %v1599 = vld [vmem:[%s7 + $0x570] sm:$0xff]
          %v1600 = vld [vmem:[%s7 + $0x578] sm:$0xff]
          %v1601 = vld [vmem:[%s7 + $0x580] sm:$0xff]
          %v1602 = vld [vmem:[%s7 + $0x588] sm:$0xff]
          %v1603 = vld [vmem:[%s7 + $0x590] sm:$0xff]
          %v1604 = vld [vmem:[%s7 + $0x598] sm:$0xff]
          %v1605 = vld [vmem:[%s7 + $0x5a0] sm:$0xff]
          %v1606 = vld [vmem:[%s7 + $0x5a8] sm:$0xff]
          %v1607 = vld [vmem:[%s7 + $0x5b0] sm:$0xff]
          %v1608 = vld [vmem:[%s7 + $0x5b8] sm:$0xff]
          %v1609 = vld [vmem:[%s7 + $0x5c0] sm:$0xff]
          %v1610 = vld [vmem:[%s7 + $0x5c8] sm:$0xff]
          %v1611 = vld [vmem:[%s7 + $0x5d0] sm:$0xff]
          %v1612 = vld [vmem:[%s7 + $0x5d8] sm:$0xff]
          %v1613 = vld [vmem:[%s7 + $0x5e0] sm:$0xff]
          %v1614 = vld [vmem:[%s7 + $0x5e8] sm:$0xff]
          %v1615 = vld [vmem:[%s7 + $0x5f0] sm:$0xff]
          %v1616 = vld [vmem:[%s7 + $0x5f8] sm:$0xff]
          %v1617 = vld [vmem:[%s7 + $0x600] sm:$0xff]
          %v1618 = vld [vmem:[%s7 + $0x608] sm:$0xff]
          %v1619 = vld [vmem:[%s7 + $0x610] sm:$0xff]
          %v1620 = vld [vmem:[%s7 + $0x618] sm:$0xff]
          %v1621 = vld [vmem:[%s7 + $0x620] sm:$0xff]
          %v1622 = vld [vmem:[%s7 + $0x628] sm:$0xff]
          %v1623 = vld [vmem:[%s7 + $0x630] sm:$0xff]
          %v1624 = vld [vmem:[%s7 + $0x638] sm:$0xff]
          %v1625 = vld [vmem:[%s7 + $0x640] sm:$0xff]
          %v1626 = vld [vmem:[%s7 + $0x648] sm:$0xff]
          %v1627 = vld [vmem:[%s7 + $0x650] sm:$0xff]
          %v1628 = vld [vmem:[%s7 + $0x658] sm:$0xff]
          %v1629 = vld [vmem:[%s7 + $0x660] sm:$0xff]
          %v1630 = vld [vmem:[%s7 + $0x668] sm:$0xff]
          %v1631 = vld [vmem:[%s7 + $0x670] sm:$0xff]
          %v1632 = vld [vmem:[%s7 + $0x678] sm:$0xff]
          %v1633 = vld [vmem:[%s7 + $0x680] sm:$0xff]
          %v1634 = vld [vmem:[%s7 + $0x688] sm:$0xff]
          %v1635 = vld [vmem:[%s7 + $0x690] sm:$0xff]
          %v1636 = vld [vmem:[%s7 + $0x698] sm:$0xff]
          %v1637 = vld [vmem:[%s7 + $0x6a0] sm:$0xff]
          %v1638 = vld [vmem:[%s7 + $0x6a8] sm:$0xff]
          %v1639 = vld [vmem:[%s7 + $0x6b0] sm:$0xff]
          %v1640 = vld [vmem:[%s7 + $0x6b8] sm:$0xff]
          %v1641 = vld [vmem:[%s7 + $0x6c0] sm:$0xff]
          %v1642 = vld [vmem:[%s7 + $0x6c8] sm:$0xff]
          %v1643 = vld [vmem:[%s7 + $0x6d0] sm:$0xff]
          %v1644 = vld [vmem:[%s7 + $0x6d8] sm:$0xff]
          %v1645 = vld [vmem:[%s7 + $0x6e0] sm:$0xff]
          %v1646 = vld [vmem:[%s7 + $0x6e8] sm:$0xff]
          %v1647 = vld [vmem:[%s7 + $0x6f0] sm:$0xff]
          %v1648 = vld [vmem:[%s7 + $0x6f8] sm:$0xff]
          %v1649 = vld [vmem:[%s7 + $0x700] sm:$0xff]
          %v1650 = vld [vmem:[%s7 + $0x708] sm:$0xff]
          %v1651 = vld [vmem:[%s7 + $0x710] sm:$0xff]
          %v1652 = vld [vmem:[%s7 + $0x718] sm:$0xff]
          %v1653 = vld [vmem:[%s7 + $0x720] sm:$0xff]
          %v1654 = vld [vmem:[%s7 + $0x728] sm:$0xff]
          %v1655 = vld [vmem:[%s7 + $0x730] sm:$0xff]
          %v1656 = vld [vmem:[%s7 + $0x738] sm:$0xff]
          %v1657 = vld [vmem:[%s7 + $0x740] sm:$0xff]
          %v1658 = vld [vmem:[%s7 + $0x748] sm:$0xff]
          %v1659 = vld [vmem:[%s7 + $0x750] sm:$0xff]
          %v1660 = vld [vmem:[%s7 + $0x758] sm:$0xff]
          %v1661 = vld [vmem:[%s7 + $0x760] sm:$0xff]
          %v1662 = vld [vmem:[%s7 + $0x768] sm:$0xff]
          %v1663 = vld [vmem:[%s7 + $0x770] sm:$0xff]
          %v1664 = vld [vmem:[%s7 + $0x778] sm:$0xff]
          %v1665 = vld [vmem:[%s7 + $0x780] sm:$0xff]
          %v1666 = vld [vmem:[%s7 + $0x788] sm:$0xff]
          %v1667 = vld [vmem:[%s7 + $0x790] sm:$0xff]
          %v1668 = vld [vmem:[%s7 + $0x798] sm:$0xff]
          %v1669 = vld [vmem:[%s7 + $0x7a0] sm:$0xff]
          %v1670 = vld [vmem:[%s7 + $0x7a8] sm:$0xff]
          %v1671 = vld [vmem:[%s7 + $0x7b0] sm:$0xff]
          %v1672 = vld [vmem:[%s7 + $0x7b8] sm:$0xff]
          %v1673 = vld [vmem:[%s7 + $0x7c0] sm:$0xff]
          %v1674 = vld [vmem:[%s7 + $0x7c8] sm:$0xff]
          %v1675 = vld [vmem:[%s7 + $0x7d0] sm:$0xff]
          %v1676 = vld [vmem:[%s7 + $0x7d8] sm:$0xff]
          %v1677 = vld [vmem:[%s7 + $0x7e0] sm:$0xff]
          %v1678 = vld [vmem:[%s7 + $0x7e8] sm:$0xff]
          %v1679 = vld [vmem:[%s7 + $0x7f0] sm:$0xff]
          %v1680 = vld [vmem:[%s7 + $0x7f8] sm:$0xff]
          %v1681 = vld [vmem:[%s8] sm:$0xf]
          %v1938 = vunpack.c.l.b16 %v1425
          %v1939 = vunpack.c.h.b16 %v1425
          %v1940 = vunpack.c.l.b16 %v1426
          %v1941 = vunpack.c.h.b16 %v1426
          %v1942 = vunpack.c.l.b16 %v1427
          %v1943 = vunpack.c.h.b16 %v1427
          %v1944 = vunpack.c.l.b16 %v1428
          %v1945 = vunpack.c.h.b16 %v1428
          %v1946 = vunpack.c.l.b16 %v1429
          %v1947 = vunpack.c.h.b16 %v1429
          %v1948 = vunpack.c.l.b16 %v1430
          %v1949 = vunpack.c.h.b16 %v1430
          %v1950 = vunpack.c.l.b16 %v1431
          %v1951 = vunpack.c.h.b16 %v1431
          %v1952 = vunpack.c.l.b16 %v1432
          %v1953 = vunpack.c.h.b16 %v1432
          %v1954 = vunpack.c.l.b16 %v1433
          %v1955 = vunpack.c.h.b16 %v1433
          %v1956 = vunpack.c.l.b16 %v1434
          %v1957 = vunpack.c.h.b16 %v1434
          %v1958 = vunpack.c.l.b16 %v1435
          %v1959 = vunpack.c.h.b16 %v1435
          %v1960 = vunpack.c.l.b16 %v1436
          %v1961 = vunpack.c.h.b16 %v1436
          %v1962 = vunpack.c.l.b16 %v1437
          %v1963 = vunpack.c.h.b16 %v1437
          %v1964 = vunpack.c.l.b16 %v1438
          %v1965 = vunpack.c.h.b16 %v1438
          %v1966 = vunpack.c.l.b16 %v1439
          %v1967 = vunpack.c.h.b16 %v1439
          %v1968 = vunpack.c.l.b16 %v1440
          %v1969 = vunpack.c.h.b16 %v1440
          %v1970 = vunpack.c.l.b16 %v1441
          %v1971 = vunpack.c.h.b16 %v1441
          %v1972 = vunpack.c.l.b16 %v1442
          %v1973 = vunpack.c.h.b16 %v1442
          %v1974 = vunpack.c.l.b16 %v1443
          %v1975 = vunpack.c.h.b16 %v1443
          %v1976 = vunpack.c.l.b16 %v1444
          %v1977 = vunpack.c.h.b16 %v1444
          %v1978 = vunpack.c.l.b16 %v1445
          %v1979 = vunpack.c.h.b16 %v1445
          %v1980 = vunpack.c.l.b16 %v1446
          %v1981 = vunpack.c.h.b16 %v1446
          %v1982 = vunpack.c.l.b16 %v1447
          %v1983 = vunpack.c.h.b16 %v1447
          %v1984 = vunpack.c.l.b16 %v1448
          %v1985 = vunpack.c.h.b16 %v1448
          %v1986 = vunpack.c.l.b16 %v1449
          %v1987 = vunpack.c.h.b16 %v1449
          %v1988 = vunpack.c.l.b16 %v1450
          %v1989 = vunpack.c.h.b16 %v1450
          %v1990 = vunpack.c.l.b16 %v1451
          %v1991 = vunpack.c.h.b16 %v1451
          %v1992 = vunpack.c.l.b16 %v1452
          %v1993 = vunpack.c.h.b16 %v1452
          %v1994 = vunpack.c.l.b16 %v1453
          %v1995 = vunpack.c.h.b16 %v1453
          %v1996 = vunpack.c.l.b16 %v1454
          %v1997 = vunpack.c.h.b16 %v1454
          %v1998 = vunpack.c.l.b16 %v1455
          %v1999 = vunpack.c.h.b16 %v1455
          %v2000 = vunpack.c.l.b16 %v1456
          %v2001 = vunpack.c.h.b16 %v1456
          %v2002 = vunpack.c.l.b16 %v1457
          %v2003 = vunpack.c.h.b16 %v1457
          %v2004 = vunpack.c.l.b16 %v1458
          %v2005 = vunpack.c.h.b16 %v1458
          %v2006 = vunpack.c.l.b16 %v1459
          %v2007 = vunpack.c.h.b16 %v1459
          %v2008 = vunpack.c.l.b16 %v1460
          %v2009 = vunpack.c.h.b16 %v1460
          %v2010 = vunpack.c.l.b16 %v1461
          %v2011 = vunpack.c.h.b16 %v1461
          %v2012 = vunpack.c.l.b16 %v1462
          %v2013 = vunpack.c.h.b16 %v1462
          %v2014 = vunpack.c.l.b16 %v1463
          %v2015 = vunpack.c.h.b16 %v1463
          %v2016 = vunpack.c.l.b16 %v1464
          %v2017 = vunpack.c.h.b16 %v1464
          %v2018 = vunpack.c.l.b16 %v1465
          %v2019 = vunpack.c.h.b16 %v1465
          %v2020 = vunpack.c.l.b16 %v1466
          %v2021 = vunpack.c.h.b16 %v1466
          %v2022 = vunpack.c.l.b16 %v1467
          %v2023 = vunpack.c.h.b16 %v1467
          %v2024 = vunpack.c.l.b16 %v1468
          %v2025 = vunpack.c.h.b16 %v1468
          %v2026 = vunpack.c.l.b16 %v1469
          %v2027 = vunpack.c.h.b16 %v1469
          %v2028 = vunpack.c.l.b16 %v1470
          %v2029 = vunpack.c.h.b16 %v1470
          %v2030 = vunpack.c.l.b16 %v1471
          %v2031 = vunpack.c.h.b16 %v1471
          %v2032 = vunpack.c.l.b16 %v1472
          %v2033 = vunpack.c.h.b16 %v1472
          %v2034 = vunpack.c.l.b16 %v1473
          %v2035 = vunpack.c.h.b16 %v1473
          %v2036 = vunpack.c.l.b16 %v1474
          %v2037 = vunpack.c.h.b16 %v1474
          %v2038 = vunpack.c.l.b16 %v1475
          %v2039 = vunpack.c.h.b16 %v1475
          %v2040 = vunpack.c.l.b16 %v1476
          %v2041 = vunpack.c.h.b16 %v1476
          %v2042 = vunpack.c.l.b16 %v1477
          %v2043 = vunpack.c.h.b16 %v1477
          %v2044 = vunpack.c.l.b16 %v1478
          %v2045 = vunpack.c.h.b16 %v1478
          %v2046 = vunpack.c.l.b16 %v1479
          %v2047 = vunpack.c.h.b16 %v1479
          %v2048 = vunpack.c.l.b16 %v1480
          %v2049 = vunpack.c.h.b16 %v1480
          %v2050 = vunpack.c.l.b16 %v1481
          %v2051 = vunpack.c.h.b16 %v1481
          %v2052 = vunpack.c.l.b16 %v1482
          %v2053 = vunpack.c.h.b16 %v1482
          %v2054 = vunpack.c.l.b16 %v1483
          %v2055 = vunpack.c.h.b16 %v1483
          %v2056 = vunpack.c.l.b16 %v1484
          %v2057 = vunpack.c.h.b16 %v1484
          %v2058 = vunpack.c.l.b16 %v1485
          %v2059 = vunpack.c.h.b16 %v1485
          %v2060 = vunpack.c.l.b16 %v1486
          %v2061 = vunpack.c.h.b16 %v1486
          %v2062 = vunpack.c.l.b16 %v1487
          %v2063 = vunpack.c.h.b16 %v1487
          %v2064 = vunpack.c.l.b16 %v1488
          %v2065 = vunpack.c.h.b16 %v1488
          %v2066 = vunpack.c.l.b16 %v1489
          %v2067 = vunpack.c.h.b16 %v1489
          %v2068 = vunpack.c.l.b16 %v1490
          %v2069 = vunpack.c.h.b16 %v1490
          %v2070 = vunpack.c.l.b16 %v1491
          %v2071 = vunpack.c.h.b16 %v1491
          %v2072 = vunpack.c.l.b16 %v1492
          %v2073 = vunpack.c.h.b16 %v1492
          %v2074 = vunpack.c.l.b16 %v1493
          %v2075 = vunpack.c.h.b16 %v1493
          %v2076 = vunpack.c.l.b16 %v1494
          %v2077 = vunpack.c.h.b16 %v1494
          %v2078 = vunpack.c.l.b16 %v1495
          %v2079 = vunpack.c.h.b16 %v1495
          %v2080 = vunpack.c.l.b16 %v1496
          %v2081 = vunpack.c.h.b16 %v1496
          %v2082 = vunpack.c.l.b16 %v1497
          %v2083 = vunpack.c.h.b16 %v1497
          %v2084 = vunpack.c.l.b16 %v1498
          %v2085 = vunpack.c.h.b16 %v1498
          %v2086 = vunpack.c.l.b16 %v1499
          %v2087 = vunpack.c.h.b16 %v1499
          %v2088 = vunpack.c.l.b16 %v1500
          %v2089 = vunpack.c.h.b16 %v1500
          %v2090 = vunpack.c.l.b16 %v1501
          %v2091 = vunpack.c.h.b16 %v1501
          %v2092 = vunpack.c.l.b16 %v1502
          %v2093 = vunpack.c.h.b16 %v1502
          %v2094 = vunpack.c.l.b16 %v1503
          %v2095 = vunpack.c.h.b16 %v1503
          %v2096 = vunpack.c.l.b16 %v1504
          %v2097 = vunpack.c.h.b16 %v1504
          %v2098 = vunpack.c.l.b16 %v1505
          %v2099 = vunpack.c.h.b16 %v1505
          %v2100 = vunpack.c.l.b16 %v1506
          %v2101 = vunpack.c.h.b16 %v1506
          %v2102 = vunpack.c.l.b16 %v1507
          %v2103 = vunpack.c.h.b16 %v1507
          %v2104 = vunpack.c.l.b16 %v1508
          %v2105 = vunpack.c.h.b16 %v1508
          %v2106 = vunpack.c.l.b16 %v1509
          %v2107 = vunpack.c.h.b16 %v1509
          %v2108 = vunpack.c.l.b16 %v1510
          %v2109 = vunpack.c.h.b16 %v1510
          %v2110 = vunpack.c.l.b16 %v1511
          %v2111 = vunpack.c.h.b16 %v1511
          %v2112 = vunpack.c.l.b16 %v1512
          %v2113 = vunpack.c.h.b16 %v1512
          %v2114 = vunpack.c.l.b16 %v1513
          %v2115 = vunpack.c.h.b16 %v1513
          %v2116 = vunpack.c.l.b16 %v1514
          %v2117 = vunpack.c.h.b16 %v1514
          %v2118 = vunpack.c.l.b16 %v1515
          %v2119 = vunpack.c.h.b16 %v1515
          %v2120 = vunpack.c.l.b16 %v1516
          %v2121 = vunpack.c.h.b16 %v1516
          %v2122 = vunpack.c.l.b16 %v1517
          %v2123 = vunpack.c.h.b16 %v1517
          %v2124 = vunpack.c.l.b16 %v1518
          %v2125 = vunpack.c.h.b16 %v1518
          %v2126 = vunpack.c.l.b16 %v1519
          %v2127 = vunpack.c.h.b16 %v1519
          %v2128 = vunpack.c.l.b16 %v1520
          %v2129 = vunpack.c.h.b16 %v1520
          %v2130 = vunpack.c.l.b16 %v1521
          %v2131 = vunpack.c.h.b16 %v1521
          %v2132 = vunpack.c.l.b16 %v1522
          %v2133 = vunpack.c.h.b16 %v1522
          %v2134 = vunpack.c.l.b16 %v1523
          %v2135 = vunpack.c.h.b16 %v1523
          %v2136 = vunpack.c.l.b16 %v1524
          %v2137 = vunpack.c.h.b16 %v1524
          %v2138 = vunpack.c.l.b16 %v1525
          %v2139 = vunpack.c.h.b16 %v1525
          %v2140 = vunpack.c.l.b16 %v1526
          %v2141 = vunpack.c.h.b16 %v1526
          %v2142 = vunpack.c.l.b16 %v1527
          %v2143 = vunpack.c.h.b16 %v1527
          %v2144 = vunpack.c.l.b16 %v1528
          %v2145 = vunpack.c.h.b16 %v1528
          %v2146 = vunpack.c.l.b16 %v1529
          %v2147 = vunpack.c.h.b16 %v1529
          %v2148 = vunpack.c.l.b16 %v1530
          %v2149 = vunpack.c.h.b16 %v1530
          %v2150 = vunpack.c.l.b16 %v1531
          %v2151 = vunpack.c.h.b16 %v1531
          %v2152 = vunpack.c.l.b16 %v1532
          %v2153 = vunpack.c.h.b16 %v1532
          %v2154 = vunpack.c.l.b16 %v1533
          %v2155 = vunpack.c.h.b16 %v1533
          %v2156 = vunpack.c.l.b16 %v1534
          %v2157 = vunpack.c.h.b16 %v1534
          %v2158 = vunpack.c.l.b16 %v1535
          %v2159 = vunpack.c.h.b16 %v1535
          %v2160 = vunpack.c.l.b16 %v1536
          %v2161 = vunpack.c.h.b16 %v1536
          %v2162 = vunpack.c.l.b16 %v1537
          %v2163 = vunpack.c.h.b16 %v1537
          %v2164 = vunpack.c.l.b16 %v1538
          %v2165 = vunpack.c.h.b16 %v1538
          %v2166 = vunpack.c.l.b16 %v1539
          %v2167 = vunpack.c.h.b16 %v1539
          %v2168 = vunpack.c.l.b16 %v1540
          %v2169 = vunpack.c.h.b16 %v1540
          %v2170 = vunpack.c.l.b16 %v1541
          %v2171 = vunpack.c.h.b16 %v1541
          %v2172 = vunpack.c.l.b16 %v1542
          %v2173 = vunpack.c.h.b16 %v1542
          %v2174 = vunpack.c.l.b16 %v1543
          %v2175 = vunpack.c.h.b16 %v1543
          %v2176 = vunpack.c.l.b16 %v1544
          %v2177 = vunpack.c.h.b16 %v1544
          %v2178 = vunpack.c.l.b16 %v1545
          %v2179 = vunpack.c.h.b16 %v1545
          %v2180 = vunpack.c.l.b16 %v1546
          %v2181 = vunpack.c.h.b16 %v1546
          %v2182 = vunpack.c.l.b16 %v1547
          %v2183 = vunpack.c.h.b16 %v1547
          %v2184 = vunpack.c.l.b16 %v1548
          %v2185 = vunpack.c.h.b16 %v1548
          %v2186 = vunpack.c.l.b16 %v1549
          %v2187 = vunpack.c.h.b16 %v1549
          %v2188 = vunpack.c.l.b16 %v1550
          %v2189 = vunpack.c.h.b16 %v1550
          %v2190 = vunpack.c.l.b16 %v1551
          %v2191 = vunpack.c.h.b16 %v1551
          %v2192 = vunpack.c.l.b16 %v1552
          %v2193 = vunpack.c.h.b16 %v1552
          %v2194 = vunpack.c.l.b16 %v1553
          %v2195 = vunpack.c.h.b16 %v1553
          %v2196 = vunpack.c.l.b16 %v1554
          %v2197 = vunpack.c.h.b16 %v1554
          %v2198 = vunpack.c.l.b16 %v1555
          %v2199 = vunpack.c.h.b16 %v1555
          %v2200 = vunpack.c.l.b16 %v1556
          %v2201 = vunpack.c.h.b16 %v1556
          %v2202 = vunpack.c.l.b16 %v1557
          %v2203 = vunpack.c.h.b16 %v1557
          %v2204 = vunpack.c.l.b16 %v1558
          %v2205 = vunpack.c.h.b16 %v1558
          %v2206 = vunpack.c.l.b16 %v1559
          %v2207 = vunpack.c.h.b16 %v1559
          %v2208 = vunpack.c.l.b16 %v1560
          %v2209 = vunpack.c.h.b16 %v1560
          %v2210 = vunpack.c.l.b16 %v1561
          %v2211 = vunpack.c.h.b16 %v1561
          %v2212 = vunpack.c.l.b16 %v1562
          %v2213 = vunpack.c.h.b16 %v1562
          %v2214 = vunpack.c.l.b16 %v1563
          %v2215 = vunpack.c.h.b16 %v1563
          %v2216 = vunpack.c.l.b16 %v1564
          %v2217 = vunpack.c.h.b16 %v1564
          %v2218 = vunpack.c.l.b16 %v1565
          %v2219 = vunpack.c.h.b16 %v1565
          %v2220 = vunpack.c.l.b16 %v1566
          %v2221 = vunpack.c.h.b16 %v1566
          %v2222 = vunpack.c.l.b16 %v1567
          %v2223 = vunpack.c.h.b16 %v1567
          %v2224 = vunpack.c.l.b16 %v1568
          %v2225 = vunpack.c.h.b16 %v1568
          %v2226 = vunpack.c.l.b16 %v1569
          %v2227 = vunpack.c.h.b16 %v1569
          %v2228 = vunpack.c.l.b16 %v1570
          %v2229 = vunpack.c.h.b16 %v1570
          %v2230 = vunpack.c.l.b16 %v1571
          %v2231 = vunpack.c.h.b16 %v1571
          %v2232 = vunpack.c.l.b16 %v1572
          %v2233 = vunpack.c.h.b16 %v1572
          %v2234 = vunpack.c.l.b16 %v1573
          %v2235 = vunpack.c.h.b16 %v1573
          %v2236 = vunpack.c.l.b16 %v1574
          %v2237 = vunpack.c.h.b16 %v1574
          %v2238 = vunpack.c.l.b16 %v1575
          %v2239 = vunpack.c.h.b16 %v1575
          %v2240 = vunpack.c.l.b16 %v1576
          %v2241 = vunpack.c.h.b16 %v1576
          %v2242 = vunpack.c.l.b16 %v1577
          %v2243 = vunpack.c.h.b16 %v1577
          %v2244 = vunpack.c.l.b16 %v1578
          %v2245 = vunpack.c.h.b16 %v1578
          %v2246 = vunpack.c.l.b16 %v1579
          %v2247 = vunpack.c.h.b16 %v1579
          %v2248 = vunpack.c.l.b16 %v1580
          %v2249 = vunpack.c.h.b16 %v1580
          %v2250 = vunpack.c.l.b16 %v1581
          %v2251 = vunpack.c.h.b16 %v1581
          %v2252 = vunpack.c.l.b16 %v1582
          %v2253 = vunpack.c.h.b16 %v1582
          %v2254 = vunpack.c.l.b16 %v1583
          %v2255 = vunpack.c.h.b16 %v1583
          %v2256 = vunpack.c.l.b16 %v1584
          %v2257 = vunpack.c.h.b16 %v1584
          %v2258 = vunpack.c.l.b16 %v1585
          %v2259 = vunpack.c.h.b16 %v1585
          %v2260 = vunpack.c.l.b16 %v1586
          %v2261 = vunpack.c.h.b16 %v1586
          %v2262 = vunpack.c.l.b16 %v1587
          %v2263 = vunpack.c.h.b16 %v1587
          %v2264 = vunpack.c.l.b16 %v1588
          %v2265 = vunpack.c.h.b16 %v1588
          %v2266 = vunpack.c.l.b16 %v1589
          %v2267 = vunpack.c.h.b16 %v1589
          %v2268 = vunpack.c.l.b16 %v1590
          %v2269 = vunpack.c.h.b16 %v1590
          %v2270 = vunpack.c.l.b16 %v1591
          %v2271 = vunpack.c.h.b16 %v1591
          %v2272 = vunpack.c.l.b16 %v1592
          %v2273 = vunpack.c.h.b16 %v1592
          %v2274 = vunpack.c.l.b16 %v1593
          %v2275 = vunpack.c.h.b16 %v1593
          %v2276 = vunpack.c.l.b16 %v1594
          %v2277 = vunpack.c.h.b16 %v1594
          %v2278 = vunpack.c.l.b16 %v1595
          %v2279 = vunpack.c.h.b16 %v1595
          %v2280 = vunpack.c.l.b16 %v1596
          %v2281 = vunpack.c.h.b16 %v1596
          %v2282 = vunpack.c.l.b16 %v1597
          %v2283 = vunpack.c.h.b16 %v1597
          %v2284 = vunpack.c.l.b16 %v1598
          %v2285 = vunpack.c.h.b16 %v1598
          %v2286 = vunpack.c.l.b16 %v1599
          %v2287 = vunpack.c.h.b16 %v1599
          %v2288 = vunpack.c.l.b16 %v1600
          %v2289 = vunpack.c.h.b16 %v1600
          %v2290 = vunpack.c.l.b16 %v1601
          %v2291 = vunpack.c.h.b16 %v1601
          %v2292 = vunpack.c.l.b16 %v1602
          %v2293 = vunpack.c.h.b16 %v1602
          %v2294 = vunpack.c.l.b16 %v1603
          %v2295 = vunpack.c.h.b16 %v1603
          %v2296 = vunpack.c.l.b16 %v1604
          %v2297 = vunpack.c.h.b16 %v1604
          %v2298 = vunpack.c.l.b16 %v1605
          %v2299 = vunpack.c.h.b16 %v1605
          %v2300 = vunpack.c.l.b16 %v1606
          %v2301 = vunpack.c.h.b16 %v1606
          %v2302 = vunpack.c.l.b16 %v1607
          %v2303 = vunpack.c.h.b16 %v1607
          %v2304 = vunpack.c.l.b16 %v1608
          %v2305 = vunpack.c.h.b16 %v1608
          %v2306 = vunpack.c.l.b16 %v1609
          %v2307 = vunpack.c.h.b16 %v1609
          %v2308 = vunpack.c.l.b16 %v1610
          %v2309 = vunpack.c.h.b16 %v1610
          %v2310 = vunpack.c.l.b16 %v1611
          %v2311 = vunpack.c.h.b16 %v1611
          %v2312 = vunpack.c.l.b16 %v1612
          %v2313 = vunpack.c.h.b16 %v1612
          %v2314 = vunpack.c.l.b16 %v1613
          %v2315 = vunpack.c.h.b16 %v1613
          %v2316 = vunpack.c.l.b16 %v1614
          %v2317 = vunpack.c.h.b16 %v1614
          %v2318 = vunpack.c.l.b16 %v1615
          %v2319 = vunpack.c.h.b16 %v1615
          %v2320 = vunpack.c.l.b16 %v1616
          %v2321 = vunpack.c.h.b16 %v1616
          %v2322 = vunpack.c.l.b16 %v1617
          %v2323 = vunpack.c.h.b16 %v1617
          %v2324 = vunpack.c.l.b16 %v1618
          %v2325 = vunpack.c.h.b16 %v1618
          %v2326 = vunpack.c.l.b16 %v1619
          %v2327 = vunpack.c.h.b16 %v1619
          %v2328 = vunpack.c.l.b16 %v1620
          %v2329 = vunpack.c.h.b16 %v1620
          %v2330 = vunpack.c.l.b16 %v1621
          %v2331 = vunpack.c.h.b16 %v1621
          %v2332 = vunpack.c.l.b16 %v1622
          %v2333 = vunpack.c.h.b16 %v1622
          %v2334 = vunpack.c.l.b16 %v1623
          %v2335 = vunpack.c.h.b16 %v1623
          %v2336 = vunpack.c.l.b16 %v1624
          %v2337 = vunpack.c.h.b16 %v1624
          %v2338 = vunpack.c.l.b16 %v1625
          %v2339 = vunpack.c.h.b16 %v1625
          %v2340 = vunpack.c.l.b16 %v1626
          %v2341 = vunpack.c.h.b16 %v1626
          %v2342 = vunpack.c.l.b16 %v1627
          %v2343 = vunpack.c.h.b16 %v1627
          %v2344 = vunpack.c.l.b16 %v1628
          %v2345 = vunpack.c.h.b16 %v1628
          %v2346 = vunpack.c.l.b16 %v1629
          %v2347 = vunpack.c.h.b16 %v1629
          %v2348 = vunpack.c.l.b16 %v1630
          %v2349 = vunpack.c.h.b16 %v1630
          %v2350 = vunpack.c.l.b16 %v1631
          %v2351 = vunpack.c.h.b16 %v1631
          %v2352 = vunpack.c.l.b16 %v1632
          %v2353 = vunpack.c.h.b16 %v1632
          %v2354 = vunpack.c.l.b16 %v1633
          %v2355 = vunpack.c.h.b16 %v1633
          %v2356 = vunpack.c.l.b16 %v1634
          %v2357 = vunpack.c.h.b16 %v1634
          %v2358 = vunpack.c.l.b16 %v1635
          %v2359 = vunpack.c.h.b16 %v1635
          %v2360 = vunpack.c.l.b16 %v1636
          %v2361 = vunpack.c.h.b16 %v1636
          %v2362 = vunpack.c.l.b16 %v1637
          %v2363 = vunpack.c.h.b16 %v1637
          %v2364 = vunpack.c.l.b16 %v1638
          %v2365 = vunpack.c.h.b16 %v1638
          %v2366 = vunpack.c.l.b16 %v1639
          %v2367 = vunpack.c.h.b16 %v1639
          %v2368 = vunpack.c.l.b16 %v1640
          %v2369 = vunpack.c.h.b16 %v1640
          %v2370 = vunpack.c.l.b16 %v1641
          %v2371 = vunpack.c.h.b16 %v1641
          %v2372 = vunpack.c.l.b16 %v1642
          %v2373 = vunpack.c.h.b16 %v1642
          %v2374 = vunpack.c.l.b16 %v1643
          %v2375 = vunpack.c.h.b16 %v1643
          %v2376 = vunpack.c.l.b16 %v1644
          %v2377 = vunpack.c.h.b16 %v1644
          %v2378 = vunpack.c.l.b16 %v1645
          %v2379 = vunpack.c.h.b16 %v1645
          %v2380 = vunpack.c.l.b16 %v1646
          %v2381 = vunpack.c.h.b16 %v1646
          %v2382 = vunpack.c.l.b16 %v1647
          %v2383 = vunpack.c.h.b16 %v1647
          %v2384 = vunpack.c.l.b16 %v1648
          %v2385 = vunpack.c.h.b16 %v1648
          %v2386 = vunpack.c.l.b16 %v1649
          %v2387 = vunpack.c.h.b16 %v1649
          %v2388 = vunpack.c.l.b16 %v1650
          %v2389 = vunpack.c.h.b16 %v1650
          %v2390 = vunpack.c.l.b16 %v1651
          %v2391 = vunpack.c.h.b16 %v1651
          %v2392 = vunpack.c.l.b16 %v1652
          %v2393 = vunpack.c.h.b16 %v1652
          %v2394 = vunpack.c.l.b16 %v1653
          %v2395 = vunpack.c.h.b16 %v1653
          %v2396 = vunpack.c.l.b16 %v1654
          %v2397 = vunpack.c.h.b16 %v1654
          %v2398 = vunpack.c.l.b16 %v1655
          %v2399 = vunpack.c.h.b16 %v1655
          %v2400 = vunpack.c.l.b16 %v1656
          %v2401 = vunpack.c.h.b16 %v1656
          %v2402 = vunpack.c.l.b16 %v1657
          %v2403 = vunpack.c.h.b16 %v1657
          %v2404 = vunpack.c.l.b16 %v1658
          %v2405 = vunpack.c.h.b16 %v1658
          %v2406 = vunpack.c.l.b16 %v1659
          %v2407 = vunpack.c.h.b16 %v1659
          %v2408 = vunpack.c.l.b16 %v1660
          %v2409 = vunpack.c.h.b16 %v1660
          %v2410 = vunpack.c.l.b16 %v1661
          %v2411 = vunpack.c.h.b16 %v1661
          %v2412 = vunpack.c.l.b16 %v1662
          %v2413 = vunpack.c.h.b16 %v1662
          %v2414 = vunpack.c.l.b16 %v1663
          %v2415 = vunpack.c.h.b16 %v1663
          %v2416 = vunpack.c.l.b16 %v1664
          %v2417 = vunpack.c.h.b16 %v1664
          %v2418 = vunpack.c.l.b16 %v1665
          %v2419 = vunpack.c.h.b16 %v1665
          %v2420 = vunpack.c.l.b16 %v1666
          %v2421 = vunpack.c.h.b16 %v1666
          %v2422 = vunpack.c.l.b16 %v1667
          %v2423 = vunpack.c.h.b16 %v1667
          %v2424 = vunpack.c.l.b16 %v1668
          %v2425 = vunpack.c.h.b16 %v1668
          %v2426 = vunpack.c.l.b16 %v1669
          %v2427 = vunpack.c.h.b16 %v1669
          %v2428 = vunpack.c.l.b16 %v1670
          %v2429 = vunpack.c.h.b16 %v1670
          %v2430 = vunpack.c.l.b16 %v1671
          %v2431 = vunpack.c.h.b16 %v1671
          %v2432 = vunpack.c.l.b16 %v1672
          %v2433 = vunpack.c.h.b16 %v1672
          %v2434 = vunpack.c.l.b16 %v1673
          %v2435 = vunpack.c.h.b16 %v1673
          %v2436 = vunpack.c.l.b16 %v1674
          %v2437 = vunpack.c.h.b16 %v1674
          %v2438 = vunpack.c.l.b16 %v1675
          %v2439 = vunpack.c.h.b16 %v1675
          %v2440 = vunpack.c.l.b16 %v1676
          %v2441 = vunpack.c.h.b16 %v1676
          %v2442 = vunpack.c.l.b16 %v1677
          %v2443 = vunpack.c.h.b16 %v1677
          %v2444 = vunpack.c.l.b16 %v1678
          %v2445 = vunpack.c.h.b16 %v1678
          %v2446 = vunpack.c.l.b16 %v1679
          %v2447 = vunpack.c.h.b16 %v1679
          %v2448 = vunpack.c.l.b16 %v1680
          %v2449 = vunpack.c.h.b16 %v1680
          %v2450 = vpack.c.b16 %v1942, %v1938
          %v2451 = vpack.c.b16 %v1943, %v1939
          %v2452 = vpack.c.b16 %v1944, %v1940
          %v2453 = vpack.c.b16 %v1945, %v1941
          %v2454 = vpack.c.b16 %v1950, %v1946
          %v2455 = vpack.c.b16 %v1951, %v1947
          %v2456 = vpack.c.b16 %v1952, %v1948
          %v2457 = vpack.c.b16 %v1953, %v1949
          %v2458 = vpack.c.b16 %v1958, %v1954
          %v2459 = vpack.c.b16 %v1959, %v1955
          %v2460 = vpack.c.b16 %v1960, %v1956
          %v2461 = vpack.c.b16 %v1961, %v1957
          %v2462 = vpack.c.b16 %v1966, %v1962
          %v2463 = vpack.c.b16 %v1967, %v1963
          %v2464 = vpack.c.b16 %v1968, %v1964
          %v2465 = vpack.c.b16 %v1969, %v1965
          %v2466 = vpack.c.b16 %v1974, %v1970
          %v2467 = vpack.c.b16 %v1975, %v1971
          %v2468 = vpack.c.b16 %v1976, %v1972
          %v2469 = vpack.c.b16 %v1977, %v1973
          %v2470 = vpack.c.b16 %v1982, %v1978
          %v2471 = vpack.c.b16 %v1983, %v1979
          %v2472 = vpack.c.b16 %v1984, %v1980
          %v2473 = vpack.c.b16 %v1985, %v1981
          %v2474 = vpack.c.b16 %v1990, %v1986
          %v2475 = vpack.c.b16 %v1991, %v1987
          %v2476 = vpack.c.b16 %v1992, %v1988
          %v2477 = vpack.c.b16 %v1993, %v1989
          %v2478 = vpack.c.b16 %v1998, %v1994
          %v2479 = vpack.c.b16 %v1999, %v1995
          %v2480 = vpack.c.b16 %v2000, %v1996
          %v2481 = vpack.c.b16 %v2001, %v1997
          %v2482 = vpack.c.b16 %v2006, %v2002
          %v2483 = vpack.c.b16 %v2007, %v2003
          %v2484 = vpack.c.b16 %v2008, %v2004
          %v2485 = vpack.c.b16 %v2009, %v2005
          %v2486 = vpack.c.b16 %v2014, %v2010
          %v2487 = vpack.c.b16 %v2015, %v2011
          %v2488 = vpack.c.b16 %v2016, %v2012
          %v2489 = vpack.c.b16 %v2017, %v2013
          %v2490 = vpack.c.b16 %v2022, %v2018
          %v2491 = vpack.c.b16 %v2023, %v2019
          %v2492 = vpack.c.b16 %v2024, %v2020
          %v2493 = vpack.c.b16 %v2025, %v2021
          %v2494 = vpack.c.b16 %v2030, %v2026
          %v2495 = vpack.c.b16 %v2031, %v2027
          %v2496 = vpack.c.b16 %v2032, %v2028
          %v2497 = vpack.c.b16 %v2033, %v2029
          %v2498 = vpack.c.b16 %v2038, %v2034
          %v2499 = vpack.c.b16 %v2039, %v2035
          %v2500 = vpack.c.b16 %v2040, %v2036
          %v2501 = vpack.c.b16 %v2041, %v2037
          %v2502 = vpack.c.b16 %v2046, %v2042
          %v2503 = vpack.c.b16 %v2047, %v2043
          %v2504 = vpack.c.b16 %v2048, %v2044
          %v2505 = vpack.c.b16 %v2049, %v2045
          %v2506 = vpack.c.b16 %v2054, %v2050
          %v2507 = vpack.c.b16 %v2055, %v2051
          %v2508 = vpack.c.b16 %v2056, %v2052
          %v2509 = vpack.c.b16 %v2057, %v2053
          %v2510 = vpack.c.b16 %v2062, %v2058
          %v2511 = vpack.c.b16 %v2063, %v2059
          %v2512 = vpack.c.b16 %v2064, %v2060
          %v2513 = vpack.c.b16 %v2065, %v2061
          %v2514 = vpack.c.b16 %v2070, %v2066
          %v2515 = vpack.c.b16 %v2071, %v2067
          %v2516 = vpack.c.b16 %v2072, %v2068
          %v2517 = vpack.c.b16 %v2073, %v2069
          %v2518 = vpack.c.b16 %v2078, %v2074
          %v2519 = vpack.c.b16 %v2079, %v2075
          %v2520 = vpack.c.b16 %v2080, %v2076
          %v2521 = vpack.c.b16 %v2081, %v2077
          %v2522 = vpack.c.b16 %v2086, %v2082
          %v2523 = vpack.c.b16 %v2087, %v2083
          %v2524 = vpack.c.b16 %v2088, %v2084
          %v2525 = vpack.c.b16 %v2089, %v2085
          %v2526 = vpack.c.b16 %v2094, %v2090
          %v2527 = vpack.c.b16 %v2095, %v2091
          %v2528 = vpack.c.b16 %v2096, %v2092
          %v2529 = vpack.c.b16 %v2097, %v2093
          %v2530 = vpack.c.b16 %v2102, %v2098
          %v2531 = vpack.c.b16 %v2103, %v2099
          %v2532 = vpack.c.b16 %v2104, %v2100
          %v2533 = vpack.c.b16 %v2105, %v2101
          %v2534 = vpack.c.b16 %v2110, %v2106
          %v2535 = vpack.c.b16 %v2111, %v2107
          %v2536 = vpack.c.b16 %v2112, %v2108
          %v2537 = vpack.c.b16 %v2113, %v2109
          %v2538 = vpack.c.b16 %v2118, %v2114
          %v2539 = vpack.c.b16 %v2119, %v2115
          %v2540 = vpack.c.b16 %v2120, %v2116
          %v2541 = vpack.c.b16 %v2121, %v2117
          %v2542 = vpack.c.b16 %v2126, %v2122
          %v2543 = vpack.c.b16 %v2127, %v2123
          %v2544 = vpack.c.b16 %v2128, %v2124
          %v2545 = vpack.c.b16 %v2129, %v2125
          %v2546 = vpack.c.b16 %v2134, %v2130
          %v2547 = vpack.c.b16 %v2135, %v2131
          %v2548 = vpack.c.b16 %v2136, %v2132
          %v2549 = vpack.c.b16 %v2137, %v2133
          %v2550 = vpack.c.b16 %v2142, %v2138
          %v2551 = vpack.c.b16 %v2143, %v2139
          %v2552 = vpack.c.b16 %v2144, %v2140
          %v2553 = vpack.c.b16 %v2145, %v2141
          %v2554 = vpack.c.b16 %v2150, %v2146
          %v2555 = vpack.c.b16 %v2151, %v2147
          %v2556 = vpack.c.b16 %v2152, %v2148
          %v2557 = vpack.c.b16 %v2153, %v2149
          %v2558 = vpack.c.b16 %v2158, %v2154
          %v2559 = vpack.c.b16 %v2159, %v2155
          %v2560 = vpack.c.b16 %v2160, %v2156
          %v2561 = vpack.c.b16 %v2161, %v2157
          %v2562 = vpack.c.b16 %v2166, %v2162
          %v2563 = vpack.c.b16 %v2167, %v2163
          %v2564 = vpack.c.b16 %v2168, %v2164
          %v2565 = vpack.c.b16 %v2169, %v2165
          %v2566 = vpack.c.b16 %v2174, %v2170
          %v2567 = vpack.c.b16 %v2175, %v2171
          %v2568 = vpack.c.b16 %v2176, %v2172
          %v2569 = vpack.c.b16 %v2177, %v2173
          %v2570 = vpack.c.b16 %v2182, %v2178
          %v2571 = vpack.c.b16 %v2183, %v2179
          %v2572 = vpack.c.b16 %v2184, %v2180
          %v2573 = vpack.c.b16 %v2185, %v2181
          %v2574 = vpack.c.b16 %v2190, %v2186
          %v2575 = vpack.c.b16 %v2191, %v2187
          %v2576 = vpack.c.b16 %v2192, %v2188
          %v2577 = vpack.c.b16 %v2193, %v2189
          %v2578 = vpack.c.b16 %v2198, %v2194
          %v2579 = vpack.c.b16 %v2199, %v2195
          %v2580 = vpack.c.b16 %v2200, %v2196
          %v2581 = vpack.c.b16 %v2201, %v2197
          %v2582 = vpack.c.b16 %v2206, %v2202
          %v2583 = vpack.c.b16 %v2207, %v2203
          %v2584 = vpack.c.b16 %v2208, %v2204
          %v2585 = vpack.c.b16 %v2209, %v2205
          %v2586 = vpack.c.b16 %v2214, %v2210
          %v2587 = vpack.c.b16 %v2215, %v2211
          %v2588 = vpack.c.b16 %v2216, %v2212
          %v2589 = vpack.c.b16 %v2217, %v2213
          %v2590 = vpack.c.b16 %v2222, %v2218
          %v2591 = vpack.c.b16 %v2223, %v2219
          %v2592 = vpack.c.b16 %v2224, %v2220
          %v2593 = vpack.c.b16 %v2225, %v2221
          %v2594 = vpack.c.b16 %v2230, %v2226
          %v2595 = vpack.c.b16 %v2231, %v2227
          %v2596 = vpack.c.b16 %v2232, %v2228
          %v2597 = vpack.c.b16 %v2233, %v2229
          %v2598 = vpack.c.b16 %v2238, %v2234
          %v2599 = vpack.c.b16 %v2239, %v2235
          %v2600 = vpack.c.b16 %v2240, %v2236
          %v2601 = vpack.c.b16 %v2241, %v2237
          %v2602 = vpack.c.b16 %v2246, %v2242
          %v2603 = vpack.c.b16 %v2247, %v2243
          %v2604 = vpack.c.b16 %v2248, %v2244
          %v2605 = vpack.c.b16 %v2249, %v2245
          %v2606 = vpack.c.b16 %v2254, %v2250
          %v2607 = vpack.c.b16 %v2255, %v2251
          %v2608 = vpack.c.b16 %v2256, %v2252
          %v2609 = vpack.c.b16 %v2257, %v2253
          %v2610 = vpack.c.b16 %v2262, %v2258
          %v2611 = vpack.c.b16 %v2263, %v2259
          %v2612 = vpack.c.b16 %v2264, %v2260
          %v2613 = vpack.c.b16 %v2265, %v2261
          %v2614 = vpack.c.b16 %v2270, %v2266
          %v2615 = vpack.c.b16 %v2271, %v2267
          %v2616 = vpack.c.b16 %v2272, %v2268
          %v2617 = vpack.c.b16 %v2273, %v2269
          %v2618 = vpack.c.b16 %v2278, %v2274
          %v2619 = vpack.c.b16 %v2279, %v2275
          %v2620 = vpack.c.b16 %v2280, %v2276
          %v2621 = vpack.c.b16 %v2281, %v2277
          %v2622 = vpack.c.b16 %v2286, %v2282
          %v2623 = vpack.c.b16 %v2287, %v2283
          %v2624 = vpack.c.b16 %v2288, %v2284
          %v2625 = vpack.c.b16 %v2289, %v2285
          %v2626 = vpack.c.b16 %v2294, %v2290
          %v2627 = vpack.c.b16 %v2295, %v2291
          %v2628 = vpack.c.b16 %v2296, %v2292
          %v2629 = vpack.c.b16 %v2297, %v2293
          %v2630 = vpack.c.b16 %v2302, %v2298
          %v2631 = vpack.c.b16 %v2303, %v2299
          %v2632 = vpack.c.b16 %v2304, %v2300
          %v2633 = vpack.c.b16 %v2305, %v2301
          %v2634 = vpack.c.b16 %v2310, %v2306
          %v2635 = vpack.c.b16 %v2311, %v2307
          %v2636 = vpack.c.b16 %v2312, %v2308
          %v2637 = vpack.c.b16 %v2313, %v2309
          %v2638 = vpack.c.b16 %v2318, %v2314
          %v2639 = vpack.c.b16 %v2319, %v2315
          %v2640 = vpack.c.b16 %v2320, %v2316
          %v2641 = vpack.c.b16 %v2321, %v2317
          %v2642 = vpack.c.b16 %v2326, %v2322
          %v2643 = vpack.c.b16 %v2327, %v2323
          %v2644 = vpack.c.b16 %v2328, %v2324
          %v2645 = vpack.c.b16 %v2329, %v2325
          %v2646 = vpack.c.b16 %v2334, %v2330
          %v2647 = vpack.c.b16 %v2335, %v2331
          %v2648 = vpack.c.b16 %v2336, %v2332
          %v2649 = vpack.c.b16 %v2337, %v2333
          %v2650 = vpack.c.b16 %v2342, %v2338
          %v2651 = vpack.c.b16 %v2343, %v2339
          %v2652 = vpack.c.b16 %v2344, %v2340
          %v2653 = vpack.c.b16 %v2345, %v2341
          %v2654 = vpack.c.b16 %v2350, %v2346
          %v2655 = vpack.c.b16 %v2351, %v2347
          %v2656 = vpack.c.b16 %v2352, %v2348
          %v2657 = vpack.c.b16 %v2353, %v2349
          %v2658 = vpack.c.b16 %v2358, %v2354
          %v2659 = vpack.c.b16 %v2359, %v2355
          %v2660 = vpack.c.b16 %v2360, %v2356
          %v2661 = vpack.c.b16 %v2361, %v2357
          %v2662 = vpack.c.b16 %v2366, %v2362
          %v2663 = vpack.c.b16 %v2367, %v2363
          %v2664 = vpack.c.b16 %v2368, %v2364
          %v2665 = vpack.c.b16 %v2369, %v2365
          %v2666 = vpack.c.b16 %v2374, %v2370
          %v2667 = vpack.c.b16 %v2375, %v2371
          %v2668 = vpack.c.b16 %v2376, %v2372
          %v2669 = vpack.c.b16 %v2377, %v2373
          %v2670 = vpack.c.b16 %v2382, %v2378
          %v2671 = vpack.c.b16 %v2383, %v2379
          %v2672 = vpack.c.b16 %v2384, %v2380
          %v2673 = vpack.c.b16 %v2385, %v2381
          %v2674 = vpack.c.b16 %v2390, %v2386
          %v2675 = vpack.c.b16 %v2391, %v2387
          %v2676 = vpack.c.b16 %v2392, %v2388
          %v2677 = vpack.c.b16 %v2393, %v2389
          %v2678 = vpack.c.b16 %v2398, %v2394
          %v2679 = vpack.c.b16 %v2399, %v2395
          %v2680 = vpack.c.b16 %v2400, %v2396
          %v2681 = vpack.c.b16 %v2401, %v2397
          %v2682 = vpack.c.b16 %v2406, %v2402
          %v2683 = vpack.c.b16 %v2407, %v2403
          %v2684 = vpack.c.b16 %v2408, %v2404
          %v2685 = vpack.c.b16 %v2409, %v2405
          %v2686 = vpack.c.b16 %v2414, %v2410
          %v2687 = vpack.c.b16 %v2415, %v2411
          %v2688 = vpack.c.b16 %v2416, %v2412
          %v2689 = vpack.c.b16 %v2417, %v2413
          %v2690 = vpack.c.b16 %v2422, %v2418
          %v2691 = vpack.c.b16 %v2423, %v2419
          %v2692 = vpack.c.b16 %v2424, %v2420
          %v2693 = vpack.c.b16 %v2425, %v2421
          %v2694 = vpack.c.b16 %v2430, %v2426
          %v2695 = vpack.c.b16 %v2431, %v2427
          %v2696 = vpack.c.b16 %v2432, %v2428
          %v2697 = vpack.c.b16 %v2433, %v2429
          %v2698 = vpack.c.b16 %v2438, %v2434
          %v2699 = vpack.c.b16 %v2439, %v2435
          %v2700 = vpack.c.b16 %v2440, %v2436
          %v2701 = vpack.c.b16 %v2441, %v2437
          %v2702 = vpack.c.b16 %v2446, %v2442
          %v2703 = vpack.c.b16 %v2447, %v2443
          %v2704 = vpack.c.b16 %v2448, %v2444
          %v2705 = vpack.c.b16 %v2449, %v2445
          %v2963 = vlaneseq
          %v2964 = vshrl.u32 %v2963, 7
          %v2965 = vsub.s32 0, %v2964
          %v2966 = vrot.slane %v1681, %v2965
          %v2967 = vlaneseq
          %v2968 = vshrl.u32 %v2967, 7
          %v2969 = vsub.s32 1, %v2968
          %v2970 = vrot.slane %v1681, %v2969
          %v2971 = vlaneseq
          %v2972 = vshrl.u32 %v2971, 7
          %v2973 = vsub.s32 2, %v2972
          %v2974 = vrot.slane %v1681, %v2973
          %v2975 = vlaneseq
          %v2976 = vshrl.u32 %v2975, 7
          %v2977 = vsub.s32 3, %v2976
          %v2978 = vrot.slane %v1681, %v2977
          %2983 = vmatprep.subr.bf16.mxu0 %v2479
          %2984 = vmatpush1.bf16.msra.mxu0 %v2478
          %2985 = vmatprep.subr.bf16.mxu0 %v2475
          %2986 = vmatpush1.bf16.msra.mxu0 %v2474
          %2987 = vmatprep.subr.bf16.mxu0 %v2471
          %2988 = vmatpush1.bf16.msra.mxu0 %v2470
          %2989 = vmatprep.subr.bf16.mxu0 %v2467
          %2990 = vmatpush1.bf16.msra.mxu0 %v2466
          %2991 = vmatprep.subr.bf16.mxu0 %v2463
          %2992 = vmatpush1.bf16.msra.mxu0 %v2462
          %2993 = vmatprep.subr.bf16.mxu0 %v2459
          %2994 = vmatpush1.bf16.msra.mxu0 %v2458
          %2995 = vmatprep.subr.bf16.mxu0 %v2455
          %2996 = vmatpush1.bf16.msra.mxu0 %v2454
          %2997 = vmatprep.subr.bf16.mxu0 %v2451
          %2998 = vmatpush1.bf16.msra.mxu0 %v2450
          %2999 = vmatprep.subr.bf16.mxu0 %v2511
          %3000 = vmatpush2.bf16.msra.mxu0 %v2510
          %3001 = vmatprep.subr.bf16.mxu0 %v2507
          %3002 = vmatpush2.bf16.msra.mxu0 %v2506
          %3003 = vmatprep.subr.bf16.mxu0 %v2503
          %3004 = vmatpush2.bf16.msra.mxu0 %v2502
          %3005 = vmatprep.subr.bf16.mxu0 %v2499
          %3006 = vmatpush2.bf16.msra.mxu0 %v2498
          %3007 = vmatprep.subr.bf16.mxu0 %v2495
          %3008 = vmatpush2.bf16.msra.mxu0 %v2494
          %3009 = vmatprep.subr.bf16.mxu0 %v2491
          %3010 = vmatpush2.bf16.msra.mxu0 %v2490
          %3011 = vmatprep.subr.bf16.mxu0 %v2487
          %3012 = vmatpush2.bf16.msra.mxu0 %v2486
          %3013 = vmatprep.subr.bf16.mxu0 %v2483
          %3014 = vmatpush2.bf16.msra.mxu0 %v2482
          %3015 = vmatprep.mubr.bf16.mxu0 %v1418
          %3016 = vmatmul.mubr.bf16.gmra.mxu0 %v1417
          %v3017 = vpop.f32.mrf.mxu0
          %v3018 = vadd.f32 %v2966, %v3017
          %v3019 = vpop.f32.mrf.mxu0
          %v3020 = vadd.f32 %v2970, %v3019
          %v3021 = vpop.f32.mrf.mxu0
          %v3022 = vpop.f32.mrf.mxu0
          %3023 = vdwg.mxu0
          %3024 = vmatprep.subr.bf16.mxu0 %v2543
          %3025 = vmatpush1.bf16.msra.mxu0 %v2542
          %3026 = vmatprep.subr.bf16.mxu0 %v2539
          %3027 = vmatpush1.bf16.msra.mxu0 %v2538
          %3028 = vmatprep.subr.bf16.mxu0 %v2535
          %3029 = vmatpush1.bf16.msra.mxu0 %v2534
          %3030 = vmatprep.subr.bf16.mxu0 %v2531
          %3031 = vmatpush1.bf16.msra.mxu0 %v2530
          %3032 = vmatprep.subr.bf16.mxu0 %v2527
          %3033 = vmatpush1.bf16.msra.mxu0 %v2526
          %3034 = vmatprep.subr.bf16.mxu0 %v2523
          %3035 = vmatpush1.bf16.msra.mxu0 %v2522
          %3036 = vmatprep.subr.bf16.mxu0 %v2519
          %3037 = vmatpush1.bf16.msra.mxu0 %v2518
          %3038 = vmatprep.subr.bf16.mxu0 %v2515
          %3039 = vmatpush1.bf16.msra.mxu0 %v2514
          %3040 = vmatprep.subr.bf16.mxu0 %v2575
          %3041 = vmatpush2.bf16.msra.mxu0 %v2574
          %3042 = vmatprep.subr.bf16.mxu0 %v2571
          %3043 = vmatpush2.bf16.msra.mxu0 %v2570
          %3044 = vmatprep.subr.bf16.mxu0 %v2567
          %3045 = vmatpush2.bf16.msra.mxu0 %v2566
          %3046 = vmatprep.subr.bf16.mxu0 %v2563
          %3047 = vmatpush2.bf16.msra.mxu0 %v2562
          %3048 = vmatprep.subr.bf16.mxu0 %v2559
          %3049 = vmatpush2.bf16.msra.mxu0 %v2558
          %3050 = vmatprep.subr.bf16.mxu0 %v2555
          %3051 = vmatpush2.bf16.msra.mxu0 %v2554
          %3052 = vmatprep.subr.bf16.mxu0 %v2551
          %3053 = vmatpush2.bf16.msra.mxu0 %v2550
          %3054 = vmatprep.subr.bf16.mxu0 %v2547
          %3055 = vmatpush2.bf16.msra.mxu0 %v2546
          %3056 = vmatprep.mubr.bf16.mxu0 %v1420
          %3057 = vmatmul.mubr.bf16.gmra.mxu0 %v1419
          %v3058 = vpop.f32.mrf.mxu0
          %v3059 = vadd.f32 %v3018, %v3058
          %v3060 = vpop.f32.mrf.mxu0
          %v3061 = vadd.f32 %v3020, %v3060
          %v3062 = vpop.f32.mrf.mxu0
          %v3063 = vpop.f32.mrf.mxu0
          %3064 = vdwg.mxu0
          %3065 = vmatprep.subr.bf16.mxu0 %v2607
          %3066 = vmatpush1.bf16.msra.mxu0 %v2606
          %3067 = vmatprep.subr.bf16.mxu0 %v2603
          %3068 = vmatpush1.bf16.msra.mxu0 %v2602
          %3069 = vmatprep.subr.bf16.mxu0 %v2599
          %3070 = vmatpush1.bf16.msra.mxu0 %v2598
          %3071 = vmatprep.subr.bf16.mxu0 %v2595
          %3072 = vmatpush1.bf16.msra.mxu0 %v2594
          %3073 = vmatprep.subr.bf16.mxu0 %v2591
          %3074 = vmatpush1.bf16.msra.mxu0 %v2590
          %3075 = vmatprep.subr.bf16.mxu0 %v2587
          %3076 = vmatpush1.bf16.msra.mxu0 %v2586
          %3077 = vmatprep.subr.bf16.mxu0 %v2583
          %3078 = vmatpush1.bf16.msra.mxu0 %v2582
          %3079 = vmatprep.subr.bf16.mxu0 %v2579
          %3080 = vmatpush1.bf16.msra.mxu0 %v2578
          %3081 = vmatprep.subr.bf16.mxu0 %v2639
          %3082 = vmatpush2.bf16.msra.mxu0 %v2638
          %3083 = vmatprep.subr.bf16.mxu0 %v2635
          %3084 = vmatpush2.bf16.msra.mxu0 %v2634
          %3085 = vmatprep.subr.bf16.mxu0 %v2631
          %3086 = vmatpush2.bf16.msra.mxu0 %v2630
          %3087 = vmatprep.subr.bf16.mxu0 %v2627
          %3088 = vmatpush2.bf16.msra.mxu0 %v2626
          %3089 = vmatprep.subr.bf16.mxu0 %v2623
          %3090 = vmatpush2.bf16.msra.mxu0 %v2622
          %3091 = vmatprep.subr.bf16.mxu0 %v2619
          %3092 = vmatpush2.bf16.msra.mxu0 %v2618
          %3093 = vmatprep.subr.bf16.mxu0 %v2615
          %3094 = vmatpush2.bf16.msra.mxu0 %v2614
          %3095 = vmatprep.subr.bf16.mxu0 %v2611
          %3096 = vmatpush2.bf16.msra.mxu0 %v2610
          %3097 = vmatprep.mubr.bf16.mxu0 %v1422
          %3098 = vmatmul.mubr.bf16.gmra.mxu0 %v1421
          %v3099 = vpop.f32.mrf.mxu0
          %v3100 = vadd.f32 %v3059, %v3099
          %v3101 = vpop.f32.mrf.mxu0
          %v3102 = vadd.f32 %v3061, %v3101
          %v3103 = vpop.f32.mrf.mxu0
          %v3104 = vpop.f32.mrf.mxu0
          %3105 = vdwg.mxu0
          %3106 = vmatprep.subr.bf16.mxu0 %v2671
          %3107 = vmatpush1.bf16.msra.mxu0 %v2670
          %3108 = vmatprep.subr.bf16.mxu0 %v2667
          %3109 = vmatpush1.bf16.msra.mxu0 %v2666
          %3110 = vmatprep.subr.bf16.mxu0 %v2663
          %3111 = vmatpush1.bf16.msra.mxu0 %v2662
          %3112 = vmatprep.subr.bf16.mxu0 %v2659
          %3113 = vmatpush1.bf16.msra.mxu0 %v2658
          %3114 = vmatprep.subr.bf16.mxu0 %v2655
          %3115 = vmatpush1.bf16.msra.mxu0 %v2654
          %3116 = vmatprep.subr.bf16.mxu0 %v2651
          %3117 = vmatpush1.bf16.msra.mxu0 %v2650
          %3118 = vmatprep.subr.bf16.mxu0 %v2647
          %3119 = vmatpush1.bf16.msra.mxu0 %v2646
          %3120 = vmatprep.subr.bf16.mxu0 %v2643
          %3121 = vmatpush1.bf16.msra.mxu0 %v2642
          %3122 = vmatprep.subr.bf16.mxu0 %v2703
          %3123 = vmatpush2.bf16.msra.mxu0 %v2702
          %3124 = vmatprep.subr.bf16.mxu0 %v2699
          %3125 = vmatpush2.bf16.msra.mxu0 %v2698
          %3126 = vmatprep.subr.bf16.mxu0 %v2695
          %3127 = vmatpush2.bf16.msra.mxu0 %v2694
          %3128 = vmatprep.subr.bf16.mxu0 %v2691
          %3129 = vmatpush2.bf16.msra.mxu0 %v2690
          %3130 = vmatprep.subr.bf16.mxu0 %v2687
          %3131 = vmatpush2.bf16.msra.mxu0 %v2686
          %3132 = vmatprep.subr.bf16.mxu0 %v2683
          %3133 = vmatpush2.bf16.msra.mxu0 %v2682
          %3134 = vmatprep.subr.bf16.mxu0 %v2679
          %3135 = vmatpush2.bf16.msra.mxu0 %v2678
          %3136 = vmatprep.subr.bf16.mxu0 %v2675
          %3137 = vmatpush2.bf16.msra.mxu0 %v2674
          %3138 = vmatprep.mubr.bf16.mxu0 %v1424
          %3139 = vmatmul.mubr.bf16.gmra.mxu0 %v1423
          %v3140 = vpop.f32.mrf.mxu0
          %v3141 = vadd.f32 %v3100, %v3140
          %v3142 = vpop.f32.mrf.mxu0
          %v3143 = vadd.f32 %v3102, %v3142
          %v3144 = vpop.f32.mrf.mxu0
          %v3145 = vpop.f32.mrf.mxu0
          %3146 = vdwg.mxu0
          %3147 = vmatprep.subr.bf16.mxu0 %v2481
          %3148 = vmatpush1.bf16.msra.mxu0 %v2480
          %3149 = vmatprep.subr.bf16.mxu0 %v2477
          %3150 = vmatpush1.bf16.msra.mxu0 %v2476
          %3151 = vmatprep.subr.bf16.mxu0 %v2473
          %3152 = vmatpush1.bf16.msra.mxu0 %v2472
          %3153 = vmatprep.subr.bf16.mxu0 %v2469
          %3154 = vmatpush1.bf16.msra.mxu0 %v2468
          %3155 = vmatprep.subr.bf16.mxu0 %v2465
          %3156 = vmatpush1.bf16.msra.mxu0 %v2464
          %3157 = vmatprep.subr.bf16.mxu0 %v2461
          %3158 = vmatpush1.bf16.msra.mxu0 %v2460
          %3159 = vmatprep.subr.bf16.mxu0 %v2457
          %3160 = vmatpush1.bf16.msra.mxu0 %v2456
          %3161 = vmatprep.subr.bf16.mxu0 %v2453
          %3162 = vmatpush1.bf16.msra.mxu0 %v2452
          %3163 = vmatprep.subr.bf16.mxu0 %v2513
          %3164 = vmatpush2.bf16.msra.mxu0 %v2512
          %3165 = vmatprep.subr.bf16.mxu0 %v2509
          %3166 = vmatpush2.bf16.msra.mxu0 %v2508
          %3167 = vmatprep.subr.bf16.mxu0 %v2505
          %3168 = vmatpush2.bf16.msra.mxu0 %v2504
          %3169 = vmatprep.subr.bf16.mxu0 %v2501
          %3170 = vmatpush2.bf16.msra.mxu0 %v2500
          %3171 = vmatprep.subr.bf16.mxu0 %v2497
          %3172 = vmatpush2.bf16.msra.mxu0 %v2496
          %3173 = vmatprep.subr.bf16.mxu0 %v2493
          %3174 = vmatpush2.bf16.msra.mxu0 %v2492
          %3175 = vmatprep.subr.bf16.mxu0 %v2489
          %3176 = vmatpush2.bf16.msra.mxu0 %v2488
          %3177 = vmatprep.subr.bf16.mxu0 %v2485
          %3178 = vmatpush2.bf16.msra.mxu0 %v2484
          %3179 = vmatprep.mubr.bf16.mxu0 %v1418
          %3180 = vmatmul.mubr.bf16.gmra.mxu0 %v1417
          %v3181 = vpop.f32.mrf.mxu0
          %v3182 = vadd.f32 %v2974, %v3181
          %v3183 = vpop.f32.mrf.mxu0
          %v3184 = vadd.f32 %v2978, %v3183
          %v3185 = vpop.f32.mrf.mxu0
          %v3186 = vpop.f32.mrf.mxu0
          %3187 = vdwg.mxu0
          %3188 = vmatprep.subr.bf16.mxu0 %v2545
          %3189 = vmatpush1.bf16.msra.mxu0 %v2544
          %3190 = vmatprep.subr.bf16.mxu0 %v2541
          %3191 = vmatpush1.bf16.msra.mxu0 %v2540
          %3192 = vmatprep.subr.bf16.mxu0 %v2537
          %3193 = vmatpush1.bf16.msra.mxu0 %v2536
          %3194 = vmatprep.subr.bf16.mxu0 %v2533
          %3195 = vmatpush1.bf16.msra.mxu0 %v2532
          %3196 = vmatprep.subr.bf16.mxu0 %v2529
          %3197 = vmatpush1.bf16.msra.mxu0 %v2528
          %3198 = vmatprep.subr.bf16.mxu0 %v2525
          %3199 = vmatpush1.bf16.msra.mxu0 %v2524
          %3200 = vmatprep.subr.bf16.mxu0 %v2521
          %3201 = vmatpush1.bf16.msra.mxu0 %v2520
          %3202 = vmatprep.subr.bf16.mxu0 %v2517
          %3203 = vmatpush1.bf16.msra.mxu0 %v2516
          %3204 = vmatprep.subr.bf16.mxu0 %v2577
          %3205 = vmatpush2.bf16.msra.mxu0 %v2576
          %3206 = vmatprep.subr.bf16.mxu0 %v2573
          %3207 = vmatpush2.bf16.msra.mxu0 %v2572
          %3208 = vmatprep.subr.bf16.mxu0 %v2569
          %3209 = vmatpush2.bf16.msra.mxu0 %v2568
          %3210 = vmatprep.subr.bf16.mxu0 %v2565
          %3211 = vmatpush2.bf16.msra.mxu0 %v2564
          %3212 = vmatprep.subr.bf16.mxu0 %v2561
          %3213 = vmatpush2.bf16.msra.mxu0 %v2560
          %3214 = vmatprep.subr.bf16.mxu0 %v2557
          %3215 = vmatpush2.bf16.msra.mxu0 %v2556
          %3216 = vmatprep.subr.bf16.mxu0 %v2553
          %3217 = vmatpush2.bf16.msra.mxu0 %v2552
          %3218 = vmatprep.subr.bf16.mxu0 %v2549
          %3219 = vmatpush2.bf16.msra.mxu0 %v2548
          %3220 = vmatprep.mubr.bf16.mxu0 %v1420
          %3221 = vmatmul.mubr.bf16.gmra.mxu0 %v1419
          %v3222 = vpop.f32.mrf.mxu0
          %v3223 = vadd.f32 %v3182, %v3222
          %v3224 = vpop.f32.mrf.mxu0
          %v3225 = vadd.f32 %v3184, %v3224
          %v3226 = vpop.f32.mrf.mxu0
          %v3227 = vpop.f32.mrf.mxu0
          %3228 = vdwg.mxu0
          %3229 = vmatprep.subr.bf16.mxu0 %v2609
          %3230 = vmatpush1.bf16.msra.mxu0 %v2608
          %3231 = vmatprep.subr.bf16.mxu0 %v2605
          %3232 = vmatpush1.bf16.msra.mxu0 %v2604
          %3233 = vmatprep.subr.bf16.mxu0 %v2601
          %3234 = vmatpush1.bf16.msra.mxu0 %v2600
          %3235 = vmatprep.subr.bf16.mxu0 %v2597
          %3236 = vmatpush1.bf16.msra.mxu0 %v2596
          %3237 = vmatprep.subr.bf16.mxu0 %v2593
          %3238 = vmatpush1.bf16.msra.mxu0 %v2592
          %3239 = vmatprep.subr.bf16.mxu0 %v2589
          %3240 = vmatpush1.bf16.msra.mxu0 %v2588
          %3241 = vmatprep.subr.bf16.mxu0 %v2585
          %3242 = vmatpush1.bf16.msra.mxu0 %v2584
          %3243 = vmatprep.subr.bf16.mxu0 %v2581
          %3244 = vmatpush1.bf16.msra.mxu0 %v2580
          %3245 = vmatprep.subr.bf16.mxu0 %v2641
          %3246 = vmatpush2.bf16.msra.mxu0 %v2640
          %3247 = vmatprep.subr.bf16.mxu0 %v2637
          %3248 = vmatpush2.bf16.msra.mxu0 %v2636
          %3249 = vmatprep.subr.bf16.mxu0 %v2633
          %3250 = vmatpush2.bf16.msra.mxu0 %v2632
          %3251 = vmatprep.subr.bf16.mxu0 %v2629
          %3252 = vmatpush2.bf16.msra.mxu0 %v2628
          %3253 = vmatprep.subr.bf16.mxu0 %v2625
          %3254 = vmatpush2.bf16.msra.mxu0 %v2624
          %3255 = vmatprep.subr.bf16.mxu0 %v2621
          %3256 = vmatpush2.bf16.msra.mxu0 %v2620
          %3257 = vmatprep.subr.bf16.mxu0 %v2617
          %3258 = vmatpush2.bf16.msra.mxu0 %v2616
          %3259 = vmatprep.subr.bf16.mxu0 %v2613
          %3260 = vmatpush2.bf16.msra.mxu0 %v2612
          %3261 = vmatprep.mubr.bf16.mxu0 %v1422
          %3262 = vmatmul.mubr.bf16.gmra.mxu0 %v1421
          %v3263 = vpop.f32.mrf.mxu0
          %v3264 = vadd.f32 %v3223, %v3263
          %v3265 = vpop.f32.mrf.mxu0
          %v3266 = vadd.f32 %v3225, %v3265
          %v3267 = vpop.f32.mrf.mxu0
          %v3268 = vpop.f32.mrf.mxu0
          %3269 = vdwg.mxu0
          %3270 = vmatprep.subr.bf16.mxu0 %v2673
          %3271 = vmatpush1.bf16.msra.mxu0 %v2672
          %3272 = vmatprep.subr.bf16.mxu0 %v2669
          %3273 = vmatpush1.bf16.msra.mxu0 %v2668
          %3274 = vmatprep.subr.bf16.mxu0 %v2665
          %3275 = vmatpush1.bf16.msra.mxu0 %v2664
          %3276 = vmatprep.subr.bf16.mxu0 %v2661
          %3277 = vmatpush1.bf16.msra.mxu0 %v2660
          %3278 = vmatprep.subr.bf16.mxu0 %v2657
          %3279 = vmatpush1.bf16.msra.mxu0 %v2656
          %3280 = vmatprep.subr.bf16.mxu0 %v2653
          %3281 = vmatpush1.bf16.msra.mxu0 %v2652
          %3282 = vmatprep.subr.bf16.mxu0 %v2649
          %3283 = vmatpush1.bf16.msra.mxu0 %v2648
          %3284 = vmatprep.subr.bf16.mxu0 %v2645
          %3285 = vmatpush1.bf16.msra.mxu0 %v2644
          %3286 = vmatprep.subr.bf16.mxu0 %v2705
          %3287 = vmatpush2.bf16.msra.mxu0 %v2704
          %3288 = vmatprep.subr.bf16.mxu0 %v2701
          %3289 = vmatpush2.bf16.msra.mxu0 %v2700
          %3290 = vmatprep.subr.bf16.mxu0 %v2697
          %3291 = vmatpush2.bf16.msra.mxu0 %v2696
          %3292 = vmatprep.subr.bf16.mxu0 %v2693
          %3293 = vmatpush2.bf16.msra.mxu0 %v2692
          %3294 = vmatprep.subr.bf16.mxu0 %v2689
          %3295 = vmatpush2.bf16.msra.mxu0 %v2688
          %3296 = vmatprep.subr.bf16.mxu0 %v2685
          %3297 = vmatpush2.bf16.msra.mxu0 %v2684
          %3298 = vmatprep.subr.bf16.mxu0 %v2681
          %3299 = vmatpush2.bf16.msra.mxu0 %v2680
          %3300 = vmatprep.subr.bf16.mxu0 %v2677
          %3301 = vmatpush2.bf16.msra.mxu0 %v2676
          %3302 = vmatprep.mubr.bf16.mxu0 %v1424
          %3303 = vmatmul.mubr.bf16.gmra.mxu0 %v1423
          %v3304 = vpop.f32.mrf.mxu0
          %v3305 = vadd.f32 %v3264, %v3304
          %v3306 = vpop.f32.mrf.mxu0
          %v3307 = vadd.f32 %v3266, %v3306
          %v3308 = vpop.f32.mrf.mxu0
          %v3309 = vpop.f32.mrf.mxu0
          %3310 = vdwg.mxu0
          %v3311 = vmax.f32 %v3141, 0.0
          %v3312 = vmax.f32 %v3143, 0.0
          %v3313 = vmax.f32 %v3305, 0.0
          %v3314 = vmax.f32 %v3307, 0.0
          %v3315 = vpack.c.bf16 %v3311, %v3311
          %v3316 = vpack.c.bf16 %v3312, %v3312
          %v3317 = vpack.c.bf16 %v3313, %v3313
          %v3318 = vpack.c.bf16 %v3314, %v3314
          %v3319 = vld [vmem:[%s9] sm:$0xff]
          %v3320 = vld [vmem:[%s9 + $0x8] sm:$0xff]
          %v3321 = vld [vmem:[%s9 + $0x10] sm:$0xff]
          %v3322 = vld [vmem:[%s9 + $0x18] sm:$0xff]
          %v3323 = vld [vmem:[%s9 + $0x20] sm:$0xff]
          %v3324 = vld [vmem:[%s9 + $0x28] sm:$0xff]
          %v3325 = vld [vmem:[%s9 + $0x30] sm:$0xff]
          %v3326 = vld [vmem:[%s9 + $0x38] sm:$0xff]
          %v3327 = vld [vmem:[%s9 + $0x40] sm:$0xff]
          %v3328 = vld [vmem:[%s9 + $0x48] sm:$0xff]
          %v3329 = vld [vmem:[%s9 + $0x50] sm:$0xff]
          %v3330 = vld [vmem:[%s9 + $0x58] sm:$0xff]
          %v3331 = vld [vmem:[%s9 + $0x60] sm:$0xff]
          %v3332 = vld [vmem:[%s9 + $0x68] sm:$0xff]
          %v3333 = vld [vmem:[%s9 + $0x70] sm:$0xff]
          %v3334 = vld [vmem:[%s9 + $0x78] sm:$0xff]
          %v3335 = vld [vmem:[%s9 + $0x80] sm:$0xff]
          %v3336 = vld [vmem:[%s9 + $0x88] sm:$0xff]
          %v3337 = vld [vmem:[%s9 + $0x90] sm:$0xff]
          %v3338 = vld [vmem:[%s9 + $0x98] sm:$0xff]
          %v3339 = vld [vmem:[%s9 + $0xa0] sm:$0xff]
          %v3340 = vld [vmem:[%s9 + $0xa8] sm:$0xff]
          %v3341 = vld [vmem:[%s9 + $0xb0] sm:$0xff]
          %v3342 = vld [vmem:[%s9 + $0xb8] sm:$0xff]
          %v3343 = vld [vmem:[%s9 + $0xc0] sm:$0xff]
          %v3344 = vld [vmem:[%s9 + $0xc8] sm:$0xff]
          %v3345 = vld [vmem:[%s9 + $0xd0] sm:$0xff]
          %v3346 = vld [vmem:[%s9 + $0xd8] sm:$0xff]
          %v3347 = vld [vmem:[%s9 + $0xe0] sm:$0xff]
          %v3348 = vld [vmem:[%s9 + $0xe8] sm:$0xff]
          %v3349 = vld [vmem:[%s9 + $0xf0] sm:$0xff]
          %v3350 = vld [vmem:[%s9 + $0xf8] sm:$0xff]
          %v3351 = vld [vmem:[%s9 + $0x100] sm:$0xff]
          %v3352 = vld [vmem:[%s9 + $0x108] sm:$0xff]
          %v3353 = vld [vmem:[%s9 + $0x110] sm:$0xff]
          %v3354 = vld [vmem:[%s9 + $0x118] sm:$0xff]
          %v3355 = vld [vmem:[%s9 + $0x120] sm:$0xff]
          %v3356 = vld [vmem:[%s9 + $0x128] sm:$0xff]
          %v3357 = vld [vmem:[%s9 + $0x130] sm:$0xff]
          %v3358 = vld [vmem:[%s9 + $0x138] sm:$0xff]
          %v3359 = vld [vmem:[%s9 + $0x140] sm:$0xff]
          %v3360 = vld [vmem:[%s9 + $0x148] sm:$0xff]
          %v3361 = vld [vmem:[%s9 + $0x150] sm:$0xff]
          %v3362 = vld [vmem:[%s9 + $0x158] sm:$0xff]
          %v3363 = vld [vmem:[%s9 + $0x160] sm:$0xff]
          %v3364 = vld [vmem:[%s9 + $0x168] sm:$0xff]
          %v3365 = vld [vmem:[%s9 + $0x170] sm:$0xff]
          %v3366 = vld [vmem:[%s9 + $0x178] sm:$0xff]
          %v3367 = vld [vmem:[%s9 + $0x180] sm:$0xff]
          %v3368 = vld [vmem:[%s9 + $0x188] sm:$0xff]
          %v3369 = vld [vmem:[%s9 + $0x190] sm:$0xff]
          %v3370 = vld [vmem:[%s9 + $0x198] sm:$0xff]
          %v3371 = vld [vmem:[%s9 + $0x1a0] sm:$0xff]
          %v3372 = vld [vmem:[%s9 + $0x1a8] sm:$0xff]
          %v3373 = vld [vmem:[%s9 + $0x1b0] sm:$0xff]
          %v3374 = vld [vmem:[%s9 + $0x1b8] sm:$0xff]
          %v3375 = vld [vmem:[%s9 + $0x1c0] sm:$0xff]
          %v3376 = vld [vmem:[%s9 + $0x1c8] sm:$0xff]
          %v3377 = vld [vmem:[%s9 + $0x1d0] sm:$0xff]
          %v3378 = vld [vmem:[%s9 + $0x1d8] sm:$0xff]
          %v3379 = vld [vmem:[%s9 + $0x1e0] sm:$0xff]
          %v3380 = vld [vmem:[%s9 + $0x1e8] sm:$0xff]
          %v3381 = vld [vmem:[%s9 + $0x1f0] sm:$0xff]
          %v3382 = vld [vmem:[%s9 + $0x1f8] sm:$0xff]
          %v3383 = vld [vmem:[%s10] sm:$0x3]
          %v3448 = vunpack.c.l.b16 %v3319
          %v3449 = vunpack.c.h.b16 %v3319
          %v3450 = vunpack.c.l.b16 %v3320
          %v3451 = vunpack.c.h.b16 %v3320
          %v3452 = vunpack.c.l.b16 %v3321
          %v3453 = vunpack.c.h.b16 %v3321
          %v3454 = vunpack.c.l.b16 %v3322
          %v3455 = vunpack.c.h.b16 %v3322
          %v3456 = vunpack.c.l.b16 %v3323
          %v3457 = vunpack.c.h.b16 %v3323
          %v3458 = vunpack.c.l.b16 %v3324
          %v3459 = vunpack.c.h.b16 %v3324
          %v3460 = vunpack.c.l.b16 %v3325
          %v3461 = vunpack.c.h.b16 %v3325
          %v3462 = vunpack.c.l.b16 %v3326
          %v3463 = vunpack.c.h.b16 %v3326
          %v3464 = vunpack.c.l.b16 %v3327
          %v3465 = vunpack.c.h.b16 %v3327
          %v3466 = vunpack.c.l.b16 %v3328
          %v3467 = vunpack.c.h.b16 %v3328
          %v3468 = vunpack.c.l.b16 %v3329
          %v3469 = vunpack.c.h.b16 %v3329
          %v3470 = vunpack.c.l.b16 %v3330
          %v3471 = vunpack.c.h.b16 %v3330
          %v3472 = vunpack.c.l.b16 %v3331
          %v3473 = vunpack.c.h.b16 %v3331
          %v3474 = vunpack.c.l.b16 %v3332
          %v3475 = vunpack.c.h.b16 %v3332
          %v3476 = vunpack.c.l.b16 %v3333
          %v3477 = vunpack.c.h.b16 %v3333
          %v3478 = vunpack.c.l.b16 %v3334
          %v3479 = vunpack.c.h.b16 %v3334
          %v3480 = vunpack.c.l.b16 %v3335
          %v3481 = vunpack.c.h.b16 %v3335
          %v3482 = vunpack.c.l.b16 %v3336
          %v3483 = vunpack.c.h.b16 %v3336
          %v3484 = vunpack.c.l.b16 %v3337
          %v3485 = vunpack.c.h.b16 %v3337
          %v3486 = vunpack.c.l.b16 %v3338
          %v3487 = vunpack.c.h.b16 %v3338
          %v3488 = vunpack.c.l.b16 %v3339
          %v3489 = vunpack.c.h.b16 %v3339
          %v3490 = vunpack.c.l.b16 %v3340
          %v3491 = vunpack.c.h.b16 %v3340
          %v3492 = vunpack.c.l.b16 %v3341
          %v3493 = vunpack.c.h.b16 %v3341
          %v3494 = vunpack.c.l.b16 %v3342
          %v3495 = vunpack.c.h.b16 %v3342
          %v3496 = vunpack.c.l.b16 %v3343
          %v3497 = vunpack.c.h.b16 %v3343
          %v3498 = vunpack.c.l.b16 %v3344
          %v3499 = vunpack.c.h.b16 %v3344
          %v3500 = vunpack.c.l.b16 %v3345
          %v3501 = vunpack.c.h.b16 %v3345
          %v3502 = vunpack.c.l.b16 %v3346
          %v3503 = vunpack.c.h.b16 %v3346
          %v3504 = vunpack.c.l.b16 %v3347
          %v3505 = vunpack.c.h.b16 %v3347
          %v3506 = vunpack.c.l.b16 %v3348
          %v3507 = vunpack.c.h.b16 %v3348
          %v3508 = vunpack.c.l.b16 %v3349
          %v3509 = vunpack.c.h.b16 %v3349
          %v3510 = vunpack.c.l.b16 %v3350
          %v3511 = vunpack.c.h.b16 %v3350
          %v3512 = vunpack.c.l.b16 %v3351
          %v3513 = vunpack.c.h.b16 %v3351
          %v3514 = vunpack.c.l.b16 %v3352
          %v3515 = vunpack.c.h.b16 %v3352
          %v3516 = vunpack.c.l.b16 %v3353
          %v3517 = vunpack.c.h.b16 %v3353
          %v3518 = vunpack.c.l.b16 %v3354
          %v3519 = vunpack.c.h.b16 %v3354
          %v3520 = vunpack.c.l.b16 %v3355
          %v3521 = vunpack.c.h.b16 %v3355
          %v3522 = vunpack.c.l.b16 %v3356
          %v3523 = vunpack.c.h.b16 %v3356
          %v3524 = vunpack.c.l.b16 %v3357
          %v3525 = vunpack.c.h.b16 %v3357
          %v3526 = vunpack.c.l.b16 %v3358
          %v3527 = vunpack.c.h.b16 %v3358
          %v3528 = vunpack.c.l.b16 %v3359
          %v3529 = vunpack.c.h.b16 %v3359
          %v3530 = vunpack.c.l.b16 %v3360
          %v3531 = vunpack.c.h.b16 %v3360
          %v3532 = vunpack.c.l.b16 %v3361
          %v3533 = vunpack.c.h.b16 %v3361
          %v3534 = vunpack.c.l.b16 %v3362
          %v3535 = vunpack.c.h.b16 %v3362
          %v3536 = vunpack.c.l.b16 %v3363
          %v3537 = vunpack.c.h.b16 %v3363
          %v3538 = vunpack.c.l.b16 %v3364
          %v3539 = vunpack.c.h.b16 %v3364
          %v3540 = vunpack.c.l.b16 %v3365
          %v3541 = vunpack.c.h.b16 %v3365
          %v3542 = vunpack.c.l.b16 %v3366
          %v3543 = vunpack.c.h.b16 %v3366
          %v3544 = vunpack.c.l.b16 %v3367
          %v3545 = vunpack.c.h.b16 %v3367
          %v3546 = vunpack.c.l.b16 %v3368
          %v3547 = vunpack.c.h.b16 %v3368
          %v3548 = vunpack.c.l.b16 %v3369
          %v3549 = vunpack.c.h.b16 %v3369
          %v3550 = vunpack.c.l.b16 %v3370
          %v3551 = vunpack.c.h.b16 %v3370
          %v3552 = vunpack.c.l.b16 %v3371
          %v3553 = vunpack.c.h.b16 %v3371
          %v3554 = vunpack.c.l.b16 %v3372
          %v3555 = vunpack.c.h.b16 %v3372
          %v3556 = vunpack.c.l.b16 %v3373
          %v3557 = vunpack.c.h.b16 %v3373
          %v3558 = vunpack.c.l.b16 %v3374
          %v3559 = vunpack.c.h.b16 %v3374
          %v3560 = vunpack.c.l.b16 %v3375
          %v3561 = vunpack.c.h.b16 %v3375
          %v3562 = vunpack.c.l.b16 %v3376
          %v3563 = vunpack.c.h.b16 %v3376
          %v3564 = vunpack.c.l.b16 %v3377
          %v3565 = vunpack.c.h.b16 %v3377
          %v3566 = vunpack.c.l.b16 %v3378
          %v3567 = vunpack.c.h.b16 %v3378
          %v3568 = vunpack.c.l.b16 %v3379
          %v3569 = vunpack.c.h.b16 %v3379
          %v3570 = vunpack.c.l.b16 %v3380
          %v3571 = vunpack.c.h.b16 %v3380
          %v3572 = vunpack.c.l.b16 %v3381
          %v3573 = vunpack.c.h.b16 %v3381
          %v3574 = vunpack.c.l.b16 %v3382
          %v3575 = vunpack.c.h.b16 %v3382
          %v3576 = vpack.c.b16 %v3450, %v3448
          %v3577 = vpack.c.b16 %v3451, %v3449
          %v3578 = vpack.c.b16 %v3454, %v3452
          %v3579 = vpack.c.b16 %v3455, %v3453
          %v3580 = vpack.c.b16 %v3458, %v3456
          %v3581 = vpack.c.b16 %v3459, %v3457
          %v3582 = vpack.c.b16 %v3462, %v3460
          %v3583 = vpack.c.b16 %v3463, %v3461
          %v3584 = vpack.c.b16 %v3466, %v3464
          %v3585 = vpack.c.b16 %v3467, %v3465
          %v3586 = vpack.c.b16 %v3470, %v3468
          %v3587 = vpack.c.b16 %v3471, %v3469
          %v3588 = vpack.c.b16 %v3474, %v3472
          %v3589 = vpack.c.b16 %v3475, %v3473
          %v3590 = vpack.c.b16 %v3478, %v3476
          %v3591 = vpack.c.b16 %v3479, %v3477
          %v3592 = vpack.c.b16 %v3482, %v3480
          %v3593 = vpack.c.b16 %v3483, %v3481
          %v3594 = vpack.c.b16 %v3486, %v3484
          %v3595 = vpack.c.b16 %v3487, %v3485
          %v3596 = vpack.c.b16 %v3490, %v3488
          %v3597 = vpack.c.b16 %v3491, %v3489
          %v3598 = vpack.c.b16 %v3494, %v3492
          %v3599 = vpack.c.b16 %v3495, %v3493
          %v3600 = vpack.c.b16 %v3498, %v3496
          %v3601 = vpack.c.b16 %v3499, %v3497
          %v3602 = vpack.c.b16 %v3502, %v3500
          %v3603 = vpack.c.b16 %v3503, %v3501
          %v3604 = vpack.c.b16 %v3506, %v3504
          %v3605 = vpack.c.b16 %v3507, %v3505
          %v3606 = vpack.c.b16 %v3510, %v3508
          %v3607 = vpack.c.b16 %v3511, %v3509
          %v3608 = vpack.c.b16 %v3514, %v3512
          %v3609 = vpack.c.b16 %v3515, %v3513
          %v3610 = vpack.c.b16 %v3518, %v3516
          %v3611 = vpack.c.b16 %v3519, %v3517
          %v3612 = vpack.c.b16 %v3522, %v3520
          %v3613 = vpack.c.b16 %v3523, %v3521
          %v3614 = vpack.c.b16 %v3526, %v3524
          %v3615 = vpack.c.b16 %v3527, %v3525
          %v3616 = vpack.c.b16 %v3530, %v3528
          %v3617 = vpack.c.b16 %v3531, %v3529
          %v3618 = vpack.c.b16 %v3534, %v3532
          %v3619 = vpack.c.b16 %v3535, %v3533
          %v3620 = vpack.c.b16 %v3538, %v3536
          %v3621 = vpack.c.b16 %v3539, %v3537
          %v3622 = vpack.c.b16 %v3542, %v3540
          %v3623 = vpack.c.b16 %v3543, %v3541
          %v3624 = vpack.c.b16 %v3546, %v3544
          %v3625 = vpack.c.b16 %v3547, %v3545
          %v3626 = vpack.c.b16 %v3550, %v3548
          %v3627 = vpack.c.b16 %v3551, %v3549
          %v3628 = vpack.c.b16 %v3554, %v3552
          %v3629 = vpack.c.b16 %v3555, %v3553
          %v3630 = vpack.c.b16 %v3558, %v3556
          %v3631 = vpack.c.b16 %v3559, %v3557
          %v3632 = vpack.c.b16 %v3562, %v3560
          %v3633 = vpack.c.b16 %v3563, %v3561
          %v3634 = vpack.c.b16 %v3566, %v3564
          %v3635 = vpack.c.b16 %v3567, %v3565
          %v3636 = vpack.c.b16 %v3570, %v3568
          %v3637 = vpack.c.b16 %v3571, %v3569
          %v3638 = vpack.c.b16 %v3574, %v3572
          %v3639 = vpack.c.b16 %v3575, %v3573
          %v3705 = vlaneseq
          %v3706 = vshrl.u32 %v3705, 7
          %v3707 = vsub.s32 0, %v3706
          %v3708 = vrot.slane %v3383, %v3707
          %v3709 = vlaneseq
          %v3710 = vshrl.u32 %v3709, 7
          %v3711 = vsub.s32 1, %v3710
          %v3712 = vrot.slane %v3383, %v3711
          %3715 = vmatprep.subr.bf16.mxu0 %v3591
          %3716 = vmatpush1.bf16.msra.mxu0 %v3590
          %3717 = vmatprep.subr.bf16.mxu0 %v3589
          %3718 = vmatpush1.bf16.msra.mxu0 %v3588
          %3719 = vmatprep.subr.bf16.mxu0 %v3587
          %3720 = vmatpush1.bf16.msra.mxu0 %v3586
          %3721 = vmatprep.subr.bf16.mxu0 %v3585
          %3722 = vmatpush1.bf16.msra.mxu0 %v3584
          %3723 = vmatprep.subr.bf16.mxu0 %v3583
          %3724 = vmatpush1.bf16.msra.mxu0 %v3582
          %3725 = vmatprep.subr.bf16.mxu0 %v3581
          %3726 = vmatpush1.bf16.msra.mxu0 %v3580
          %3727 = vmatprep.subr.bf16.mxu0 %v3579
          %3728 = vmatpush1.bf16.msra.mxu0 %v3578
          %3729 = vmatprep.subr.bf16.mxu0 %v3577
          %3730 = vmatpush1.bf16.msra.mxu0 %v3576
          %3731 = vmatprep.subr.bf16.mxu0 %v3607
          %3732 = vmatpush2.bf16.msra.mxu0 %v3606
          %3733 = vmatprep.subr.bf16.mxu0 %v3605
          %3734 = vmatpush2.bf16.msra.mxu0 %v3604
          %3735 = vmatprep.subr.bf16.mxu0 %v3603
          %3736 = vmatpush2.bf16.msra.mxu0 %v3602
          %3737 = vmatprep.subr.bf16.mxu0 %v3601
          %3738 = vmatpush2.bf16.msra.mxu0 %v3600
          %3739 = vmatprep.subr.bf16.mxu0 %v3599
          %3740 = vmatpush2.bf16.msra.mxu0 %v3598
          %3741 = vmatprep.subr.bf16.mxu0 %v3597
          %3742 = vmatpush2.bf16.msra.mxu0 %v3596
          %3743 = vmatprep.subr.bf16.mxu0 %v3595
          %3744 = vmatpush2.bf16.msra.mxu0 %v3594
          %3745 = vmatprep.subr.bf16.mxu0 %v3593
          %3746 = vmatpush2.bf16.msra.mxu0 %v3592
          %3747 = vmatprep.mubr.bf16.mxu0 %v3316
          %3748 = vmatmul.mubr.bf16.gmra.mxu0 %v3315
          %v3749 = vpop.f32.mrf.mxu0
          %v3750 = vadd.f32 %v3708, %v3749
          %v3751 = vpop.f32.mrf.mxu0
          %v3752 = vadd.f32 %v3712, %v3751
          %v3753 = vpop.f32.mrf.mxu0
          %v3754 = vpop.f32.mrf.mxu0
          %3755 = vdwg.mxu0
          %3756 = vmatprep.subr.bf16.mxu0 %v3623
          %3757 = vmatpush1.bf16.msra.mxu0 %v3622
          %3758 = vmatprep.subr.bf16.mxu0 %v3621
          %3759 = vmatpush1.bf16.msra.mxu0 %v3620
          %3760 = vmatprep.subr.bf16.mxu0 %v3619
          %3761 = vmatpush1.bf16.msra.mxu0 %v3618
          %3762 = vmatprep.subr.bf16.mxu0 %v3617
          %3763 = vmatpush1.bf16.msra.mxu0 %v3616
          %3764 = vmatprep.subr.bf16.mxu0 %v3615
          %3765 = vmatpush1.bf16.msra.mxu0 %v3614
          %3766 = vmatprep.subr.bf16.mxu0 %v3613
          %3767 = vmatpush1.bf16.msra.mxu0 %v3612
          %3768 = vmatprep.subr.bf16.mxu0 %v3611
          %3769 = vmatpush1.bf16.msra.mxu0 %v3610
          %3770 = vmatprep.subr.bf16.mxu0 %v3609
          %3771 = vmatpush1.bf16.msra.mxu0 %v3608
          %3772 = vmatprep.subr.bf16.mxu0 %v3639
          %3773 = vmatpush2.bf16.msra.mxu0 %v3638
          %3774 = vmatprep.subr.bf16.mxu0 %v3637
          %3775 = vmatpush2.bf16.msra.mxu0 %v3636
          %3776 = vmatprep.subr.bf16.mxu0 %v3635
          %3777 = vmatpush2.bf16.msra.mxu0 %v3634
          %3778 = vmatprep.subr.bf16.mxu0 %v3633
          %3779 = vmatpush2.bf16.msra.mxu0 %v3632
          %3780 = vmatprep.subr.bf16.mxu0 %v3631
          %3781 = vmatpush2.bf16.msra.mxu0 %v3630
          %3782 = vmatprep.subr.bf16.mxu0 %v3629
          %3783 = vmatpush2.bf16.msra.mxu0 %v3628
          %3784 = vmatprep.subr.bf16.mxu0 %v3627
          %3785 = vmatpush2.bf16.msra.mxu0 %v3626
          %3786 = vmatprep.subr.bf16.mxu0 %v3625
          %3787 = vmatpush2.bf16.msra.mxu0 %v3624
          %3788 = vmatprep.mubr.bf16.mxu0 %v3318
          %3789 = vmatmul.mubr.bf16.gmra.mxu0 %v3317
          %v3790 = vpop.f32.mrf.mxu0
          %v3791 = vadd.f32 %v3750, %v3790
          %v3792 = vpop.f32.mrf.mxu0
          %v3793 = vadd.f32 %v3752, %v3792
          %v3794 = vpop.f32.mrf.mxu0
          %v3795 = vpop.f32.mrf.mxu0
          %3796 = vdwg.mxu0
          %v3797 = vmax.f32 %v3791, 0.0
          %v3798 = vmax.f32 %v3793, 0.0
          %v3799 = vpack.c.bf16 %v3797, %v3797
          %v3800 = vpack.c.bf16 %v3798, %v3798
          %v3801 = vld [vmem:[%s11] sm:$0xf]
          %v3802 = vld [vmem:[%s11 + $0x4] sm:$0xf]
          %v3803 = vld [vmem:[%s11 + $0x8] sm:$0xf]
          %v3804 = vld [vmem:[%s11 + $0xc] sm:$0xf]
          %v3805 = vld [vmem:[%s11 + $0x10] sm:$0xf]
          %v3806 = vld [vmem:[%s11 + $0x14] sm:$0xf]
          %v3807 = vld [vmem:[%s11 + $0x18] sm:$0xf]
          %v3808 = vld [vmem:[%s11 + $0x1c] sm:$0xf]
          %v3809 = vld [vmem:[%s11 + $0x20] sm:$0xf]
          %v3810 = vld [vmem:[%s11 + $0x24] sm:$0xf]
          %v3811 = vld [vmem:[%s11 + $0x28] sm:$0xf]
          %v3812 = vld [vmem:[%s11 + $0x2c] sm:$0xf]
          %v3813 = vld [vmem:[%s11 + $0x30] sm:$0xf]
          %v3814 = vld [vmem:[%s11 + $0x34] sm:$0xf]
          %v3815 = vld [vmem:[%s11 + $0x38] sm:$0xf]
          %v3816 = vld [vmem:[%s11 + $0x3c] sm:$0xf]
          %v3817 = vld [vmem:[%s11 + $0x40] sm:$0xf]
          %v3818 = vld [vmem:[%s11 + $0x44] sm:$0xf]
          %v3819 = vld [vmem:[%s11 + $0x48] sm:$0xf]
          %v3820 = vld [vmem:[%s11 + $0x4c] sm:$0xf]
          %v3821 = vld [vmem:[%s11 + $0x50] sm:$0xf]
          %v3822 = vld [vmem:[%s11 + $0x54] sm:$0xf]
          %v3823 = vld [vmem:[%s11 + $0x58] sm:$0xf]
          %v3824 = vld [vmem:[%s11 + $0x5c] sm:$0xf]
          %v3825 = vld [vmem:[%s11 + $0x60] sm:$0xf]
          %v3826 = vld [vmem:[%s11 + $0x64] sm:$0xf]
          %v3827 = vld [vmem:[%s11 + $0x68] sm:$0xf]
          %v3828 = vld [vmem:[%s11 + $0x6c] sm:$0xf]
          %v3829 = vld [vmem:[%s11 + $0x70] sm:$0xf]
          %v3830 = vld [vmem:[%s11 + $0x74] sm:$0xf]
          %v3831 = vld [vmem:[%s11 + $0x78] sm:$0xf]
          %v3832 = vld [vmem:[%s11 + $0x7c] sm:$0xf]
          %v3833 = vld [vmem:[%s12] sm:$0x1]
          %v3866 = vunpack.c.l.b16 %v3801
          %v3867 = vunpack.c.l.b16 %v3802
          %v3868 = vunpack.c.l.b16 %v3803
          %v3869 = vunpack.c.l.b16 %v3804
          %v3870 = vunpack.c.l.b16 %v3805
          %v3871 = vunpack.c.l.b16 %v3806
          %v3872 = vunpack.c.l.b16 %v3807
          %v3873 = vunpack.c.l.b16 %v3808
          %v3874 = vunpack.c.l.b16 %v3809
          %v3875 = vunpack.c.l.b16 %v3810
          %v3876 = vunpack.c.l.b16 %v3811
          %v3877 = vunpack.c.l.b16 %v3812
          %v3878 = vunpack.c.l.b16 %v3813
          %v3879 = vunpack.c.l.b16 %v3814
          %v3880 = vunpack.c.l.b16 %v3815
          %v3881 = vunpack.c.l.b16 %v3816
          %v3882 = vunpack.c.l.b16 %v3817
          %v3883 = vunpack.c.l.b16 %v3818
          %v3884 = vunpack.c.l.b16 %v3819
          %v3885 = vunpack.c.l.b16 %v3820
          %v3886 = vunpack.c.l.b16 %v3821
          %v3887 = vunpack.c.l.b16 %v3822
          %v3888 = vunpack.c.l.b16 %v3823
          %v3889 = vunpack.c.l.b16 %v3824
          %v3890 = vunpack.c.l.b16 %v3825
          %v3891 = vunpack.c.l.b16 %v3826
          %v3892 = vunpack.c.l.b16 %v3827
          %v3893 = vunpack.c.l.b16 %v3828
          %v3894 = vunpack.c.l.b16 %v3829
          %v3895 = vunpack.c.l.b16 %v3830
          %v3896 = vunpack.c.l.b16 %v3831
          %v3897 = vunpack.c.l.b16 %v3832
          %v3898 = vpack.c.b16 %v3867, %v3866
          %v3899 = vpack.c.b16 %v3869, %v3868
          %v3900 = vpack.c.b16 %v3871, %v3870
          %v3901 = vpack.c.b16 %v3873, %v3872
          %v3902 = vpack.c.b16 %v3875, %v3874
          %v3903 = vpack.c.b16 %v3877, %v3876
          %v3904 = vpack.c.b16 %v3879, %v3878
          %v3905 = vpack.c.b16 %v3881, %v3880
          %v3906 = vpack.c.b16 %v3883, %v3882
          %v3907 = vpack.c.b16 %v3885, %v3884
          %v3908 = vpack.c.b16 %v3887, %v3886
          %v3909 = vpack.c.b16 %v3889, %v3888
          %v3910 = vpack.c.b16 %v3891, %v3890
          %v3911 = vpack.c.b16 %v3893, %v3892
          %v3912 = vpack.c.b16 %v3895, %v3894
          %v3913 = vpack.c.b16 %v3897, %v3896
          %3930 = vmatprep.subr.bf16.mxu0 0
          %3931 = vmatpush1.bf16.msra.mxu0 %v3905
          %3932 = vmatprep.subr.bf16.mxu0 0
          %3933 = vmatpush1.bf16.msra.mxu0 %v3904
          %3934 = vmatprep.subr.bf16.mxu0 0
          %3935 = vmatpush1.bf16.msra.mxu0 %v3903
          %3936 = vmatprep.subr.bf16.mxu0 0
          %3937 = vmatpush1.bf16.msra.mxu0 %v3902
          %3938 = vmatprep.subr.bf16.mxu0 0
          %3939 = vmatpush1.bf16.msra.mxu0 %v3901
          %3940 = vmatprep.subr.bf16.mxu0 0
          %3941 = vmatpush1.bf16.msra.mxu0 %v3900
          %3942 = vmatprep.subr.bf16.mxu0 0
          %3943 = vmatpush1.bf16.msra.mxu0 %v3899
          %3944 = vmatprep.subr.bf16.mxu0 0
          %3945 = vmatpush1.bf16.msra.mxu0 %v3898
          %3946 = vmatprep.subr.bf16.mxu0 0
          %3947 = vmatpush2.bf16.msra.mxu0 %v3913
          %3948 = vmatprep.subr.bf16.mxu0 0
          %3949 = vmatpush2.bf16.msra.mxu0 %v3912
          %3950 = vmatprep.subr.bf16.mxu0 0
          %3951 = vmatpush2.bf16.msra.mxu0 %v3911
          %3952 = vmatprep.subr.bf16.mxu0 0
          %3953 = vmatpush2.bf16.msra.mxu0 %v3910
          %3954 = vmatprep.subr.bf16.mxu0 0
          %3955 = vmatpush2.bf16.msra.mxu0 %v3909
          %3956 = vmatprep.subr.bf16.mxu0 0
          %3957 = vmatpush2.bf16.msra.mxu0 %v3908
          %3958 = vmatprep.subr.bf16.mxu0 0
          %3959 = vmatpush2.bf16.msra.mxu0 %v3907
          %3960 = vmatprep.subr.bf16.mxu0 0
          %3961 = vmatpush2.bf16.msra.mxu0 %v3906
          %3962 = vmatprep.mubr.bf16.mxu0 %v3800
          %3963 = vmatmul.mubr.bf16.gmra.mxu0 %v3799
          %v3964 = vpop.f32.mrf.mxu0
          %v3965 = vadd.f32 %v3833, %v3964
          %v3966 = vpop.f32.mrf.mxu0
          %v3967 = vpop.f32.mrf.mxu0
          %v3968 = vpop.f32.mrf.mxu0
          %3969 = vdwg.mxu0
          %v3970 = vmax.f32 %v3965, 0.0
          %v3971 = vpack.c.bf16 %v3970, %v3970
          %v3972 = vld [vmem:[%s13] sm:$0xf]
          %v3973 = vld [vmem:[%s13 + $0x4] sm:$0xf]
          %v3974 = vld [vmem:[%s13 + $0x8] sm:$0xf]
          %v3975 = vld [vmem:[%s13 + $0xc] sm:$0xf]
          %v3976 = vld [vmem:[%s13 + $0x10] sm:$0xf]
          %v3977 = vld [vmem:[%s13 + $0x14] sm:$0xf]
          %v3978 = vld [vmem:[%s13 + $0x18] sm:$0xf]
          %v3979 = vld [vmem:[%s13 + $0x1c] sm:$0xf]
          %v3980 = vld [vmem:[%s13 + $0x20] sm:$0xf]
          %v3981 = vld [vmem:[%s13 + $0x24] sm:$0xf]
          %v3982 = vld [vmem:[%s13 + $0x28] sm:$0xf]
          %v3983 = vld [vmem:[%s13 + $0x2c] sm:$0xf]
          %v3984 = vld [vmem:[%s13 + $0x30] sm:$0xf]
          %v3985 = vld [vmem:[%s13 + $0x34] sm:$0xf]
          %v3986 = vld [vmem:[%s13 + $0x38] sm:$0xf]
          %v3987 = vld [vmem:[%s13 + $0x3c] sm:$0xf]
          %v3988 = vld [vmem:[%s14] sm:$0x1]
          %v4005 = vunpack.c.l.b16 %v3972
          %v4006 = vunpack.c.l.b16 %v3973
          %v4007 = vunpack.c.l.b16 %v3974
          %v4008 = vunpack.c.l.b16 %v3975
          %v4009 = vunpack.c.l.b16 %v3976
          %v4010 = vunpack.c.l.b16 %v3977
          %v4011 = vunpack.c.l.b16 %v3978
          %v4012 = vunpack.c.l.b16 %v3979
          %v4013 = vunpack.c.l.b16 %v3980
          %v4014 = vunpack.c.l.b16 %v3981
          %v4015 = vunpack.c.l.b16 %v3982
          %v4016 = vunpack.c.l.b16 %v3983
          %v4017 = vunpack.c.l.b16 %v3984
          %v4018 = vunpack.c.l.b16 %v3985
          %v4019 = vunpack.c.l.b16 %v3986
          %v4020 = vunpack.c.l.b16 %v3987
          %v4021 = vpack.c.b16 %v4006, %v4005
          %v4022 = vpack.c.b16 %v4008, %v4007
          %v4023 = vpack.c.b16 %v4010, %v4009
          %v4024 = vpack.c.b16 %v4012, %v4011
          %v4025 = vpack.c.b16 %v4014, %v4013
          %v4026 = vpack.c.b16 %v4016, %v4015
          %v4027 = vpack.c.b16 %v4018, %v4017
          %v4028 = vpack.c.b16 %v4020, %v4019
          %4037 = vmatprep.subr.bf16.mxu0 0
          %4038 = vmatpush1.bf16.msra.mxu0 %v4028
          %4039 = vmatprep.subr.bf16.mxu0 0
          %4040 = vmatpush1.bf16.msra.mxu0 %v4027
          %4041 = vmatprep.subr.bf16.mxu0 0
          %4042 = vmatpush1.bf16.msra.mxu0 %v4026
          %4043 = vmatprep.subr.bf16.mxu0 0
          %4044 = vmatpush1.bf16.msra.mxu0 %v4025
          %4045 = vmatprep.subr.bf16.mxu0 0
          %4046 = vmatpush1.bf16.msra.mxu0 %v4024
          %4047 = vmatprep.subr.bf16.mxu0 0
          %4048 = vmatpush1.bf16.msra.mxu0 %v4023
          %4049 = vmatprep.subr.bf16.mxu0 0
          %4050 = vmatpush1.bf16.msra.mxu0 %v4022
          %4051 = vmatprep.subr.bf16.mxu0 0
          %4052 = vmatpush1.bf16.msra.mxu0 %v4021
          %4053 = vmatprep.subr.bf16.mxu0 0
          %4054 = vmatpush2.bf16.msra.mxu0 0
          %4055 = vmatprep.subr.bf16.mxu0 0
          %4056 = vmatpush2.bf16.msra.mxu0 0
          %4057 = vmatprep.subr.bf16.mxu0 0
          %4058 = vmatpush2.bf16.msra.mxu0 0
          %4059 = vmatprep.subr.bf16.mxu0 0
          %4060 = vmatpush2.bf16.msra.mxu0 0
          %4061 = vmatprep.subr.bf16.mxu0 0
          %4062 = vmatpush2.bf16.msra.mxu0 0
          %4063 = vmatprep.subr.bf16.mxu0 0
          %4064 = vmatpush2.bf16.msra.mxu0 0
          %4065 = vmatprep.subr.bf16.mxu0 0
          %4066 = vmatpush2.bf16.msra.mxu0 0
          %4067 = vmatprep.subr.bf16.mxu0 0
          %4068 = vmatpush2.bf16.msra.mxu0 0
          %4069 = vmatprep.mubr.bf16.mxu0 0
          %4070 = vmatmul.mubr.bf16.gmra.mxu0 %v3971
          %v4071 = vpop.f32.mrf.mxu0
          %v4072 = vadd.f32 %v3988, %v4071
          %v4073 = vpop.f32.mrf.mxu0
          %v4074 = vpop.f32.mrf.mxu0
          %v4075 = vpop.f32.mrf.mxu0
          %4076 = vdwg.mxu0
          %vm4077 = vcmask 8192
          %v4078 = vsel %vm4077, %v4072, -inf
          %4079 = vmax.xlane.f32.xlu0 %v4078
          %v4080 = vpop.xlane.xlu0 %4079
          %v4081 = vsub.f32 %v4072, %v4080
          %v4082 = vmul.f32 %v4081, 1.442695
          %v4083 = vpow.pop %v4082
          %v4084 = vsel %vm4077, %v4083, 0.0
          %4085 = vadd.xlane.f32.xlu0 %v4084
          %v4086 = vpop.xlane.xlu0 %4085
          %v4087 = vlog2.pop %v4086
          %v4088 = vmul.f32 %v4087, 0.6931472
          %v4089 = vsub.f32 %v4081, %v4088
          %4090 = vst.msk [vmem:[%s522] sm:$0x1] %vm4077, %v4089
        $region88: #{pointnet_cls_forward.3} parent=79 // pred_fallthru
          _
        %s4091 = sand.u32 %s376, 1
        %s4092 = scalar_lea.sflag [#allocation4], %s4091
        %s4093 = sand.u32 %s376, 1
        %s4094 = scalar_lea.vmem [#allocation3], %s4093
        // Predicated region
        $region89: #{pointnet_cls_forward.3} parent=79 // pred_check
          %p4095 = pneg %p386
        $region90: #{pointnet_cls_forward.3} parent=79 // pred_check_branch
          %4097 = sbr.rel (%p4095) target = $region92
        $region91: #{pointnet_cls_forward.3} parent=79 // pred_region
          %s4099 = ssub.s32 16, 16
          %4100 = vsyncadd %s4092, %s4099
          %s4101 = smul.addr %s33, 16
          %s4102 = scalar_lea.hbm %s15, %s4101
          %s4104 = sshll.u32 %s4094, 4
          %s4105 = int_to_ptr.vmem [resolvable:$true] %s4104
          %4107 = dma.vmem_to_hbm [thread:$0]  %s4105, 16, %s4102, %s4092
        $region92: #{pointnet_cls_forward.3} parent=79 // pred_fallthru
          _
      $region80: #{pointnet_cls_forward.3} parent=5 // pred_fallthru
        _
      %p4108 = scmp.le.s32.totalorder 2, %s24
      // Predicated region
      $region93: #{pointnet_cls_forward.3} parent=5 // pred_check
        %p4109 = pneg %p4108
      $region94: #{pointnet_cls_forward.3} parent=5 // pred_check_branch
        %4111 = sbr.rel (%p4109) target = $region96
      $region95: #{pointnet_cls_forward.3} parent=5 // pred_region
        %s4112 = ssub.s32 %s24, 2
        // Predicated region
        $region97: #{pointnet_cls_forward.3} parent=95 // pred_check
          %p4113 = pneg %p392
        $region98: #{pointnet_cls_forward.3} parent=95 // pred_check_branch
          %4115 = sbr.rel (%p4113) target = $region100
        $region99: #{pointnet_cls_forward.3} parent=95 // pred_region
          %s4116 = sand.u32 %s377, 1
          %s4117 = scalar_lea.sflag [#allocation4], %s4116
          %s4118 = sand.u32 %s377, 1
          %s4119 = scalar_lea.vmem [#allocation3], %s4118
          %4120 = dma.done %s4117, 16
        $region100: #{pointnet_cls_forward.3} parent=95 // pred_fallthru
          _
      $region96: #{pointnet_cls_forward.3} parent=5 // pred_fallthru
        _
    $region6: #{pointnet_cls_forward.3} parent=1 // loop_footer
      %s28 = sadd.s32 1, %s24
    $region7: #{pointnet_cls_forward.3} parent=1 // loop_footer_branch
      %23 = sbr.rel target = $region3
    $region8: #{pointnet_cls_forward.3} parent=1 // loop_exit
      _
    %4121 = vsyncpa [#allocation4], 1
    %s4122 = scalar_lea.sflag [#allocation4], 1
    %4123 = vsyncpa %s4122, 1

// kernel: pointnet_cls_forward.2
$region0: #{pointnet_cls_forward.2}
  #allocation0 [shape = 'u32[]', space=smem, size = 0x4, offset = 0x4, fixed_abs, tag = 'smem constant byte address 0x4 - core index']
  #allocation1 [shape = 'u32[144,128]{1,0:T(1,128)}', space=vmem, size = 0x12000, scoped, tag = 'internal scratch']
  #allocation2 [shape = 'f32[1,1024]{1,0:T(1,128)}', space=vmem, size = 0x1000, scoped, tag = 'scratch operand']
  %s0 = inlined_call_operand.vmem [shape: bf16[2,16,8], index: 0, kind: input, shape index: {}]
  %s1 = inlined_call_operand.vmem [shape: bf16[8,64], index: 1, kind: input, shape index: {}]
  %s2 = inlined_call_operand.vmem [shape: f32[1,64], index: 2, kind: input, shape index: {}]
  %s3 = inlined_call_operand.vmem [shape: bf16[64,128], index: 3, kind: input, shape index: {}]
  %s4 = inlined_call_operand.vmem [shape: f32[1,128], index: 4, kind: input, shape index: {}]
  %s5 = inlined_call_operand.hbm [shape: bf16[128,1024], index: 5, kind: input, shape index: {}]
  %s6 = inlined_call_operand.vmem [shape: f32[1,1024], index: 6, kind: input, shape index: {}]
  %s7 = inlined_call_operand.hbm [shape: bf16[1024,512], index: 7, kind: input, shape index: {}]
  %s8 = inlined_call_operand.vmem [shape: f32[1,512], index: 8, kind: input, shape index: {}]
  %s9 = inlined_call_operand.hbm [shape: bf16[512,256], index: 9, kind: input, shape index: {}]
  %s10 = inlined_call_operand.vmem [shape: f32[1,256], index: 10, kind: input, shape index: {}]
  %s11 = inlined_call_operand.vmem [shape: bf16[256,9], index: 11, kind: input, shape index: {}]
  %s12 = inlined_call_operand.vmem [shape: f32[1,9], index: 12, kind: input, shape index: {}]
  %s13 = inlined_call_operand.vmem [shape: f32[2,1,9], index: 13, kind: output, shape index: {}]
  %s14 = sld [smem:[#allocation0]]
  $region105: #{pointnet_cls_forward.2} parent=0
    _
  %s16 = ssub.s32 1, %s14
  %s17 = scalar_select 0, %s16, %s14
  $region1: #{pointnet_cls_forward.2} parent=0
    #allocation3 [shape = 'u8[262144]{0}', space=vmem, size = 0x40000, scoped, tag = 'input window, operand 5, single buffered']
    #allocation4 [shape = 's32[2]{0}', space=sflag, size = 0x8, scoped, tag = 'scoped memory for pointnet_cls_forward.2']
    #allocation5 [shape = 'u8[1048576]{0}', space=vmem, size = 0x100000, scoped, tag = 'input window, operand 7, single buffered']
    #allocation6 [shape = 's32[1]{0}', space=sflag, size = 0x4, scoped, tag = 'scoped memory for pointnet_cls_forward.2']
    #allocation7 [shape = 'u8[262144]{0}', space=vmem, size = 0x40000, scoped, tag = 'input window, operand 9, single buffered']
    %18 = vsyncpa [#allocation4], 0
    %19 = vsyncpa [#allocation6], 0
    loop: start=0, step=1, limit=4
    $region2: #{pointnet_cls_forward.2} parent=1 // loop_pre_header
      _
    $region3: #{pointnet_cls_forward.2} parent=1 // loop_header
      %s21 = sphi 0, %s25
      %p22 = scmp.ge.s32.totalorder %s21, 4
      %s28 = sphi 0, %s40
      %s29 = sphi 0, %s36
      %s30 = sphi 0, %s28
      %s31 = sphi 0, %s29
      %s32 = sphi 0, %s30
      %s33 = sphi 0, %s31
      %s45 = sphi 0, %s47
      %s48 = sphi 0, %s45
      %s49 = sphi 0, %s48
      %s65 = sphi 0, %s49
      %s69 = sphi 0, %s69
      %s71 = sphi 0, %s69
      %s72 = sphi 0, %s71
      %s86 = sphi 0, %s72
      %s90 = sphi 0, %s90
      %s92 = sphi 0, %s90
      %s93 = sphi 0, %s92
      %s107 = sphi 0, %s93
      %s111 = sphi 0, %s111
      %s113 = sphi 0, %s111
      %s114 = sphi 0, %s113
      %s128 = sphi 0, %s114
      %s132 = sphi 0, %s132
      %s134 = sphi 0, %s132
      %s135 = sphi 0, %s134
      %s149 = sphi 0, %s135
      %s153 = sphi 0, %s153
      %s155 = sphi 0, %s153
      %s156 = sphi 0, %s155
      %s170 = sphi 0, %s156
      %s174 = sphi 0, %s174
      %s176 = sphi 0, %s174
      %s177 = sphi 0, %s176
      %s191 = sphi 0, %s177
      %s195 = sphi 0, %s195
      %s197 = sphi 0, %s195
      %s198 = sphi 0, %s197
      %s212 = sphi 0, %s198
      %s216 = sphi 0, %s216
      %s218 = sphi 0, %s216
      %s219 = sphi 0, %s218
      %s233 = sphi 0, %s219
      %s237 = sphi 0, %s237
      %s239 = sphi 0, %s237
      %s240 = sphi 0, %s239
      %s254 = sphi 0, %s240
      %s258 = sphi 0, %s258
      %s260 = sphi 0, %s258
      %s261 = sphi 0, %s260
      %s275 = sphi 0, %s261
      %s279 = sphi 0, %s279
      %s281 = sphi 0, %s279
      %s282 = sphi 0, %s281
      %s296 = sphi 0, %s282
      %s300 = sphi 0, %s300
      %s302 = sphi 0, %s300
      %s303 = sphi 0, %s302
      %s317 = sphi 0, %s303
      %s323 = sphi 0, %s325
      %s326 = sphi 0, %s323
      %s327 = sphi 0, %s326
      %s343 = sphi 0, %s327
    $region4: #{pointnet_cls_forward.2} parent=1 // loop_header_branch
      %24 = sbr.rel (%p22) target = $region8
    $region5: #{pointnet_cls_forward.2} parent=1 // loop_body
      %s26 = ssub.s32 %s21, 1
      %s27 = ssub.s32 %s21, 2
      %s34 = sadd.s32 1, %s29
      %p35 = scmp.ge.s32.totalorder %s34, 1
      %s36 = scalar_select %p35, 0, %s34
      %s37 = sadd.s32 1, %s28
      %s38 = scalar_select %p35, %s37, %s28
      %p39 = scmp.ge.s32.totalorder %s38, 2
      %s40 = scalar_select %p39, 0, %s38
      %s41 = ssub.s32 %s28, %s40
      %s42 = ssub.s32 %s29, %s36
      %s43 = sor.u32 %s41, %s42
      %p44 = scmp.eq.s32.totalorder %s43, 0
      %s46 = sadd.s32 %s45, 1
      %s47 = scalar_select %p44, %s45, %s46
      %p50 = pneg %p44
      %p51 = scmp.eq.s32.totalorder %s21, 1
      %p52 = por %p50, %p51
      %p53 = scmp.ne.s32.totalorder %s45, %s48
      %p54 = scmp.eq.s32.totalorder %s21, 0
      %p55 = por %p53, %p54
      %p56 = scmp.ne.s32.totalorder %s45, %s48
      %p57 = scmp.eq.s32.totalorder %s26, 1
      %p58 = por %p56, %p57
      %p59 = scmp.ne.s32.totalorder %s48, %s49
      %p60 = scmp.eq.s32.totalorder %s26, 0
      %p61 = por %p59, %p60
      %p62 = scmp.ne.s32.totalorder %s48, %s49
      %p63 = scmp.eq.s32.totalorder %s27, 1
      %p64 = por %p62, %p63
      %p66 = scmp.ne.s32.totalorder %s49, %s65
      %p67 = scmp.eq.s32.totalorder %s27, 0
      %p68 = por %p66, %p67
      %s70 = sadd.s32 %s69, 1
      %p73 = scmp.eq.s32.totalorder %s21, 1
      %p74 = scmp.ne.s32.totalorder %s69, %s71
      %p75 = scmp.eq.s32.totalorder %s21, 0
      %p76 = por %p74, %p75
      %p77 = scmp.ne.s32.totalorder %s69, %s71
      %p78 = scmp.eq.s32.totalorder %s26, 1
      %p79 = por %p77, %p78
      %p80 = scmp.ne.s32.totalorder %s71, %s72
      %p81 = scmp.eq.s32.totalorder %s26, 0
      %p82 = por %p80, %p81
      %p83 = scmp.ne.s32.totalorder %s71, %s72
      %p84 = scmp.eq.s32.totalorder %s27, 1
      %p85 = por %p83, %p84
      %p87 = scmp.ne.s32.totalorder %s72, %s86
      %p88 = scmp.eq.s32.totalorder %s27, 0
      %p89 = por %p87, %p88
      %s91 = sadd.s32 %s90, 1
      %p94 = scmp.eq.s32.totalorder %s21, 1
      %p95 = scmp.ne.s32.totalorder %s90, %s92
      %p96 = scmp.eq.s32.totalorder %s21, 0
      %p97 = por %p95, %p96
      %p98 = scmp.ne.s32.totalorder %s90, %s92
      %p99 = scmp.eq.s32.totalorder %s26, 1
      %p100 = por %p98, %p99
      %p101 = scmp.ne.s32.totalorder %s92, %s93
      %p102 = scmp.eq.s32.totalorder %s26, 0
      %p103 = por %p101, %p102
      %p104 = scmp.ne.s32.totalorder %s92, %s93
      %p105 = scmp.eq.s32.totalorder %s27, 1
      %p106 = por %p104, %p105
      %p108 = scmp.ne.s32.totalorder %s93, %s107
      %p109 = scmp.eq.s32.totalorder %s27, 0
      %p110 = por %p108, %p109
      %s112 = sadd.s32 %s111, 1
      %p115 = scmp.eq.s32.totalorder %s21, 1
      %p116 = scmp.ne.s32.totalorder %s111, %s113
      %p117 = scmp.eq.s32.totalorder %s21, 0
      %p118 = por %p116, %p117
      %p119 = scmp.ne.s32.totalorder %s111, %s113
      %p120 = scmp.eq.s32.totalorder %s26, 1
      %p121 = por %p119, %p120
      %p122 = scmp.ne.s32.totalorder %s113, %s114
      %p123 = scmp.eq.s32.totalorder %s26, 0
      %p124 = por %p122, %p123
      %p125 = scmp.ne.s32.totalorder %s113, %s114
      %p126 = scmp.eq.s32.totalorder %s27, 1
      %p127 = por %p125, %p126
      %p129 = scmp.ne.s32.totalorder %s114, %s128
      %p130 = scmp.eq.s32.totalorder %s27, 0
      %p131 = por %p129, %p130
      %s133 = sadd.s32 %s132, 1
      %p136 = scmp.eq.s32.totalorder %s21, 1
      %p137 = scmp.ne.s32.totalorder %s132, %s134
      %p138 = scmp.eq.s32.totalorder %s21, 0
      %p139 = por %p137, %p138
      %p140 = scmp.ne.s32.totalorder %s132, %s134
      %p141 = scmp.eq.s32.totalorder %s26, 1
      %p142 = por %p140, %p141
      %p143 = scmp.ne.s32.totalorder %s134, %s135
      %p144 = scmp.eq.s32.totalorder %s26, 0
      %p145 = por %p143, %p144
      %p146 = scmp.ne.s32.totalorder %s134, %s135
      %p147 = scmp.eq.s32.totalorder %s27, 1
      %p148 = por %p146, %p147
      %p150 = scmp.ne.s32.totalorder %s135, %s149
      %p151 = scmp.eq.s32.totalorder %s27, 0
      %p152 = por %p150, %p151
      %s154 = sadd.s32 %s153, 1
      %p157 = scmp.eq.s32.totalorder %s21, 1
      %p158 = scmp.ne.s32.totalorder %s153, %s155
      %p159 = scmp.eq.s32.totalorder %s21, 0
      %p160 = por %p158, %p159
      %p161 = scmp.ne.s32.totalorder %s153, %s155
      %p162 = scmp.eq.s32.totalorder %s26, 1
      %p163 = por %p161, %p162
      %p164 = scmp.ne.s32.totalorder %s155, %s156
      %p165 = scmp.eq.s32.totalorder %s26, 0
      %p166 = por %p164, %p165
      %p167 = scmp.ne.s32.totalorder %s155, %s156
      %p168 = scmp.eq.s32.totalorder %s27, 1
      %p169 = por %p167, %p168
      %p171 = scmp.ne.s32.totalorder %s156, %s170
      %p172 = scmp.eq.s32.totalorder %s27, 0
      %p173 = por %p171, %p172
      %s175 = sadd.s32 %s174, 1
      %p178 = scmp.eq.s32.totalorder %s21, 1
      %p179 = scmp.ne.s32.totalorder %s174, %s176
      %p180 = scmp.eq.s32.totalorder %s21, 0
      %p181 = por %p179, %p180
      %p182 = scmp.ne.s32.totalorder %s174, %s176
      %p183 = scmp.eq.s32.totalorder %s26, 1
      %p184 = por %p182, %p183
      %p185 = scmp.ne.s32.totalorder %s176, %s177
      %p186 = scmp.eq.s32.totalorder %s26, 0
      %p187 = por %p185, %p186
      %p188 = scmp.ne.s32.totalorder %s176, %s177
      %p189 = scmp.eq.s32.totalorder %s27, 1
      %p190 = por %p188, %p189
      %p192 = scmp.ne.s32.totalorder %s177, %s191
      %p193 = scmp.eq.s32.totalorder %s27, 0
      %p194 = por %p192, %p193
      %s196 = sadd.s32 %s195, 1
      %p199 = scmp.eq.s32.totalorder %s21, 1
      %p200 = scmp.ne.s32.totalorder %s195, %s197
      %p201 = scmp.eq.s32.totalorder %s21, 0
      %p202 = por %p200, %p201
      %p203 = scmp.ne.s32.totalorder %s195, %s197
      %p204 = scmp.eq.s32.totalorder %s26, 1
      %p205 = por %p203, %p204
      %p206 = scmp.ne.s32.totalorder %s197, %s198
      %p207 = scmp.eq.s32.totalorder %s26, 0
      %p208 = por %p206, %p207
      %p209 = scmp.ne.s32.totalorder %s197, %s198
      %p210 = scmp.eq.s32.totalorder %s27, 1
      %p211 = por %p209, %p210
      %p213 = scmp.ne.s32.totalorder %s198, %s212
      %p214 = scmp.eq.s32.totalorder %s27, 0
      %p215 = por %p213, %p214
      %s217 = sadd.s32 %s216, 1
      %p220 = scmp.eq.s32.totalorder %s21, 1
      %p221 = scmp.ne.s32.totalorder %s216, %s218
      %p222 = scmp.eq.s32.totalorder %s21, 0
      %p223 = por %p221, %p222
      %p224 = scmp.ne.s32.totalorder %s216, %s218
      %p225 = scmp.eq.s32.totalorder %s26, 1
      %p226 = por %p224, %p225
      %p227 = scmp.ne.s32.totalorder %s218, %s219
      %p228 = scmp.eq.s32.totalorder %s26, 0
      %p229 = por %p227, %p228
      %p230 = scmp.ne.s32.totalorder %s218, %s219
      %p231 = scmp.eq.s32.totalorder %s27, 1
      %p232 = por %p230, %p231
      %p234 = scmp.ne.s32.totalorder %s219, %s233
      %p235 = scmp.eq.s32.totalorder %s27, 0
      %p236 = por %p234, %p235
      %s238 = sadd.s32 %s237, 1
      %p241 = scmp.eq.s32.totalorder %s21, 1
      %p242 = scmp.ne.s32.totalorder %s237, %s239
      %p243 = scmp.eq.s32.totalorder %s21, 0
      %p244 = por %p242, %p243
      %p245 = scmp.ne.s32.totalorder %s237, %s239
      %p246 = scmp.eq.s32.totalorder %s26, 1
      %p247 = por %p245, %p246
      %p248 = scmp.ne.s32.totalorder %s239, %s240
      %p249 = scmp.eq.s32.totalorder %s26, 0
      %p250 = por %p248, %p249
      %p251 = scmp.ne.s32.totalorder %s239, %s240
      %p252 = scmp.eq.s32.totalorder %s27, 1
      %p253 = por %p251, %p252
      %p255 = scmp.ne.s32.totalorder %s240, %s254
      %p256 = scmp.eq.s32.totalorder %s27, 0
      %p257 = por %p255, %p256
      %s259 = sadd.s32 %s258, 1
      %p262 = scmp.eq.s32.totalorder %s21, 1
      %p263 = scmp.ne.s32.totalorder %s258, %s260
      %p264 = scmp.eq.s32.totalorder %s21, 0
      %p265 = por %p263, %p264
      %p266 = scmp.ne.s32.totalorder %s258, %s260
      %p267 = scmp.eq.s32.totalorder %s26, 1
      %p268 = por %p266, %p267
      %p269 = scmp.ne.s32.totalorder %s260, %s261
      %p270 = scmp.eq.s32.totalorder %s26, 0
      %p271 = por %p269, %p270
      %p272 = scmp.ne.s32.totalorder %s260, %s261
      %p273 = scmp.eq.s32.totalorder %s27, 1
      %p274 = por %p272, %p273
      %p276 = scmp.ne.s32.totalorder %s261, %s275
      %p277 = scmp.eq.s32.totalorder %s27, 0
      %p278 = por %p276, %p277
      %s280 = sadd.s32 %s279, 1
      %p283 = scmp.eq.s32.totalorder %s21, 1
      %p284 = scmp.ne.s32.totalorder %s279, %s281
      %p285 = scmp.eq.s32.totalorder %s21, 0
      %p286 = por %p284, %p285
      %p287 = scmp.ne.s32.totalorder %s279, %s281
      %p288 = scmp.eq.s32.totalorder %s26, 1
      %p289 = por %p287, %p288
      %p290 = scmp.ne.s32.totalorder %s281, %s282
      %p291 = scmp.eq.s32.totalorder %s26, 0
      %p292 = por %p290, %p291
      %p293 = scmp.ne.s32.totalorder %s281, %s282
      %p294 = scmp.eq.s32.totalorder %s27, 1
      %p295 = por %p293, %p294
      %p297 = scmp.ne.s32.totalorder %s282, %s296
      %p298 = scmp.eq.s32.totalorder %s27, 0
      %p299 = por %p297, %p298
      %s301 = sadd.s32 %s300, 1
      %p304 = scmp.eq.s32.totalorder %s21, 1
      %p305 = scmp.ne.s32.totalorder %s300, %s302
      %p306 = scmp.eq.s32.totalorder %s21, 0
      %p307 = por %p305, %p306
      %p308 = scmp.ne.s32.totalorder %s300, %s302
      %p309 = scmp.eq.s32.totalorder %s26, 1
      %p310 = por %p308, %p309
      %p311 = scmp.ne.s32.totalorder %s302, %s303
      %p312 = scmp.eq.s32.totalorder %s26, 0
      %p313 = por %p311, %p312
      %p314 = scmp.ne.s32.totalorder %s302, %s303
      %p315 = scmp.eq.s32.totalorder %s27, 1
      %p316 = por %p314, %p315
      %p318 = scmp.ne.s32.totalorder %s303, %s317
      %p319 = scmp.eq.s32.totalorder %s27, 0
      %p320 = por %p318, %p319
      %s321 = ssub.s32 %s28, %s40
      %p322 = scmp.eq.s32.totalorder %s321, 0
      %s324 = sadd.s32 %s323, 1
      %s325 = scalar_select %p322, %s323, %s324
      %p328 = pneg %p322
      %p329 = scmp.eq.s32.totalorder %s21, 1
      %p330 = por %p328, %p329
      %p331 = scmp.ne.s32.totalorder %s323, %s326
      %p332 = scmp.eq.s32.totalorder %s21, 0
      %p333 = por %p331, %p332
      %p334 = scmp.ne.s32.totalorder %s323, %s326
      %p335 = scmp.eq.s32.totalorder %s26, 1
      %p336 = por %p334, %p335
      %p337 = scmp.ne.s32.totalorder %s326, %s327
      %p338 = scmp.eq.s32.totalorder %s26, 0
      %p339 = por %p337, %p338
      %p340 = scmp.ne.s32.totalorder %s326, %s327
      %p341 = scmp.eq.s32.totalorder %s27, 1
      %p342 = por %p340, %p341
      %p344 = scmp.ne.s32.totalorder %s327, %s343
      %p345 = scmp.eq.s32.totalorder %s27, 0
      %p346 = por %p344, %p345
      %p347 = scmp.le.s32.totalorder 1, %s21
      %p348 = scmp.lt.s32.totalorder %s21, 3
      %p349 = pnand %p347, %p348
      %p350 = pneg %p349
      // Predicated region
      $region9: #{pointnet_cls_forward.2} parent=5 // pred_check
        _
      $region10: #{pointnet_cls_forward.2} parent=5 // pred_check_branch
        %352 = sbr.rel (%p349) target = $region12
      $region11: #{pointnet_cls_forward.2} parent=5 // pred_region
        %s353 = ssub.s32 %s21, 1
        // Predicated region
        $region13: #{pointnet_cls_forward.2} parent=11 // pred_check
          %p354 = pneg %p82
        $region14: #{pointnet_cls_forward.2} parent=11 // pred_check_branch
          %356 = sbr.rel (%p354) target = $region16
        $region15: #{pointnet_cls_forward.2} parent=11 // pred_region
          _
        $region16: #{pointnet_cls_forward.2} parent=11 // pred_fallthru
          _
        // Predicated region
        $region17: #{pointnet_cls_forward.2} parent=11 // pred_check
          %p357 = pneg %p103
        $region18: #{pointnet_cls_forward.2} parent=11 // pred_check_branch
          %359 = sbr.rel (%p357) target = $region20
        $region19: #{pointnet_cls_forward.2} parent=11 // pred_region
          _
        $region20: #{pointnet_cls_forward.2} parent=11 // pred_fallthru
          _
        // Predicated region
        $region21: #{pointnet_cls_forward.2} parent=11 // pred_check
          %p360 = pneg %p124
        $region22: #{pointnet_cls_forward.2} parent=11 // pred_check_branch
          %362 = sbr.rel (%p360) target = $region24
        $region23: #{pointnet_cls_forward.2} parent=11 // pred_region
          _
        $region24: #{pointnet_cls_forward.2} parent=11 // pred_fallthru
          _
        // Predicated region
        $region25: #{pointnet_cls_forward.2} parent=11 // pred_check
          %p363 = pneg %p145
        $region26: #{pointnet_cls_forward.2} parent=11 // pred_check_branch
          %365 = sbr.rel (%p363) target = $region28
        $region27: #{pointnet_cls_forward.2} parent=11 // pred_region
          _
        $region28: #{pointnet_cls_forward.2} parent=11 // pred_fallthru
          _
        // Predicated region
        $region29: #{pointnet_cls_forward.2} parent=11 // pred_check
          %p366 = pneg %p166
        $region30: #{pointnet_cls_forward.2} parent=11 // pred_check_branch
          %368 = sbr.rel (%p366) target = $region32
        $region31: #{pointnet_cls_forward.2} parent=11 // pred_region
          %s370 = ssub.s32 8192, 8192
          %371 = vsyncadd [#allocation4], %s370
          %s372 = sshll.u32 [#allocation3], 4
          %s373 = int_to_ptr.vmem [resolvable:$true] %s372
          %378 = dma.hbm_to_vmem [thread:$0]  %s5, 8192, %s373, [#allocation4], 512, 512, 32
        $region32: #{pointnet_cls_forward.2} parent=11 // pred_fallthru
          _
        // Predicated region
        $region33: #{pointnet_cls_forward.2} parent=11 // pred_check
          %p379 = pneg %p187
        $region34: #{pointnet_cls_forward.2} parent=11 // pred_check_branch
          %381 = sbr.rel (%p379) target = $region36
        $region35: #{pointnet_cls_forward.2} parent=11 // pred_region
          _
        $region36: #{pointnet_cls_forward.2} parent=11 // pred_fallthru
          _
        // Predicated region
        $region37: #{pointnet_cls_forward.2} parent=11 // pred_check
          %p382 = pneg %p208
        $region38: #{pointnet_cls_forward.2} parent=11 // pred_check_branch
          %384 = sbr.rel (%p382) target = $region40
        $region39: #{pointnet_cls_forward.2} parent=11 // pred_region
          %s386 = ssub.s32 32768, 32768
          %387 = vsyncadd [#allocation6], %s386
          %s388 = sshll.u32 [#allocation5], 4
          %s389 = int_to_ptr.vmem [resolvable:$true] %s388
          %394 = dma.hbm_to_vmem [thread:$0]  %s7, 32768, %s389, [#allocation6], 256, 256, 16
        $region40: #{pointnet_cls_forward.2} parent=11 // pred_fallthru
          _
        // Predicated region
        $region41: #{pointnet_cls_forward.2} parent=11 // pred_check
          %p395 = pneg %p229
        $region42: #{pointnet_cls_forward.2} parent=11 // pred_check_branch
          %397 = sbr.rel (%p395) target = $region44
        $region43: #{pointnet_cls_forward.2} parent=11 // pred_region
          _
        $region44: #{pointnet_cls_forward.2} parent=11 // pred_fallthru
          _
        // Predicated region
        $region45: #{pointnet_cls_forward.2} parent=11 // pred_check
          %p398 = pneg %p250
        $region46: #{pointnet_cls_forward.2} parent=11 // pred_check_branch
          %400 = sbr.rel (%p398) target = $region48
        $region47: #{pointnet_cls_forward.2} parent=11 // pred_region
          %s402 = ssub.s32 8192, 8192
          %403 = vsyncadd [#allocation6], %s402
          %s404 = sshll.u32 [#allocation7], 4
          %s405 = int_to_ptr.vmem [resolvable:$true] %s404
          %410 = dma.hbm_to_vmem [thread:$0]  %s9, 8192, %s405, [#allocation6], 128, 128, 8
        $region48: #{pointnet_cls_forward.2} parent=11 // pred_fallthru
          _
        // Predicated region
        $region49: #{pointnet_cls_forward.2} parent=11 // pred_check
          %p411 = pneg %p271
        $region50: #{pointnet_cls_forward.2} parent=11 // pred_check_branch
          %413 = sbr.rel (%p411) target = $region52
        $region51: #{pointnet_cls_forward.2} parent=11 // pred_region
          _
        $region52: #{pointnet_cls_forward.2} parent=11 // pred_fallthru
          _
        // Predicated region
        $region53: #{pointnet_cls_forward.2} parent=11 // pred_check
          %p414 = pneg %p292
        $region54: #{pointnet_cls_forward.2} parent=11 // pred_check_branch
          %416 = sbr.rel (%p414) target = $region56
        $region55: #{pointnet_cls_forward.2} parent=11 // pred_region
          _
        $region56: #{pointnet_cls_forward.2} parent=11 // pred_fallthru
          _
        // Predicated region
        $region57: #{pointnet_cls_forward.2} parent=11 // pred_check
          %p417 = pneg %p313
        $region58: #{pointnet_cls_forward.2} parent=11 // pred_check_branch
          %419 = sbr.rel (%p417) target = $region60
        $region59: #{pointnet_cls_forward.2} parent=11 // pred_region
          _
        $region60: #{pointnet_cls_forward.2} parent=11 // pred_fallthru
          _
      $region12: #{pointnet_cls_forward.2} parent=5 // pred_fallthru
        _
      %p420 = scmp.lt.s32.totalorder %s21, 2
      // Predicated region
      $region61: #{pointnet_cls_forward.2} parent=5 // pred_check
        %p421 = pneg %p420
      $region62: #{pointnet_cls_forward.2} parent=5 // pred_check_branch
        %423 = sbr.rel (%p421) target = $region64
      $region63: #{pointnet_cls_forward.2} parent=5 // pred_region
        // Predicated region
        $region65: #{pointnet_cls_forward.2} parent=63 // pred_check
          %p424 = pneg %p55
        $region66: #{pointnet_cls_forward.2} parent=63 // pred_check_branch
          %426 = sbr.rel (%p424) target = $region68
        $region67: #{pointnet_cls_forward.2} parent=63 // pred_region
          %s427 = smul.u32 2, %s29
          %p428 = scmp.lt.s32.totalorder %s28, 1
          %s429 = scalar_select %p428, %s28, 1
          %p430 = scmp.lt.s32.totalorder %s427, 1
          %s431 = scalar_select %p430, %s427, 1
          %s432 = smul.addr %s429, 2
          %s433 = sadd.s32 %s431, %s432
          %s434 = smul.addr %s433, 4
          %s435 = scalar_lea.vmem %s0, %s434
          %s436 = smul.u32 2, %s29
        $region68: #{pointnet_cls_forward.2} parent=63 // pred_fallthru
          _
      $region64: #{pointnet_cls_forward.2} parent=5 // pred_fallthru
        _
      %p437 = scmp.le.s32.totalorder 1, %s21
      %p438 = scmp.lt.s32.totalorder %s21, 3
      %p439 = pnand %p437, %p438
      %p440 = pneg %p439
      // Predicated region
      $region69: #{pointnet_cls_forward.2} parent=5 // pred_check
        _
      $region70: #{pointnet_cls_forward.2} parent=5 // pred_check_branch
        %442 = sbr.rel (%p439) target = $region72
      $region71: #{pointnet_cls_forward.2} parent=5 // pred_region
        %s443 = ssub.s32 %s21, 1
        // Predicated region
        $region73: #{pointnet_cls_forward.2} parent=71 // pred_check
          %p444 = pneg %p166
        $region74: #{pointnet_cls_forward.2} parent=71 // pred_check_branch
          %446 = sbr.rel (%p444) target = $region76
        $region75: #{pointnet_cls_forward.2} parent=71 // pred_region
          %447 = dma.done [#allocation4], 8192
        $region76: #{pointnet_cls_forward.2} parent=71 // pred_fallthru
          _
        // Predicated region
        $region77: #{pointnet_cls_forward.2} parent=71 // pred_check
          %p448 = pneg %p208
        $region78: #{pointnet_cls_forward.2} parent=71 // pred_check_branch
          %450 = sbr.rel (%p448) target = $region80
        $region79: #{pointnet_cls_forward.2} parent=71 // pred_region
          %451 = dma.done [#allocation6], 32768
        $region80: #{pointnet_cls_forward.2} parent=71 // pred_fallthru
          _
        // Predicated region
        $region81: #{pointnet_cls_forward.2} parent=71 // pred_check
          %p452 = pneg %p250
        $region82: #{pointnet_cls_forward.2} parent=71 // pred_check_branch
          %454 = sbr.rel (%p452) target = $region84
        $region83: #{pointnet_cls_forward.2} parent=71 // pred_region
          %455 = dma.done [#allocation6], 8192
        $region84: #{pointnet_cls_forward.2} parent=71 // pred_fallthru
          _
        %s456 = smul.u32 2, %s31
        %p457 = scmp.lt.s32.totalorder %s30, 1
        %s458 = scalar_select %p457, %s30, 1
        %p459 = scmp.lt.s32.totalorder %s456, 1
        %s460 = scalar_select %p459, %s456, 1
        %s461 = smul.addr %s458, 2
        %s462 = sadd.s32 %s460, %s461
        %s463 = smul.addr %s462, 4
        %s464 = scalar_lea.vmem %s0, %s463
        %p465 = pneg %p61
        %p466 = pneg %p58
        %p467 = pneg %p82
        %p468 = pneg %p79
        %p469 = pneg %p103
        %p470 = pneg %p100
        %p471 = pneg %p124
        %p472 = pneg %p121
        %p473 = pneg %p145
        %p474 = pneg %p142
        %p475 = pneg %p166
        %p476 = pneg %p163
        %p477 = pneg %p187
        %p478 = pneg %p184
        %p479 = pneg %p208
        %p480 = pneg %p205
        %p481 = pneg %p229
        %p482 = pneg %p226
        %p483 = pneg %p250
        %p484 = pneg %p247
        %p485 = pneg %p271
        %p486 = pneg %p268
        %p487 = pneg %p292
        %p488 = pneg %p289
        %p489 = pneg %p313
        %p490 = pneg %p310
        %p491 = pneg %p339
        %p492 = pneg %p336
        %p493 = scmp.lt.s32.totalorder %s30, 1
        %s494 = scalar_select %p493, %s30, 1
        %s495 = scalar_lea.vmem %s13, %s494
        %s496 = smul.u32 2, %s31
        %p497 = scmp.lt.s32.totalorder %s30, 1
        %s498 = scalar_select %p497, %s30, 1
        %p499 = scmp.lt.s32.totalorder %s496, 1
        %s500 = scalar_select %p499, %s496, 1
        %s501 = smul.addr %s498, 2
        %s502 = sadd.s32 %s500, %s501
        %s503 = smul.addr %s502, 4
        %s504 = scalar_lea.vmem %s0, %s503
        %s505 = smul.u32 2, %s31
        %p506 = scmp.lt.s32.totalorder %s30, 1
        %s507 = scalar_select %p506, %s30, 1
        %s508 = scalar_lea.vmem %s13, %s507
        %p510 = scmp.eq.s32.totalorder %s31, 0
        // Predicated region
        $region85: #{pointnet_cls_forward.2} parent=71 // pred_check
          %p511 = pneg %p510
        $region86: #{pointnet_cls_forward.2} parent=71 // pred_check_branch
          %513 = sbr.rel (%p511) target = $region88
        $region87: #{pointnet_cls_forward.2} parent=71 // pred_region
          %514 = vst [vmem:[#allocation2] sm:$0xff] -inf
        $region88: #{pointnet_cls_forward.2} parent=71 // pred_fallthru
          _
        %v515 = vld [vmem:[%s504] sm:$0xf]
        %v516 = vld [vmem:[%s504 + $0x4] sm:$0xf]
        %v517 = vld [vmem:[%s1] sm:$0xf]
        %v518 = vld [vmem:[%s2] sm:$0x1]
        %v520 = vlaneseq
        %v521 = vshrl.u32 %v520, 7
        %v522 = vsub.s32 0, %v521
        %v523 = vrot.slane %v518, %v522
        %v527 = vunpack.c.l.b16 %v515
        %v528 = vunpack.c.l.b16 %v516
        %v529 = vpack.c.b16 %v528, %v527
        %vm530 = vcmask 64512
        %v532 = vsel %vm530, %v529, 0
        %vm534 = vcmask 1043456
        %v536 = vsel %vm534, %v517, 0
        %538 = vmatprep.subr.bf16.mxu0 0
        %539 = vmatpush1.bf16.msra.mxu0 0
        %540 = vmatprep.subr.bf16.mxu0 0
        %541 = vmatpush1.bf16.msra.mxu0 0
        %542 = vmatprep.subr.bf16.mxu0 0
        %543 = vmatpush1.bf16.msra.mxu0 0
        %544 = vmatprep.subr.bf16.mxu0 0
        %545 = vmatpush1.bf16.msra.mxu0 0
        %546 = vmatprep.subr.bf16.mxu0 0
        %547 = vmatpush1.bf16.msra.mxu0 0
        %548 = vmatprep.subr.bf16.mxu0 0
        %549 = vmatpush1.bf16.msra.mxu0 0
        %550 = vmatprep.subr.bf16.mxu0 0
        %551 = vmatpush1.bf16.msra.mxu0 0
        %552 = vmatprep.subr.bf16.mxu0 0
        %553 = vmatpush1.bf16.msra.mxu0 %v536
        %554 = vmatprep.subr.bf16.mxu0 0
        %555 = vmatpush2.bf16.msra.mxu0 0
        %556 = vmatprep.subr.bf16.mxu0 0
        %557 = vmatpush2.bf16.msra.mxu0 0
        %558 = vmatprep.subr.bf16.mxu0 0
        %559 = vmatpush2.bf16.msra.mxu0 0
        %560 = vmatprep.subr.bf16.mxu0 0
        %561 = vmatpush2.bf16.msra.mxu0 0
        %562 = vmatprep.subr.bf16.mxu0 0
        %563 = vmatpush2.bf16.msra.mxu0 0
        %564 = vmatprep.subr.bf16.mxu0 0
        %565 = vmatpush2.bf16.msra.mxu0 0
        %566 = vmatprep.subr.bf16.mxu0 0
        %567 = vmatpush2.bf16.msra.mxu0 0
        %568 = vmatprep.subr.bf16.mxu0 0
        %569 = vmatpush2.bf16.msra.mxu0 0
        %570 = vmatprep.mubr.bf16.mxu0 0
        %571 = vmatmul.mubr.bf16.gmra.mxu0 %v532
        %v572 = vpop.f32.mrf.mxu0
        %v573 = vadd.f32 %v523, %v572
        %v574 = vpop.f32.mrf.mxu0
        %v575 = vpop.f32.mrf.mxu0
        %v576 = vadd.f32 %v523, %v575
        %v577 = vpop.f32.mrf.mxu0
        %578 = vdwg.mxu0
        %v579 = vmax.f32 %v573, 0.0
        %v580 = vmax.f32 %v576, 0.0
        %v581 = vpack.c.bf16 %v580, %v579
        %v582 = vld [vmem:[%s3] sm:$0xf]
        %v583 = vld [vmem:[%s3 + $0x4] sm:$0xf]
        %v584 = vld [vmem:[%s3 + $0x8] sm:$0xf]
        %v585 = vld [vmem:[%s3 + $0xc] sm:$0xf]
        %v586 = vld [vmem:[%s3 + $0x10] sm:$0xf]
        %v587 = vld [vmem:[%s3 + $0x14] sm:$0xf]
        %v588 = vld [vmem:[%s3 + $0x18] sm:$0xf]
        %v589 = vld [vmem:[%s3 + $0x1c] sm:$0xf]
        %v590 = vld [vmem:[%s4] sm:$0x1]
        %v592 = vlaneseq
        %v593 = vshrl.u32 %v592, 7
        %v594 = vsub.s32 0, %v593
        %v595 = vrot.slane %v590, %v594
        %v605 = vunpack.c.l.b16 %v582
        %v606 = vunpack.c.l.b16 %v583
        %v607 = vunpack.c.l.b16 %v584
        %v608 = vunpack.c.l.b16 %v585
        %v609 = vunpack.c.l.b16 %v586
        %v610 = vunpack.c.l.b16 %v587
        %v611 = vunpack.c.l.b16 %v588
        %v612 = vunpack.c.l.b16 %v589
        %v613 = vpack.c.b16 %v606, %v605
        %v614 = vpack.c.b16 %v608, %v607
        %v615 = vpack.c.b16 %v610, %v609
        %v616 = vpack.c.b16 %v612, %v611
        %vm621 = vcmask 523264
        %v623 = vsel %vm621, %v581, 0
        %625 = vmatprep.subr.bf16.mxu0 0
        %626 = vmatpush1.bf16.msra.mxu0 0
        %627 = vmatprep.subr.bf16.mxu0 0
        %628 = vmatpush1.bf16.msra.mxu0 0
        %629 = vmatprep.subr.bf16.mxu0 0
        %630 = vmatpush1.bf16.msra.mxu0 0
        %631 = vmatprep.subr.bf16.mxu0 0
        %632 = vmatpush1.bf16.msra.mxu0 0
        %633 = vmatprep.subr.bf16.mxu0 0
        %634 = vmatpush1.bf16.msra.mxu0 %v616
        %635 = vmatprep.subr.bf16.mxu0 0
        %636 = vmatpush1.bf16.msra.mxu0 %v615
        %637 = vmatprep.subr.bf16.mxu0 0
        %638 = vmatpush1.bf16.msra.mxu0 %v614
        %639 = vmatprep.subr.bf16.mxu0 0
        %640 = vmatpush1.bf16.msra.mxu0 %v613
        %641 = vmatprep.subr.bf16.mxu0 0
        %642 = vmatpush2.bf16.msra.mxu0 0
        %643 = vmatprep.subr.bf16.mxu0 0
        %644 = vmatpush2.bf16.msra.mxu0 0
        %645 = vmatprep.subr.bf16.mxu0 0
        %646 = vmatpush2.bf16.msra.mxu0 0
        %647 = vmatprep.subr.bf16.mxu0 0
        %648 = vmatpush2.bf16.msra.mxu0 0
        %649 = vmatprep.subr.bf16.mxu0 0
        %650 = vmatpush2.bf16.msra.mxu0 0
        %651 = vmatprep.subr.bf16.mxu0 0
        %652 = vmatpush2.bf16.msra.mxu0 0
        %653 = vmatprep.subr.bf16.mxu0 0
        %654 = vmatpush2.bf16.msra.mxu0 0
        %655 = vmatprep.subr.bf16.mxu0 0
        %656 = vmatpush2.bf16.msra.mxu0 0
        %657 = vmatprep.mubr.bf16.mxu0 0
        %658 = vmatmul.mubr.bf16.gmra.mxu0 %v623
        %v659 = vpop.f32.mrf.mxu0
        %v660 = vadd.f32 %v595, %v659
        %v661 = vpop.f32.mrf.mxu0
        %v662 = vpop.f32.mrf.mxu0
        %v663 = vadd.f32 %v595, %v662
        %v664 = vpop.f32.mrf.mxu0
        %665 = vdwg.mxu0
        %v666 = vmax.f32 %v660, 0.0
        %v667 = vmax.f32 %v663, 0.0
        %v668 = vpack.c.bf16 %v667, %v666
        %v669 = vld [vmem:[#allocation3] sm:$0xff]
        %v670 = vld [vmem:[#allocation3 + $0x8] sm:$0xff]
        %v671 = vld [vmem:[#allocation3 + $0x10] sm:$0xff]
        %v672 = vld [vmem:[#allocation3 + $0x18] sm:$0xff]
        %v673 = vld [vmem:[#allocation3 + $0x20] sm:$0xff]
        %v674 = vld [vmem:[#allocation3 + $0x28] sm:$0xff]
        %v675 = vld [vmem:[#allocation3 + $0x30] sm:$0xff]
        %v676 = vld [vmem:[#allocation3 + $0x38] sm:$0xff]
        %v677 = vld [vmem:[#allocation3 + $0x40] sm:$0xff]
        %v678 = vld [vmem:[#allocation3 + $0x48] sm:$0xff]
        %v679 = vld [vmem:[#allocation3 + $0x50] sm:$0xff]
        %v680 = vld [vmem:[#allocation3 + $0x58] sm:$0xff]
        %v681 = vld [vmem:[#allocation3 + $0x60] sm:$0xff]
        %v682 = vld [vmem:[#allocation3 + $0x68] sm:$0xff]
        %v683 = vld [vmem:[#allocation3 + $0x70] sm:$0xff]
        %v684 = vld [vmem:[#allocation3 + $0x78] sm:$0xff]
        %v685 = vld [vmem:[#allocation3 + $0x80] sm:$0xff]
        %v686 = vld [vmem:[#allocation3 + $0x88] sm:$0xff]
        %v687 = vld [vmem:[#allocation3 + $0x90] sm:$0xff]
        %v688 = vld [vmem:[#allocation3 + $0x98] sm:$0xff]
        %v689 = vld [vmem:[#allocation3 + $0xa0] sm:$0xff]
        %v690 = vld [vmem:[#allocation3 + $0xa8] sm:$0xff]
        %v691 = vld [vmem:[#allocation3 + $0xb0] sm:$0xff]
        %v692 = vld [vmem:[#allocation3 + $0xb8] sm:$0xff]
        %v693 = vld [vmem:[#allocation3 + $0xc0] sm:$0xff]
        %v694 = vld [vmem:[#allocation3 + $0xc8] sm:$0xff]
        %v695 = vld [vmem:[#allocation3 + $0xd0] sm:$0xff]
        %v696 = vld [vmem:[#allocation3 + $0xd8] sm:$0xff]
        %v697 = vld [vmem:[#allocation3 + $0xe0] sm:$0xff]
        %v698 = vld [vmem:[#allocation3 + $0xe8] sm:$0xff]
        %v699 = vld [vmem:[#allocation3 + $0xf0] sm:$0xff]
        %v700 = vld [vmem:[#allocation3 + $0xf8] sm:$0xff]
        %v701 = vld [vmem:[#allocation3 + $0x100] sm:$0xff]
        %v702 = vld [vmem:[#allocation3 + $0x108] sm:$0xff]
        %v703 = vld [vmem:[#allocation3 + $0x110] sm:$0xff]
        %v704 = vld [vmem:[#allocation3 + $0x118] sm:$0xff]
        %v705 = vld [vmem:[#allocation3 + $0x120] sm:$0xff]
        %v706 = vld [vmem:[#allocation3 + $0x128] sm:$0xff]
        %v707 = vld [vmem:[#allocation3 + $0x130] sm:$0xff]
        %v708 = vld [vmem:[#allocation3 + $0x138] sm:$0xff]
        %v709 = vld [vmem:[#allocation3 + $0x140] sm:$0xff]
        %v710 = vld [vmem:[#allocation3 + $0x148] sm:$0xff]
        %v711 = vld [vmem:[#allocation3 + $0x150] sm:$0xff]
        %v712 = vld [vmem:[#allocation3 + $0x158] sm:$0xff]
        %v713 = vld [vmem:[#allocation3 + $0x160] sm:$0xff]
        %v714 = vld [vmem:[#allocation3 + $0x168] sm:$0xff]
        %v715 = vld [vmem:[#allocation3 + $0x170] sm:$0xff]
        %v716 = vld [vmem:[#allocation3 + $0x178] sm:$0xff]
        %v717 = vld [vmem:[#allocation3 + $0x180] sm:$0xff]
        %v718 = vld [vmem:[#allocation3 + $0x188] sm:$0xff]
        %v719 = vld [vmem:[#allocation3 + $0x190] sm:$0xff]
        %v720 = vld [vmem:[#allocation3 + $0x198] sm:$0xff]
        %v721 = vld [vmem:[#allocation3 + $0x1a0] sm:$0xff]
        %v722 = vld [vmem:[#allocation3 + $0x1a8] sm:$0xff]
        %v723 = vld [vmem:[#allocation3 + $0x1b0] sm:$0xff]
        %v724 = vld [vmem:[#allocation3 + $0x1b8] sm:$0xff]
        %v725 = vld [vmem:[#allocation3 + $0x1c0] sm:$0xff]
        %v726 = vld [vmem:[#allocation3 + $0x1c8] sm:$0xff]
        %v727 = vld [vmem:[#allocation3 + $0x1d0] sm:$0xff]
        %v728 = vld [vmem:[#allocation3 + $0x1d8] sm:$0xff]
        %v729 = vld [vmem:[#allocation3 + $0x1e0] sm:$0xff]
        %v730 = vld [vmem:[#allocation3 + $0x1e8] sm:$0xff]
        %v731 = vld [vmem:[#allocation3 + $0x1f0] sm:$0xff]
        %v732 = vld [vmem:[#allocation3 + $0x1f8] sm:$0xff]
        %v797 = vunpack.c.l.b16 %v669
        %v798 = vunpack.c.h.b16 %v669
        %v799 = vunpack.c.l.b16 %v670
        %v800 = vunpack.c.h.b16 %v670
        %v801 = vunpack.c.l.b16 %v671
        %v802 = vunpack.c.h.b16 %v671
        %v803 = vunpack.c.l.b16 %v672
        %v804 = vunpack.c.h.b16 %v672
        %v805 = vunpack.c.l.b16 %v673
        %v806 = vunpack.c.h.b16 %v673
        %v807 = vunpack.c.l.b16 %v674
        %v808 = vunpack.c.h.b16 %v674
        %v809 = vunpack.c.l.b16 %v675
        %v810 = vunpack.c.h.b16 %v675
        %v811 = vunpack.c.l.b16 %v676
        %v812 = vunpack.c.h.b16 %v676
        %v813 = vunpack.c.l.b16 %v677
        %v814 = vunpack.c.h.b16 %v677
        %v815 = vunpack.c.l.b16 %v678
        %v816 = vunpack.c.h.b16 %v678
        %v817 = vunpack.c.l.b16 %v679
        %v818 = vunpack.c.h.b16 %v679
        %v819 = vunpack.c.l.b16 %v680
        %v820 = vunpack.c.h.b16 %v680
        %v821 = vunpack.c.l.b16 %v681
        %v822 = vunpack.c.h.b16 %v681
        %v823 = vunpack.c.l.b16 %v682
        %v824 = vunpack.c.h.b16 %v682
        %v825 = vunpack.c.l.b16 %v683
        %v826 = vunpack.c.h.b16 %v683
        %v827 = vunpack.c.l.b16 %v684
        %v828 = vunpack.c.h.b16 %v684
        %v829 = vunpack.c.l.b16 %v685
        %v830 = vunpack.c.h.b16 %v685
        %v831 = vunpack.c.l.b16 %v686
        %v832 = vunpack.c.h.b16 %v686
        %v833 = vunpack.c.l.b16 %v687
        %v834 = vunpack.c.h.b16 %v687
        %v835 = vunpack.c.l.b16 %v688
        %v836 = vunpack.c.h.b16 %v688
        %v837 = vunpack.c.l.b16 %v689
        %v838 = vunpack.c.h.b16 %v689
        %v839 = vunpack.c.l.b16 %v690
        %v840 = vunpack.c.h.b16 %v690
        %v841 = vunpack.c.l.b16 %v691
        %v842 = vunpack.c.h.b16 %v691
        %v843 = vunpack.c.l.b16 %v692
        %v844 = vunpack.c.h.b16 %v692
        %v845 = vunpack.c.l.b16 %v693
        %v846 = vunpack.c.h.b16 %v693
        %v847 = vunpack.c.l.b16 %v694
        %v848 = vunpack.c.h.b16 %v694
        %v849 = vunpack.c.l.b16 %v695
        %v850 = vunpack.c.h.b16 %v695
        %v851 = vunpack.c.l.b16 %v696
        %v852 = vunpack.c.h.b16 %v696
        %v853 = vunpack.c.l.b16 %v697
        %v854 = vunpack.c.h.b16 %v697
        %v855 = vunpack.c.l.b16 %v698
        %v856 = vunpack.c.h.b16 %v698
        %v857 = vunpack.c.l.b16 %v699
        %v858 = vunpack.c.h.b16 %v699
        %v859 = vunpack.c.l.b16 %v700
        %v860 = vunpack.c.h.b16 %v700
        %v861 = vunpack.c.l.b16 %v701
        %v862 = vunpack.c.h.b16 %v701
        %v863 = vunpack.c.l.b16 %v702
        %v864 = vunpack.c.h.b16 %v702
        %v865 = vunpack.c.l.b16 %v703
        %v866 = vunpack.c.h.b16 %v703
        %v867 = vunpack.c.l.b16 %v704
        %v868 = vunpack.c.h.b16 %v704
        %v869 = vunpack.c.l.b16 %v705
        %v870 = vunpack.c.h.b16 %v705
        %v871 = vunpack.c.l.b16 %v706
        %v872 = vunpack.c.h.b16 %v706
        %v873 = vunpack.c.l.b16 %v707
        %v874 = vunpack.c.h.b16 %v707
        %v875 = vunpack.c.l.b16 %v708
        %v876 = vunpack.c.h.b16 %v708
        %v877 = vunpack.c.l.b16 %v709
        %v878 = vunpack.c.h.b16 %v709
        %v879 = vunpack.c.l.b16 %v710
        %v880 = vunpack.c.h.b16 %v710
        %v881 = vunpack.c.l.b16 %v711
        %v882 = vunpack.c.h.b16 %v711
        %v883 = vunpack.c.l.b16 %v712
        %v884 = vunpack.c.h.b16 %v712
        %v885 = vunpack.c.l.b16 %v713
        %v886 = vunpack.c.h.b16 %v713
        %v887 = vunpack.c.l.b16 %v714
        %v888 = vunpack.c.h.b16 %v714
        %v889 = vunpack.c.l.b16 %v715
        %v890 = vunpack.c.h.b16 %v715
        %v891 = vunpack.c.l.b16 %v716
        %v892 = vunpack.c.h.b16 %v716
        %v893 = vunpack.c.l.b16 %v717
        %v894 = vunpack.c.h.b16 %v717
        %v895 = vunpack.c.l.b16 %v718
        %v896 = vunpack.c.h.b16 %v718
        %v897 = vunpack.c.l.b16 %v719
        %v898 = vunpack.c.h.b16 %v719
        %v899 = vunpack.c.l.b16 %v720
        %v900 = vunpack.c.h.b16 %v720
        %v901 = vunpack.c.l.b16 %v721
        %v902 = vunpack.c.h.b16 %v721
        %v903 = vunpack.c.l.b16 %v722
        %v904 = vunpack.c.h.b16 %v722
        %v905 = vunpack.c.l.b16 %v723
        %v906 = vunpack.c.h.b16 %v723
        %v907 = vunpack.c.l.b16 %v724
        %v908 = vunpack.c.h.b16 %v724
        %v909 = vunpack.c.l.b16 %v725
        %v910 = vunpack.c.h.b16 %v725
        %v911 = vunpack.c.l.b16 %v726
        %v912 = vunpack.c.h.b16 %v726
        %v913 = vunpack.c.l.b16 %v727
        %v914 = vunpack.c.h.b16 %v727
        %v915 = vunpack.c.l.b16 %v728
        %v916 = vunpack.c.h.b16 %v728
        %v917 = vunpack.c.l.b16 %v729
        %v918 = vunpack.c.h.b16 %v729
        %v919 = vunpack.c.l.b16 %v730
        %v920 = vunpack.c.h.b16 %v730
        %v921 = vunpack.c.l.b16 %v731
        %v922 = vunpack.c.h.b16 %v731
        %v923 = vunpack.c.l.b16 %v732
        %v924 = vunpack.c.h.b16 %v732
        %v925 = vpack.c.b16 %v805, %v797
        %v926 = vpack.c.b16 %v806, %v798
        %v927 = vpack.c.b16 %v807, %v799
        %v928 = vpack.c.b16 %v808, %v800
        %v929 = vpack.c.b16 %v809, %v801
        %v930 = vpack.c.b16 %v810, %v802
        %v931 = vpack.c.b16 %v811, %v803
        %v932 = vpack.c.b16 %v812, %v804
        %v933 = vpack.c.b16 %v821, %v813
        %v934 = vpack.c.b16 %v822, %v814
        %v935 = vpack.c.b16 %v823, %v815
        %v936 = vpack.c.b16 %v824, %v816
        %v937 = vpack.c.b16 %v825, %v817
        %v938 = vpack.c.b16 %v826, %v818
        %v939 = vpack.c.b16 %v827, %v819
        %v940 = vpack.c.b16 %v828, %v820
        %v941 = vpack.c.b16 %v837, %v829
        %v942 = vpack.c.b16 %v838, %v830
        %v943 = vpack.c.b16 %v839, %v831
        %v944 = vpack.c.b16 %v840, %v832
        %v945 = vpack.c.b16 %v841, %v833
        %v946 = vpack.c.b16 %v842, %v834
        %v947 = vpack.c.b16 %v843, %v835
        %v948 = vpack.c.b16 %v844, %v836
        %v949 = vpack.c.b16 %v853, %v845
        %v950 = vpack.c.b16 %v854, %v846
        %v951 = vpack.c.b16 %v855, %v847
        %v952 = vpack.c.b16 %v856, %v848
        %v953 = vpack.c.b16 %v857, %v849
        %v954 = vpack.c.b16 %v858, %v850
        %v955 = vpack.c.b16 %v859, %v851
        %v956 = vpack.c.b16 %v860, %v852
        %v957 = vpack.c.b16 %v869, %v861
        %v958 = vpack.c.b16 %v870, %v862
        %v959 = vpack.c.b16 %v871, %v863
        %v960 = vpack.c.b16 %v872, %v864
        %v961 = vpack.c.b16 %v873, %v865
        %v962 = vpack.c.b16 %v874, %v866
        %v963 = vpack.c.b16 %v875, %v867
        %v964 = vpack.c.b16 %v876, %v868
        %v965 = vpack.c.b16 %v885, %v877
        %v966 = vpack.c.b16 %v886, %v878
        %v967 = vpack.c.b16 %v887, %v879
        %v968 = vpack.c.b16 %v888, %v880
        %v969 = vpack.c.b16 %v889, %v881
        %v970 = vpack.c.b16 %v890, %v882
        %v971 = vpack.c.b16 %v891, %v883
        %v972 = vpack.c.b16 %v892, %v884
        %v973 = vpack.c.b16 %v901, %v893
        %v974 = vpack.c.b16 %v902, %v894
        %v975 = vpack.c.b16 %v903, %v895
        %v976 = vpack.c.b16 %v904, %v896
        %v977 = vpack.c.b16 %v905, %v897
        %v978 = vpack.c.b16 %v906, %v898
        %v979 = vpack.c.b16 %v907, %v899
        %v980 = vpack.c.b16 %v908, %v900
        %v981 = vpack.c.b16 %v917, %v909
        %v982 = vpack.c.b16 %v918, %v910
        %v983 = vpack.c.b16 %v919, %v911
        %v984 = vpack.c.b16 %v920, %v912
        %v985 = vpack.c.b16 %v921, %v913
        %v986 = vpack.c.b16 %v922, %v914
        %v987 = vpack.c.b16 %v923, %v915
        %v988 = vpack.c.b16 %v924, %v916
        %1053 = vmatprep.subr.bf16.mxu0 %v982
        %1054 = vmatpush1.bf16.msra.mxu0 %v981
        %1055 = vmatprep.subr.bf16.mxu0 %v974
        %1056 = vmatpush1.bf16.msra.mxu0 %v973
        %1057 = vmatprep.subr.bf16.mxu0 %v966
        %1058 = vmatpush1.bf16.msra.mxu0 %v965
        %1059 = vmatprep.subr.bf16.mxu0 %v958
        %1060 = vmatpush1.bf16.msra.mxu0 %v957
        %1061 = vmatprep.subr.bf16.mxu0 %v950
        %1062 = vmatpush1.bf16.msra.mxu0 %v949
        %1063 = vmatprep.subr.bf16.mxu0 %v942
        %1064 = vmatpush1.bf16.msra.mxu0 %v941
        %1065 = vmatprep.subr.bf16.mxu0 %v934
        %1066 = vmatpush1.bf16.msra.mxu0 %v933
        %1067 = vmatprep.subr.bf16.mxu0 %v926
        %1068 = vmatpush1.bf16.msra.mxu0 %v925
        %1069 = vmatprep.subr.bf16.mxu0 0
        %1070 = vmatpush2.bf16.msra.mxu0 0
        %1071 = vmatprep.subr.bf16.mxu0 0
        %1072 = vmatpush2.bf16.msra.mxu0 0
        %1073 = vmatprep.subr.bf16.mxu0 0
        %1074 = vmatpush2.bf16.msra.mxu0 0
        %1075 = vmatprep.subr.bf16.mxu0 0
        %1076 = vmatpush2.bf16.msra.mxu0 0
        %1077 = vmatprep.subr.bf16.mxu0 0
        %1078 = vmatpush2.bf16.msra.mxu0 0
        %1079 = vmatprep.subr.bf16.mxu0 0
        %1080 = vmatpush2.bf16.msra.mxu0 0
        %1081 = vmatprep.subr.bf16.mxu0 0
        %1082 = vmatpush2.bf16.msra.mxu0 0
        %1083 = vmatprep.subr.bf16.mxu0 0
        %1084 = vmatpush2.bf16.msra.mxu0 0
        %1085 = vmatprep.mubr.bf16.mxu0 0
        %1086 = vmatmul.mubr.bf16.gmra.mxu0 %v668
        %v1087 = vpop.f32.mrf.mxu0
        %v1088 = vadd.f32 0.0, %v1087
        %v1089 = vpop.f32.mrf.mxu0
        %v1090 = vadd.f32 0.0, %v1089
        %v1091 = vpop.f32.mrf.mxu0
        %v1092 = vadd.f32 0.0, %v1091
        %v1093 = vpop.f32.mrf.mxu0
        %v1094 = vadd.f32 0.0, %v1093
        %1095 = vdwg.mxu0
        %1096 = vmatprep.subr.bf16.mxu0 %v984
        %1097 = vmatpush1.bf16.msra.mxu0 %v983
        %1098 = vmatprep.subr.bf16.mxu0 %v976
        %1099 = vmatpush1.bf16.msra.mxu0 %v975
        %1100 = vmatprep.subr.bf16.mxu0 %v968
        %1101 = vmatpush1.bf16.msra.mxu0 %v967
        %1102 = vmatprep.subr.bf16.mxu0 %v960
        %1103 = vmatpush1.bf16.msra.mxu0 %v959
        %1104 = vmatprep.subr.bf16.mxu0 %v952
        %1105 = vmatpush1.bf16.msra.mxu0 %v951
        %1106 = vmatprep.subr.bf16.mxu0 %v944
        %1107 = vmatpush1.bf16.msra.mxu0 %v943
        %1108 = vmatprep.subr.bf16.mxu0 %v936
        %1109 = vmatpush1.bf16.msra.mxu0 %v935
        %1110 = vmatprep.subr.bf16.mxu0 %v928
        %1111 = vmatpush1.bf16.msra.mxu0 %v927
        %1112 = vmatprep.subr.bf16.mxu0 0
        %1113 = vmatpush2.bf16.msra.mxu0 0
        %1114 = vmatprep.subr.bf16.mxu0 0
        %1115 = vmatpush2.bf16.msra.mxu0 0
        %1116 = vmatprep.subr.bf16.mxu0 0
        %1117 = vmatpush2.bf16.msra.mxu0 0
        %1118 = vmatprep.subr.bf16.mxu0 0
        %1119 = vmatpush2.bf16.msra.mxu0 0
        %1120 = vmatprep.subr.bf16.mxu0 0
        %1121 = vmatpush2.bf16.msra.mxu0 0
        %1122 = vmatprep.subr.bf16.mxu0 0
        %1123 = vmatpush2.bf16.msra.mxu0 0
        %1124 = vmatprep.subr.bf16.mxu0 0
        %1125 = vmatpush2.bf16.msra.mxu0 0
        %1126 = vmatprep.subr.bf16.mxu0 0
        %1127 = vmatpush2.bf16.msra.mxu0 0
        %1128 = vmatprep.mubr.bf16.mxu0 0
        %1129 = vmatmul.mubr.bf16.gmra.mxu0 %v668
        %v1130 = vpop.f32.mrf.mxu0
        %v1131 = vadd.f32 0.0, %v1130
        %v1132 = vpop.f32.mrf.mxu0
        %v1133 = vadd.f32 0.0, %v1132
        %v1134 = vpop.f32.mrf.mxu0
        %v1135 = vadd.f32 0.0, %v1134
        %v1136 = vpop.f32.mrf.mxu0
        %v1137 = vadd.f32 0.0, %v1136
        %1138 = vdwg.mxu0
        %1139 = vmatprep.subr.bf16.mxu0 %v986
        %1140 = vmatpush1.bf16.msra.mxu0 %v985
        %1141 = vmatprep.subr.bf16.mxu0 %v978
        %1142 = vmatpush1.bf16.msra.mxu0 %v977
        %1143 = vmatprep.subr.bf16.mxu0 %v970
        %1144 = vmatpush1.bf16.msra.mxu0 %v969
        %1145 = vmatprep.subr.bf16.mxu0 %v962
        %1146 = vmatpush1.bf16.msra.mxu0 %v961
        %1147 = vmatprep.subr.bf16.mxu0 %v954
        %1148 = vmatpush1.bf16.msra.mxu0 %v953
        %1149 = vmatprep.subr.bf16.mxu0 %v946
        %1150 = vmatpush1.bf16.msra.mxu0 %v945
        %1151 = vmatprep.subr.bf16.mxu0 %v938
        %1152 = vmatpush1.bf16.msra.mxu0 %v937
        %1153 = vmatprep.subr.bf16.mxu0 %v930
        %1154 = vmatpush1.bf16.msra.mxu0 %v929
        %1155 = vmatprep.subr.bf16.mxu0 0
        %1156 = vmatpush2.bf16.msra.mxu0 0
        %1157 = vmatprep.subr.bf16.mxu0 0
        %1158 = vmatpush2.bf16.msra.mxu0 0
        %1159 = vmatprep.subr.bf16.mxu0 0
        %1160 = vmatpush2.bf16.msra.mxu0 0
        %1161 = vmatprep.subr.bf16.mxu0 0
        %1162 = vmatpush2.bf16.msra.mxu0 0
        %1163 = vmatprep.subr.bf16.mxu0 0
        %1164 = vmatpush2.bf16.msra.mxu0 0
        %1165 = vmatprep.subr.bf16.mxu0 0
        %1166 = vmatpush2.bf16.msra.mxu0 0
        %1167 = vmatprep.subr.bf16.mxu0 0
        %1168 = vmatpush2.bf16.msra.mxu0 0
        %1169 = vmatprep.subr.bf16.mxu0 0
        %1170 = vmatpush2.bf16.msra.mxu0 0
        %1171 = vmatprep.mubr.bf16.mxu0 0
        %1172 = vmatmul.mubr.bf16.gmra.mxu0 %v668
        %v1173 = vpop.f32.mrf.mxu0
        %v1174 = vadd.f32 0.0, %v1173
        %v1175 = vpop.f32.mrf.mxu0
        %v1176 = vadd.f32 0.0, %v1175
        %v1177 = vpop.f32.mrf.mxu0
        %v1178 = vadd.f32 0.0, %v1177
        %v1179 = vpop.f32.mrf.mxu0
        %v1180 = vadd.f32 0.0, %v1179
        %1181 = vdwg.mxu0
        %1182 = vmatprep.subr.bf16.mxu0 %v988
        %1183 = vmatpush1.bf16.msra.mxu0 %v987
        %1184 = vmatprep.subr.bf16.mxu0 %v980
        %1185 = vmatpush1.bf16.msra.mxu0 %v979
        %1186 = vmatprep.subr.bf16.mxu0 %v972
        %1187 = vmatpush1.bf16.msra.mxu0 %v971
        %1188 = vmatprep.subr.bf16.mxu0 %v964
        %1189 = vmatpush1.bf16.msra.mxu0 %v963
        %1190 = vmatprep.subr.bf16.mxu0 %v956
        %1191 = vmatpush1.bf16.msra.mxu0 %v955
        %1192 = vmatprep.subr.bf16.mxu0 %v948
        %1193 = vmatpush1.bf16.msra.mxu0 %v947
        %1194 = vmatprep.subr.bf16.mxu0 %v940
        %1195 = vmatpush1.bf16.msra.mxu0 %v939
        %1196 = vmatprep.subr.bf16.mxu0 %v932
        %1197 = vmatpush1.bf16.msra.mxu0 %v931
        %1198 = vmatprep.subr.bf16.mxu0 0
        %1199 = vmatpush2.bf16.msra.mxu0 0
        %1200 = vmatprep.subr.bf16.mxu0 0
        %1201 = vmatpush2.bf16.msra.mxu0 0
        %1202 = vmatprep.subr.bf16.mxu0 0
        %1203 = vmatpush2.bf16.msra.mxu0 0
        %1204 = vmatprep.subr.bf16.mxu0 0
        %1205 = vmatpush2.bf16.msra.mxu0 0
        %1206 = vmatprep.subr.bf16.mxu0 0
        %1207 = vmatpush2.bf16.msra.mxu0 0
        %1208 = vmatprep.subr.bf16.mxu0 0
        %1209 = vmatpush2.bf16.msra.mxu0 0
        %1210 = vmatprep.subr.bf16.mxu0 0
        %1211 = vmatpush2.bf16.msra.mxu0 0
        %1212 = vmatprep.subr.bf16.mxu0 0
        %1213 = vmatpush2.bf16.msra.mxu0 0
        %1214 = vmatprep.mubr.bf16.mxu0 0
        %1215 = vmatmul.mubr.bf16.gmra.mxu0 %v668
        %v1216 = vpop.f32.mrf.mxu0
        %v1217 = vadd.f32 0.0, %v1216
        %v1218 = vpop.f32.mrf.mxu0
        %v1219 = vadd.f32 0.0, %v1218
        %v1220 = vpop.f32.mrf.mxu0
        %v1221 = vadd.f32 0.0, %v1220
        %v1222 = vpop.f32.mrf.mxu0
        %v1223 = vadd.f32 0.0, %v1222
        %1224 = vdwg.mxu0
        %v1225 = vld [vmem:[#allocation2] sm:$0xff]
        %v1226 = vmax.f32 %v1088, %v1092
        %v1227 = vrot.slane %v1226, 4
        %v1228 = vmax.f32 %v1226, %v1227
        %v1229 = vrot.slane %v1228, 2
        %v1230 = vmax.f32 %v1228, %v1229
        %v1231 = vrot.slane %v1230, 1
        %v1232 = vmax.f32 %v1230, %v1231
        %v1233 = vmax.f32 %v1090, %v1094
        %v1234 = vrot.slane %v1233, 4
        %v1235 = vmax.f32 %v1233, %v1234
        %v1236 = vrot.slane %v1235, 2
        %v1237 = vmax.f32 %v1235, %v1236
        %v1238 = vrot.slane %v1237, 1
        %v1239 = vmax.f32 %v1237, %v1238
        %v1240 = vmax.f32 %v1131, %v1135
        %v1241 = vrot.slane %v1240, 4
        %v1242 = vmax.f32 %v1240, %v1241
        %v1243 = vrot.slane %v1242, 2
        %v1244 = vmax.f32 %v1242, %v1243
        %v1245 = vrot.slane %v1244, 1
        %v1246 = vmax.f32 %v1244, %v1245
        %v1247 = vmax.f32 %v1133, %v1137
        %v1248 = vrot.slane %v1247, 4
        %v1249 = vmax.f32 %v1247, %v1248
        %v1250 = vrot.slane %v1249, 2
        %v1251 = vmax.f32 %v1249, %v1250
        %v1252 = vrot.slane %v1251, 1
        %v1253 = vmax.f32 %v1251, %v1252
        %v1254 = vmax.f32 %v1174, %v1178
        %v1255 = vrot.slane %v1254, 4
        %v1256 = vmax.f32 %v1254, %v1255
        %v1257 = vrot.slane %v1256, 2
        %v1258 = vmax.f32 %v1256, %v1257
        %v1259 = vrot.slane %v1258, 1
        %v1260 = vmax.f32 %v1258, %v1259
        %v1261 = vmax.f32 %v1176, %v1180
        %v1262 = vrot.slane %v1261, 4
        %v1263 = vmax.f32 %v1261, %v1262
        %v1264 = vrot.slane %v1263, 2
        %v1265 = vmax.f32 %v1263, %v1264
        %v1266 = vrot.slane %v1265, 1
        %v1267 = vmax.f32 %v1265, %v1266
        %v1268 = vmax.f32 %v1217, %v1221
        %v1269 = vrot.slane %v1268, 4
        %v1270 = vmax.f32 %v1268, %v1269
        %v1271 = vrot.slane %v1270, 2
        %v1272 = vmax.f32 %v1270, %v1271
        %v1273 = vrot.slane %v1272, 1
        %v1274 = vmax.f32 %v1272, %v1273
        %v1275 = vmax.f32 %v1219, %v1223
        %v1276 = vrot.slane %v1275, 4
        %v1277 = vmax.f32 %v1275, %v1276
        %v1278 = vrot.slane %v1277, 2
        %v1279 = vmax.f32 %v1277, %v1278
        %v1280 = vrot.slane %v1279, 1
        %v1281 = vmax.f32 %v1279, %v1280
        %v1290 = vcombine.low %v1232, %v1239
        %v1291 = vcombine.low %v1246, %v1253
        %v1292 = vcombine.low %v1260, %v1267
        %v1293 = vcombine.low %v1274, %v1281
        %v1295 = vunpack.c.l.s4 1966171168
        %v1296 = vunpack.c.0.s8 %v1295
        %v1297 = vlaneseq
        %v1298 = vshrl.u32 %v1297, 7
        %v1299 = vsub.s32 %v1296, %v1298
        %v1300 = vrot.slane %v1290, %v1299
        %v1302 = vunpack.c.l.s4 1966171168
        %v1303 = vunpack.c.0.s8 %v1302
        %v1304 = vlaneseq
        %v1305 = vshrl.u32 %v1304, 7
        %v1306 = vsub.s32 %v1303, %v1305
        %v1307 = vrot.slane %v1291, %v1306
        %v1309 = vunpack.c.l.s4 1966171168
        %v1310 = vunpack.c.0.s8 %v1309
        %v1311 = vlaneseq
        %v1312 = vshrl.u32 %v1311, 7
        %v1313 = vsub.s32 %v1310, %v1312
        %v1314 = vrot.slane %v1292, %v1313
        %v1316 = vunpack.c.l.s4 1966171168
        %v1317 = vunpack.c.0.s8 %v1316
        %v1318 = vlaneseq
        %v1319 = vshrl.u32 %v1318, 7
        %v1320 = vsub.s32 %v1317, %v1319
        %v1321 = vrot.slane %v1293, %v1320
        %v1322 = vcombine.low %v1300, %v1307
        %v1323 = vcombine.low %v1314, %v1321
        %v1325 = vunpack.c.l.s4 1966171168
        %v1326 = vunpack.c.0.s8 %v1325
        %v1327 = vlaneseq
        %v1328 = vshrl.u32 %v1327, 7
        %v1329 = vsub.s32 %v1326, %v1328
        %v1330 = vrot.slane %v1322, %v1329
        %v1332 = vunpack.c.l.s4 1966171168
        %v1333 = vunpack.c.0.s8 %v1332
        %v1334 = vlaneseq
        %v1335 = vshrl.u32 %v1334, 7
        %v1336 = vsub.s32 %v1333, %v1335
        %v1337 = vrot.slane %v1323, %v1336
        %v1338 = vcombine.low %v1330, %v1337
        %v1340 = vmax.f32 %v1225, %v1338
        %1341 = vst [vmem:[#allocation2] sm:$0xff] %v1340
        // Predicated region
        $region89: #{pointnet_cls_forward.2} parent=71 // pred_check
          %p1342 = pneg %p510
        $region90: #{pointnet_cls_forward.2} parent=71 // pred_check_branch
          %1344 = sbr.rel (%p1342) target = $region92
        $region91: #{pointnet_cls_forward.2} parent=71 // pred_region
          %v1345 = vld [vmem:[#allocation2] sm:$0xff]
          %v1346 = vld [vmem:[%s6] sm:$0xff]
          %v1347 = vadd.f32 %v1345, %v1346
          %v1348 = vmax.f32 %v1347, 0.0
          %v1350 = vlaneseq
          %v1351 = vshrl.u32 %v1350, 7
          %v1352 = vsub.s32 0, %v1351
          %v1353 = vrot.slane %v1348, %v1352
          %v1354 = vlaneseq
          %v1355 = vshrl.u32 %v1354, 7
          %v1356 = vsub.s32 1, %v1355
          %v1357 = vrot.slane %v1348, %v1356
          %v1358 = vlaneseq
          %v1359 = vshrl.u32 %v1358, 7
          %v1360 = vsub.s32 2, %v1359
          %v1361 = vrot.slane %v1348, %v1360
          %v1362 = vlaneseq
          %v1363 = vshrl.u32 %v1362, 7
          %v1364 = vsub.s32 3, %v1363
          %v1365 = vrot.slane %v1348, %v1364
          %v1366 = vlaneseq
          %v1367 = vshrl.u32 %v1366, 7
          %v1368 = vsub.s32 4, %v1367
          %v1369 = vrot.slane %v1348, %v1368
          %v1370 = vlaneseq
          %v1371 = vshrl.u32 %v1370, 7
          %v1372 = vsub.s32 5, %v1371
          %v1373 = vrot.slane %v1348, %v1372
          %v1374 = vlaneseq
          %v1375 = vshrl.u32 %v1374, 7
          %v1376 = vsub.s32 6, %v1375
          %v1377 = vrot.slane %v1348, %v1376
          %v1378 = vlaneseq
          %v1379 = vshrl.u32 %v1378, 7
          %v1380 = vsub.s32 7, %v1379
          %v1381 = vrot.slane %v1348, %v1380
          %v1390 = vpack.c.bf16 %v1353, %v1353
          %v1391 = vpack.c.bf16 %v1357, %v1357
          %v1392 = vpack.c.bf16 %v1361, %v1361
          %v1393 = vpack.c.bf16 %v1365, %v1365
          %v1394 = vpack.c.bf16 %v1369, %v1369
          %v1395 = vpack.c.bf16 %v1373, %v1373
          %v1396 = vpack.c.bf16 %v1377, %v1377
          %v1397 = vpack.c.bf16 %v1381, %v1381
          %v1398 = vld [vmem:[#allocation5] sm:$0xff]
          %v1399 = vld [vmem:[#allocation5 + $0x8] sm:$0xff]
          %v1400 = vld [vmem:[#allocation5 + $0x10] sm:$0xff]
          %v1401 = vld [vmem:[#allocation5 + $0x18] sm:$0xff]
          %v1402 = vld [vmem:[#allocation5 + $0x20] sm:$0xff]
          %v1403 = vld [vmem:[#allocation5 + $0x28] sm:$0xff]
          %v1404 = vld [vmem:[#allocation5 + $0x30] sm:$0xff]
          %v1405 = vld [vmem:[#allocation5 + $0x38] sm:$0xff]
          %v1406 = vld [vmem:[#allocation5 + $0x40] sm:$0xff]
          %v1407 = vld [vmem:[#allocation5 + $0x48] sm:$0xff]
          %v1408 = vld [vmem:[#allocation5 + $0x50] sm:$0xff]
          %v1409 = vld [vmem:[#allocation5 + $0x58] sm:$0xff]
          %v1410 = vld [vmem:[#allocation5 + $0x60] sm:$0xff]
          %v1411 = vld [vmem:[#allocation5 + $0x68] sm:$0xff]
          %v1412 = vld [vmem:[#allocation5 + $0x70] sm:$0xff]
          %v1413 = vld [vmem:[#allocation5 + $0x78] sm:$0xff]
          %v1414 = vld [vmem:[#allocation5 + $0x80] sm:$0xff]
          %v1415 = vld [vmem:[#allocation5 + $0x88] sm:$0xff]
          %v1416 = vld [vmem:[#allocation5 + $0x90] sm:$0xff]
          %v1417 = vld [vmem:[#allocation5 + $0x98] sm:$0xff]
          %v1418 = vld [vmem:[#allocation5 + $0xa0] sm:$0xff]
          %v1419 = vld [vmem:[#allocation5 + $0xa8] sm:$0xff]
          %v1420 = vld [vmem:[#allocation5 + $0xb0] sm:$0xff]
          %v1421 = vld [vmem:[#allocation5 + $0xb8] sm:$0xff]
          %v1422 = vld [vmem:[#allocation5 + $0xc0] sm:$0xff]
          %v1423 = vld [vmem:[#allocation5 + $0xc8] sm:$0xff]
          %v1424 = vld [vmem:[#allocation5 + $0xd0] sm:$0xff]
          %v1425 = vld [vmem:[#allocation5 + $0xd8] sm:$0xff]
          %v1426 = vld [vmem:[#allocation5 + $0xe0] sm:$0xff]
          %v1427 = vld [vmem:[#allocation5 + $0xe8] sm:$0xff]
          %v1428 = vld [vmem:[#allocation5 + $0xf0] sm:$0xff]
          %v1429 = vld [vmem:[#allocation5 + $0xf8] sm:$0xff]
          %v1430 = vld [vmem:[#allocation5 + $0x100] sm:$0xff]
          %v1431 = vld [vmem:[#allocation5 + $0x108] sm:$0xff]
          %v1432 = vld [vmem:[#allocation5 + $0x110] sm:$0xff]
          %v1433 = vld [vmem:[#allocation5 + $0x118] sm:$0xff]
          %v1434 = vld [vmem:[#allocation5 + $0x120] sm:$0xff]
          %v1435 = vld [vmem:[#allocation5 + $0x128] sm:$0xff]
          %v1436 = vld [vmem:[#allocation5 + $0x130] sm:$0xff]
          %v1437 = vld [vmem:[#allocation5 + $0x138] sm:$0xff]
          %v1438 = vld [vmem:[#allocation5 + $0x140] sm:$0xff]
          %v1439 = vld [vmem:[#allocation5 + $0x148] sm:$0xff]
          %v1440 = vld [vmem:[#allocation5 + $0x150] sm:$0xff]
          %v1441 = vld [vmem:[#allocation5 + $0x158] sm:$0xff]
          %v1442 = vld [vmem:[#allocation5 + $0x160] sm:$0xff]
          %v1443 = vld [vmem:[#allocation5 + $0x168] sm:$0xff]
          %v1444 = vld [vmem:[#allocation5 + $0x170] sm:$0xff]
          %v1445 = vld [vmem:[#allocation5 + $0x178] sm:$0xff]
          %v1446 = vld [vmem:[#allocation5 + $0x180] sm:$0xff]
          %v1447 = vld [vmem:[#allocation5 + $0x188] sm:$0xff]
          %v1448 = vld [vmem:[#allocation5 + $0x190] sm:$0xff]
          %v1449 = vld [vmem:[#allocation5 + $0x198] sm:$0xff]
          %v1450 = vld [vmem:[#allocation5 + $0x1a0] sm:$0xff]
          %v1451 = vld [vmem:[#allocation5 + $0x1a8] sm:$0xff]
          %v1452 = vld [vmem:[#allocation5 + $0x1b0] sm:$0xff]
          %v1453 = vld [vmem:[#allocation5 + $0x1b8] sm:$0xff]
          %v1454 = vld [vmem:[#allocation5 + $0x1c0] sm:$0xff]
          %v1455 = vld [vmem:[#allocation5 + $0x1c8] sm:$0xff]
          %v1456 = vld [vmem:[#allocation5 + $0x1d0] sm:$0xff]
          %v1457 = vld [vmem:[#allocation5 + $0x1d8] sm:$0xff]
          %v1458 = vld [vmem:[#allocation5 + $0x1e0] sm:$0xff]
          %v1459 = vld [vmem:[#allocation5 + $0x1e8] sm:$0xff]
          %v1460 = vld [vmem:[#allocation5 + $0x1f0] sm:$0xff]
          %v1461 = vld [vmem:[#allocation5 + $0x1f8] sm:$0xff]
          %v1462 = vld [vmem:[#allocation5 + $0x200] sm:$0xff]
          %v1463 = vld [vmem:[#allocation5 + $0x208] sm:$0xff]
          %v1464 = vld [vmem:[#allocation5 + $0x210] sm:$0xff]
          %v1465 = vld [vmem:[#allocation5 + $0x218] sm:$0xff]
          %v1466 = vld [vmem:[#allocation5 + $0x220] sm:$0xff]
          %v1467 = vld [vmem:[#allocation5 + $0x228] sm:$0xff]
          %v1468 = vld [vmem:[#allocation5 + $0x230] sm:$0xff]
          %v1469 = vld [vmem:[#allocation5 + $0x238] sm:$0xff]
          %v1470 = vld [vmem:[#allocation5 + $0x240] sm:$0xff]
          %v1471 = vld [vmem:[#allocation5 + $0x248] sm:$0xff]
          %v1472 = vld [vmem:[#allocation5 + $0x250] sm:$0xff]
          %v1473 = vld [vmem:[#allocation5 + $0x258] sm:$0xff]
          %v1474 = vld [vmem:[#allocation5 + $0x260] sm:$0xff]
          %v1475 = vld [vmem:[#allocation5 + $0x268] sm:$0xff]
          %v1476 = vld [vmem:[#allocation5 + $0x270] sm:$0xff]
          %v1477 = vld [vmem:[#allocation5 + $0x278] sm:$0xff]
          %v1478 = vld [vmem:[#allocation5 + $0x280] sm:$0xff]
          %v1479 = vld [vmem:[#allocation5 + $0x288] sm:$0xff]
          %v1480 = vld [vmem:[#allocation5 + $0x290] sm:$0xff]
          %v1481 = vld [vmem:[#allocation5 + $0x298] sm:$0xff]
          %v1482 = vld [vmem:[#allocation5 + $0x2a0] sm:$0xff]
          %v1483 = vld [vmem:[#allocation5 + $0x2a8] sm:$0xff]
          %v1484 = vld [vmem:[#allocation5 + $0x2b0] sm:$0xff]
          %v1485 = vld [vmem:[#allocation5 + $0x2b8] sm:$0xff]
          %v1486 = vld [vmem:[#allocation5 + $0x2c0] sm:$0xff]
          %v1487 = vld [vmem:[#allocation5 + $0x2c8] sm:$0xff]
          %v1488 = vld [vmem:[#allocation5 + $0x2d0] sm:$0xff]
          %v1489 = vld [vmem:[#allocation5 + $0x2d8] sm:$0xff]
          %v1490 = vld [vmem:[#allocation5 + $0x2e0] sm:$0xff]
          %v1491 = vld [vmem:[#allocation5 + $0x2e8] sm:$0xff]
          %v1492 = vld [vmem:[#allocation5 + $0x2f0] sm:$0xff]
          %v1493 = vld [vmem:[#allocation5 + $0x2f8] sm:$0xff]
          %v1494 = vld [vmem:[#allocation5 + $0x300] sm:$0xff]
          %v1495 = vld [vmem:[#allocation5 + $0x308] sm:$0xff]
          %v1496 = vld [vmem:[#allocation5 + $0x310] sm:$0xff]
          %v1497 = vld [vmem:[#allocation5 + $0x318] sm:$0xff]
          %v1498 = vld [vmem:[#allocation5 + $0x320] sm:$0xff]
          %v1499 = vld [vmem:[#allocation5 + $0x328] sm:$0xff]
          %v1500 = vld [vmem:[#allocation5 + $0x330] sm:$0xff]
          %v1501 = vld [vmem:[#allocation5 + $0x338] sm:$0xff]
          %v1502 = vld [vmem:[#allocation5 + $0x340] sm:$0xff]
          %v1503 = vld [vmem:[#allocation5 + $0x348] sm:$0xff]
          %v1504 = vld [vmem:[#allocation5 + $0x350] sm:$0xff]
          %v1505 = vld [vmem:[#allocation5 + $0x358] sm:$0xff]
          %v1506 = vld [vmem:[#allocation5 + $0x360] sm:$0xff]
          %v1507 = vld [vmem:[#allocation5 + $0x368] sm:$0xff]
          %v1508 = vld [vmem:[#allocation5 + $0x370] sm:$0xff]
          %v1509 = vld [vmem:[#allocation5 + $0x378] sm:$0xff]
          %v1510 = vld [vmem:[#allocation5 + $0x380] sm:$0xff]
          %v1511 = vld [vmem:[#allocation5 + $0x388] sm:$0xff]
          %v1512 = vld [vmem:[#allocation5 + $0x390] sm:$0xff]
          %v1513 = vld [vmem:[#allocation5 + $0x398] sm:$0xff]
          %v1514 = vld [vmem:[#allocation5 + $0x3a0] sm:$0xff]
          %v1515 = vld [vmem:[#allocation5 + $0x3a8] sm:$0xff]
          %v1516 = vld [vmem:[#allocation5 + $0x3b0] sm:$0xff]
          %v1517 = vld [vmem:[#allocation5 + $0x3b8] sm:$0xff]
          %v1518 = vld [vmem:[#allocation5 + $0x3c0] sm:$0xff]
          %v1519 = vld [vmem:[#allocation5 + $0x3c8] sm:$0xff]
          %v1520 = vld [vmem:[#allocation5 + $0x3d0] sm:$0xff]
          %v1521 = vld [vmem:[#allocation5 + $0x3d8] sm:$0xff]
          %v1522 = vld [vmem:[#allocation5 + $0x3e0] sm:$0xff]
          %v1523 = vld [vmem:[#allocation5 + $0x3e8] sm:$0xff]
          %v1524 = vld [vmem:[#allocation5 + $0x3f0] sm:$0xff]
          %v1525 = vld [vmem:[#allocation5 + $0x3f8] sm:$0xff]
          %v1526 = vld [vmem:[#allocation5 + $0x400] sm:$0xff]
          %v1527 = vld [vmem:[#allocation5 + $0x408] sm:$0xff]
          %v1528 = vld [vmem:[#allocation5 + $0x410] sm:$0xff]
          %v1529 = vld [vmem:[#allocation5 + $0x418] sm:$0xff]
          %v1530 = vld [vmem:[#allocation5 + $0x420] sm:$0xff]
          %v1531 = vld [vmem:[#allocation5 + $0x428] sm:$0xff]
          %v1532 = vld [vmem:[#allocation5 + $0x430] sm:$0xff]
          %v1533 = vld [vmem:[#allocation5 + $0x438] sm:$0xff]
          %v1534 = vld [vmem:[#allocation5 + $0x440] sm:$0xff]
          %v1535 = vld [vmem:[#allocation5 + $0x448] sm:$0xff]
          %v1536 = vld [vmem:[#allocation5 + $0x450] sm:$0xff]
          %v1537 = vld [vmem:[#allocation5 + $0x458] sm:$0xff]
          %v1538 = vld [vmem:[#allocation5 + $0x460] sm:$0xff]
          %v1539 = vld [vmem:[#allocation5 + $0x468] sm:$0xff]
          %v1540 = vld [vmem:[#allocation5 + $0x470] sm:$0xff]
          %v1541 = vld [vmem:[#allocation5 + $0x478] sm:$0xff]
          %v1542 = vld [vmem:[#allocation5 + $0x480] sm:$0xff]
          %v1543 = vld [vmem:[#allocation5 + $0x488] sm:$0xff]
          %v1544 = vld [vmem:[#allocation5 + $0x490] sm:$0xff]
          %v1545 = vld [vmem:[#allocation5 + $0x498] sm:$0xff]
          %v1546 = vld [vmem:[#allocation5 + $0x4a0] sm:$0xff]
          %v1547 = vld [vmem:[#allocation5 + $0x4a8] sm:$0xff]
          %v1548 = vld [vmem:[#allocation5 + $0x4b0] sm:$0xff]
          %v1549 = vld [vmem:[#allocation5 + $0x4b8] sm:$0xff]
          %v1550 = vld [vmem:[#allocation5 + $0x4c0] sm:$0xff]
          %v1551 = vld [vmem:[#allocation5 + $0x4c8] sm:$0xff]
          %v1552 = vld [vmem:[#allocation5 + $0x4d0] sm:$0xff]
          %v1553 = vld [vmem:[#allocation5 + $0x4d8] sm:$0xff]
          %v1554 = vld [vmem:[#allocation5 + $0x4e0] sm:$0xff]
          %v1555 = vld [vmem:[#allocation5 + $0x4e8] sm:$0xff]
          %v1556 = vld [vmem:[#allocation5 + $0x4f0] sm:$0xff]
          %v1557 = vld [vmem:[#allocation5 + $0x4f8] sm:$0xff]
          %v1558 = vld [vmem:[#allocation5 + $0x500] sm:$0xff]
          %v1559 = vld [vmem:[#allocation5 + $0x508] sm:$0xff]
          %v1560 = vld [vmem:[#allocation5 + $0x510] sm:$0xff]
          %v1561 = vld [vmem:[#allocation5 + $0x518] sm:$0xff]
          %v1562 = vld [vmem:[#allocation5 + $0x520] sm:$0xff]
          %v1563 = vld [vmem:[#allocation5 + $0x528] sm:$0xff]
          %v1564 = vld [vmem:[#allocation5 + $0x530] sm:$0xff]
          %v1565 = vld [vmem:[#allocation5 + $0x538] sm:$0xff]
          %v1566 = vld [vmem:[#allocation5 + $0x540] sm:$0xff]
          %v1567 = vld [vmem:[#allocation5 + $0x548] sm:$0xff]
          %v1568 = vld [vmem:[#allocation5 + $0x550] sm:$0xff]
          %v1569 = vld [vmem:[#allocation5 + $0x558] sm:$0xff]
          %v1570 = vld [vmem:[#allocation5 + $0x560] sm:$0xff]
          %v1571 = vld [vmem:[#allocation5 + $0x568] sm:$0xff]
          %v1572 = vld [vmem:[#allocation5 + $0x570] sm:$0xff]
          %v1573 = vld [vmem:[#allocation5 + $0x578] sm:$0xff]
          %v1574 = vld [vmem:[#allocation5 + $0x580] sm:$0xff]
          %v1575 = vld [vmem:[#allocation5 + $0x588] sm:$0xff]
          %v1576 = vld [vmem:[#allocation5 + $0x590] sm:$0xff]
          %v1577 = vld [vmem:[#allocation5 + $0x598] sm:$0xff]
          %v1578 = vld [vmem:[#allocation5 + $0x5a0] sm:$0xff]
          %v1579 = vld [vmem:[#allocation5 + $0x5a8] sm:$0xff]
          %v1580 = vld [vmem:[#allocation5 + $0x5b0] sm:$0xff]
          %v1581 = vld [vmem:[#allocation5 + $0x5b8] sm:$0xff]
          %v1582 = vld [vmem:[#allocation5 + $0x5c0] sm:$0xff]
          %v1583 = vld [vmem:[#allocation5 + $0x5c8] sm:$0xff]
          %v1584 = vld [vmem:[#allocation5 + $0x5d0] sm:$0xff]
          %v1585 = vld [vmem:[#allocation5 + $0x5d8] sm:$0xff]
          %v1586 = vld [vmem:[#allocation5 + $0x5e0] sm:$0xff]
          %v1587 = vld [vmem:[#allocation5 + $0x5e8] sm:$0xff]
          %v1588 = vld [vmem:[#allocation5 + $0x5f0] sm:$0xff]
          %v1589 = vld [vmem:[#allocation5 + $0x5f8] sm:$0xff]
          %v1590 = vld [vmem:[#allocation5 + $0x600] sm:$0xff]
          %v1591 = vld [vmem:[#allocation5 + $0x608] sm:$0xff]
          %v1592 = vld [vmem:[#allocation5 + $0x610] sm:$0xff]
          %v1593 = vld [vmem:[#allocation5 + $0x618] sm:$0xff]
          %v1594 = vld [vmem:[#allocation5 + $0x620] sm:$0xff]
          %v1595 = vld [vmem:[#allocation5 + $0x628] sm:$0xff]
          %v1596 = vld [vmem:[#allocation5 + $0x630] sm:$0xff]
          %v1597 = vld [vmem:[#allocation5 + $0x638] sm:$0xff]
          %v1598 = vld [vmem:[#allocation5 + $0x640] sm:$0xff]
          %v1599 = vld [vmem:[#allocation5 + $0x648] sm:$0xff]
          %v1600 = vld [vmem:[#allocation5 + $0x650] sm:$0xff]
          %v1601 = vld [vmem:[#allocation5 + $0x658] sm:$0xff]
          %v1602 = vld [vmem:[#allocation5 + $0x660] sm:$0xff]
          %v1603 = vld [vmem:[#allocation5 + $0x668] sm:$0xff]
          %v1604 = vld [vmem:[#allocation5 + $0x670] sm:$0xff]
          %v1605 = vld [vmem:[#allocation5 + $0x678] sm:$0xff]
          %v1606 = vld [vmem:[#allocation5 + $0x680] sm:$0xff]
          %v1607 = vld [vmem:[#allocation5 + $0x688] sm:$0xff]
          %v1608 = vld [vmem:[#allocation5 + $0x690] sm:$0xff]
          %v1609 = vld [vmem:[#allocation5 + $0x698] sm:$0xff]
          %v1610 = vld [vmem:[#allocation5 + $0x6a0] sm:$0xff]
          %v1611 = vld [vmem:[#allocation5 + $0x6a8] sm:$0xff]
          %v1612 = vld [vmem:[#allocation5 + $0x6b0] sm:$0xff]
          %v1613 = vld [vmem:[#allocation5 + $0x6b8] sm:$0xff]
          %v1614 = vld [vmem:[#allocation5 + $0x6c0] sm:$0xff]
          %v1615 = vld [vmem:[#allocation5 + $0x6c8] sm:$0xff]
          %v1616 = vld [vmem:[#allocation5 + $0x6d0] sm:$0xff]
          %v1617 = vld [vmem:[#allocation5 + $0x6d8] sm:$0xff]
          %v1618 = vld [vmem:[#allocation5 + $0x6e0] sm:$0xff]
          %v1619 = vld [vmem:[#allocation5 + $0x6e8] sm:$0xff]
          %v1620 = vld [vmem:[#allocation5 + $0x6f0] sm:$0xff]
          %v1621 = vld [vmem:[#allocation5 + $0x6f8] sm:$0xff]
          %v1622 = vld [vmem:[#allocation5 + $0x700] sm:$0xff]
          %v1623 = vld [vmem:[#allocation5 + $0x708] sm:$0xff]
          %v1624 = vld [vmem:[#allocation5 + $0x710] sm:$0xff]
          %v1625 = vld [vmem:[#allocation5 + $0x718] sm:$0xff]
          %v1626 = vld [vmem:[#allocation5 + $0x720] sm:$0xff]
          %v1627 = vld [vmem:[#allocation5 + $0x728] sm:$0xff]
          %v1628 = vld [vmem:[#allocation5 + $0x730] sm:$0xff]
          %v1629 = vld [vmem:[#allocation5 + $0x738] sm:$0xff]
          %v1630 = vld [vmem:[#allocation5 + $0x740] sm:$0xff]
          %v1631 = vld [vmem:[#allocation5 + $0x748] sm:$0xff]
          %v1632 = vld [vmem:[#allocation5 + $0x750] sm:$0xff]
          %v1633 = vld [vmem:[#allocation5 + $0x758] sm:$0xff]
          %v1634 = vld [vmem:[#allocation5 + $0x760] sm:$0xff]
          %v1635 = vld [vmem:[#allocation5 + $0x768] sm:$0xff]
          %v1636 = vld [vmem:[#allocation5 + $0x770] sm:$0xff]
          %v1637 = vld [vmem:[#allocation5 + $0x778] sm:$0xff]
          %v1638 = vld [vmem:[#allocation5 + $0x780] sm:$0xff]
          %v1639 = vld [vmem:[#allocation5 + $0x788] sm:$0xff]
          %v1640 = vld [vmem:[#allocation5 + $0x790] sm:$0xff]
          %v1641 = vld [vmem:[#allocation5 + $0x798] sm:$0xff]
          %v1642 = vld [vmem:[#allocation5 + $0x7a0] sm:$0xff]
          %v1643 = vld [vmem:[#allocation5 + $0x7a8] sm:$0xff]
          %v1644 = vld [vmem:[#allocation5 + $0x7b0] sm:$0xff]
          %v1645 = vld [vmem:[#allocation5 + $0x7b8] sm:$0xff]
          %v1646 = vld [vmem:[#allocation5 + $0x7c0] sm:$0xff]
          %v1647 = vld [vmem:[#allocation5 + $0x7c8] sm:$0xff]
          %v1648 = vld [vmem:[#allocation5 + $0x7d0] sm:$0xff]
          %v1649 = vld [vmem:[#allocation5 + $0x7d8] sm:$0xff]
          %v1650 = vld [vmem:[#allocation5 + $0x7e0] sm:$0xff]
          %v1651 = vld [vmem:[#allocation5 + $0x7e8] sm:$0xff]
          %v1652 = vld [vmem:[#allocation5 + $0x7f0] sm:$0xff]
          %v1653 = vld [vmem:[#allocation5 + $0x7f8] sm:$0xff]
          %v1654 = vld [vmem:[%s8] sm:$0xf]
          %v1911 = vunpack.c.l.b16 %v1398
          %v1912 = vunpack.c.h.b16 %v1398
          %v1913 = vunpack.c.l.b16 %v1399
          %v1914 = vunpack.c.h.b16 %v1399
          %v1915 = vunpack.c.l.b16 %v1400
          %v1916 = vunpack.c.h.b16 %v1400
          %v1917 = vunpack.c.l.b16 %v1401
          %v1918 = vunpack.c.h.b16 %v1401
          %v1919 = vunpack.c.l.b16 %v1402
          %v1920 = vunpack.c.h.b16 %v1402
          %v1921 = vunpack.c.l.b16 %v1403
          %v1922 = vunpack.c.h.b16 %v1403
          %v1923 = vunpack.c.l.b16 %v1404
          %v1924 = vunpack.c.h.b16 %v1404
          %v1925 = vunpack.c.l.b16 %v1405
          %v1926 = vunpack.c.h.b16 %v1405
          %v1927 = vunpack.c.l.b16 %v1406
          %v1928 = vunpack.c.h.b16 %v1406
          %v1929 = vunpack.c.l.b16 %v1407
          %v1930 = vunpack.c.h.b16 %v1407
          %v1931 = vunpack.c.l.b16 %v1408
          %v1932 = vunpack.c.h.b16 %v1408
          %v1933 = vunpack.c.l.b16 %v1409
          %v1934 = vunpack.c.h.b16 %v1409
          %v1935 = vunpack.c.l.b16 %v1410
          %v1936 = vunpack.c.h.b16 %v1410
          %v1937 = vunpack.c.l.b16 %v1411
          %v1938 = vunpack.c.h.b16 %v1411
          %v1939 = vunpack.c.l.b16 %v1412
          %v1940 = vunpack.c.h.b16 %v1412
          %v1941 = vunpack.c.l.b16 %v1413
          %v1942 = vunpack.c.h.b16 %v1413
          %v1943 = vunpack.c.l.b16 %v1414
          %v1944 = vunpack.c.h.b16 %v1414
          %v1945 = vunpack.c.l.b16 %v1415
          %v1946 = vunpack.c.h.b16 %v1415
          %v1947 = vunpack.c.l.b16 %v1416
          %v1948 = vunpack.c.h.b16 %v1416
          %v1949 = vunpack.c.l.b16 %v1417
          %v1950 = vunpack.c.h.b16 %v1417
          %v1951 = vunpack.c.l.b16 %v1418
          %v1952 = vunpack.c.h.b16 %v1418
          %v1953 = vunpack.c.l.b16 %v1419
          %v1954 = vunpack.c.h.b16 %v1419
          %v1955 = vunpack.c.l.b16 %v1420
          %v1956 = vunpack.c.h.b16 %v1420
          %v1957 = vunpack.c.l.b16 %v1421
          %v1958 = vunpack.c.h.b16 %v1421
          %v1959 = vunpack.c.l.b16 %v1422
          %v1960 = vunpack.c.h.b16 %v1422
          %v1961 = vunpack.c.l.b16 %v1423
          %v1962 = vunpack.c.h.b16 %v1423
          %v1963 = vunpack.c.l.b16 %v1424
          %v1964 = vunpack.c.h.b16 %v1424
          %v1965 = vunpack.c.l.b16 %v1425
          %v1966 = vunpack.c.h.b16 %v1425
          %v1967 = vunpack.c.l.b16 %v1426
          %v1968 = vunpack.c.h.b16 %v1426
          %v1969 = vunpack.c.l.b16 %v1427
          %v1970 = vunpack.c.h.b16 %v1427
          %v1971 = vunpack.c.l.b16 %v1428
          %v1972 = vunpack.c.h.b16 %v1428
          %v1973 = vunpack.c.l.b16 %v1429
          %v1974 = vunpack.c.h.b16 %v1429
          %v1975 = vunpack.c.l.b16 %v1430
          %v1976 = vunpack.c.h.b16 %v1430
          %v1977 = vunpack.c.l.b16 %v1431
          %v1978 = vunpack.c.h.b16 %v1431
          %v1979 = vunpack.c.l.b16 %v1432
          %v1980 = vunpack.c.h.b16 %v1432
          %v1981 = vunpack.c.l.b16 %v1433
          %v1982 = vunpack.c.h.b16 %v1433
          %v1983 = vunpack.c.l.b16 %v1434
          %v1984 = vunpack.c.h.b16 %v1434
          %v1985 = vunpack.c.l.b16 %v1435
          %v1986 = vunpack.c.h.b16 %v1435
          %v1987 = vunpack.c.l.b16 %v1436
          %v1988 = vunpack.c.h.b16 %v1436
          %v1989 = vunpack.c.l.b16 %v1437
          %v1990 = vunpack.c.h.b16 %v1437
          %v1991 = vunpack.c.l.b16 %v1438
          %v1992 = vunpack.c.h.b16 %v1438
          %v1993 = vunpack.c.l.b16 %v1439
          %v1994 = vunpack.c.h.b16 %v1439
          %v1995 = vunpack.c.l.b16 %v1440
          %v1996 = vunpack.c.h.b16 %v1440
          %v1997 = vunpack.c.l.b16 %v1441
          %v1998 = vunpack.c.h.b16 %v1441
          %v1999 = vunpack.c.l.b16 %v1442
          %v2000 = vunpack.c.h.b16 %v1442
          %v2001 = vunpack.c.l.b16 %v1443
          %v2002 = vunpack.c.h.b16 %v1443
          %v2003 = vunpack.c.l.b16 %v1444
          %v2004 = vunpack.c.h.b16 %v1444
          %v2005 = vunpack.c.l.b16 %v1445
          %v2006 = vunpack.c.h.b16 %v1445
          %v2007 = vunpack.c.l.b16 %v1446
          %v2008 = vunpack.c.h.b16 %v1446
          %v2009 = vunpack.c.l.b16 %v1447
          %v2010 = vunpack.c.h.b16 %v1447
          %v2011 = vunpack.c.l.b16 %v1448
          %v2012 = vunpack.c.h.b16 %v1448
          %v2013 = vunpack.c.l.b16 %v1449
          %v2014 = vunpack.c.h.b16 %v1449
          %v2015 = vunpack.c.l.b16 %v1450
          %v2016 = vunpack.c.h.b16 %v1450
          %v2017 = vunpack.c.l.b16 %v1451
          %v2018 = vunpack.c.h.b16 %v1451
          %v2019 = vunpack.c.l.b16 %v1452
          %v2020 = vunpack.c.h.b16 %v1452
          %v2021 = vunpack.c.l.b16 %v1453
          %v2022 = vunpack.c.h.b16 %v1453
          %v2023 = vunpack.c.l.b16 %v1454
          %v2024 = vunpack.c.h.b16 %v1454
          %v2025 = vunpack.c.l.b16 %v1455
          %v2026 = vunpack.c.h.b16 %v1455
          %v2027 = vunpack.c.l.b16 %v1456
          %v2028 = vunpack.c.h.b16 %v1456
          %v2029 = vunpack.c.l.b16 %v1457
          %v2030 = vunpack.c.h.b16 %v1457
          %v2031 = vunpack.c.l.b16 %v1458
          %v2032 = vunpack.c.h.b16 %v1458
          %v2033 = vunpack.c.l.b16 %v1459
          %v2034 = vunpack.c.h.b16 %v1459
          %v2035 = vunpack.c.l.b16 %v1460
          %v2036 = vunpack.c.h.b16 %v1460
          %v2037 = vunpack.c.l.b16 %v1461
          %v2038 = vunpack.c.h.b16 %v1461
          %v2039 = vunpack.c.l.b16 %v1462
          %v2040 = vunpack.c.h.b16 %v1462
          %v2041 = vunpack.c.l.b16 %v1463
          %v2042 = vunpack.c.h.b16 %v1463
          %v2043 = vunpack.c.l.b16 %v1464
          %v2044 = vunpack.c.h.b16 %v1464
          %v2045 = vunpack.c.l.b16 %v1465
          %v2046 = vunpack.c.h.b16 %v1465
          %v2047 = vunpack.c.l.b16 %v1466
          %v2048 = vunpack.c.h.b16 %v1466
          %v2049 = vunpack.c.l.b16 %v1467
          %v2050 = vunpack.c.h.b16 %v1467
          %v2051 = vunpack.c.l.b16 %v1468
          %v2052 = vunpack.c.h.b16 %v1468
          %v2053 = vunpack.c.l.b16 %v1469
          %v2054 = vunpack.c.h.b16 %v1469
          %v2055 = vunpack.c.l.b16 %v1470
          %v2056 = vunpack.c.h.b16 %v1470
          %v2057 = vunpack.c.l.b16 %v1471
          %v2058 = vunpack.c.h.b16 %v1471
          %v2059 = vunpack.c.l.b16 %v1472
          %v2060 = vunpack.c.h.b16 %v1472
          %v2061 = vunpack.c.l.b16 %v1473
          %v2062 = vunpack.c.h.b16 %v1473
          %v2063 = vunpack.c.l.b16 %v1474
          %v2064 = vunpack.c.h.b16 %v1474
          %v2065 = vunpack.c.l.b16 %v1475
          %v2066 = vunpack.c.h.b16 %v1475
          %v2067 = vunpack.c.l.b16 %v1476
          %v2068 = vunpack.c.h.b16 %v1476
          %v2069 = vunpack.c.l.b16 %v1477
          %v2070 = vunpack.c.h.b16 %v1477
          %v2071 = vunpack.c.l.b16 %v1478
          %v2072 = vunpack.c.h.b16 %v1478
          %v2073 = vunpack.c.l.b16 %v1479
          %v2074 = vunpack.c.h.b16 %v1479
          %v2075 = vunpack.c.l.b16 %v1480
          %v2076 = vunpack.c.h.b16 %v1480
          %v2077 = vunpack.c.l.b16 %v1481
          %v2078 = vunpack.c.h.b16 %v1481
          %v2079 = vunpack.c.l.b16 %v1482
          %v2080 = vunpack.c.h.b16 %v1482
          %v2081 = vunpack.c.l.b16 %v1483
          %v2082 = vunpack.c.h.b16 %v1483
          %v2083 = vunpack.c.l.b16 %v1484
          %v2084 = vunpack.c.h.b16 %v1484
          %v2085 = vunpack.c.l.b16 %v1485
          %v2086 = vunpack.c.h.b16 %v1485
          %v2087 = vunpack.c.l.b16 %v1486
          %v2088 = vunpack.c.h.b16 %v1486
          %v2089 = vunpack.c.l.b16 %v1487
          %v2090 = vunpack.c.h.b16 %v1487
          %v2091 = vunpack.c.l.b16 %v1488
          %v2092 = vunpack.c.h.b16 %v1488
          %v2093 = vunpack.c.l.b16 %v1489
          %v2094 = vunpack.c.h.b16 %v1489
          %v2095 = vunpack.c.l.b16 %v1490
          %v2096 = vunpack.c.h.b16 %v1490
          %v2097 = vunpack.c.l.b16 %v1491
          %v2098 = vunpack.c.h.b16 %v1491
          %v2099 = vunpack.c.l.b16 %v1492
          %v2100 = vunpack.c.h.b16 %v1492
          %v2101 = vunpack.c.l.b16 %v1493
          %v2102 = vunpack.c.h.b16 %v1493
          %v2103 = vunpack.c.l.b16 %v1494
          %v2104 = vunpack.c.h.b16 %v1494
          %v2105 = vunpack.c.l.b16 %v1495
          %v2106 = vunpack.c.h.b16 %v1495
          %v2107 = vunpack.c.l.b16 %v1496
          %v2108 = vunpack.c.h.b16 %v1496
          %v2109 = vunpack.c.l.b16 %v1497
          %v2110 = vunpack.c.h.b16 %v1497
          %v2111 = vunpack.c.l.b16 %v1498
          %v2112 = vunpack.c.h.b16 %v1498
          %v2113 = vunpack.c.l.b16 %v1499
          %v2114 = vunpack.c.h.b16 %v1499
          %v2115 = vunpack.c.l.b16 %v1500
          %v2116 = vunpack.c.h.b16 %v1500
          %v2117 = vunpack.c.l.b16 %v1501
          %v2118 = vunpack.c.h.b16 %v1501
          %v2119 = vunpack.c.l.b16 %v1502
          %v2120 = vunpack.c.h.b16 %v1502
          %v2121 = vunpack.c.l.b16 %v1503
          %v2122 = vunpack.c.h.b16 %v1503
          %v2123 = vunpack.c.l.b16 %v1504
          %v2124 = vunpack.c.h.b16 %v1504
          %v2125 = vunpack.c.l.b16 %v1505
          %v2126 = vunpack.c.h.b16 %v1505
          %v2127 = vunpack.c.l.b16 %v1506
          %v2128 = vunpack.c.h.b16 %v1506
          %v2129 = vunpack.c.l.b16 %v1507
          %v2130 = vunpack.c.h.b16 %v1507
          %v2131 = vunpack.c.l.b16 %v1508
          %v2132 = vunpack.c.h.b16 %v1508
          %v2133 = vunpack.c.l.b16 %v1509
          %v2134 = vunpack.c.h.b16 %v1509
          %v2135 = vunpack.c.l.b16 %v1510
          %v2136 = vunpack.c.h.b16 %v1510
          %v2137 = vunpack.c.l.b16 %v1511
          %v2138 = vunpack.c.h.b16 %v1511
          %v2139 = vunpack.c.l.b16 %v1512
          %v2140 = vunpack.c.h.b16 %v1512
          %v2141 = vunpack.c.l.b16 %v1513
          %v2142 = vunpack.c.h.b16 %v1513
          %v2143 = vunpack.c.l.b16 %v1514
          %v2144 = vunpack.c.h.b16 %v1514
          %v2145 = vunpack.c.l.b16 %v1515
          %v2146 = vunpack.c.h.b16 %v1515
          %v2147 = vunpack.c.l.b16 %v1516
          %v2148 = vunpack.c.h.b16 %v1516
          %v2149 = vunpack.c.l.b16 %v1517
          %v2150 = vunpack.c.h.b16 %v1517
          %v2151 = vunpack.c.l.b16 %v1518
          %v2152 = vunpack.c.h.b16 %v1518
          %v2153 = vunpack.c.l.b16 %v1519
          %v2154 = vunpack.c.h.b16 %v1519
          %v2155 = vunpack.c.l.b16 %v1520
          %v2156 = vunpack.c.h.b16 %v1520
          %v2157 = vunpack.c.l.b16 %v1521
          %v2158 = vunpack.c.h.b16 %v1521
          %v2159 = vunpack.c.l.b16 %v1522
          %v2160 = vunpack.c.h.b16 %v1522
          %v2161 = vunpack.c.l.b16 %v1523
          %v2162 = vunpack.c.h.b16 %v1523
          %v2163 = vunpack.c.l.b16 %v1524
          %v2164 = vunpack.c.h.b16 %v1524
          %v2165 = vunpack.c.l.b16 %v1525
          %v2166 = vunpack.c.h.b16 %v1525
          %v2167 = vunpack.c.l.b16 %v1526
          %v2168 = vunpack.c.h.b16 %v1526
          %v2169 = vunpack.c.l.b16 %v1527
          %v2170 = vunpack.c.h.b16 %v1527
          %v2171 = vunpack.c.l.b16 %v1528
          %v2172 = vunpack.c.h.b16 %v1528
          %v2173 = vunpack.c.l.b16 %v1529
          %v2174 = vunpack.c.h.b16 %v1529
          %v2175 = vunpack.c.l.b16 %v1530
          %v2176 = vunpack.c.h.b16 %v1530
          %v2177 = vunpack.c.l.b16 %v1531
          %v2178 = vunpack.c.h.b16 %v1531
          %v2179 = vunpack.c.l.b16 %v1532
          %v2180 = vunpack.c.h.b16 %v1532
          %v2181 = vunpack.c.l.b16 %v1533
          %v2182 = vunpack.c.h.b16 %v1533
          %v2183 = vunpack.c.l.b16 %v1534
          %v2184 = vunpack.c.h.b16 %v1534
          %v2185 = vunpack.c.l.b16 %v1535
          %v2186 = vunpack.c.h.b16 %v1535
          %v2187 = vunpack.c.l.b16 %v1536
          %v2188 = vunpack.c.h.b16 %v1536
          %v2189 = vunpack.c.l.b16 %v1537
          %v2190 = vunpack.c.h.b16 %v1537
          %v2191 = vunpack.c.l.b16 %v1538
          %v2192 = vunpack.c.h.b16 %v1538
          %v2193 = vunpack.c.l.b16 %v1539
          %v2194 = vunpack.c.h.b16 %v1539
          %v2195 = vunpack.c.l.b16 %v1540
          %v2196 = vunpack.c.h.b16 %v1540
          %v2197 = vunpack.c.l.b16 %v1541
          %v2198 = vunpack.c.h.b16 %v1541
          %v2199 = vunpack.c.l.b16 %v1542
          %v2200 = vunpack.c.h.b16 %v1542
          %v2201 = vunpack.c.l.b16 %v1543
          %v2202 = vunpack.c.h.b16 %v1543
          %v2203 = vunpack.c.l.b16 %v1544
          %v2204 = vunpack.c.h.b16 %v1544
          %v2205 = vunpack.c.l.b16 %v1545
          %v2206 = vunpack.c.h.b16 %v1545
          %v2207 = vunpack.c.l.b16 %v1546
          %v2208 = vunpack.c.h.b16 %v1546
          %v2209 = vunpack.c.l.b16 %v1547
          %v2210 = vunpack.c.h.b16 %v1547
          %v2211 = vunpack.c.l.b16 %v1548
          %v2212 = vunpack.c.h.b16 %v1548
          %v2213 = vunpack.c.l.b16 %v1549
          %v2214 = vunpack.c.h.b16 %v1549
          %v2215 = vunpack.c.l.b16 %v1550
          %v2216 = vunpack.c.h.b16 %v1550
          %v2217 = vunpack.c.l.b16 %v1551
          %v2218 = vunpack.c.h.b16 %v1551
          %v2219 = vunpack.c.l.b16 %v1552
          %v2220 = vunpack.c.h.b16 %v1552
          %v2221 = vunpack.c.l.b16 %v1553
          %v2222 = vunpack.c.h.b16 %v1553
          %v2223 = vunpack.c.l.b16 %v1554
          %v2224 = vunpack.c.h.b16 %v1554
          %v2225 = vunpack.c.l.b16 %v1555
          %v2226 = vunpack.c.h.b16 %v1555
          %v2227 = vunpack.c.l.b16 %v1556
          %v2228 = vunpack.c.h.b16 %v1556
          %v2229 = vunpack.c.l.b16 %v1557
          %v2230 = vunpack.c.h.b16 %v1557
          %v2231 = vunpack.c.l.b16 %v1558
          %v2232 = vunpack.c.h.b16 %v1558
          %v2233 = vunpack.c.l.b16 %v1559
          %v2234 = vunpack.c.h.b16 %v1559
          %v2235 = vunpack.c.l.b16 %v1560
          %v2236 = vunpack.c.h.b16 %v1560
          %v2237 = vunpack.c.l.b16 %v1561
          %v2238 = vunpack.c.h.b16 %v1561
          %v2239 = vunpack.c.l.b16 %v1562
          %v2240 = vunpack.c.h.b16 %v1562
          %v2241 = vunpack.c.l.b16 %v1563
          %v2242 = vunpack.c.h.b16 %v1563
          %v2243 = vunpack.c.l.b16 %v1564
          %v2244 = vunpack.c.h.b16 %v1564
          %v2245 = vunpack.c.l.b16 %v1565
          %v2246 = vunpack.c.h.b16 %v1565
          %v2247 = vunpack.c.l.b16 %v1566
          %v2248 = vunpack.c.h.b16 %v1566
          %v2249 = vunpack.c.l.b16 %v1567
          %v2250 = vunpack.c.h.b16 %v1567
          %v2251 = vunpack.c.l.b16 %v1568
          %v2252 = vunpack.c.h.b16 %v1568
          %v2253 = vunpack.c.l.b16 %v1569
          %v2254 = vunpack.c.h.b16 %v1569
          %v2255 = vunpack.c.l.b16 %v1570
          %v2256 = vunpack.c.h.b16 %v1570
          %v2257 = vunpack.c.l.b16 %v1571
          %v2258 = vunpack.c.h.b16 %v1571
          %v2259 = vunpack.c.l.b16 %v1572
          %v2260 = vunpack.c.h.b16 %v1572
          %v2261 = vunpack.c.l.b16 %v1573
          %v2262 = vunpack.c.h.b16 %v1573
          %v2263 = vunpack.c.l.b16 %v1574
          %v2264 = vunpack.c.h.b16 %v1574
          %v2265 = vunpack.c.l.b16 %v1575
          %v2266 = vunpack.c.h.b16 %v1575
          %v2267 = vunpack.c.l.b16 %v1576
          %v2268 = vunpack.c.h.b16 %v1576
          %v2269 = vunpack.c.l.b16 %v1577
          %v2270 = vunpack.c.h.b16 %v1577
          %v2271 = vunpack.c.l.b16 %v1578
          %v2272 = vunpack.c.h.b16 %v1578
          %v2273 = vunpack.c.l.b16 %v1579
          %v2274 = vunpack.c.h.b16 %v1579
          %v2275 = vunpack.c.l.b16 %v1580
          %v2276 = vunpack.c.h.b16 %v1580
          %v2277 = vunpack.c.l.b16 %v1581
          %v2278 = vunpack.c.h.b16 %v1581
          %v2279 = vunpack.c.l.b16 %v1582
          %v2280 = vunpack.c.h.b16 %v1582
          %v2281 = vunpack.c.l.b16 %v1583
          %v2282 = vunpack.c.h.b16 %v1583
          %v2283 = vunpack.c.l.b16 %v1584
          %v2284 = vunpack.c.h.b16 %v1584
          %v2285 = vunpack.c.l.b16 %v1585
          %v2286 = vunpack.c.h.b16 %v1585
          %v2287 = vunpack.c.l.b16 %v1586
          %v2288 = vunpack.c.h.b16 %v1586
          %v2289 = vunpack.c.l.b16 %v1587
          %v2290 = vunpack.c.h.b16 %v1587
          %v2291 = vunpack.c.l.b16 %v1588
          %v2292 = vunpack.c.h.b16 %v1588
          %v2293 = vunpack.c.l.b16 %v1589
          %v2294 = vunpack.c.h.b16 %v1589
          %v2295 = vunpack.c.l.b16 %v1590
          %v2296 = vunpack.c.h.b16 %v1590
          %v2297 = vunpack.c.l.b16 %v1591
          %v2298 = vunpack.c.h.b16 %v1591
          %v2299 = vunpack.c.l.b16 %v1592
          %v2300 = vunpack.c.h.b16 %v1592
          %v2301 = vunpack.c.l.b16 %v1593
          %v2302 = vunpack.c.h.b16 %v1593
          %v2303 = vunpack.c.l.b16 %v1594
          %v2304 = vunpack.c.h.b16 %v1594
          %v2305 = vunpack.c.l.b16 %v1595
          %v2306 = vunpack.c.h.b16 %v1595
          %v2307 = vunpack.c.l.b16 %v1596
          %v2308 = vunpack.c.h.b16 %v1596
          %v2309 = vunpack.c.l.b16 %v1597
          %v2310 = vunpack.c.h.b16 %v1597
          %v2311 = vunpack.c.l.b16 %v1598
          %v2312 = vunpack.c.h.b16 %v1598
          %v2313 = vunpack.c.l.b16 %v1599
          %v2314 = vunpack.c.h.b16 %v1599
          %v2315 = vunpack.c.l.b16 %v1600
          %v2316 = vunpack.c.h.b16 %v1600
          %v2317 = vunpack.c.l.b16 %v1601
          %v2318 = vunpack.c.h.b16 %v1601
          %v2319 = vunpack.c.l.b16 %v1602
          %v2320 = vunpack.c.h.b16 %v1602
          %v2321 = vunpack.c.l.b16 %v1603
          %v2322 = vunpack.c.h.b16 %v1603
          %v2323 = vunpack.c.l.b16 %v1604
          %v2324 = vunpack.c.h.b16 %v1604
          %v2325 = vunpack.c.l.b16 %v1605
          %v2326 = vunpack.c.h.b16 %v1605
          %v2327 = vunpack.c.l.b16 %v1606
          %v2328 = vunpack.c.h.b16 %v1606
          %v2329 = vunpack.c.l.b16 %v1607
          %v2330 = vunpack.c.h.b16 %v1607
          %v2331 = vunpack.c.l.b16 %v1608
          %v2332 = vunpack.c.h.b16 %v1608
          %v2333 = vunpack.c.l.b16 %v1609
          %v2334 = vunpack.c.h.b16 %v1609
          %v2335 = vunpack.c.l.b16 %v1610
          %v2336 = vunpack.c.h.b16 %v1610
          %v2337 = vunpack.c.l.b16 %v1611
          %v2338 = vunpack.c.h.b16 %v1611
          %v2339 = vunpack.c.l.b16 %v1612
          %v2340 = vunpack.c.h.b16 %v1612
          %v2341 = vunpack.c.l.b16 %v1613
          %v2342 = vunpack.c.h.b16 %v1613
          %v2343 = vunpack.c.l.b16 %v1614
          %v2344 = vunpack.c.h.b16 %v1614
          %v2345 = vunpack.c.l.b16 %v1615
          %v2346 = vunpack.c.h.b16 %v1615
          %v2347 = vunpack.c.l.b16 %v1616
          %v2348 = vunpack.c.h.b16 %v1616
          %v2349 = vunpack.c.l.b16 %v1617
          %v2350 = vunpack.c.h.b16 %v1617
          %v2351 = vunpack.c.l.b16 %v1618
          %v2352 = vunpack.c.h.b16 %v1618
          %v2353 = vunpack.c.l.b16 %v1619
          %v2354 = vunpack.c.h.b16 %v1619
          %v2355 = vunpack.c.l.b16 %v1620
          %v2356 = vunpack.c.h.b16 %v1620
          %v2357 = vunpack.c.l.b16 %v1621
          %v2358 = vunpack.c.h.b16 %v1621
          %v2359 = vunpack.c.l.b16 %v1622
          %v2360 = vunpack.c.h.b16 %v1622
          %v2361 = vunpack.c.l.b16 %v1623
          %v2362 = vunpack.c.h.b16 %v1623
          %v2363 = vunpack.c.l.b16 %v1624
          %v2364 = vunpack.c.h.b16 %v1624
          %v2365 = vunpack.c.l.b16 %v1625
          %v2366 = vunpack.c.h.b16 %v1625
          %v2367 = vunpack.c.l.b16 %v1626
          %v2368 = vunpack.c.h.b16 %v1626
          %v2369 = vunpack.c.l.b16 %v1627
          %v2370 = vunpack.c.h.b16 %v1627
          %v2371 = vunpack.c.l.b16 %v1628
          %v2372 = vunpack.c.h.b16 %v1628
          %v2373 = vunpack.c.l.b16 %v1629
          %v2374 = vunpack.c.h.b16 %v1629
          %v2375 = vunpack.c.l.b16 %v1630
          %v2376 = vunpack.c.h.b16 %v1630
          %v2377 = vunpack.c.l.b16 %v1631
          %v2378 = vunpack.c.h.b16 %v1631
          %v2379 = vunpack.c.l.b16 %v1632
          %v2380 = vunpack.c.h.b16 %v1632
          %v2381 = vunpack.c.l.b16 %v1633
          %v2382 = vunpack.c.h.b16 %v1633
          %v2383 = vunpack.c.l.b16 %v1634
          %v2384 = vunpack.c.h.b16 %v1634
          %v2385 = vunpack.c.l.b16 %v1635
          %v2386 = vunpack.c.h.b16 %v1635
          %v2387 = vunpack.c.l.b16 %v1636
          %v2388 = vunpack.c.h.b16 %v1636
          %v2389 = vunpack.c.l.b16 %v1637
          %v2390 = vunpack.c.h.b16 %v1637
          %v2391 = vunpack.c.l.b16 %v1638
          %v2392 = vunpack.c.h.b16 %v1638
          %v2393 = vunpack.c.l.b16 %v1639
          %v2394 = vunpack.c.h.b16 %v1639
          %v2395 = vunpack.c.l.b16 %v1640
          %v2396 = vunpack.c.h.b16 %v1640
          %v2397 = vunpack.c.l.b16 %v1641
          %v2398 = vunpack.c.h.b16 %v1641
          %v2399 = vunpack.c.l.b16 %v1642
          %v2400 = vunpack.c.h.b16 %v1642
          %v2401 = vunpack.c.l.b16 %v1643
          %v2402 = vunpack.c.h.b16 %v1643
          %v2403 = vunpack.c.l.b16 %v1644
          %v2404 = vunpack.c.h.b16 %v1644
          %v2405 = vunpack.c.l.b16 %v1645
          %v2406 = vunpack.c.h.b16 %v1645
          %v2407 = vunpack.c.l.b16 %v1646
          %v2408 = vunpack.c.h.b16 %v1646
          %v2409 = vunpack.c.l.b16 %v1647
          %v2410 = vunpack.c.h.b16 %v1647
          %v2411 = vunpack.c.l.b16 %v1648
          %v2412 = vunpack.c.h.b16 %v1648
          %v2413 = vunpack.c.l.b16 %v1649
          %v2414 = vunpack.c.h.b16 %v1649
          %v2415 = vunpack.c.l.b16 %v1650
          %v2416 = vunpack.c.h.b16 %v1650
          %v2417 = vunpack.c.l.b16 %v1651
          %v2418 = vunpack.c.h.b16 %v1651
          %v2419 = vunpack.c.l.b16 %v1652
          %v2420 = vunpack.c.h.b16 %v1652
          %v2421 = vunpack.c.l.b16 %v1653
          %v2422 = vunpack.c.h.b16 %v1653
          %v2423 = vpack.c.b16 %v1915, %v1911
          %v2424 = vpack.c.b16 %v1916, %v1912
          %v2425 = vpack.c.b16 %v1917, %v1913
          %v2426 = vpack.c.b16 %v1918, %v1914
          %v2427 = vpack.c.b16 %v1923, %v1919
          %v2428 = vpack.c.b16 %v1924, %v1920
          %v2429 = vpack.c.b16 %v1925, %v1921
          %v2430 = vpack.c.b16 %v1926, %v1922
          %v2431 = vpack.c.b16 %v1931, %v1927
          %v2432 = vpack.c.b16 %v1932, %v1928
          %v2433 = vpack.c.b16 %v1933, %v1929
          %v2434 = vpack.c.b16 %v1934, %v1930
          %v2435 = vpack.c.b16 %v1939, %v1935
          %v2436 = vpack.c.b16 %v1940, %v1936
          %v2437 = vpack.c.b16 %v1941, %v1937
          %v2438 = vpack.c.b16 %v1942, %v1938
          %v2439 = vpack.c.b16 %v1947, %v1943
          %v2440 = vpack.c.b16 %v1948, %v1944
          %v2441 = vpack.c.b16 %v1949, %v1945
          %v2442 = vpack.c.b16 %v1950, %v1946
          %v2443 = vpack.c.b16 %v1955, %v1951
          %v2444 = vpack.c.b16 %v1956, %v1952
          %v2445 = vpack.c.b16 %v1957, %v1953
          %v2446 = vpack.c.b16 %v1958, %v1954
          %v2447 = vpack.c.b16 %v1963, %v1959
          %v2448 = vpack.c.b16 %v1964, %v1960
          %v2449 = vpack.c.b16 %v1965, %v1961
          %v2450 = vpack.c.b16 %v1966, %v1962
          %v2451 = vpack.c.b16 %v1971, %v1967
          %v2452 = vpack.c.b16 %v1972, %v1968
          %v2453 = vpack.c.b16 %v1973, %v1969
          %v2454 = vpack.c.b16 %v1974, %v1970
          %v2455 = vpack.c.b16 %v1979, %v1975
          %v2456 = vpack.c.b16 %v1980, %v1976
          %v2457 = vpack.c.b16 %v1981, %v1977
          %v2458 = vpack.c.b16 %v1982, %v1978
          %v2459 = vpack.c.b16 %v1987, %v1983
          %v2460 = vpack.c.b16 %v1988, %v1984
          %v2461 = vpack.c.b16 %v1989, %v1985
          %v2462 = vpack.c.b16 %v1990, %v1986
          %v2463 = vpack.c.b16 %v1995, %v1991
          %v2464 = vpack.c.b16 %v1996, %v1992
          %v2465 = vpack.c.b16 %v1997, %v1993
          %v2466 = vpack.c.b16 %v1998, %v1994
          %v2467 = vpack.c.b16 %v2003, %v1999
          %v2468 = vpack.c.b16 %v2004, %v2000
          %v2469 = vpack.c.b16 %v2005, %v2001
          %v2470 = vpack.c.b16 %v2006, %v2002
          %v2471 = vpack.c.b16 %v2011, %v2007
          %v2472 = vpack.c.b16 %v2012, %v2008
          %v2473 = vpack.c.b16 %v2013, %v2009
          %v2474 = vpack.c.b16 %v2014, %v2010
          %v2475 = vpack.c.b16 %v2019, %v2015
          %v2476 = vpack.c.b16 %v2020, %v2016
          %v2477 = vpack.c.b16 %v2021, %v2017
          %v2478 = vpack.c.b16 %v2022, %v2018
          %v2479 = vpack.c.b16 %v2027, %v2023
          %v2480 = vpack.c.b16 %v2028, %v2024
          %v2481 = vpack.c.b16 %v2029, %v2025
          %v2482 = vpack.c.b16 %v2030, %v2026
          %v2483 = vpack.c.b16 %v2035, %v2031
          %v2484 = vpack.c.b16 %v2036, %v2032
          %v2485 = vpack.c.b16 %v2037, %v2033
          %v2486 = vpack.c.b16 %v2038, %v2034
          %v2487 = vpack.c.b16 %v2043, %v2039
          %v2488 = vpack.c.b16 %v2044, %v2040
          %v2489 = vpack.c.b16 %v2045, %v2041
          %v2490 = vpack.c.b16 %v2046, %v2042
          %v2491 = vpack.c.b16 %v2051, %v2047
          %v2492 = vpack.c.b16 %v2052, %v2048
          %v2493 = vpack.c.b16 %v2053, %v2049
          %v2494 = vpack.c.b16 %v2054, %v2050
          %v2495 = vpack.c.b16 %v2059, %v2055
          %v2496 = vpack.c.b16 %v2060, %v2056
          %v2497 = vpack.c.b16 %v2061, %v2057
          %v2498 = vpack.c.b16 %v2062, %v2058
          %v2499 = vpack.c.b16 %v2067, %v2063
          %v2500 = vpack.c.b16 %v2068, %v2064
          %v2501 = vpack.c.b16 %v2069, %v2065
          %v2502 = vpack.c.b16 %v2070, %v2066
          %v2503 = vpack.c.b16 %v2075, %v2071
          %v2504 = vpack.c.b16 %v2076, %v2072
          %v2505 = vpack.c.b16 %v2077, %v2073
          %v2506 = vpack.c.b16 %v2078, %v2074
          %v2507 = vpack.c.b16 %v2083, %v2079
          %v2508 = vpack.c.b16 %v2084, %v2080
          %v2509 = vpack.c.b16 %v2085, %v2081
          %v2510 = vpack.c.b16 %v2086, %v2082
          %v2511 = vpack.c.b16 %v2091, %v2087
          %v2512 = vpack.c.b16 %v2092, %v2088
          %v2513 = vpack.c.b16 %v2093, %v2089
          %v2514 = vpack.c.b16 %v2094, %v2090
          %v2515 = vpack.c.b16 %v2099, %v2095
          %v2516 = vpack.c.b16 %v2100, %v2096
          %v2517 = vpack.c.b16 %v2101, %v2097
          %v2518 = vpack.c.b16 %v2102, %v2098
          %v2519 = vpack.c.b16 %v2107, %v2103
          %v2520 = vpack.c.b16 %v2108, %v2104
          %v2521 = vpack.c.b16 %v2109, %v2105
          %v2522 = vpack.c.b16 %v2110, %v2106
          %v2523 = vpack.c.b16 %v2115, %v2111
          %v2524 = vpack.c.b16 %v2116, %v2112
          %v2525 = vpack.c.b16 %v2117, %v2113
          %v2526 = vpack.c.b16 %v2118, %v2114
          %v2527 = vpack.c.b16 %v2123, %v2119
          %v2528 = vpack.c.b16 %v2124, %v2120
          %v2529 = vpack.c.b16 %v2125, %v2121
          %v2530 = vpack.c.b16 %v2126, %v2122
          %v2531 = vpack.c.b16 %v2131, %v2127
          %v2532 = vpack.c.b16 %v2132, %v2128
          %v2533 = vpack.c.b16 %v2133, %v2129
          %v2534 = vpack.c.b16 %v2134, %v2130
          %v2535 = vpack.c.b16 %v2139, %v2135
          %v2536 = vpack.c.b16 %v2140, %v2136
          %v2537 = vpack.c.b16 %v2141, %v2137
          %v2538 = vpack.c.b16 %v2142, %v2138
          %v2539 = vpack.c.b16 %v2147, %v2143
          %v2540 = vpack.c.b16 %v2148, %v2144
          %v2541 = vpack.c.b16 %v2149, %v2145
          %v2542 = vpack.c.b16 %v2150, %v2146
          %v2543 = vpack.c.b16 %v2155, %v2151
          %v2544 = vpack.c.b16 %v2156, %v2152
          %v2545 = vpack.c.b16 %v2157, %v2153
          %v2546 = vpack.c.b16 %v2158, %v2154
          %v2547 = vpack.c.b16 %v2163, %v2159
          %v2548 = vpack.c.b16 %v2164, %v2160
          %v2549 = vpack.c.b16 %v2165, %v2161
          %v2550 = vpack.c.b16 %v2166, %v2162
          %v2551 = vpack.c.b16 %v2171, %v2167
          %v2552 = vpack.c.b16 %v2172, %v2168
          %v2553 = vpack.c.b16 %v2173, %v2169
          %v2554 = vpack.c.b16 %v2174, %v2170
          %v2555 = vpack.c.b16 %v2179, %v2175
          %v2556 = vpack.c.b16 %v2180, %v2176
          %v2557 = vpack.c.b16 %v2181, %v2177
          %v2558 = vpack.c.b16 %v2182, %v2178
          %v2559 = vpack.c.b16 %v2187, %v2183
          %v2560 = vpack.c.b16 %v2188, %v2184
          %v2561 = vpack.c.b16 %v2189, %v2185
          %v2562 = vpack.c.b16 %v2190, %v2186
          %v2563 = vpack.c.b16 %v2195, %v2191
          %v2564 = vpack.c.b16 %v2196, %v2192
          %v2565 = vpack.c.b16 %v2197, %v2193
          %v2566 = vpack.c.b16 %v2198, %v2194
          %v2567 = vpack.c.b16 %v2203, %v2199
          %v2568 = vpack.c.b16 %v2204, %v2200
          %v2569 = vpack.c.b16 %v2205, %v2201
          %v2570 = vpack.c.b16 %v2206, %v2202
          %v2571 = vpack.c.b16 %v2211, %v2207
          %v2572 = vpack.c.b16 %v2212, %v2208
          %v2573 = vpack.c.b16 %v2213, %v2209
          %v2574 = vpack.c.b16 %v2214, %v2210
          %v2575 = vpack.c.b16 %v2219, %v2215
          %v2576 = vpack.c.b16 %v2220, %v2216
          %v2577 = vpack.c.b16 %v2221, %v2217
          %v2578 = vpack.c.b16 %v2222, %v2218
          %v2579 = vpack.c.b16 %v2227, %v2223
          %v2580 = vpack.c.b16 %v2228, %v2224
          %v2581 = vpack.c.b16 %v2229, %v2225
          %v2582 = vpack.c.b16 %v2230, %v2226
          %v2583 = vpack.c.b16 %v2235, %v2231
          %v2584 = vpack.c.b16 %v2236, %v2232
          %v2585 = vpack.c.b16 %v2237, %v2233
          %v2586 = vpack.c.b16 %v2238, %v2234
          %v2587 = vpack.c.b16 %v2243, %v2239
          %v2588 = vpack.c.b16 %v2244, %v2240
          %v2589 = vpack.c.b16 %v2245, %v2241
          %v2590 = vpack.c.b16 %v2246, %v2242
          %v2591 = vpack.c.b16 %v2251, %v2247
          %v2592 = vpack.c.b16 %v2252, %v2248
          %v2593 = vpack.c.b16 %v2253, %v2249
          %v2594 = vpack.c.b16 %v2254, %v2250
          %v2595 = vpack.c.b16 %v2259, %v2255
          %v2596 = vpack.c.b16 %v2260, %v2256
          %v2597 = vpack.c.b16 %v2261, %v2257
          %v2598 = vpack.c.b16 %v2262, %v2258
          %v2599 = vpack.c.b16 %v2267, %v2263
          %v2600 = vpack.c.b16 %v2268, %v2264
          %v2601 = vpack.c.b16 %v2269, %v2265
          %v2602 = vpack.c.b16 %v2270, %v2266
          %v2603 = vpack.c.b16 %v2275, %v2271
          %v2604 = vpack.c.b16 %v2276, %v2272
          %v2605 = vpack.c.b16 %v2277, %v2273
          %v2606 = vpack.c.b16 %v2278, %v2274
          %v2607 = vpack.c.b16 %v2283, %v2279
          %v2608 = vpack.c.b16 %v2284, %v2280
          %v2609 = vpack.c.b16 %v2285, %v2281
          %v2610 = vpack.c.b16 %v2286, %v2282
          %v2611 = vpack.c.b16 %v2291, %v2287
          %v2612 = vpack.c.b16 %v2292, %v2288
          %v2613 = vpack.c.b16 %v2293, %v2289
          %v2614 = vpack.c.b16 %v2294, %v2290
          %v2615 = vpack.c.b16 %v2299, %v2295
          %v2616 = vpack.c.b16 %v2300, %v2296
          %v2617 = vpack.c.b16 %v2301, %v2297
          %v2618 = vpack.c.b16 %v2302, %v2298
          %v2619 = vpack.c.b16 %v2307, %v2303
          %v2620 = vpack.c.b16 %v2308, %v2304
          %v2621 = vpack.c.b16 %v2309, %v2305
          %v2622 = vpack.c.b16 %v2310, %v2306
          %v2623 = vpack.c.b16 %v2315, %v2311
          %v2624 = vpack.c.b16 %v2316, %v2312
          %v2625 = vpack.c.b16 %v2317, %v2313
          %v2626 = vpack.c.b16 %v2318, %v2314
          %v2627 = vpack.c.b16 %v2323, %v2319
          %v2628 = vpack.c.b16 %v2324, %v2320
          %v2629 = vpack.c.b16 %v2325, %v2321
          %v2630 = vpack.c.b16 %v2326, %v2322
          %v2631 = vpack.c.b16 %v2331, %v2327
          %v2632 = vpack.c.b16 %v2332, %v2328
          %v2633 = vpack.c.b16 %v2333, %v2329
          %v2634 = vpack.c.b16 %v2334, %v2330
          %v2635 = vpack.c.b16 %v2339, %v2335
          %v2636 = vpack.c.b16 %v2340, %v2336
          %v2637 = vpack.c.b16 %v2341, %v2337
          %v2638 = vpack.c.b16 %v2342, %v2338
          %v2639 = vpack.c.b16 %v2347, %v2343
          %v2640 = vpack.c.b16 %v2348, %v2344
          %v2641 = vpack.c.b16 %v2349, %v2345
          %v2642 = vpack.c.b16 %v2350, %v2346
          %v2643 = vpack.c.b16 %v2355, %v2351
          %v2644 = vpack.c.b16 %v2356, %v2352
          %v2645 = vpack.c.b16 %v2357, %v2353
          %v2646 = vpack.c.b16 %v2358, %v2354
          %v2647 = vpack.c.b16 %v2363, %v2359
          %v2648 = vpack.c.b16 %v2364, %v2360
          %v2649 = vpack.c.b16 %v2365, %v2361
          %v2650 = vpack.c.b16 %v2366, %v2362
          %v2651 = vpack.c.b16 %v2371, %v2367
          %v2652 = vpack.c.b16 %v2372, %v2368
          %v2653 = vpack.c.b16 %v2373, %v2369
          %v2654 = vpack.c.b16 %v2374, %v2370
          %v2655 = vpack.c.b16 %v2379, %v2375
          %v2656 = vpack.c.b16 %v2380, %v2376
          %v2657 = vpack.c.b16 %v2381, %v2377
          %v2658 = vpack.c.b16 %v2382, %v2378
          %v2659 = vpack.c.b16 %v2387, %v2383
          %v2660 = vpack.c.b16 %v2388, %v2384
          %v2661 = vpack.c.b16 %v2389, %v2385
          %v2662 = vpack.c.b16 %v2390, %v2386
          %v2663 = vpack.c.b16 %v2395, %v2391
          %v2664 = vpack.c.b16 %v2396, %v2392
          %v2665 = vpack.c.b16 %v2397, %v2393
          %v2666 = vpack.c.b16 %v2398, %v2394
          %v2667 = vpack.c.b16 %v2403, %v2399
          %v2668 = vpack.c.b16 %v2404, %v2400
          %v2669 = vpack.c.b16 %v2405, %v2401
          %v2670 = vpack.c.b16 %v2406, %v2402
          %v2671 = vpack.c.b16 %v2411, %v2407
          %v2672 = vpack.c.b16 %v2412, %v2408
          %v2673 = vpack.c.b16 %v2413, %v2409
          %v2674 = vpack.c.b16 %v2414, %v2410
          %v2675 = vpack.c.b16 %v2419, %v2415
          %v2676 = vpack.c.b16 %v2420, %v2416
          %v2677 = vpack.c.b16 %v2421, %v2417
          %v2678 = vpack.c.b16 %v2422, %v2418
          %v2936 = vlaneseq
          %v2937 = vshrl.u32 %v2936, 7
          %v2938 = vsub.s32 0, %v2937
          %v2939 = vrot.slane %v1654, %v2938
          %v2940 = vlaneseq
          %v2941 = vshrl.u32 %v2940, 7
          %v2942 = vsub.s32 1, %v2941
          %v2943 = vrot.slane %v1654, %v2942
          %v2944 = vlaneseq
          %v2945 = vshrl.u32 %v2944, 7
          %v2946 = vsub.s32 2, %v2945
          %v2947 = vrot.slane %v1654, %v2946
          %v2948 = vlaneseq
          %v2949 = vshrl.u32 %v2948, 7
          %v2950 = vsub.s32 3, %v2949
          %v2951 = vrot.slane %v1654, %v2950
          %2956 = vmatprep.subr.bf16.mxu0 %v2452
          %2957 = vmatpush1.bf16.msra.mxu0 %v2451
          %2958 = vmatprep.subr.bf16.mxu0 %v2448
          %2959 = vmatpush1.bf16.msra.mxu0 %v2447
          %2960 = vmatprep.subr.bf16.mxu0 %v2444
          %2961 = vmatpush1.bf16.msra.mxu0 %v2443
          %2962 = vmatprep.subr.bf16.mxu0 %v2440
          %2963 = vmatpush1.bf16.msra.mxu0 %v2439
          %2964 = vmatprep.subr.bf16.mxu0 %v2436
          %2965 = vmatpush1.bf16.msra.mxu0 %v2435
          %2966 = vmatprep.subr.bf16.mxu0 %v2432
          %2967 = vmatpush1.bf16.msra.mxu0 %v2431
          %2968 = vmatprep.subr.bf16.mxu0 %v2428
          %2969 = vmatpush1.bf16.msra.mxu0 %v2427
          %2970 = vmatprep.subr.bf16.mxu0 %v2424
          %2971 = vmatpush1.bf16.msra.mxu0 %v2423
          %2972 = vmatprep.subr.bf16.mxu0 %v2484
          %2973 = vmatpush2.bf16.msra.mxu0 %v2483
          %2974 = vmatprep.subr.bf16.mxu0 %v2480
          %2975 = vmatpush2.bf16.msra.mxu0 %v2479
          %2976 = vmatprep.subr.bf16.mxu0 %v2476
          %2977 = vmatpush2.bf16.msra.mxu0 %v2475
          %2978 = vmatprep.subr.bf16.mxu0 %v2472
          %2979 = vmatpush2.bf16.msra.mxu0 %v2471
          %2980 = vmatprep.subr.bf16.mxu0 %v2468
          %2981 = vmatpush2.bf16.msra.mxu0 %v2467
          %2982 = vmatprep.subr.bf16.mxu0 %v2464
          %2983 = vmatpush2.bf16.msra.mxu0 %v2463
          %2984 = vmatprep.subr.bf16.mxu0 %v2460
          %2985 = vmatpush2.bf16.msra.mxu0 %v2459
          %2986 = vmatprep.subr.bf16.mxu0 %v2456
          %2987 = vmatpush2.bf16.msra.mxu0 %v2455
          %2988 = vmatprep.mubr.bf16.mxu0 %v1391
          %2989 = vmatmul.mubr.bf16.gmra.mxu0 %v1390
          %v2990 = vpop.f32.mrf.mxu0
          %v2991 = vadd.f32 %v2939, %v2990
          %v2992 = vpop.f32.mrf.mxu0
          %v2993 = vadd.f32 %v2943, %v2992
          %v2994 = vpop.f32.mrf.mxu0
          %v2995 = vpop.f32.mrf.mxu0
          %2996 = vdwg.mxu0
          %2997 = vmatprep.subr.bf16.mxu0 %v2516
          %2998 = vmatpush1.bf16.msra.mxu0 %v2515
          %2999 = vmatprep.subr.bf16.mxu0 %v2512
          %3000 = vmatpush1.bf16.msra.mxu0 %v2511
          %3001 = vmatprep.subr.bf16.mxu0 %v2508
          %3002 = vmatpush1.bf16.msra.mxu0 %v2507
          %3003 = vmatprep.subr.bf16.mxu0 %v2504
          %3004 = vmatpush1.bf16.msra.mxu0 %v2503
          %3005 = vmatprep.subr.bf16.mxu0 %v2500
          %3006 = vmatpush1.bf16.msra.mxu0 %v2499
          %3007 = vmatprep.subr.bf16.mxu0 %v2496
          %3008 = vmatpush1.bf16.msra.mxu0 %v2495
          %3009 = vmatprep.subr.bf16.mxu0 %v2492
          %3010 = vmatpush1.bf16.msra.mxu0 %v2491
          %3011 = vmatprep.subr.bf16.mxu0 %v2488
          %3012 = vmatpush1.bf16.msra.mxu0 %v2487
          %3013 = vmatprep.subr.bf16.mxu0 %v2548
          %3014 = vmatpush2.bf16.msra.mxu0 %v2547
          %3015 = vmatprep.subr.bf16.mxu0 %v2544
          %3016 = vmatpush2.bf16.msra.mxu0 %v2543
          %3017 = vmatprep.subr.bf16.mxu0 %v2540
          %3018 = vmatpush2.bf16.msra.mxu0 %v2539
          %3019 = vmatprep.subr.bf16.mxu0 %v2536
          %3020 = vmatpush2.bf16.msra.mxu0 %v2535
          %3021 = vmatprep.subr.bf16.mxu0 %v2532
          %3022 = vmatpush2.bf16.msra.mxu0 %v2531
          %3023 = vmatprep.subr.bf16.mxu0 %v2528
          %3024 = vmatpush2.bf16.msra.mxu0 %v2527
          %3025 = vmatprep.subr.bf16.mxu0 %v2524
          %3026 = vmatpush2.bf16.msra.mxu0 %v2523
          %3027 = vmatprep.subr.bf16.mxu0 %v2520
          %3028 = vmatpush2.bf16.msra.mxu0 %v2519
          %3029 = vmatprep.mubr.bf16.mxu0 %v1393
          %3030 = vmatmul.mubr.bf16.gmra.mxu0 %v1392
          %v3031 = vpop.f32.mrf.mxu0
          %v3032 = vadd.f32 %v2991, %v3031
          %v3033 = vpop.f32.mrf.mxu0
          %v3034 = vadd.f32 %v2993, %v3033
          %v3035 = vpop.f32.mrf.mxu0
          %v3036 = vpop.f32.mrf.mxu0
          %3037 = vdwg.mxu0
          %3038 = vmatprep.subr.bf16.mxu0 %v2580
          %3039 = vmatpush1.bf16.msra.mxu0 %v2579
          %3040 = vmatprep.subr.bf16.mxu0 %v2576
          %3041 = vmatpush1.bf16.msra.mxu0 %v2575
          %3042 = vmatprep.subr.bf16.mxu0 %v2572
          %3043 = vmatpush1.bf16.msra.mxu0 %v2571
          %3044 = vmatprep.subr.bf16.mxu0 %v2568
          %3045 = vmatpush1.bf16.msra.mxu0 %v2567
          %3046 = vmatprep.subr.bf16.mxu0 %v2564
          %3047 = vmatpush1.bf16.msra.mxu0 %v2563
          %3048 = vmatprep.subr.bf16.mxu0 %v2560
          %3049 = vmatpush1.bf16.msra.mxu0 %v2559
          %3050 = vmatprep.subr.bf16.mxu0 %v2556
          %3051 = vmatpush1.bf16.msra.mxu0 %v2555
          %3052 = vmatprep.subr.bf16.mxu0 %v2552
          %3053 = vmatpush1.bf16.msra.mxu0 %v2551
          %3054 = vmatprep.subr.bf16.mxu0 %v2612
          %3055 = vmatpush2.bf16.msra.mxu0 %v2611
          %3056 = vmatprep.subr.bf16.mxu0 %v2608
          %3057 = vmatpush2.bf16.msra.mxu0 %v2607
          %3058 = vmatprep.subr.bf16.mxu0 %v2604
          %3059 = vmatpush2.bf16.msra.mxu0 %v2603
          %3060 = vmatprep.subr.bf16.mxu0 %v2600
          %3061 = vmatpush2.bf16.msra.mxu0 %v2599
          %3062 = vmatprep.subr.bf16.mxu0 %v2596
          %3063 = vmatpush2.bf16.msra.mxu0 %v2595
          %3064 = vmatprep.subr.bf16.mxu0 %v2592
          %3065 = vmatpush2.bf16.msra.mxu0 %v2591
          %3066 = vmatprep.subr.bf16.mxu0 %v2588
          %3067 = vmatpush2.bf16.msra.mxu0 %v2587
          %3068 = vmatprep.subr.bf16.mxu0 %v2584
          %3069 = vmatpush2.bf16.msra.mxu0 %v2583
          %3070 = vmatprep.mubr.bf16.mxu0 %v1395
          %3071 = vmatmul.mubr.bf16.gmra.mxu0 %v1394
          %v3072 = vpop.f32.mrf.mxu0
          %v3073 = vadd.f32 %v3032, %v3072
          %v3074 = vpop.f32.mrf.mxu0
          %v3075 = vadd.f32 %v3034, %v3074
          %v3076 = vpop.f32.mrf.mxu0
          %v3077 = vpop.f32.mrf.mxu0
          %3078 = vdwg.mxu0
          %3079 = vmatprep.subr.bf16.mxu0 %v2644
          %3080 = vmatpush1.bf16.msra.mxu0 %v2643
          %3081 = vmatprep.subr.bf16.mxu0 %v2640
          %3082 = vmatpush1.bf16.msra.mxu0 %v2639
          %3083 = vmatprep.subr.bf16.mxu0 %v2636
          %3084 = vmatpush1.bf16.msra.mxu0 %v2635
          %3085 = vmatprep.subr.bf16.mxu0 %v2632
          %3086 = vmatpush1.bf16.msra.mxu0 %v2631
          %3087 = vmatprep.subr.bf16.mxu0 %v2628
          %3088 = vmatpush1.bf16.msra.mxu0 %v2627
          %3089 = vmatprep.subr.bf16.mxu0 %v2624
          %3090 = vmatpush1.bf16.msra.mxu0 %v2623
          %3091 = vmatprep.subr.bf16.mxu0 %v2620
          %3092 = vmatpush1.bf16.msra.mxu0 %v2619
          %3093 = vmatprep.subr.bf16.mxu0 %v2616
          %3094 = vmatpush1.bf16.msra.mxu0 %v2615
          %3095 = vmatprep.subr.bf16.mxu0 %v2676
          %3096 = vmatpush2.bf16.msra.mxu0 %v2675
          %3097 = vmatprep.subr.bf16.mxu0 %v2672
          %3098 = vmatpush2.bf16.msra.mxu0 %v2671
          %3099 = vmatprep.subr.bf16.mxu0 %v2668
          %3100 = vmatpush2.bf16.msra.mxu0 %v2667
          %3101 = vmatprep.subr.bf16.mxu0 %v2664
          %3102 = vmatpush2.bf16.msra.mxu0 %v2663
          %3103 = vmatprep.subr.bf16.mxu0 %v2660
          %3104 = vmatpush2.bf16.msra.mxu0 %v2659
          %3105 = vmatprep.subr.bf16.mxu0 %v2656
          %3106 = vmatpush2.bf16.msra.mxu0 %v2655
          %3107 = vmatprep.subr.bf16.mxu0 %v2652
          %3108 = vmatpush2.bf16.msra.mxu0 %v2651
          %3109 = vmatprep.subr.bf16.mxu0 %v2648
          %3110 = vmatpush2.bf16.msra.mxu0 %v2647
          %3111 = vmatprep.mubr.bf16.mxu0 %v1397
          %3112 = vmatmul.mubr.bf16.gmra.mxu0 %v1396
          %v3113 = vpop.f32.mrf.mxu0
          %v3114 = vadd.f32 %v3073, %v3113
          %v3115 = vpop.f32.mrf.mxu0
          %v3116 = vadd.f32 %v3075, %v3115
          %v3117 = vpop.f32.mrf.mxu0
          %v3118 = vpop.f32.mrf.mxu0
          %3119 = vdwg.mxu0
          %3120 = vmatprep.subr.bf16.mxu0 %v2454
          %3121 = vmatpush1.bf16.msra.mxu0 %v2453
          %3122 = vmatprep.subr.bf16.mxu0 %v2450
          %3123 = vmatpush1.bf16.msra.mxu0 %v2449
          %3124 = vmatprep.subr.bf16.mxu0 %v2446
          %3125 = vmatpush1.bf16.msra.mxu0 %v2445
          %3126 = vmatprep.subr.bf16.mxu0 %v2442
          %3127 = vmatpush1.bf16.msra.mxu0 %v2441
          %3128 = vmatprep.subr.bf16.mxu0 %v2438
          %3129 = vmatpush1.bf16.msra.mxu0 %v2437
          %3130 = vmatprep.subr.bf16.mxu0 %v2434
          %3131 = vmatpush1.bf16.msra.mxu0 %v2433
          %3132 = vmatprep.subr.bf16.mxu0 %v2430
          %3133 = vmatpush1.bf16.msra.mxu0 %v2429
          %3134 = vmatprep.subr.bf16.mxu0 %v2426
          %3135 = vmatpush1.bf16.msra.mxu0 %v2425
          %3136 = vmatprep.subr.bf16.mxu0 %v2486
          %3137 = vmatpush2.bf16.msra.mxu0 %v2485
          %3138 = vmatprep.subr.bf16.mxu0 %v2482
          %3139 = vmatpush2.bf16.msra.mxu0 %v2481
          %3140 = vmatprep.subr.bf16.mxu0 %v2478
          %3141 = vmatpush2.bf16.msra.mxu0 %v2477
          %3142 = vmatprep.subr.bf16.mxu0 %v2474
          %3143 = vmatpush2.bf16.msra.mxu0 %v2473
          %3144 = vmatprep.subr.bf16.mxu0 %v2470
          %3145 = vmatpush2.bf16.msra.mxu0 %v2469
          %3146 = vmatprep.subr.bf16.mxu0 %v2466
          %3147 = vmatpush2.bf16.msra.mxu0 %v2465
          %3148 = vmatprep.subr.bf16.mxu0 %v2462
          %3149 = vmatpush2.bf16.msra.mxu0 %v2461
          %3150 = vmatprep.subr.bf16.mxu0 %v2458
          %3151 = vmatpush2.bf16.msra.mxu0 %v2457
          %3152 = vmatprep.mubr.bf16.mxu0 %v1391
          %3153 = vmatmul.mubr.bf16.gmra.mxu0 %v1390
          %v3154 = vpop.f32.mrf.mxu0
          %v3155 = vadd.f32 %v2947, %v3154
          %v3156 = vpop.f32.mrf.mxu0
          %v3157 = vadd.f32 %v2951, %v3156
          %v3158 = vpop.f32.mrf.mxu0
          %v3159 = vpop.f32.mrf.mxu0
          %3160 = vdwg.mxu0
          %3161 = vmatprep.subr.bf16.mxu0 %v2518
          %3162 = vmatpush1.bf16.msra.mxu0 %v2517
          %3163 = vmatprep.subr.bf16.mxu0 %v2514
          %3164 = vmatpush1.bf16.msra.mxu0 %v2513
          %3165 = vmatprep.subr.bf16.mxu0 %v2510
          %3166 = vmatpush1.bf16.msra.mxu0 %v2509
          %3167 = vmatprep.subr.bf16.mxu0 %v2506
          %3168 = vmatpush1.bf16.msra.mxu0 %v2505
          %3169 = vmatprep.subr.bf16.mxu0 %v2502
          %3170 = vmatpush1.bf16.msra.mxu0 %v2501
          %3171 = vmatprep.subr.bf16.mxu0 %v2498
          %3172 = vmatpush1.bf16.msra.mxu0 %v2497
          %3173 = vmatprep.subr.bf16.mxu0 %v2494
          %3174 = vmatpush1.bf16.msra.mxu0 %v2493
          %3175 = vmatprep.subr.bf16.mxu0 %v2490
          %3176 = vmatpush1.bf16.msra.mxu0 %v2489
          %3177 = vmatprep.subr.bf16.mxu0 %v2550
          %3178 = vmatpush2.bf16.msra.mxu0 %v2549
          %3179 = vmatprep.subr.bf16.mxu0 %v2546
          %3180 = vmatpush2.bf16.msra.mxu0 %v2545
          %3181 = vmatprep.subr.bf16.mxu0 %v2542
          %3182 = vmatpush2.bf16.msra.mxu0 %v2541
          %3183 = vmatprep.subr.bf16.mxu0 %v2538
          %3184 = vmatpush2.bf16.msra.mxu0 %v2537
          %3185 = vmatprep.subr.bf16.mxu0 %v2534
          %3186 = vmatpush2.bf16.msra.mxu0 %v2533
          %3187 = vmatprep.subr.bf16.mxu0 %v2530
          %3188 = vmatpush2.bf16.msra.mxu0 %v2529
          %3189 = vmatprep.subr.bf16.mxu0 %v2526
          %3190 = vmatpush2.bf16.msra.mxu0 %v2525
          %3191 = vmatprep.subr.bf16.mxu0 %v2522
          %3192 = vmatpush2.bf16.msra.mxu0 %v2521
          %3193 = vmatprep.mubr.bf16.mxu0 %v1393
          %3194 = vmatmul.mubr.bf16.gmra.mxu0 %v1392
          %v3195 = vpop.f32.mrf.mxu0
          %v3196 = vadd.f32 %v3155, %v3195
          %v3197 = vpop.f32.mrf.mxu0
          %v3198 = vadd.f32 %v3157, %v3197
          %v3199 = vpop.f32.mrf.mxu0
          %v3200 = vpop.f32.mrf.mxu0
          %3201 = vdwg.mxu0
          %3202 = vmatprep.subr.bf16.mxu0 %v2582
          %3203 = vmatpush1.bf16.msra.mxu0 %v2581
          %3204 = vmatprep.subr.bf16.mxu0 %v2578
          %3205 = vmatpush1.bf16.msra.mxu0 %v2577
          %3206 = vmatprep.subr.bf16.mxu0 %v2574
          %3207 = vmatpush1.bf16.msra.mxu0 %v2573
          %3208 = vmatprep.subr.bf16.mxu0 %v2570
          %3209 = vmatpush1.bf16.msra.mxu0 %v2569
          %3210 = vmatprep.subr.bf16.mxu0 %v2566
          %3211 = vmatpush1.bf16.msra.mxu0 %v2565
          %3212 = vmatprep.subr.bf16.mxu0 %v2562
          %3213 = vmatpush1.bf16.msra.mxu0 %v2561
          %3214 = vmatprep.subr.bf16.mxu0 %v2558
          %3215 = vmatpush1.bf16.msra.mxu0 %v2557
          %3216 = vmatprep.subr.bf16.mxu0 %v2554
          %3217 = vmatpush1.bf16.msra.mxu0 %v2553
          %3218 = vmatprep.subr.bf16.mxu0 %v2614
          %3219 = vmatpush2.bf16.msra.mxu0 %v2613
          %3220 = vmatprep.subr.bf16.mxu0 %v2610
          %3221 = vmatpush2.bf16.msra.mxu0 %v2609
          %3222 = vmatprep.subr.bf16.mxu0 %v2606
          %3223 = vmatpush2.bf16.msra.mxu0 %v2605
          %3224 = vmatprep.subr.bf16.mxu0 %v2602
          %3225 = vmatpush2.bf16.msra.mxu0 %v2601
          %3226 = vmatprep.subr.bf16.mxu0 %v2598
          %3227 = vmatpush2.bf16.msra.mxu0 %v2597
          %3228 = vmatprep.subr.bf16.mxu0 %v2594
          %3229 = vmatpush2.bf16.msra.mxu0 %v2593
          %3230 = vmatprep.subr.bf16.mxu0 %v2590
          %3231 = vmatpush2.bf16.msra.mxu0 %v2589
          %3232 = vmatprep.subr.bf16.mxu0 %v2586
          %3233 = vmatpush2.bf16.msra.mxu0 %v2585
          %3234 = vmatprep.mubr.bf16.mxu0 %v1395
          %3235 = vmatmul.mubr.bf16.gmra.mxu0 %v1394
          %v3236 = vpop.f32.mrf.mxu0
          %v3237 = vadd.f32 %v3196, %v3236
          %v3238 = vpop.f32.mrf.mxu0
          %v3239 = vadd.f32 %v3198, %v3238
          %v3240 = vpop.f32.mrf.mxu0
          %v3241 = vpop.f32.mrf.mxu0
          %3242 = vdwg.mxu0
          %3243 = vmatprep.subr.bf16.mxu0 %v2646
          %3244 = vmatpush1.bf16.msra.mxu0 %v2645
          %3245 = vmatprep.subr.bf16.mxu0 %v2642
          %3246 = vmatpush1.bf16.msra.mxu0 %v2641
          %3247 = vmatprep.subr.bf16.mxu0 %v2638
          %3248 = vmatpush1.bf16.msra.mxu0 %v2637
          %3249 = vmatprep.subr.bf16.mxu0 %v2634
          %3250 = vmatpush1.bf16.msra.mxu0 %v2633
          %3251 = vmatprep.subr.bf16.mxu0 %v2630
          %3252 = vmatpush1.bf16.msra.mxu0 %v2629
          %3253 = vmatprep.subr.bf16.mxu0 %v2626
          %3254 = vmatpush1.bf16.msra.mxu0 %v2625
          %3255 = vmatprep.subr.bf16.mxu0 %v2622
          %3256 = vmatpush1.bf16.msra.mxu0 %v2621
          %3257 = vmatprep.subr.bf16.mxu0 %v2618
          %3258 = vmatpush1.bf16.msra.mxu0 %v2617
          %3259 = vmatprep.subr.bf16.mxu0 %v2678
          %3260 = vmatpush2.bf16.msra.mxu0 %v2677
          %3261 = vmatprep.subr.bf16.mxu0 %v2674
          %3262 = vmatpush2.bf16.msra.mxu0 %v2673
          %3263 = vmatprep.subr.bf16.mxu0 %v2670
          %3264 = vmatpush2.bf16.msra.mxu0 %v2669
          %3265 = vmatprep.subr.bf16.mxu0 %v2666
          %3266 = vmatpush2.bf16.msra.mxu0 %v2665
          %3267 = vmatprep.subr.bf16.mxu0 %v2662
          %3268 = vmatpush2.bf16.msra.mxu0 %v2661
          %3269 = vmatprep.subr.bf16.mxu0 %v2658
          %3270 = vmatpush2.bf16.msra.mxu0 %v2657
          %3271 = vmatprep.subr.bf16.mxu0 %v2654
          %3272 = vmatpush2.bf16.msra.mxu0 %v2653
          %3273 = vmatprep.subr.bf16.mxu0 %v2650
          %3274 = vmatpush2.bf16.msra.mxu0 %v2649
          %3275 = vmatprep.mubr.bf16.mxu0 %v1397
          %3276 = vmatmul.mubr.bf16.gmra.mxu0 %v1396
          %v3277 = vpop.f32.mrf.mxu0
          %v3278 = vadd.f32 %v3237, %v3277
          %v3279 = vpop.f32.mrf.mxu0
          %v3280 = vadd.f32 %v3239, %v3279
          %v3281 = vpop.f32.mrf.mxu0
          %v3282 = vpop.f32.mrf.mxu0
          %3283 = vdwg.mxu0
          %v3284 = vmax.f32 %v3114, 0.0
          %v3285 = vmax.f32 %v3116, 0.0
          %v3286 = vmax.f32 %v3278, 0.0
          %v3287 = vmax.f32 %v3280, 0.0
          %v3288 = vpack.c.bf16 %v3284, %v3284
          %v3289 = vpack.c.bf16 %v3285, %v3285
          %v3290 = vpack.c.bf16 %v3286, %v3286
          %v3291 = vpack.c.bf16 %v3287, %v3287
          %v3292 = vld [vmem:[#allocation7] sm:$0xff]
          %v3293 = vld [vmem:[#allocation7 + $0x8] sm:$0xff]
          %v3294 = vld [vmem:[#allocation7 + $0x10] sm:$0xff]
          %v3295 = vld [vmem:[#allocation7 + $0x18] sm:$0xff]
          %v3296 = vld [vmem:[#allocation7 + $0x20] sm:$0xff]
          %v3297 = vld [vmem:[#allocation7 + $0x28] sm:$0xff]
          %v3298 = vld [vmem:[#allocation7 + $0x30] sm:$0xff]
          %v3299 = vld [vmem:[#allocation7 + $0x38] sm:$0xff]
          %v3300 = vld [vmem:[#allocation7 + $0x40] sm:$0xff]
          %v3301 = vld [vmem:[#allocation7 + $0x48] sm:$0xff]
          %v3302 = vld [vmem:[#allocation7 + $0x50] sm:$0xff]
          %v3303 = vld [vmem:[#allocation7 + $0x58] sm:$0xff]
          %v3304 = vld [vmem:[#allocation7 + $0x60] sm:$0xff]
          %v3305 = vld [vmem:[#allocation7 + $0x68] sm:$0xff]
          %v3306 = vld [vmem:[#allocation7 + $0x70] sm:$0xff]
          %v3307 = vld [vmem:[#allocation7 + $0x78] sm:$0xff]
          %v3308 = vld [vmem:[#allocation7 + $0x80] sm:$0xff]
          %v3309 = vld [vmem:[#allocation7 + $0x88] sm:$0xff]
          %v3310 = vld [vmem:[#allocation7 + $0x90] sm:$0xff]
          %v3311 = vld [vmem:[#allocation7 + $0x98] sm:$0xff]
          %v3312 = vld [vmem:[#allocation7 + $0xa0] sm:$0xff]
          %v3313 = vld [vmem:[#allocation7 + $0xa8] sm:$0xff]
          %v3314 = vld [vmem:[#allocation7 + $0xb0] sm:$0xff]
          %v3315 = vld [vmem:[#allocation7 + $0xb8] sm:$0xff]
          %v3316 = vld [vmem:[#allocation7 + $0xc0] sm:$0xff]
          %v3317 = vld [vmem:[#allocation7 + $0xc8] sm:$0xff]
          %v3318 = vld [vmem:[#allocation7 + $0xd0] sm:$0xff]
          %v3319 = vld [vmem:[#allocation7 + $0xd8] sm:$0xff]
          %v3320 = vld [vmem:[#allocation7 + $0xe0] sm:$0xff]
          %v3321 = vld [vmem:[#allocation7 + $0xe8] sm:$0xff]
          %v3322 = vld [vmem:[#allocation7 + $0xf0] sm:$0xff]
          %v3323 = vld [vmem:[#allocation7 + $0xf8] sm:$0xff]
          %v3324 = vld [vmem:[#allocation7 + $0x100] sm:$0xff]
          %v3325 = vld [vmem:[#allocation7 + $0x108] sm:$0xff]
          %v3326 = vld [vmem:[#allocation7 + $0x110] sm:$0xff]
          %v3327 = vld [vmem:[#allocation7 + $0x118] sm:$0xff]
          %v3328 = vld [vmem:[#allocation7 + $0x120] sm:$0xff]
          %v3329 = vld [vmem:[#allocation7 + $0x128] sm:$0xff]
          %v3330 = vld [vmem:[#allocation7 + $0x130] sm:$0xff]
          %v3331 = vld [vmem:[#allocation7 + $0x138] sm:$0xff]
          %v3332 = vld [vmem:[#allocation7 + $0x140] sm:$0xff]
          %v3333 = vld [vmem:[#allocation7 + $0x148] sm:$0xff]
          %v3334 = vld [vmem:[#allocation7 + $0x150] sm:$0xff]
          %v3335 = vld [vmem:[#allocation7 + $0x158] sm:$0xff]
          %v3336 = vld [vmem:[#allocation7 + $0x160] sm:$0xff]
          %v3337 = vld [vmem:[#allocation7 + $0x168] sm:$0xff]
          %v3338 = vld [vmem:[#allocation7 + $0x170] sm:$0xff]
          %v3339 = vld [vmem:[#allocation7 + $0x178] sm:$0xff]
          %v3340 = vld [vmem:[#allocation7 + $0x180] sm:$0xff]
          %v3341 = vld [vmem:[#allocation7 + $0x188] sm:$0xff]
          %v3342 = vld [vmem:[#allocation7 + $0x190] sm:$0xff]
          %v3343 = vld [vmem:[#allocation7 + $0x198] sm:$0xff]
          %v3344 = vld [vmem:[#allocation7 + $0x1a0] sm:$0xff]
          %v3345 = vld [vmem:[#allocation7 + $0x1a8] sm:$0xff]
          %v3346 = vld [vmem:[#allocation7 + $0x1b0] sm:$0xff]
          %v3347 = vld [vmem:[#allocation7 + $0x1b8] sm:$0xff]
          %v3348 = vld [vmem:[#allocation7 + $0x1c0] sm:$0xff]
          %v3349 = vld [vmem:[#allocation7 + $0x1c8] sm:$0xff]
          %v3350 = vld [vmem:[#allocation7 + $0x1d0] sm:$0xff]
          %v3351 = vld [vmem:[#allocation7 + $0x1d8] sm:$0xff]
          %v3352 = vld [vmem:[#allocation7 + $0x1e0] sm:$0xff]
          %v3353 = vld [vmem:[#allocation7 + $0x1e8] sm:$0xff]
          %v3354 = vld [vmem:[#allocation7 + $0x1f0] sm:$0xff]
          %v3355 = vld [vmem:[#allocation7 + $0x1f8] sm:$0xff]
          %v3356 = vld [vmem:[%s10] sm:$0x3]
          %v3421 = vunpack.c.l.b16 %v3292
          %v3422 = vunpack.c.h.b16 %v3292
          %v3423 = vunpack.c.l.b16 %v3293
          %v3424 = vunpack.c.h.b16 %v3293
          %v3425 = vunpack.c.l.b16 %v3294
          %v3426 = vunpack.c.h.b16 %v3294
          %v3427 = vunpack.c.l.b16 %v3295
          %v3428 = vunpack.c.h.b16 %v3295
          %v3429 = vunpack.c.l.b16 %v3296
          %v3430 = vunpack.c.h.b16 %v3296
          %v3431 = vunpack.c.l.b16 %v3297
          %v3432 = vunpack.c.h.b16 %v3297
          %v3433 = vunpack.c.l.b16 %v3298
          %v3434 = vunpack.c.h.b16 %v3298
          %v3435 = vunpack.c.l.b16 %v3299
          %v3436 = vunpack.c.h.b16 %v3299
          %v3437 = vunpack.c.l.b16 %v3300
          %v3438 = vunpack.c.h.b16 %v3300
          %v3439 = vunpack.c.l.b16 %v3301
          %v3440 = vunpack.c.h.b16 %v3301
          %v3441 = vunpack.c.l.b16 %v3302
          %v3442 = vunpack.c.h.b16 %v3302
          %v3443 = vunpack.c.l.b16 %v3303
          %v3444 = vunpack.c.h.b16 %v3303
          %v3445 = vunpack.c.l.b16 %v3304
          %v3446 = vunpack.c.h.b16 %v3304
          %v3447 = vunpack.c.l.b16 %v3305
          %v3448 = vunpack.c.h.b16 %v3305
          %v3449 = vunpack.c.l.b16 %v3306
          %v3450 = vunpack.c.h.b16 %v3306
          %v3451 = vunpack.c.l.b16 %v3307
          %v3452 = vunpack.c.h.b16 %v3307
          %v3453 = vunpack.c.l.b16 %v3308
          %v3454 = vunpack.c.h.b16 %v3308
          %v3455 = vunpack.c.l.b16 %v3309
          %v3456 = vunpack.c.h.b16 %v3309
          %v3457 = vunpack.c.l.b16 %v3310
          %v3458 = vunpack.c.h.b16 %v3310
          %v3459 = vunpack.c.l.b16 %v3311
          %v3460 = vunpack.c.h.b16 %v3311
          %v3461 = vunpack.c.l.b16 %v3312
          %v3462 = vunpack.c.h.b16 %v3312
          %v3463 = vunpack.c.l.b16 %v3313
          %v3464 = vunpack.c.h.b16 %v3313
          %v3465 = vunpack.c.l.b16 %v3314
          %v3466 = vunpack.c.h.b16 %v3314
          %v3467 = vunpack.c.l.b16 %v3315
          %v3468 = vunpack.c.h.b16 %v3315
          %v3469 = vunpack.c.l.b16 %v3316
          %v3470 = vunpack.c.h.b16 %v3316
          %v3471 = vunpack.c.l.b16 %v3317
          %v3472 = vunpack.c.h.b16 %v3317
          %v3473 = vunpack.c.l.b16 %v3318
          %v3474 = vunpack.c.h.b16 %v3318
          %v3475 = vunpack.c.l.b16 %v3319
          %v3476 = vunpack.c.h.b16 %v3319
          %v3477 = vunpack.c.l.b16 %v3320
          %v3478 = vunpack.c.h.b16 %v3320
          %v3479 = vunpack.c.l.b16 %v3321
          %v3480 = vunpack.c.h.b16 %v3321
          %v3481 = vunpack.c.l.b16 %v3322
          %v3482 = vunpack.c.h.b16 %v3322
          %v3483 = vunpack.c.l.b16 %v3323
          %v3484 = vunpack.c.h.b16 %v3323
          %v3485 = vunpack.c.l.b16 %v3324
          %v3486 = vunpack.c.h.b16 %v3324
          %v3487 = vunpack.c.l.b16 %v3325
          %v3488 = vunpack.c.h.b16 %v3325
          %v3489 = vunpack.c.l.b16 %v3326
          %v3490 = vunpack.c.h.b16 %v3326
          %v3491 = vunpack.c.l.b16 %v3327
          %v3492 = vunpack.c.h.b16 %v3327
          %v3493 = vunpack.c.l.b16 %v3328
          %v3494 = vunpack.c.h.b16 %v3328
          %v3495 = vunpack.c.l.b16 %v3329
          %v3496 = vunpack.c.h.b16 %v3329
          %v3497 = vunpack.c.l.b16 %v3330
          %v3498 = vunpack.c.h.b16 %v3330
          %v3499 = vunpack.c.l.b16 %v3331
          %v3500 = vunpack.c.h.b16 %v3331
          %v3501 = vunpack.c.l.b16 %v3332
          %v3502 = vunpack.c.h.b16 %v3332
          %v3503 = vunpack.c.l.b16 %v3333
          %v3504 = vunpack.c.h.b16 %v3333
          %v3505 = vunpack.c.l.b16 %v3334
          %v3506 = vunpack.c.h.b16 %v3334
          %v3507 = vunpack.c.l.b16 %v3335
          %v3508 = vunpack.c.h.b16 %v3335
          %v3509 = vunpack.c.l.b16 %v3336
          %v3510 = vunpack.c.h.b16 %v3336
          %v3511 = vunpack.c.l.b16 %v3337
          %v3512 = vunpack.c.h.b16 %v3337
          %v3513 = vunpack.c.l.b16 %v3338
          %v3514 = vunpack.c.h.b16 %v3338
          %v3515 = vunpack.c.l.b16 %v3339
          %v3516 = vunpack.c.h.b16 %v3339
          %v3517 = vunpack.c.l.b16 %v3340
          %v3518 = vunpack.c.h.b16 %v3340
          %v3519 = vunpack.c.l.b16 %v3341
          %v3520 = vunpack.c.h.b16 %v3341
          %v3521 = vunpack.c.l.b16 %v3342
          %v3522 = vunpack.c.h.b16 %v3342
          %v3523 = vunpack.c.l.b16 %v3343
          %v3524 = vunpack.c.h.b16 %v3343
          %v3525 = vunpack.c.l.b16 %v3344
          %v3526 = vunpack.c.h.b16 %v3344
          %v3527 = vunpack.c.l.b16 %v3345
          %v3528 = vunpack.c.h.b16 %v3345
          %v3529 = vunpack.c.l.b16 %v3346
          %v3530 = vunpack.c.h.b16 %v3346
          %v3531 = vunpack.c.l.b16 %v3347
          %v3532 = vunpack.c.h.b16 %v3347
          %v3533 = vunpack.c.l.b16 %v3348
          %v3534 = vunpack.c.h.b16 %v3348
          %v3535 = vunpack.c.l.b16 %v3349
          %v3536 = vunpack.c.h.b16 %v3349
          %v3537 = vunpack.c.l.b16 %v3350
          %v3538 = vunpack.c.h.b16 %v3350
          %v3539 = vunpack.c.l.b16 %v3351
          %v3540 = vunpack.c.h.b16 %v3351
          %v3541 = vunpack.c.l.b16 %v3352
          %v3542 = vunpack.c.h.b16 %v3352
          %v3543 = vunpack.c.l.b16 %v3353
          %v3544 = vunpack.c.h.b16 %v3353
          %v3545 = vunpack.c.l.b16 %v3354
          %v3546 = vunpack.c.h.b16 %v3354
          %v3547 = vunpack.c.l.b16 %v3355
          %v3548 = vunpack.c.h.b16 %v3355
          %v3549 = vpack.c.b16 %v3423, %v3421
          %v3550 = vpack.c.b16 %v3424, %v3422
          %v3551 = vpack.c.b16 %v3427, %v3425
          %v3552 = vpack.c.b16 %v3428, %v3426
          %v3553 = vpack.c.b16 %v3431, %v3429
          %v3554 = vpack.c.b16 %v3432, %v3430
          %v3555 = vpack.c.b16 %v3435, %v3433
          %v3556 = vpack.c.b16 %v3436, %v3434
          %v3557 = vpack.c.b16 %v3439, %v3437
          %v3558 = vpack.c.b16 %v3440, %v3438
          %v3559 = vpack.c.b16 %v3443, %v3441
          %v3560 = vpack.c.b16 %v3444, %v3442
          %v3561 = vpack.c.b16 %v3447, %v3445
          %v3562 = vpack.c.b16 %v3448, %v3446
          %v3563 = vpack.c.b16 %v3451, %v3449
          %v3564 = vpack.c.b16 %v3452, %v3450
          %v3565 = vpack.c.b16 %v3455, %v3453
          %v3566 = vpack.c.b16 %v3456, %v3454
          %v3567 = vpack.c.b16 %v3459, %v3457
          %v3568 = vpack.c.b16 %v3460, %v3458
          %v3569 = vpack.c.b16 %v3463, %v3461
          %v3570 = vpack.c.b16 %v3464, %v3462
          %v3571 = vpack.c.b16 %v3467, %v3465
          %v3572 = vpack.c.b16 %v3468, %v3466
          %v3573 = vpack.c.b16 %v3471, %v3469
          %v3574 = vpack.c.b16 %v3472, %v3470
          %v3575 = vpack.c.b16 %v3475, %v3473
          %v3576 = vpack.c.b16 %v3476, %v3474
          %v3577 = vpack.c.b16 %v3479, %v3477
          %v3578 = vpack.c.b16 %v3480, %v3478
          %v3579 = vpack.c.b16 %v3483, %v3481
          %v3580 = vpack.c.b16 %v3484, %v3482
          %v3581 = vpack.c.b16 %v3487, %v3485
          %v3582 = vpack.c.b16 %v3488, %v3486
          %v3583 = vpack.c.b16 %v3491, %v3489
          %v3584 = vpack.c.b16 %v3492, %v3490
          %v3585 = vpack.c.b16 %v3495, %v3493
          %v3586 = vpack.c.b16 %v3496, %v3494
          %v3587 = vpack.c.b16 %v3499, %v3497
          %v3588 = vpack.c.b16 %v3500, %v3498
          %v3589 = vpack.c.b16 %v3503, %v3501
          %v3590 = vpack.c.b16 %v3504, %v3502
          %v3591 = vpack.c.b16 %v3507, %v3505
          %v3592 = vpack.c.b16 %v3508, %v3506
          %v3593 = vpack.c.b16 %v3511, %v3509
          %v3594 = vpack.c.b16 %v3512, %v3510
          %v3595 = vpack.c.b16 %v3515, %v3513
          %v3596 = vpack.c.b16 %v3516, %v3514
          %v3597 = vpack.c.b16 %v3519, %v3517
          %v3598 = vpack.c.b16 %v3520, %v3518
          %v3599 = vpack.c.b16 %v3523, %v3521
          %v3600 = vpack.c.b16 %v3524, %v3522
          %v3601 = vpack.c.b16 %v3527, %v3525
          %v3602 = vpack.c.b16 %v3528, %v3526
          %v3603 = vpack.c.b16 %v3531, %v3529
          %v3604 = vpack.c.b16 %v3532, %v3530
          %v3605 = vpack.c.b16 %v3535, %v3533
          %v3606 = vpack.c.b16 %v3536, %v3534
          %v3607 = vpack.c.b16 %v3539, %v3537
          %v3608 = vpack.c.b16 %v3540, %v3538
          %v3609 = vpack.c.b16 %v3543, %v3541
          %v3610 = vpack.c.b16 %v3544, %v3542
          %v3611 = vpack.c.b16 %v3547, %v3545
          %v3612 = vpack.c.b16 %v3548, %v3546
          %v3678 = vlaneseq
          %v3679 = vshrl.u32 %v3678, 7
          %v3680 = vsub.s32 0, %v3679
          %v3681 = vrot.slane %v3356, %v3680
          %v3682 = vlaneseq
          %v3683 = vshrl.u32 %v3682, 7
          %v3684 = vsub.s32 1, %v3683
          %v3685 = vrot.slane %v3356, %v3684
          %3688 = vmatprep.subr.bf16.mxu0 %v3564
          %3689 = vmatpush1.bf16.msra.mxu0 %v3563
          %3690 = vmatprep.subr.bf16.mxu0 %v3562
          %3691 = vmatpush1.bf16.msra.mxu0 %v3561
          %3692 = vmatprep.subr.bf16.mxu0 %v3560
          %3693 = vmatpush1.bf16.msra.mxu0 %v3559
          %3694 = vmatprep.subr.bf16.mxu0 %v3558
          %3695 = vmatpush1.bf16.msra.mxu0 %v3557
          %3696 = vmatprep.subr.bf16.mxu0 %v3556
          %3697 = vmatpush1.bf16.msra.mxu0 %v3555
          %3698 = vmatprep.subr.bf16.mxu0 %v3554
          %3699 = vmatpush1.bf16.msra.mxu0 %v3553
          %3700 = vmatprep.subr.bf16.mxu0 %v3552
          %3701 = vmatpush1.bf16.msra.mxu0 %v3551
          %3702 = vmatprep.subr.bf16.mxu0 %v3550
          %3703 = vmatpush1.bf16.msra.mxu0 %v3549
          %3704 = vmatprep.subr.bf16.mxu0 %v3580
          %3705 = vmatpush2.bf16.msra.mxu0 %v3579
          %3706 = vmatprep.subr.bf16.mxu0 %v3578
          %3707 = vmatpush2.bf16.msra.mxu0 %v3577
          %3708 = vmatprep.subr.bf16.mxu0 %v3576
          %3709 = vmatpush2.bf16.msra.mxu0 %v3575
          %3710 = vmatprep.subr.bf16.mxu0 %v3574
          %3711 = vmatpush2.bf16.msra.mxu0 %v3573
          %3712 = vmatprep.subr.bf16.mxu0 %v3572
          %3713 = vmatpush2.bf16.msra.mxu0 %v3571
          %3714 = vmatprep.subr.bf16.mxu0 %v3570
          %3715 = vmatpush2.bf16.msra.mxu0 %v3569
          %3716 = vmatprep.subr.bf16.mxu0 %v3568
          %3717 = vmatpush2.bf16.msra.mxu0 %v3567
          %3718 = vmatprep.subr.bf16.mxu0 %v3566
          %3719 = vmatpush2.bf16.msra.mxu0 %v3565
          %3720 = vmatprep.mubr.bf16.mxu0 %v3289
          %3721 = vmatmul.mubr.bf16.gmra.mxu0 %v3288
          %v3722 = vpop.f32.mrf.mxu0
          %v3723 = vadd.f32 %v3681, %v3722
          %v3724 = vpop.f32.mrf.mxu0
          %v3725 = vadd.f32 %v3685, %v3724
          %v3726 = vpop.f32.mrf.mxu0
          %v3727 = vpop.f32.mrf.mxu0
          %3728 = vdwg.mxu0
          %3729 = vmatprep.subr.bf16.mxu0 %v3596
          %3730 = vmatpush1.bf16.msra.mxu0 %v3595
          %3731 = vmatprep.subr.bf16.mxu0 %v3594
          %3732 = vmatpush1.bf16.msra.mxu0 %v3593
          %3733 = vmatprep.subr.bf16.mxu0 %v3592
          %3734 = vmatpush1.bf16.msra.mxu0 %v3591
          %3735 = vmatprep.subr.bf16.mxu0 %v3590
          %3736 = vmatpush1.bf16.msra.mxu0 %v3589
          %3737 = vmatprep.subr.bf16.mxu0 %v3588
          %3738 = vmatpush1.bf16.msra.mxu0 %v3587
          %3739 = vmatprep.subr.bf16.mxu0 %v3586
          %3740 = vmatpush1.bf16.msra.mxu0 %v3585
          %3741 = vmatprep.subr.bf16.mxu0 %v3584
          %3742 = vmatpush1.bf16.msra.mxu0 %v3583
          %3743 = vmatprep.subr.bf16.mxu0 %v3582
          %3744 = vmatpush1.bf16.msra.mxu0 %v3581
          %3745 = vmatprep.subr.bf16.mxu0 %v3612
          %3746 = vmatpush2.bf16.msra.mxu0 %v3611
          %3747 = vmatprep.subr.bf16.mxu0 %v3610
          %3748 = vmatpush2.bf16.msra.mxu0 %v3609
          %3749 = vmatprep.subr.bf16.mxu0 %v3608
          %3750 = vmatpush2.bf16.msra.mxu0 %v3607
          %3751 = vmatprep.subr.bf16.mxu0 %v3606
          %3752 = vmatpush2.bf16.msra.mxu0 %v3605
          %3753 = vmatprep.subr.bf16.mxu0 %v3604
          %3754 = vmatpush2.bf16.msra.mxu0 %v3603
          %3755 = vmatprep.subr.bf16.mxu0 %v3602
          %3756 = vmatpush2.bf16.msra.mxu0 %v3601
          %3757 = vmatprep.subr.bf16.mxu0 %v3600
          %3758 = vmatpush2.bf16.msra.mxu0 %v3599
          %3759 = vmatprep.subr.bf16.mxu0 %v3598
          %3760 = vmatpush2.bf16.msra.mxu0 %v3597
          %3761 = vmatprep.mubr.bf16.mxu0 %v3291
          %3762 = vmatmul.mubr.bf16.gmra.mxu0 %v3290
          %v3763 = vpop.f32.mrf.mxu0
          %v3764 = vadd.f32 %v3723, %v3763
          %v3765 = vpop.f32.mrf.mxu0
          %v3766 = vadd.f32 %v3725, %v3765
          %v3767 = vpop.f32.mrf.mxu0
          %v3768 = vpop.f32.mrf.mxu0
          %3769 = vdwg.mxu0
          %v3770 = vmax.f32 %v3764, 0.0
          %v3771 = vmax.f32 %v3766, 0.0
          %v3772 = vpack.c.bf16 %v3770, %v3770
          %v3773 = vpack.c.bf16 %v3771, %v3771
          %v3774 = vld [vmem:[%s11] sm:$0xf]
          %v3775 = vld [vmem:[%s11 + $0x4] sm:$0xf]
          %v3776 = vld [vmem:[%s11 + $0x8] sm:$0xf]
          %v3777 = vld [vmem:[%s11 + $0xc] sm:$0xf]
          %v3778 = vld [vmem:[%s11 + $0x10] sm:$0xf]
          %v3779 = vld [vmem:[%s11 + $0x14] sm:$0xf]
          %v3780 = vld [vmem:[%s11 + $0x18] sm:$0xf]
          %v3781 = vld [vmem:[%s11 + $0x1c] sm:$0xf]
          %v3782 = vld [vmem:[%s11 + $0x20] sm:$0xf]
          %v3783 = vld [vmem:[%s11 + $0x24] sm:$0xf]
          %v3784 = vld [vmem:[%s11 + $0x28] sm:$0xf]
          %v3785 = vld [vmem:[%s11 + $0x2c] sm:$0xf]
          %v3786 = vld [vmem:[%s11 + $0x30] sm:$0xf]
          %v3787 = vld [vmem:[%s11 + $0x34] sm:$0xf]
          %v3788 = vld [vmem:[%s11 + $0x38] sm:$0xf]
          %v3789 = vld [vmem:[%s11 + $0x3c] sm:$0xf]
          %v3790 = vld [vmem:[%s11 + $0x40] sm:$0xf]
          %v3791 = vld [vmem:[%s11 + $0x44] sm:$0xf]
          %v3792 = vld [vmem:[%s11 + $0x48] sm:$0xf]
          %v3793 = vld [vmem:[%s11 + $0x4c] sm:$0xf]
          %v3794 = vld [vmem:[%s11 + $0x50] sm:$0xf]
          %v3795 = vld [vmem:[%s11 + $0x54] sm:$0xf]
          %v3796 = vld [vmem:[%s11 + $0x58] sm:$0xf]
          %v3797 = vld [vmem:[%s11 + $0x5c] sm:$0xf]
          %v3798 = vld [vmem:[%s11 + $0x60] sm:$0xf]
          %v3799 = vld [vmem:[%s11 + $0x64] sm:$0xf]
          %v3800 = vld [vmem:[%s11 + $0x68] sm:$0xf]
          %v3801 = vld [vmem:[%s11 + $0x6c] sm:$0xf]
          %v3802 = vld [vmem:[%s11 + $0x70] sm:$0xf]
          %v3803 = vld [vmem:[%s11 + $0x74] sm:$0xf]
          %v3804 = vld [vmem:[%s11 + $0x78] sm:$0xf]
          %v3805 = vld [vmem:[%s11 + $0x7c] sm:$0xf]
          %v3806 = vld [vmem:[%s12] sm:$0x1]
          %v3839 = vunpack.c.l.b16 %v3774
          %v3840 = vunpack.c.l.b16 %v3775
          %v3841 = vunpack.c.l.b16 %v3776
          %v3842 = vunpack.c.l.b16 %v3777
          %v3843 = vunpack.c.l.b16 %v3778
          %v3844 = vunpack.c.l.b16 %v3779
          %v3845 = vunpack.c.l.b16 %v3780
          %v3846 = vunpack.c.l.b16 %v3781
          %v3847 = vunpack.c.l.b16 %v3782
          %v3848 = vunpack.c.l.b16 %v3783
          %v3849 = vunpack.c.l.b16 %v3784
          %v3850 = vunpack.c.l.b16 %v3785
          %v3851 = vunpack.c.l.b16 %v3786
          %v3852 = vunpack.c.l.b16 %v3787
          %v3853 = vunpack.c.l.b16 %v3788
          %v3854 = vunpack.c.l.b16 %v3789
          %v3855 = vunpack.c.l.b16 %v3790
          %v3856 = vunpack.c.l.b16 %v3791
          %v3857 = vunpack.c.l.b16 %v3792
          %v3858 = vunpack.c.l.b16 %v3793
          %v3859 = vunpack.c.l.b16 %v3794
          %v3860 = vunpack.c.l.b16 %v3795
          %v3861 = vunpack.c.l.b16 %v3796
          %v3862 = vunpack.c.l.b16 %v3797
          %v3863 = vunpack.c.l.b16 %v3798
          %v3864 = vunpack.c.l.b16 %v3799
          %v3865 = vunpack.c.l.b16 %v3800
          %v3866 = vunpack.c.l.b16 %v3801
          %v3867 = vunpack.c.l.b16 %v3802
          %v3868 = vunpack.c.l.b16 %v3803
          %v3869 = vunpack.c.l.b16 %v3804
          %v3870 = vunpack.c.l.b16 %v3805
          %v3871 = vpack.c.b16 %v3840, %v3839
          %v3872 = vpack.c.b16 %v3842, %v3841
          %v3873 = vpack.c.b16 %v3844, %v3843
          %v3874 = vpack.c.b16 %v3846, %v3845
          %v3875 = vpack.c.b16 %v3848, %v3847
          %v3876 = vpack.c.b16 %v3850, %v3849
          %v3877 = vpack.c.b16 %v3852, %v3851
          %v3878 = vpack.c.b16 %v3854, %v3853
          %v3879 = vpack.c.b16 %v3856, %v3855
          %v3880 = vpack.c.b16 %v3858, %v3857
          %v3881 = vpack.c.b16 %v3860, %v3859
          %v3882 = vpack.c.b16 %v3862, %v3861
          %v3883 = vpack.c.b16 %v3864, %v3863
          %v3884 = vpack.c.b16 %v3866, %v3865
          %v3885 = vpack.c.b16 %v3868, %v3867
          %v3886 = vpack.c.b16 %v3870, %v3869
          %3903 = vmatprep.subr.bf16.mxu0 0
          %3904 = vmatpush1.bf16.msra.mxu0 %v3878
          %3905 = vmatprep.subr.bf16.mxu0 0
          %3906 = vmatpush1.bf16.msra.mxu0 %v3877
          %3907 = vmatprep.subr.bf16.mxu0 0
          %3908 = vmatpush1.bf16.msra.mxu0 %v3876
          %3909 = vmatprep.subr.bf16.mxu0 0
          %3910 = vmatpush1.bf16.msra.mxu0 %v3875
          %3911 = vmatprep.subr.bf16.mxu0 0
          %3912 = vmatpush1.bf16.msra.mxu0 %v3874
          %3913 = vmatprep.subr.bf16.mxu0 0
          %3914 = vmatpush1.bf16.msra.mxu0 %v3873
          %3915 = vmatprep.subr.bf16.mxu0 0
          %3916 = vmatpush1.bf16.msra.mxu0 %v3872
          %3917 = vmatprep.subr.bf16.mxu0 0
          %3918 = vmatpush1.bf16.msra.mxu0 %v3871
          %3919 = vmatprep.subr.bf16.mxu0 0
          %3920 = vmatpush2.bf16.msra.mxu0 %v3886
          %3921 = vmatprep.subr.bf16.mxu0 0
          %3922 = vmatpush2.bf16.msra.mxu0 %v3885
          %3923 = vmatprep.subr.bf16.mxu0 0
          %3924 = vmatpush2.bf16.msra.mxu0 %v3884
          %3925 = vmatprep.subr.bf16.mxu0 0
          %3926 = vmatpush2.bf16.msra.mxu0 %v3883
          %3927 = vmatprep.subr.bf16.mxu0 0
          %3928 = vmatpush2.bf16.msra.mxu0 %v3882
          %3929 = vmatprep.subr.bf16.mxu0 0
          %3930 = vmatpush2.bf16.msra.mxu0 %v3881
          %3931 = vmatprep.subr.bf16.mxu0 0
          %3932 = vmatpush2.bf16.msra.mxu0 %v3880
          %3933 = vmatprep.subr.bf16.mxu0 0
          %3934 = vmatpush2.bf16.msra.mxu0 %v3879
          %3935 = vmatprep.mubr.bf16.mxu0 %v3773
          %3936 = vmatmul.mubr.bf16.gmra.mxu0 %v3772
          %v3937 = vpop.f32.mrf.mxu0
          %v3938 = vadd.f32 %v3806, %v3937
          %v3939 = vpop.f32.mrf.mxu0
          %v3940 = vpop.f32.mrf.mxu0
          %v3941 = vpop.f32.mrf.mxu0
          %3942 = vdwg.mxu0
          %vm3943 = vcmask 65536
          %3944 = vst.msk [vmem:[%s508] sm:$0x1] %vm3943, %v3938
        $region92: #{pointnet_cls_forward.2} parent=71 // pred_fallthru
          _
        %p3945 = scmp.lt.s32.totalorder %s30, 1
        %s3946 = scalar_select %p3945, %s30, 1
        %s3947 = scalar_lea.vmem %s13, %s3946
        // Predicated region
        $region93: #{pointnet_cls_forward.2} parent=71 // pred_check
          %p3948 = pneg %p336
        $region94: #{pointnet_cls_forward.2} parent=71 // pred_check_branch
          %3950 = sbr.rel (%p3948) target = $region96
        $region95: #{pointnet_cls_forward.2} parent=71 // pred_region
          _
        $region96: #{pointnet_cls_forward.2} parent=71 // pred_fallthru
          _
      $region72: #{pointnet_cls_forward.2} parent=5 // pred_fallthru
        _
      %p3951 = scmp.le.s32.totalorder 2, %s21
      // Predicated region
      $region97: #{pointnet_cls_forward.2} parent=5 // pred_check
        %p3952 = pneg %p3951
      $region98: #{pointnet_cls_forward.2} parent=5 // pred_check_branch
        %3954 = sbr.rel (%p3952) target = $region100
      $region99: #{pointnet_cls_forward.2} parent=5 // pred_region
        %s3955 = ssub.s32 %s21, 2
        // Predicated region
        $region101: #{pointnet_cls_forward.2} parent=99 // pred_check
          %p3956 = pneg %p342
        $region102: #{pointnet_cls_forward.2} parent=99 // pred_check_branch
          %3958 = sbr.rel (%p3956) target = $region104
        $region103: #{pointnet_cls_forward.2} parent=99 // pred_region
          %p3959 = scmp.lt.s32.totalorder %s32, 1
          %s3960 = scalar_select %p3959, %s32, 1
          %s3961 = scalar_lea.vmem %s13, %s3960
        $region104: #{pointnet_cls_forward.2} parent=99 // pred_fallthru
          _
      $region100: #{pointnet_cls_forward.2} parent=5 // pred_fallthru
        _
    $region6: #{pointnet_cls_forward.2} parent=1 // loop_footer
      %s25 = sadd.s32 1, %s21
    $region7: #{pointnet_cls_forward.2} parent=1 // loop_footer_branch
      %20 = sbr.rel target = $region3
    $region8: #{pointnet_cls_forward.2} parent=1 // loop_exit
      _
    %3962 = vsyncpa [#allocation4], 1
    %s3963 = scalar_lea.sflag [#allocation4], 1
    %3964 = vsyncpa %s3963, 1
    %3965 = vsyncpa [#allocation6], 1

</llo_original>
